<compile_context>
chip_gen: v6e
topology: v6e:2x2x1
jax: 0.10.0
libtpu: 0.0.40
codegen_flags: <defaults>
</compile_context>

<pallas_src>
import jax
import jax.numpy as jnp
from jax import lax
from jax.experimental import pallas as pl
from jax.experimental.pallas import tpu as pltpu

K = 5  # LeNet5 conv kernel size


# ------------------------------ fused kernel ------------------------------- #

def _make_lenet5_kernel(cin, n_classes, H, W):
    H1, W1 = H - K + 1, W - K + 1          # conv1 out: 28 x 28
    HP1, WP1 = H1 // 2, W1 // 2            # pool1 out: 14 x 14
    H2, W2 = HP1 - K + 1, WP1 - K + 1      # conv2 out: 10 x 10
    HP2, WP2 = H2 // 2, W2 // 2            # pool2 out:  5 x  5
    assert HP2 == K and WP2 == K, "LeNet5 requires 32x32 spatial input"

    def conv_row(src_ref, row0, w_ref, b_ref, w_out, c_in, c_out):
        """tanh of one output row of a valid 5x5 conv, read from VMEM `src_ref`."""
        acc = jnp.zeros((w_out, c_out), jnp.float32)
        for kh in range(K):
            row = src_ref[row0 + kh]                     # (w_in, c_in)
            for kw in range(K):
                piece = row[kw:kw + w_out, :]            # (w_out, c_in)
                wk = w_ref[kh * K + kw]                  # (c_in, c_out)
                if c_in == 1:
                    acc = acc + piece * wk               # outer product (VPU)
                else:
                    acc = acc + jnp.dot(
                        piece, wk, preferred_element_type=jnp.float32)
        return jnp.tanh(acc + b_ref[...])

    def pool_matrix(rows_out, rows_in):
        # P[i, j] = 1 if j in {2i, 2i+1} else 0  (column-pooling matmul operand)
        ii = lax.broadcasted_iota(jnp.int32, (rows_out, rows_in), 0)
        jj = lax.broadcasted_iota(jnp.int32, (rows_out, rows_in), 1)
        return ((jj == 2 * ii) | (jj == 2 * ii + 1)).astype(jnp.float32)

    def kernel(x_ref, w1_ref, b1_ref, w2_ref, b2_ref, w3_ref, b3_ref,
               wf1_ref, bf1_ref, wf2_ref, bf2_ref, o_ref,
               pool1_ref, pool2_ref):
        # ---- stage 1: conv1 (cin -> 6) + tanh + 2x2 avg-pool (VMEM-resident) ----
        p1 = pool_matrix(WP1, W1)

        def body1(ph, carry):
            r0 = 2 * ph
            t0 = conv_row(x_ref, r0,     w1_ref, b1_ref, W1, cin, 6)
            t1 = conv_row(x_ref, r0 + 1, w1_ref, b1_ref, W1, cin, 6)
            pool1_ref[ph] = 0.25 * jnp.dot(
                p1, t0 + t1, preferred_element_type=jnp.float32)
            return carry
        lax.fori_loop(0, HP1, body1, 0)

        # ---- stage 2: conv2 (6 -> 16) + tanh + 2x2 avg-pool ----
        p2 = pool_matrix(WP2, W2)

        def body2(ph, carry):
            r0 = 2 * ph
            t0 = conv_row(pool1_ref, r0,     w2_ref, b2_ref, W2, 6, 16)
            t1 = conv_row(pool1_ref, r0 + 1, w2_ref, b2_ref, W2, 6, 16)
            pool2_ref[ph] = 0.25 * jnp.dot(
                p2, t0 + t1, preferred_element_type=jnp.float32)
            return carry
        lax.fori_loop(0, HP2, body2, 0)

        # ---- stage 3: conv3 (16 -> 120) + tanh (single 1x1 output position) ----
        a3 = conv_row(pool2_ref, 0, w3_ref, b3_ref, 1, 16, 120)     # (1, 120)

        # ---- stage 4: fc1 (120 -> 84) + tanh ----
        h1 = jnp.tanh(jnp.dot(a3, wf1_ref[...],
                              preferred_element_type=jnp.float32) + bf1_ref[...])

        # ---- stage 5: fc2 (84 -> n_classes) + softmax over classes ----
        logits = jnp.dot(h1, wf2_ref[...],
                         preferred_element_type=jnp.float32) + bf2_ref[...]
        m = jnp.max(logits, axis=1, keepdims=True)
        e = jnp.exp(logits - m)
        s = jnp.sum(e, axis=1, keepdims=True)
        o_ref[...] = e * pl.reciprocal(s, approx=True)

    scratch = [pltpu.VMEM((HP1, WP1, 6), jnp.float32),   # pool1 activations
               pltpu.VMEM((HP2, WP2, 16), jnp.float32)]  # pool2 activations
    return kernel, scratch


# ------------------------------ forward wrapper ----------------------------- #

def _resident(shape):
    """Full-array VMEM block, same block for every grid step (stays resident)."""
    return pl.BlockSpec(shape, lambda b: (0,) * len(shape))


@jax.jit
def lenet5_forward(x_nchw, params):
    """x_nchw: (B, Cin, 32, 32) float32 (PyTorch layout) -> (B, n_classes) probs."""
    x = jnp.transpose(x_nchw, (0, 2, 3, 1)).astype(jnp.float32)   # NHWC
    B, H, W, cin = x.shape
    n_classes = params["wf2"].shape[1]

    kernel, scratch = _make_lenet5_kernel(cin, n_classes, H, W)

    in_specs = [
        pl.BlockSpec((None, H, W, cin), lambda b: (b, 0, 0, 0)),   # per-sample x
        _resident(params["w1"].shape), _resident(params["b1"].shape),
        _resident(params["w2"].shape), _resident(params["b2"].shape),
        _resident(params["w3"].shape), _resident(params["b3"].shape),
        _resident(params["wf1"].shape), _resident(params["bf1"].shape),
        _resident(params["wf2"].shape), _resident(params["bf2"].shape),
    ]
    out_specs = pl.BlockSpec((None, 1, n_classes), lambda b: (b, 0, 0))

    flops = 2 * B * (28 * 28 * 25 * cin * 6 + 14 * 14 * 28 * 6
                     + 10 * 10 * 25 * 6 * 16 + 5 * 5 * 10 * 16
                     + 25 * 16 * 120 + 120 * 84 + 84 * n_classes)
    transcendentals = B * (28 * 28 * 6 + 10 * 10 * 16 + 120 + 84 + n_classes)
    bytes_accessed = 4 * (int(x.size)
                          + sum(int(p.size) for p in params.values())
                          + B * n_classes)

    out = pl.pallas_call(
        kernel,
        grid=(B,),
        in_specs=in_specs,
        out_specs=out_specs,
        out_shape=jax.ShapeDtypeStruct((B, 1, n_classes), jnp.float32),
        scratch_shapes=scratch,
        compiler_params=pltpu.CompilerParams(
            dimension_semantics=("parallel",),          # shard batch over TCs (v7x)
            vmem_limit_bytes=16 * 1024 * 1024),
        cost_estimate=pl.CostEstimate(flops=flops,
                                      transcendentals=transcendentals,
                                      bytes_accessed=bytes_accessed),
    )(x, params["w1"], params["b1"], params["w2"], params["b2"],
      params["w3"], params["b3"], params["wf1"], params["bf1"],
      params["wf2"], params["bf2"])
    return out.reshape(B, n_classes)


# ------------------------------ parameters ---------------------------------- #

def init_lenet5_params(key, first_channel, n_classes):
    """Random parameters in the PyTorch nn.Module layout."""
    ks = jax.random.split(key, 10)
    s = 0.1
    return {
        "w1": s * jax.random.normal(ks[0], (6, first_channel, K, K), jnp.float32),
        "b1": s * jax.random.normal(ks[1], (6,), jnp.float32),
        "w2": s * jax.random.normal(ks[2], (16, 6, K, K), jnp.float32),
        "b2": s * jax.random.normal(ks[3], (16,), jnp.float32),
        "w3": s * jax.random.normal(ks[4], (120, 16, K, K), jnp.float32),
        "b3": s * jax.random.normal(ks[5], (120,), jnp.float32),
        "w_fc1": s * jax.random.normal(ks[6], (84, 120), jnp.float32),   # (out, in)
        "b_fc1": s * jax.random.normal(ks[7], (84,), jnp.float32),
        "w_fc2": s * jax.random.normal(ks[8], (n_classes, 84), jnp.float32),
        "b_fc2": s * jax.random.normal(ks[9], (n_classes,), jnp.float32),
    }


def prepare_lenet5_params(raw):
    """One-time layout hoist: conv weights -> (kh*K+kw, Cin, Cout), Linear -> (in, out)."""
    def conv_w(w):  # (Co, Ci, K, K) -> (K*K, Ci, Co), flat index = kh*K + kw
        co, ci, _, _ = w.shape
        return jnp.transpose(w, (2, 3, 1, 0)).reshape(K * K, ci, co)
    return {
        "w1": conv_w(raw["w1"]), "b1": raw["b1"].reshape(1, -1),
        "w2": conv_w(raw["w2"]), "b2": raw["b2"].reshape(1, -1),
        "w3": conv_w(raw["w3"]), "b3": raw["b3"].reshape(1, -1),
        "wf1": raw["w_fc1"].T,   "bf1": raw["b_fc1"].reshape(1, -1),
        "wf2": raw["w_fc2"].T,   "bf2": raw["b_fc2"].reshape(1, -1),
    }


# ------------------------------ pure-JAX reference -------------------------- #

def _ref_conv_tanh(x, w, b):
    B, H, W, C = x.shape
    co, ci, k, _ = w.shape
    Ho, Wo = H - k + 1, W - k + 1
    cols = [x[:, kh:kh + Ho, kw:kw + Wo, :] for kh in range(k) for kw in range(k)]
    patches = jnp.concatenate(cols, axis=-1).reshape(B * Ho * Wo, k * k * C)
    wm = jnp.transpose(w, (2, 3, 1, 0)).reshape(k * k * ci, co)
    y = jnp.tanh(jnp.dot(patches, wm, precision=lax.Precision.HIGHEST) + b)
    return y.reshape(B, Ho, Wo, co)


def _ref_avgpool2(x):
    return 0.25 * (x[:, 0::2, 0::2, :] + x[:, 0::2, 1::2, :]
                   + x[:, 1::2, 0::2, :] + x[:, 1::2, 1::2, :])


def lenet5_reference(x_nchw, raw):
    x = jnp.transpose(x_nchw, (0, 2, 3, 1)).astype(jnp.float32)
    x = _ref_avgpool2(_ref_conv_tanh(x, raw["w1"], raw["b1"]))
    x = _ref_avgpool2(_ref_conv_tanh(x, raw["w2"], raw["b2"]))
    x = _ref_conv_tanh(x, raw["w3"], raw["b3"])
    x = x.reshape(x.shape[0], -1)
    x = jnp.tanh(jnp.dot(x, raw["w_fc1"].T, precision=lax.Precision.HIGHEST)
                 + raw["b_fc1"])
    logits = jnp.dot(x, raw["w_fc2"].T, precision=lax.Precision.HIGHEST) + raw["b_fc2"]
    return jax.nn.softmax(logits, axis=1)


# --------------------------------- main -------------------------------------- #

if __name__ == "__main__":
    FIRST_CHANNEL = 1
    N_CLASSES = 10
    BATCH = 2

    key = jax.random.PRNGKey(0)
    k_x, k_p = jax.random.split(key)
    # LeNet5's Linear(120) requires 32x32 spatial input.
    x = jax.random.normal(k_x, (BATCH, FIRST_CHANNEL, 32, 32), jnp.float32)
    raw = init_lenet5_params(k_p, FIRST_CHANNEL, N_CLASSES)
    params = prepare_lenet5_params(raw)          # one-time weight layout hoist

    prob = jax.block_until_ready(lenet5_forward(x, params))

    assert prob.shape == (BATCH, N_CLASSES)
    assert bool(jnp.all(jnp.isfinite(prob)))

    ref = jax.block_until_ready(lenet5_reference(x, raw))
    max_err = float(jnp.max(jnp.abs(prob - ref)))
    assert max_err < 1e-2, f"kernel deviates from reference: max abs err {max_err}"

    print("KERNEL_OK")
</pallas_src>

<mosaic_0001>
module attributes {stable_mosaic.version = 11 : i64} {
  func.func @kernel(%arg0: i32, %arg1: memref<1x32x32x1xf32, #tpu.memory_space<vmem>>, %arg2: memref<25x1x6xf32, #tpu.memory_space<vmem>>, %arg3: memref<1x6xf32, #tpu.memory_space<vmem>>, %arg4: memref<25x6x16xf32, #tpu.memory_space<vmem>>, %arg5: memref<1x16xf32, #tpu.memory_space<vmem>>, %arg6: memref<25x16x120xf32, #tpu.memory_space<vmem>>, %arg7: memref<1x120xf32, #tpu.memory_space<vmem>>, %arg8: memref<120x84xf32, #tpu.memory_space<vmem>>, %arg9: memref<1x84xf32, #tpu.memory_space<vmem>>, %arg10: memref<84x10xf32, #tpu.memory_space<vmem>>, %arg11: memref<1x10xf32, #tpu.memory_space<vmem>>, %arg12: memref<1x1x10xf32, #tpu.memory_space<vmem>>, %arg13: memref<14x14x6xf32, #tpu.memory_space<vmem>>, %arg14: memref<5x5x16xf32, #tpu.memory_space<vmem>>) attributes {dimension_semantics = [#tpu.dimension_semantics<parallel>], iteration_bounds = array<i64: 2>, scalar_prefetch = 0 : i64, scratch_operands = 2 : i64, tpu.core_type = #tpu.core_type<tc>, window_params = [{transform_indices = @transform_0, window_bounds = array<i64: 1, 32, 32, 1>}, {pipeline_mode = #tpu.pipeline_mode<synchronous>, transform_indices = @transform_1, window_bounds = array<i64: 25, 1, 6>}, {pipeline_mode = #tpu.pipeline_mode<synchronous>, transform_indices = @transform_2, window_bounds = array<i64: 1, 6>}, {pipeline_mode = #tpu.pipeline_mode<synchronous>, transform_indices = @transform_3, window_bounds = array<i64: 25, 6, 16>}, {pipeline_mode = #tpu.pipeline_mode<synchronous>, transform_indices = @transform_4, window_bounds = array<i64: 1, 16>}, {pipeline_mode = #tpu.pipeline_mode<synchronous>, transform_indices = @transform_5, window_bounds = array<i64: 25, 16, 120>}, {pipeline_mode = #tpu.pipeline_mode<synchronous>, transform_indices = @transform_6, window_bounds = array<i64: 1, 120>}, {pipeline_mode = #tpu.pipeline_mode<synchronous>, transform_indices = @transform_7, window_bounds = array<i64: 120, 84>}, {pipeline_mode = #tpu.pipeline_mode<synchronous>, transform_indices = @transform_8, window_bounds = array<i64: 1, 84>}, {pipeline_mode = #tpu.pipeline_mode<synchronous>, transform_indices = @transform_9, window_bounds = array<i64: 84, 10>}, {pipeline_mode = #tpu.pipeline_mode<synchronous>, transform_indices = @transform_10, window_bounds = array<i64: 1, 10>}, {transform_indices = @transform_11, window_bounds = array<i64: 1, 1, 10>}]} {
    %0 = tpu.iota {dimensions = array<i32: 0>} : vector<14x28xi32>
    %1 = tpu.iota {dimensions = array<i32: 1>} : vector<14x28xi32>
    %c2_i32 = arith.constant 2 : i32
    %2 = vector.broadcast %c2_i32 : i32 to vector<14x28xi32>
    %3 = arith.muli %2, %0 : vector<14x28xi32>
    %4 = arith.cmpi eq, %1, %3 : vector<14x28xi32>
    %c2_i32_0 = arith.constant 2 : i32
    %5 = vector.broadcast %c2_i32_0 : i32 to vector<14x28xi32>
    %6 = arith.muli %5, %0 : vector<14x28xi32>
    %c1_i32 = arith.constant 1 : i32
    %7 = vector.broadcast %c1_i32 : i32 to vector<14x28xi32>
    %8 = arith.addi %6, %7 : vector<14x28xi32>
    %9 = arith.cmpi eq, %1, %8 : vector<14x28xi32>
    %10 = arith.ori %4, %9 : vector<14x28xi1>
    %11 = arith.extui %10 : vector<14x28xi1> to vector<14x28xi32>
    %12 = arith.sitofp %11 : vector<14x28xi32> to vector<14x28xf32>
    %c0_i32 = arith.constant 0 : i32
    %c14_i32 = arith.constant 14 : i32
    %13 = arith.addi %c0_i32, %c14_i32 : i32
    %c1_i32_1 = arith.constant 1 : i32
    scf.for %arg15 = %c0_i32 to %13 step %c1_i32_1  : i32 {
      %c2_i32_116 = arith.constant 2 : i32
      %189 = arith.muli %c2_i32_116, %arg15 : i32
      %cst_117 = arith.constant 0.000000e+00 : f32
      %190 = vector.broadcast %cst_117 : f32 to vector<28x6xf32>
      %c0_i32_118 = arith.constant 0 : i32
      %191 = arith.addi %189, %c0_i32_118 : i32
      %c0_119 = arith.constant 0 : index
      %192 = arith.index_cast %191 : i32 to index
      %c0_120 = arith.constant 0 : index
      %c0_121 = arith.constant 0 : index
      %193 = vector.load %arg1[%c0_119, %192, %c0_120, %c0_121] : memref<1x32x32x1xf32, #tpu.memory_space<vmem>>, vector<1x1x32x1xf32>
      %194 = vector.shape_cast %193 : vector<1x1x32x1xf32> to vector<32x1xf32>
      %195 = vector.extract_strided_slice %194 {offsets = [0, 0], sizes = [28, 1], strides = [1, 1]} : vector<32x1xf32> to vector<28x1xf32>
      %c0_122 = arith.constant 0 : index
      %c0_123 = arith.constant 0 : index
      %c0_124 = arith.constant 0 : index
      %196 = vector.load %arg2[%c0_122, %c0_123, %c0_124] : memref<25x1x6xf32, #tpu.memory_space<vmem>>, vector<1x1x6xf32>
      %197 = vector.shape_cast %196 : vector<1x1x6xf32> to vector<1x6xf32>
      %198 = vector.broadcast %195 : vector<28x1xf32> to vector<28x6xf32>
      %199 = vector.broadcast %197 : vector<1x6xf32> to vector<28x6xf32>
      %200 = arith.mulf %198, %199 : vector<28x6xf32>
      %201 = arith.addf %190, %200 : vector<28x6xf32>
      %202 = vector.extract_strided_slice %194 {offsets = [1, 0], sizes = [28, 1], strides = [1, 1]} : vector<32x1xf32> to vector<28x1xf32>
      %c1_125 = arith.constant 1 : index
      %c0_126 = arith.constant 0 : index
      %c0_127 = arith.constant 0 : index
      %203 = vector.load %arg2[%c1_125, %c0_126, %c0_127] : memref<25x1x6xf32, #tpu.memory_space<vmem>>, vector<1x1x6xf32>
      %204 = vector.shape_cast %203 : vector<1x1x6xf32> to vector<1x6xf32>
      %205 = vector.broadcast %202 : vector<28x1xf32> to vector<28x6xf32>
      %206 = vector.broadcast %204 : vector<1x6xf32> to vector<28x6xf32>
      %207 = arith.mulf %205, %206 : vector<28x6xf32>
      %208 = arith.addf %201, %207 : vector<28x6xf32>
      %209 = vector.extract_strided_slice %194 {offsets = [2, 0], sizes = [28, 1], strides = [1, 1]} : vector<32x1xf32> to vector<28x1xf32>
      %c2_128 = arith.constant 2 : index
      %c0_129 = arith.constant 0 : index
      %c0_130 = arith.constant 0 : index
      %210 = vector.load %arg2[%c2_128, %c0_129, %c0_130] : memref<25x1x6xf32, #tpu.memory_space<vmem>>, vector<1x1x6xf32>
      %211 = vector.shape_cast %210 : vector<1x1x6xf32> to vector<1x6xf32>
      %212 = vector.broadcast %209 : vector<28x1xf32> to vector<28x6xf32>
      %213 = vector.broadcast %211 : vector<1x6xf32> to vector<28x6xf32>
      %214 = arith.mulf %212, %213 : vector<28x6xf32>
      %215 = arith.addf %208, %214 : vector<28x6xf32>
      %216 = vector.extract_strided_slice %194 {offsets = [3, 0], sizes = [28, 1], strides = [1, 1]} : vector<32x1xf32> to vector<28x1xf32>
      %c3_131 = arith.constant 3 : index
      %c0_132 = arith.constant 0 : index
      %c0_133 = arith.constant 0 : index
      %217 = vector.load %arg2[%c3_131, %c0_132, %c0_133] : memref<25x1x6xf32, #tpu.memory_space<vmem>>, vector<1x1x6xf32>
      %218 = vector.shape_cast %217 : vector<1x1x6xf32> to vector<1x6xf32>
      %219 = vector.broadcast %216 : vector<28x1xf32> to vector<28x6xf32>
      %220 = vector.broadcast %218 : vector<1x6xf32> to vector<28x6xf32>
      %221 = arith.mulf %219, %220 : vector<28x6xf32>
      %222 = arith.addf %215, %221 : vector<28x6xf32>
      %223 = vector.extract_strided_slice %194 {offsets = [4, 0], sizes = [28, 1], strides = [1, 1]} : vector<32x1xf32> to vector<28x1xf32>
      %c4_134 = arith.constant 4 : index
      %c0_135 = arith.constant 0 : index
      %c0_136 = arith.constant 0 : index
      %224 = vector.load %arg2[%c4_134, %c0_135, %c0_136] : memref<25x1x6xf32, #tpu.memory_space<vmem>>, vector<1x1x6xf32>
      %225 = vector.shape_cast %224 : vector<1x1x6xf32> to vector<1x6xf32>
      %226 = vector.broadcast %223 : vector<28x1xf32> to vector<28x6xf32>
      %227 = vector.broadcast %225 : vector<1x6xf32> to vector<28x6xf32>
      %228 = arith.mulf %226, %227 : vector<28x6xf32>
      %229 = arith.addf %222, %228 : vector<28x6xf32>
      %c1_i32_137 = arith.constant 1 : i32
      %230 = arith.addi %189, %c1_i32_137 : i32
      %c0_138 = arith.constant 0 : index
      %231 = arith.index_cast %230 : i32 to index
      %c0_139 = arith.constant 0 : index
      %c0_140 = arith.constant 0 : index
      %232 = vector.load %arg1[%c0_138, %231, %c0_139, %c0_140] : memref<1x32x32x1xf32, #tpu.memory_space<vmem>>, vector<1x1x32x1xf32>
      %233 = vector.shape_cast %232 : vector<1x1x32x1xf32> to vector<32x1xf32>
      %234 = vector.extract_strided_slice %233 {offsets = [0, 0], sizes = [28, 1], strides = [1, 1]} : vector<32x1xf32> to vector<28x1xf32>
      %c5_141 = arith.constant 5 : index
      %c0_142 = arith.constant 0 : index
      %c0_143 = arith.constant 0 : index
      %235 = vector.load %arg2[%c5_141, %c0_142, %c0_143] : memref<25x1x6xf32, #tpu.memory_space<vmem>>, vector<1x1x6xf32>
      %236 = vector.shape_cast %235 : vector<1x1x6xf32> to vector<1x6xf32>
      %237 = vector.broadcast %234 : vector<28x1xf32> to vector<28x6xf32>
      %238 = vector.broadcast %236 : vector<1x6xf32> to vector<28x6xf32>
      %239 = arith.mulf %237, %238 : vector<28x6xf32>
      %240 = arith.addf %229, %239 : vector<28x6xf32>
      %241 = vector.extract_strided_slice %233 {offsets = [1, 0], sizes = [28, 1], strides = [1, 1]} : vector<32x1xf32> to vector<28x1xf32>
      %c6_144 = arith.constant 6 : index
      %c0_145 = arith.constant 0 : index
      %c0_146 = arith.constant 0 : index
      %242 = vector.load %arg2[%c6_144, %c0_145, %c0_146] : memref<25x1x6xf32, #tpu.memory_space<vmem>>, vector<1x1x6xf32>
      %243 = vector.shape_cast %242 : vector<1x1x6xf32> to vector<1x6xf32>
      %244 = vector.broadcast %241 : vector<28x1xf32> to vector<28x6xf32>
      %245 = vector.broadcast %243 : vector<1x6xf32> to vector<28x6xf32>
      %246 = arith.mulf %244, %245 : vector<28x6xf32>
      %247 = arith.addf %240, %246 : vector<28x6xf32>
      %248 = vector.extract_strided_slice %233 {offsets = [2, 0], sizes = [28, 1], strides = [1, 1]} : vector<32x1xf32> to vector<28x1xf32>
      %c7_147 = arith.constant 7 : index
      %c0_148 = arith.constant 0 : index
      %c0_149 = arith.constant 0 : index
      %249 = vector.load %arg2[%c7_147, %c0_148, %c0_149] : memref<25x1x6xf32, #tpu.memory_space<vmem>>, vector<1x1x6xf32>
      %250 = vector.shape_cast %249 : vector<1x1x6xf32> to vector<1x6xf32>
      %251 = vector.broadcast %248 : vector<28x1xf32> to vector<28x6xf32>
      %252 = vector.broadcast %250 : vector<1x6xf32> to vector<28x6xf32>
      %253 = arith.mulf %251, %252 : vector<28x6xf32>
      %254 = arith.addf %247, %253 : vector<28x6xf32>
      %255 = vector.extract_strided_slice %233 {offsets = [3, 0], sizes = [28, 1], strides = [1, 1]} : vector<32x1xf32> to vector<28x1xf32>
      %c8_150 = arith.constant 8 : index
      %c0_151 = arith.constant 0 : index
      %c0_152 = arith.constant 0 : index
      %256 = vector.load %arg2[%c8_150, %c0_151, %c0_152] : memref<25x1x6xf32, #tpu.memory_space<vmem>>, vector<1x1x6xf32>
      %257 = vector.shape_cast %256 : vector<1x1x6xf32> to vector<1x6xf32>
      %258 = vector.broadcast %255 : vector<28x1xf32> to vector<28x6xf32>
      %259 = vector.broadcast %257 : vector<1x6xf32> to vector<28x6xf32>
      %260 = arith.mulf %258, %259 : vector<28x6xf32>
      %261 = arith.addf %254, %260 : vector<28x6xf32>
      %262 = vector.extract_strided_slice %233 {offsets = [4, 0], sizes = [28, 1], strides = [1, 1]} : vector<32x1xf32> to vector<28x1xf32>
      %c9_153 = arith.constant 9 : index
      %c0_154 = arith.constant 0 : index
      %c0_155 = arith.constant 0 : index
      %263 = vector.load %arg2[%c9_153, %c0_154, %c0_155] : memref<25x1x6xf32, #tpu.memory_space<vmem>>, vector<1x1x6xf32>
      %264 = vector.shape_cast %263 : vector<1x1x6xf32> to vector<1x6xf32>
      %265 = vector.broadcast %262 : vector<28x1xf32> to vector<28x6xf32>
      %266 = vector.broadcast %264 : vector<1x6xf32> to vector<28x6xf32>
      %267 = arith.mulf %265, %266 : vector<28x6xf32>
      %268 = arith.addf %261, %267 : vector<28x6xf32>
      %c2_i32_156 = arith.constant 2 : i32
      %269 = arith.addi %189, %c2_i32_156 : i32
      %c0_157 = arith.constant 0 : index
      %270 = arith.index_cast %269 : i32 to index
      %c0_158 = arith.constant 0 : index
      %c0_159 = arith.constant 0 : index
      %271 = vector.load %arg1[%c0_157, %270, %c0_158, %c0_159] : memref<1x32x32x1xf32, #tpu.memory_space<vmem>>, vector<1x1x32x1xf32>
      %272 = vector.shape_cast %271 : vector<1x1x32x1xf32> to vector<32x1xf32>
      %273 = vector.extract_strided_slice %272 {offsets = [0, 0], sizes = [28, 1], strides = [1, 1]} : vector<32x1xf32> to vector<28x1xf32>
      %c10_160 = arith.constant 10 : index
      %c0_161 = arith.constant 0 : index
      %c0_162 = arith.constant 0 : index
      %274 = vector.load %arg2[%c10_160, %c0_161, %c0_162] : memref<25x1x6xf32, #tpu.memory_space<vmem>>, vector<1x1x6xf32>
      %275 = vector.shape_cast %274 : vector<1x1x6xf32> to vector<1x6xf32>
      %276 = vector.broadcast %273 : vector<28x1xf32> to vector<28x6xf32>
      %277 = vector.broadcast %275 : vector<1x6xf32> to vector<28x6xf32>
      %278 = arith.mulf %276, %277 : vector<28x6xf32>
      %279 = arith.addf %268, %278 : vector<28x6xf32>
      %280 = vector.extract_strided_slice %272 {offsets = [1, 0], sizes = [28, 1], strides = [1, 1]} : vector<32x1xf32> to vector<28x1xf32>
      %c11_163 = arith.constant 11 : index
      %c0_164 = arith.constant 0 : index
      %c0_165 = arith.constant 0 : index
      %281 = vector.load %arg2[%c11_163, %c0_164, %c0_165] : memref<25x1x6xf32, #tpu.memory_space<vmem>>, vector<1x1x6xf32>
      %282 = vector.shape_cast %281 : vector<1x1x6xf32> to vector<1x6xf32>
      %283 = vector.broadcast %280 : vector<28x1xf32> to vector<28x6xf32>
      %284 = vector.broadcast %282 : vector<1x6xf32> to vector<28x6xf32>
      %285 = arith.mulf %283, %284 : vector<28x6xf32>
      %286 = arith.addf %279, %285 : vector<28x6xf32>
      %287 = vector.extract_strided_slice %272 {offsets = [2, 0], sizes = [28, 1], strides = [1, 1]} : vector<32x1xf32> to vector<28x1xf32>
      %c12_166 = arith.constant 12 : index
      %c0_167 = arith.constant 0 : index
      %c0_168 = arith.constant 0 : index
      %288 = vector.load %arg2[%c12_166, %c0_167, %c0_168] : memref<25x1x6xf32, #tpu.memory_space<vmem>>, vector<1x1x6xf32>
      %289 = vector.shape_cast %288 : vector<1x1x6xf32> to vector<1x6xf32>
      %290 = vector.broadcast %287 : vector<28x1xf32> to vector<28x6xf32>
      %291 = vector.broadcast %289 : vector<1x6xf32> to vector<28x6xf32>
      %292 = arith.mulf %290, %291 : vector<28x6xf32>
      %293 = arith.addf %286, %292 : vector<28x6xf32>
      %294 = vector.extract_strided_slice %272 {offsets = [3, 0], sizes = [28, 1], strides = [1, 1]} : vector<32x1xf32> to vector<28x1xf32>
      %c13_169 = arith.constant 13 : index
      %c0_170 = arith.constant 0 : index
      %c0_171 = arith.constant 0 : index
      %295 = vector.load %arg2[%c13_169, %c0_170, %c0_171] : memref<25x1x6xf32, #tpu.memory_space<vmem>>, vector<1x1x6xf32>
      %296 = vector.shape_cast %295 : vector<1x1x6xf32> to vector<1x6xf32>
      %297 = vector.broadcast %294 : vector<28x1xf32> to vector<28x6xf32>
      %298 = vector.broadcast %296 : vector<1x6xf32> to vector<28x6xf32>
      %299 = arith.mulf %297, %298 : vector<28x6xf32>
      %300 = arith.addf %293, %299 : vector<28x6xf32>
      %301 = vector.extract_strided_slice %272 {offsets = [4, 0], sizes = [28, 1], strides = [1, 1]} : vector<32x1xf32> to vector<28x1xf32>
      %c14_172 = arith.constant 14 : index
      %c0_173 = arith.constant 0 : index
      %c0_174 = arith.constant 0 : index
      %302 = vector.load %arg2[%c14_172, %c0_173, %c0_174] : memref<25x1x6xf32, #tpu.memory_space<vmem>>, vector<1x1x6xf32>
      %303 = vector.shape_cast %302 : vector<1x1x6xf32> to vector<1x6xf32>
      %304 = vector.broadcast %301 : vector<28x1xf32> to vector<28x6xf32>
      %305 = vector.broadcast %303 : vector<1x6xf32> to vector<28x6xf32>
      %306 = arith.mulf %304, %305 : vector<28x6xf32>
      %307 = arith.addf %300, %306 : vector<28x6xf32>
      %c3_i32 = arith.constant 3 : i32
      %308 = arith.addi %189, %c3_i32 : i32
      %c0_175 = arith.constant 0 : index
      %309 = arith.index_cast %308 : i32 to index
      %c0_176 = arith.constant 0 : index
      %c0_177 = arith.constant 0 : index
      %310 = vector.load %arg1[%c0_175, %309, %c0_176, %c0_177] : memref<1x32x32x1xf32, #tpu.memory_space<vmem>>, vector<1x1x32x1xf32>
      %311 = vector.shape_cast %310 : vector<1x1x32x1xf32> to vector<32x1xf32>
      %312 = vector.extract_strided_slice %311 {offsets = [0, 0], sizes = [28, 1], strides = [1, 1]} : vector<32x1xf32> to vector<28x1xf32>
      %c15_178 = arith.constant 15 : index
      %c0_179 = arith.constant 0 : index
      %c0_180 = arith.constant 0 : index
      %313 = vector.load %arg2[%c15_178, %c0_179, %c0_180] : memref<25x1x6xf32, #tpu.memory_space<vmem>>, vector<1x1x6xf32>
      %314 = vector.shape_cast %313 : vector<1x1x6xf32> to vector<1x6xf32>
      %315 = vector.broadcast %312 : vector<28x1xf32> to vector<28x6xf32>
      %316 = vector.broadcast %314 : vector<1x6xf32> to vector<28x6xf32>
      %317 = arith.mulf %315, %316 : vector<28x6xf32>
      %318 = arith.addf %307, %317 : vector<28x6xf32>
      %319 = vector.extract_strided_slice %311 {offsets = [1, 0], sizes = [28, 1], strides = [1, 1]} : vector<32x1xf32> to vector<28x1xf32>
      %c16_181 = arith.constant 16 : index
      %c0_182 = arith.constant 0 : index
      %c0_183 = arith.constant 0 : index
      %320 = vector.load %arg2[%c16_181, %c0_182, %c0_183] : memref<25x1x6xf32, #tpu.memory_space<vmem>>, vector<1x1x6xf32>
      %321 = vector.shape_cast %320 : vector<1x1x6xf32> to vector<1x6xf32>
      %322 = vector.broadcast %319 : vector<28x1xf32> to vector<28x6xf32>
      %323 = vector.broadcast %321 : vector<1x6xf32> to vector<28x6xf32>
      %324 = arith.mulf %322, %323 : vector<28x6xf32>
      %325 = arith.addf %318, %324 : vector<28x6xf32>
      %326 = vector.extract_strided_slice %311 {offsets = [2, 0], sizes = [28, 1], strides = [1, 1]} : vector<32x1xf32> to vector<28x1xf32>
      %c17_184 = arith.constant 17 : index
      %c0_185 = arith.constant 0 : index
      %c0_186 = arith.constant 0 : index
      %327 = vector.load %arg2[%c17_184, %c0_185, %c0_186] : memref<25x1x6xf32, #tpu.memory_space<vmem>>, vector<1x1x6xf32>
      %328 = vector.shape_cast %327 : vector<1x1x6xf32> to vector<1x6xf32>
      %329 = vector.broadcast %326 : vector<28x1xf32> to vector<28x6xf32>
      %330 = vector.broadcast %328 : vector<1x6xf32> to vector<28x6xf32>
      %331 = arith.mulf %329, %330 : vector<28x6xf32>
      %332 = arith.addf %325, %331 : vector<28x6xf32>
      %333 = vector.extract_strided_slice %311 {offsets = [3, 0], sizes = [28, 1], strides = [1, 1]} : vector<32x1xf32> to vector<28x1xf32>
      %c18_187 = arith.constant 18 : index
      %c0_188 = arith.constant 0 : index
      %c0_189 = arith.constant 0 : index
      %334 = vector.load %arg2[%c18_187, %c0_188, %c0_189] : memref<25x1x6xf32, #tpu.memory_space<vmem>>, vector<1x1x6xf32>
      %335 = vector.shape_cast %334 : vector<1x1x6xf32> to vector<1x6xf32>
      %336 = vector.broadcast %333 : vector<28x1xf32> to vector<28x6xf32>
      %337 = vector.broadcast %335 : vector<1x6xf32> to vector<28x6xf32>
      %338 = arith.mulf %336, %337 : vector<28x6xf32>
      %339 = arith.addf %332, %338 : vector<28x6xf32>
      %340 = vector.extract_strided_slice %311 {offsets = [4, 0], sizes = [28, 1], strides = [1, 1]} : vector<32x1xf32> to vector<28x1xf32>
      %c19_190 = arith.constant 19 : index
      %c0_191 = arith.constant 0 : index
      %c0_192 = arith.constant 0 : index
      %341 = vector.load %arg2[%c19_190, %c0_191, %c0_192] : memref<25x1x6xf32, #tpu.memory_space<vmem>>, vector<1x1x6xf32>
      %342 = vector.shape_cast %341 : vector<1x1x6xf32> to vector<1x6xf32>
      %343 = vector.broadcast %340 : vector<28x1xf32> to vector<28x6xf32>
      %344 = vector.broadcast %342 : vector<1x6xf32> to vector<28x6xf32>
      %345 = arith.mulf %343, %344 : vector<28x6xf32>
      %346 = arith.addf %339, %345 : vector<28x6xf32>
      %c4_i32 = arith.constant 4 : i32
      %347 = arith.addi %189, %c4_i32 : i32
      %c0_193 = arith.constant 0 : index
      %348 = arith.index_cast %347 : i32 to index
      %c0_194 = arith.constant 0 : index
      %c0_195 = arith.constant 0 : index
      %349 = vector.load %arg1[%c0_193, %348, %c0_194, %c0_195] : memref<1x32x32x1xf32, #tpu.memory_space<vmem>>, vector<1x1x32x1xf32>
      %350 = vector.shape_cast %349 : vector<1x1x32x1xf32> to vector<32x1xf32>
      %351 = vector.extract_strided_slice %350 {offsets = [0, 0], sizes = [28, 1], strides = [1, 1]} : vector<32x1xf32> to vector<28x1xf32>
      %c20_196 = arith.constant 20 : index
      %c0_197 = arith.constant 0 : index
      %c0_198 = arith.constant 0 : index
      %352 = vector.load %arg2[%c20_196, %c0_197, %c0_198] : memref<25x1x6xf32, #tpu.memory_space<vmem>>, vector<1x1x6xf32>
      %353 = vector.shape_cast %352 : vector<1x1x6xf32> to vector<1x6xf32>
      %354 = vector.broadcast %351 : vector<28x1xf32> to vector<28x6xf32>
      %355 = vector.broadcast %353 : vector<1x6xf32> to vector<28x6xf32>
      %356 = arith.mulf %354, %355 : vector<28x6xf32>
      %357 = arith.addf %346, %356 : vector<28x6xf32>
      %358 = vector.extract_strided_slice %350 {offsets = [1, 0], sizes = [28, 1], strides = [1, 1]} : vector<32x1xf32> to vector<28x1xf32>
      %c21_199 = arith.constant 21 : index
      %c0_200 = arith.constant 0 : index
      %c0_201 = arith.constant 0 : index
      %359 = vector.load %arg2[%c21_199, %c0_200, %c0_201] : memref<25x1x6xf32, #tpu.memory_space<vmem>>, vector<1x1x6xf32>
      %360 = vector.shape_cast %359 : vector<1x1x6xf32> to vector<1x6xf32>
      %361 = vector.broadcast %358 : vector<28x1xf32> to vector<28x6xf32>
      %362 = vector.broadcast %360 : vector<1x6xf32> to vector<28x6xf32>
      %363 = arith.mulf %361, %362 : vector<28x6xf32>
      %364 = arith.addf %357, %363 : vector<28x6xf32>
      %365 = vector.extract_strided_slice %350 {offsets = [2, 0], sizes = [28, 1], strides = [1, 1]} : vector<32x1xf32> to vector<28x1xf32>
      %c22_202 = arith.constant 22 : index
      %c0_203 = arith.constant 0 : index
      %c0_204 = arith.constant 0 : index
      %366 = vector.load %arg2[%c22_202, %c0_203, %c0_204] : memref<25x1x6xf32, #tpu.memory_space<vmem>>, vector<1x1x6xf32>
      %367 = vector.shape_cast %366 : vector<1x1x6xf32> to vector<1x6xf32>
      %368 = vector.broadcast %365 : vector<28x1xf32> to vector<28x6xf32>
      %369 = vector.broadcast %367 : vector<1x6xf32> to vector<28x6xf32>
      %370 = arith.mulf %368, %369 : vector<28x6xf32>
      %371 = arith.addf %364, %370 : vector<28x6xf32>
      %372 = vector.extract_strided_slice %350 {offsets = [3, 0], sizes = [28, 1], strides = [1, 1]} : vector<32x1xf32> to vector<28x1xf32>
      %c23_205 = arith.constant 23 : index
      %c0_206 = arith.constant 0 : index
      %c0_207 = arith.constant 0 : index
      %373 = vector.load %arg2[%c23_205, %c0_206, %c0_207] : memref<25x1x6xf32, #tpu.memory_space<vmem>>, vector<1x1x6xf32>
      %374 = vector.shape_cast %373 : vector<1x1x6xf32> to vector<1x6xf32>
      %375 = vector.broadcast %372 : vector<28x1xf32> to vector<28x6xf32>
      %376 = vector.broadcast %374 : vector<1x6xf32> to vector<28x6xf32>
      %377 = arith.mulf %375, %376 : vector<28x6xf32>
      %378 = arith.addf %371, %377 : vector<28x6xf32>
      %379 = vector.extract_strided_slice %350 {offsets = [4, 0], sizes = [28, 1], strides = [1, 1]} : vector<32x1xf32> to vector<28x1xf32>
      %c24_208 = arith.constant 24 : index
      %c0_209 = arith.constant 0 : index
      %c0_210 = arith.constant 0 : index
      %380 = vector.load %arg2[%c24_208, %c0_209, %c0_210] : memref<25x1x6xf32, #tpu.memory_space<vmem>>, vector<1x1x6xf32>
      %381 = vector.shape_cast %380 : vector<1x1x6xf32> to vector<1x6xf32>
      %382 = vector.broadcast %379 : vector<28x1xf32> to vector<28x6xf32>
      %383 = vector.broadcast %381 : vector<1x6xf32> to vector<28x6xf32>
      %384 = arith.mulf %382, %383 : vector<28x6xf32>
      %385 = arith.addf %378, %384 : vector<28x6xf32>
      %c0_211 = arith.constant 0 : index
      %c0_212 = arith.constant 0 : index
      %386 = vector.load %arg3[%c0_211, %c0_212] : memref<1x6xf32, #tpu.memory_space<vmem>>, vector<1x6xf32>
      %387 = vector.broadcast %386 : vector<1x6xf32> to vector<28x6xf32>
      %388 = arith.addf %385, %387 : vector<28x6xf32>
      %389 = math.tanh %388 : vector<28x6xf32>
      %c1_i32_213 = arith.constant 1 : i32
      %390 = arith.addi %189, %c1_i32_213 : i32
      %cst_214 = arith.constant 0.000000e+00 : f32
      %391 = vector.broadcast %cst_214 : f32 to vector<28x6xf32>
      %c0_i32_215 = arith.constant 0 : i32
      %392 = arith.addi %390, %c0_i32_215 : i32
      %c0_216 = arith.constant 0 : index
      %393 = arith.index_cast %392 : i32 to index
      %c0_217 = arith.constant 0 : index
      %c0_218 = arith.constant 0 : index
      %394 = vector.load %arg1[%c0_216, %393, %c0_217, %c0_218] : memref<1x32x32x1xf32, #tpu.memory_space<vmem>>, vector<1x1x32x1xf32>
      %395 = vector.shape_cast %394 : vector<1x1x32x1xf32> to vector<32x1xf32>
      %396 = vector.extract_strided_slice %395 {offsets = [0, 0], sizes = [28, 1], strides = [1, 1]} : vector<32x1xf32> to vector<28x1xf32>
      %c0_219 = arith.constant 0 : index
      %c0_220 = arith.constant 0 : index
      %c0_221 = arith.constant 0 : index
      %397 = vector.load %arg2[%c0_219, %c0_220, %c0_221] : memref<25x1x6xf32, #tpu.memory_space<vmem>>, vector<1x1x6xf32>
      %398 = vector.shape_cast %397 : vector<1x1x6xf32> to vector<1x6xf32>
      %399 = vector.broadcast %396 : vector<28x1xf32> to vector<28x6xf32>
      %400 = vector.broadcast %398 : vector<1x6xf32> to vector<28x6xf32>
      %401 = arith.mulf %399, %400 : vector<28x6xf32>
      %402 = arith.addf %391, %401 : vector<28x6xf32>
      %403 = vector.extract_strided_slice %395 {offsets = [1, 0], sizes = [28, 1], strides = [1, 1]} : vector<32x1xf32> to vector<28x1xf32>
      %c1_222 = arith.constant 1 : index
      %c0_223 = arith.constant 0 : index
      %c0_224 = arith.constant 0 : index
      %404 = vector.load %arg2[%c1_222, %c0_223, %c0_224] : memref<25x1x6xf32, #tpu.memory_space<vmem>>, vector<1x1x6xf32>
      %405 = vector.shape_cast %404 : vector<1x1x6xf32> to vector<1x6xf32>
      %406 = vector.broadcast %403 : vector<28x1xf32> to vector<28x6xf32>
      %407 = vector.broadcast %405 : vector<1x6xf32> to vector<28x6xf32>
      %408 = arith.mulf %406, %407 : vector<28x6xf32>
      %409 = arith.addf %402, %408 : vector<28x6xf32>
      %410 = vector.extract_strided_slice %395 {offsets = [2, 0], sizes = [28, 1], strides = [1, 1]} : vector<32x1xf32> to vector<28x1xf32>
      %c2_225 = arith.constant 2 : index
      %c0_226 = arith.constant 0 : index
      %c0_227 = arith.constant 0 : index
      %411 = vector.load %arg2[%c2_225, %c0_226, %c0_227] : memref<25x1x6xf32, #tpu.memory_space<vmem>>, vector<1x1x6xf32>
      %412 = vector.shape_cast %411 : vector<1x1x6xf32> to vector<1x6xf32>
      %413 = vector.broadcast %410 : vector<28x1xf32> to vector<28x6xf32>
      %414 = vector.broadcast %412 : vector<1x6xf32> to vector<28x6xf32>
      %415 = arith.mulf %413, %414 : vector<28x6xf32>
      %416 = arith.addf %409, %415 : vector<28x6xf32>
      %417 = vector.extract_strided_slice %395 {offsets = [3, 0], sizes = [28, 1], strides = [1, 1]} : vector<32x1xf32> to vector<28x1xf32>
      %c3_228 = arith.constant 3 : index
      %c0_229 = arith.constant 0 : index
      %c0_230 = arith.constant 0 : index
      %418 = vector.load %arg2[%c3_228, %c0_229, %c0_230] : memref<25x1x6xf32, #tpu.memory_space<vmem>>, vector<1x1x6xf32>
      %419 = vector.shape_cast %418 : vector<1x1x6xf32> to vector<1x6xf32>
      %420 = vector.broadcast %417 : vector<28x1xf32> to vector<28x6xf32>
      %421 = vector.broadcast %419 : vector<1x6xf32> to vector<28x6xf32>
      %422 = arith.mulf %420, %421 : vector<28x6xf32>
      %423 = arith.addf %416, %422 : vector<28x6xf32>
      %424 = vector.extract_strided_slice %395 {offsets = [4, 0], sizes = [28, 1], strides = [1, 1]} : vector<32x1xf32> to vector<28x1xf32>
      %c4_231 = arith.constant 4 : index
      %c0_232 = arith.constant 0 : index
      %c0_233 = arith.constant 0 : index
      %425 = vector.load %arg2[%c4_231, %c0_232, %c0_233] : memref<25x1x6xf32, #tpu.memory_space<vmem>>, vector<1x1x6xf32>
      %426 = vector.shape_cast %425 : vector<1x1x6xf32> to vector<1x6xf32>
      %427 = vector.broadcast %424 : vector<28x1xf32> to vector<28x6xf32>
      %428 = vector.broadcast %426 : vector<1x6xf32> to vector<28x6xf32>
      %429 = arith.mulf %427, %428 : vector<28x6xf32>
      %430 = arith.addf %423, %429 : vector<28x6xf32>
      %c1_i32_234 = arith.constant 1 : i32
      %431 = arith.addi %390, %c1_i32_234 : i32
      %c0_235 = arith.constant 0 : index
      %432 = arith.index_cast %431 : i32 to index
      %c0_236 = arith.constant 0 : index
      %c0_237 = arith.constant 0 : index
      %433 = vector.load %arg1[%c0_235, %432, %c0_236, %c0_237] : memref<1x32x32x1xf32, #tpu.memory_space<vmem>>, vector<1x1x32x1xf32>
      %434 = vector.shape_cast %433 : vector<1x1x32x1xf32> to vector<32x1xf32>
      %435 = vector.extract_strided_slice %434 {offsets = [0, 0], sizes = [28, 1], strides = [1, 1]} : vector<32x1xf32> to vector<28x1xf32>
      %c5_238 = arith.constant 5 : index
      %c0_239 = arith.constant 0 : index
      %c0_240 = arith.constant 0 : index
      %436 = vector.load %arg2[%c5_238, %c0_239, %c0_240] : memref<25x1x6xf32, #tpu.memory_space<vmem>>, vector<1x1x6xf32>
      %437 = vector.shape_cast %436 : vector<1x1x6xf32> to vector<1x6xf32>
      %438 = vector.broadcast %435 : vector<28x1xf32> to vector<28x6xf32>
      %439 = vector.broadcast %437 : vector<1x6xf32> to vector<28x6xf32>
      %440 = arith.mulf %438, %439 : vector<28x6xf32>
      %441 = arith.addf %430, %440 : vector<28x6xf32>
      %442 = vector.extract_strided_slice %434 {offsets = [1, 0], sizes = [28, 1], strides = [1, 1]} : vector<32x1xf32> to vector<28x1xf32>
      %c6_241 = arith.constant 6 : index
      %c0_242 = arith.constant 0 : index
      %c0_243 = arith.constant 0 : index
      %443 = vector.load %arg2[%c6_241, %c0_242, %c0_243] : memref<25x1x6xf32, #tpu.memory_space<vmem>>, vector<1x1x6xf32>
      %444 = vector.shape_cast %443 : vector<1x1x6xf32> to vector<1x6xf32>
      %445 = vector.broadcast %442 : vector<28x1xf32> to vector<28x6xf32>
      %446 = vector.broadcast %444 : vector<1x6xf32> to vector<28x6xf32>
      %447 = arith.mulf %445, %446 : vector<28x6xf32>
      %448 = arith.addf %441, %447 : vector<28x6xf32>
      %449 = vector.extract_strided_slice %434 {offsets = [2, 0], sizes = [28, 1], strides = [1, 1]} : vector<32x1xf32> to vector<28x1xf32>
      %c7_244 = arith.constant 7 : index
      %c0_245 = arith.constant 0 : index
      %c0_246 = arith.constant 0 : index
      %450 = vector.load %arg2[%c7_244, %c0_245, %c0_246] : memref<25x1x6xf32, #tpu.memory_space<vmem>>, vector<1x1x6xf32>
      %451 = vector.shape_cast %450 : vector<1x1x6xf32> to vector<1x6xf32>
      %452 = vector.broadcast %449 : vector<28x1xf32> to vector<28x6xf32>
      %453 = vector.broadcast %451 : vector<1x6xf32> to vector<28x6xf32>
      %454 = arith.mulf %452, %453 : vector<28x6xf32>
      %455 = arith.addf %448, %454 : vector<28x6xf32>
      %456 = vector.extract_strided_slice %434 {offsets = [3, 0], sizes = [28, 1], strides = [1, 1]} : vector<32x1xf32> to vector<28x1xf32>
      %c8_247 = arith.constant 8 : index
      %c0_248 = arith.constant 0 : index
      %c0_249 = arith.constant 0 : index
      %457 = vector.load %arg2[%c8_247, %c0_248, %c0_249] : memref<25x1x6xf32, #tpu.memory_space<vmem>>, vector<1x1x6xf32>
      %458 = vector.shape_cast %457 : vector<1x1x6xf32> to vector<1x6xf32>
      %459 = vector.broadcast %456 : vector<28x1xf32> to vector<28x6xf32>
      %460 = vector.broadcast %458 : vector<1x6xf32> to vector<28x6xf32>
      %461 = arith.mulf %459, %460 : vector<28x6xf32>
      %462 = arith.addf %455, %461 : vector<28x6xf32>
      %463 = vector.extract_strided_slice %434 {offsets = [4, 0], sizes = [28, 1], strides = [1, 1]} : vector<32x1xf32> to vector<28x1xf32>
      %c9_250 = arith.constant 9 : index
      %c0_251 = arith.constant 0 : index
      %c0_252 = arith.constant 0 : index
      %464 = vector.load %arg2[%c9_250, %c0_251, %c0_252] : memref<25x1x6xf32, #tpu.memory_space<vmem>>, vector<1x1x6xf32>
      %465 = vector.shape_cast %464 : vector<1x1x6xf32> to vector<1x6xf32>
      %466 = vector.broadcast %463 : vector<28x1xf32> to vector<28x6xf32>
      %467 = vector.broadcast %465 : vector<1x6xf32> to vector<28x6xf32>
      %468 = arith.mulf %466, %467 : vector<28x6xf32>
      %469 = arith.addf %462, %468 : vector<28x6xf32>
      %c2_i32_253 = arith.constant 2 : i32
      %470 = arith.addi %390, %c2_i32_253 : i32
      %c0_254 = arith.constant 0 : index
      %471 = arith.index_cast %470 : i32 to index
      %c0_255 = arith.constant 0 : index
      %c0_256 = arith.constant 0 : index
      %472 = vector.load %arg1[%c0_254, %471, %c0_255, %c0_256] : memref<1x32x32x1xf32, #tpu.memory_space<vmem>>, vector<1x1x32x1xf32>
      %473 = vector.shape_cast %472 : vector<1x1x32x1xf32> to vector<32x1xf32>
      %474 = vector.extract_strided_slice %473 {offsets = [0, 0], sizes = [28, 1], strides = [1, 1]} : vector<32x1xf32> to vector<28x1xf32>
      %c10_257 = arith.constant 10 : index
      %c0_258 = arith.constant 0 : index
      %c0_259 = arith.constant 0 : index
      %475 = vector.load %arg2[%c10_257, %c0_258, %c0_259] : memref<25x1x6xf32, #tpu.memory_space<vmem>>, vector<1x1x6xf32>
      %476 = vector.shape_cast %475 : vector<1x1x6xf32> to vector<1x6xf32>
      %477 = vector.broadcast %474 : vector<28x1xf32> to vector<28x6xf32>
      %478 = vector.broadcast %476 : vector<1x6xf32> to vector<28x6xf32>
      %479 = arith.mulf %477, %478 : vector<28x6xf32>
      %480 = arith.addf %469, %479 : vector<28x6xf32>
      %481 = vector.extract_strided_slice %473 {offsets = [1, 0], sizes = [28, 1], strides = [1, 1]} : vector<32x1xf32> to vector<28x1xf32>
      %c11_260 = arith.constant 11 : index
      %c0_261 = arith.constant 0 : index
      %c0_262 = arith.constant 0 : index
      %482 = vector.load %arg2[%c11_260, %c0_261, %c0_262] : memref<25x1x6xf32, #tpu.memory_space<vmem>>, vector<1x1x6xf32>
      %483 = vector.shape_cast %482 : vector<1x1x6xf32> to vector<1x6xf32>
      %484 = vector.broadcast %481 : vector<28x1xf32> to vector<28x6xf32>
      %485 = vector.broadcast %483 : vector<1x6xf32> to vector<28x6xf32>
      %486 = arith.mulf %484, %485 : vector<28x6xf32>
      %487 = arith.addf %480, %486 : vector<28x6xf32>
      %488 = vector.extract_strided_slice %473 {offsets = [2, 0], sizes = [28, 1], strides = [1, 1]} : vector<32x1xf32> to vector<28x1xf32>
      %c12_263 = arith.constant 12 : index
      %c0_264 = arith.constant 0 : index
      %c0_265 = arith.constant 0 : index
      %489 = vector.load %arg2[%c12_263, %c0_264, %c0_265] : memref<25x1x6xf32, #tpu.memory_space<vmem>>, vector<1x1x6xf32>
      %490 = vector.shape_cast %489 : vector<1x1x6xf32> to vector<1x6xf32>
      %491 = vector.broadcast %488 : vector<28x1xf32> to vector<28x6xf32>
      %492 = vector.broadcast %490 : vector<1x6xf32> to vector<28x6xf32>
      %493 = arith.mulf %491, %492 : vector<28x6xf32>
      %494 = arith.addf %487, %493 : vector<28x6xf32>
      %495 = vector.extract_strided_slice %473 {offsets = [3, 0], sizes = [28, 1], strides = [1, 1]} : vector<32x1xf32> to vector<28x1xf32>
      %c13_266 = arith.constant 13 : index
      %c0_267 = arith.constant 0 : index
      %c0_268 = arith.constant 0 : index
      %496 = vector.load %arg2[%c13_266, %c0_267, %c0_268] : memref<25x1x6xf32, #tpu.memory_space<vmem>>, vector<1x1x6xf32>
      %497 = vector.shape_cast %496 : vector<1x1x6xf32> to vector<1x6xf32>
      %498 = vector.broadcast %495 : vector<28x1xf32> to vector<28x6xf32>
      %499 = vector.broadcast %497 : vector<1x6xf32> to vector<28x6xf32>
      %500 = arith.mulf %498, %499 : vector<28x6xf32>
      %501 = arith.addf %494, %500 : vector<28x6xf32>
      %502 = vector.extract_strided_slice %473 {offsets = [4, 0], sizes = [28, 1], strides = [1, 1]} : vector<32x1xf32> to vector<28x1xf32>
      %c14_269 = arith.constant 14 : index
      %c0_270 = arith.constant 0 : index
      %c0_271 = arith.constant 0 : index
      %503 = vector.load %arg2[%c14_269, %c0_270, %c0_271] : memref<25x1x6xf32, #tpu.memory_space<vmem>>, vector<1x1x6xf32>
      %504 = vector.shape_cast %503 : vector<1x1x6xf32> to vector<1x6xf32>
      %505 = vector.broadcast %502 : vector<28x1xf32> to vector<28x6xf32>
      %506 = vector.broadcast %504 : vector<1x6xf32> to vector<28x6xf32>
      %507 = arith.mulf %505, %506 : vector<28x6xf32>
      %508 = arith.addf %501, %507 : vector<28x6xf32>
      %c3_i32_272 = arith.constant 3 : i32
      %509 = arith.addi %390, %c3_i32_272 : i32
      %c0_273 = arith.constant 0 : index
      %510 = arith.index_cast %509 : i32 to index
      %c0_274 = arith.constant 0 : index
      %c0_275 = arith.constant 0 : index
      %511 = vector.load %arg1[%c0_273, %510, %c0_274, %c0_275] : memref<1x32x32x1xf32, #tpu.memory_space<vmem>>, vector<1x1x32x1xf32>
      %512 = vector.shape_cast %511 : vector<1x1x32x1xf32> to vector<32x1xf32>
      %513 = vector.extract_strided_slice %512 {offsets = [0, 0], sizes = [28, 1], strides = [1, 1]} : vector<32x1xf32> to vector<28x1xf32>
      %c15_276 = arith.constant 15 : index
      %c0_277 = arith.constant 0 : index
      %c0_278 = arith.constant 0 : index
      %514 = vector.load %arg2[%c15_276, %c0_277, %c0_278] : memref<25x1x6xf32, #tpu.memory_space<vmem>>, vector<1x1x6xf32>
      %515 = vector.shape_cast %514 : vector<1x1x6xf32> to vector<1x6xf32>
      %516 = vector.broadcast %513 : vector<28x1xf32> to vector<28x6xf32>
      %517 = vector.broadcast %515 : vector<1x6xf32> to vector<28x6xf32>
      %518 = arith.mulf %516, %517 : vector<28x6xf32>
      %519 = arith.addf %508, %518 : vector<28x6xf32>
      %520 = vector.extract_strided_slice %512 {offsets = [1, 0], sizes = [28, 1], strides = [1, 1]} : vector<32x1xf32> to vector<28x1xf32>
      %c16_279 = arith.constant 16 : index
      %c0_280 = arith.constant 0 : index
      %c0_281 = arith.constant 0 : index
      %521 = vector.load %arg2[%c16_279, %c0_280, %c0_281] : memref<25x1x6xf32, #tpu.memory_space<vmem>>, vector<1x1x6xf32>
      %522 = vector.shape_cast %521 : vector<1x1x6xf32> to vector<1x6xf32>
      %523 = vector.broadcast %520 : vector<28x1xf32> to vector<28x6xf32>
      %524 = vector.broadcast %522 : vector<1x6xf32> to vector<28x6xf32>
      %525 = arith.mulf %523, %524 : vector<28x6xf32>
      %526 = arith.addf %519, %525 : vector<28x6xf32>
      %527 = vector.extract_strided_slice %512 {offsets = [2, 0], sizes = [28, 1], strides = [1, 1]} : vector<32x1xf32> to vector<28x1xf32>
      %c17_282 = arith.constant 17 : index
      %c0_283 = arith.constant 0 : index
      %c0_284 = arith.constant 0 : index
      %528 = vector.load %arg2[%c17_282, %c0_283, %c0_284] : memref<25x1x6xf32, #tpu.memory_space<vmem>>, vector<1x1x6xf32>
      %529 = vector.shape_cast %528 : vector<1x1x6xf32> to vector<1x6xf32>
      %530 = vector.broadcast %527 : vector<28x1xf32> to vector<28x6xf32>
      %531 = vector.broadcast %529 : vector<1x6xf32> to vector<28x6xf32>
      %532 = arith.mulf %530, %531 : vector<28x6xf32>
      %533 = arith.addf %526, %532 : vector<28x6xf32>
      %534 = vector.extract_strided_slice %512 {offsets = [3, 0], sizes = [28, 1], strides = [1, 1]} : vector<32x1xf32> to vector<28x1xf32>
      %c18_285 = arith.constant 18 : index
      %c0_286 = arith.constant 0 : index
      %c0_287 = arith.constant 0 : index
      %535 = vector.load %arg2[%c18_285, %c0_286, %c0_287] : memref<25x1x6xf32, #tpu.memory_space<vmem>>, vector<1x1x6xf32>
      %536 = vector.shape_cast %535 : vector<1x1x6xf32> to vector<1x6xf32>
      %537 = vector.broadcast %534 : vector<28x1xf32> to vector<28x6xf32>
      %538 = vector.broadcast %536 : vector<1x6xf32> to vector<28x6xf32>
      %539 = arith.mulf %537, %538 : vector<28x6xf32>
      %540 = arith.addf %533, %539 : vector<28x6xf32>
      %541 = vector.extract_strided_slice %512 {offsets = [4, 0], sizes = [28, 1], strides = [1, 1]} : vector<32x1xf32> to vector<28x1xf32>
      %c19_288 = arith.constant 19 : index
      %c0_289 = arith.constant 0 : index
      %c0_290 = arith.constant 0 : index
      %542 = vector.load %arg2[%c19_288, %c0_289, %c0_290] : memref<25x1x6xf32, #tpu.memory_space<vmem>>, vector<1x1x6xf32>
      %543 = vector.shape_cast %542 : vector<1x1x6xf32> to vector<1x6xf32>
      %544 = vector.broadcast %541 : vector<28x1xf32> to vector<28x6xf32>
      %545 = vector.broadcast %543 : vector<1x6xf32> to vector<28x6xf32>
      %546 = arith.mulf %544, %545 : vector<28x6xf32>
      %547 = arith.addf %540, %546 : vector<28x6xf32>
      %c4_i32_291 = arith.constant 4 : i32
      %548 = arith.addi %390, %c4_i32_291 : i32
      %c0_292 = arith.constant 0 : index
      %549 = arith.index_cast %548 : i32 to index
      %c0_293 = arith.constant 0 : index
      %c0_294 = arith.constant 0 : index
      %550 = vector.load %arg1[%c0_292, %549, %c0_293, %c0_294] : memref<1x32x32x1xf32, #tpu.memory_space<vmem>>, vector<1x1x32x1xf32>
      %551 = vector.shape_cast %550 : vector<1x1x32x1xf32> to vector<32x1xf32>
      %552 = vector.extract_strided_slice %551 {offsets = [0, 0], sizes = [28, 1], strides = [1, 1]} : vector<32x1xf32> to vector<28x1xf32>
      %c20_295 = arith.constant 20 : index
      %c0_296 = arith.constant 0 : index
      %c0_297 = arith.constant 0 : index
      %553 = vector.load %arg2[%c20_295, %c0_296, %c0_297] : memref<25x1x6xf32, #tpu.memory_space<vmem>>, vector<1x1x6xf32>
      %554 = vector.shape_cast %553 : vector<1x1x6xf32> to vector<1x6xf32>
      %555 = vector.broadcast %552 : vector<28x1xf32> to vector<28x6xf32>
      %556 = vector.broadcast %554 : vector<1x6xf32> to vector<28x6xf32>
      %557 = arith.mulf %555, %556 : vector<28x6xf32>
      %558 = arith.addf %547, %557 : vector<28x6xf32>
      %559 = vector.extract_strided_slice %551 {offsets = [1, 0], sizes = [28, 1], strides = [1, 1]} : vector<32x1xf32> to vector<28x1xf32>
      %c21_298 = arith.constant 21 : index
      %c0_299 = arith.constant 0 : index
      %c0_300 = arith.constant 0 : index
      %560 = vector.load %arg2[%c21_298, %c0_299, %c0_300] : memref<25x1x6xf32, #tpu.memory_space<vmem>>, vector<1x1x6xf32>
      %561 = vector.shape_cast %560 : vector<1x1x6xf32> to vector<1x6xf32>
      %562 = vector.broadcast %559 : vector<28x1xf32> to vector<28x6xf32>
      %563 = vector.broadcast %561 : vector<1x6xf32> to vector<28x6xf32>
      %564 = arith.mulf %562, %563 : vector<28x6xf32>
      %565 = arith.addf %558, %564 : vector<28x6xf32>
      %566 = vector.extract_strided_slice %551 {offsets = [2, 0], sizes = [28, 1], strides = [1, 1]} : vector<32x1xf32> to vector<28x1xf32>
      %c22_301 = arith.constant 22 : index
      %c0_302 = arith.constant 0 : index
      %c0_303 = arith.constant 0 : index
      %567 = vector.load %arg2[%c22_301, %c0_302, %c0_303] : memref<25x1x6xf32, #tpu.memory_space<vmem>>, vector<1x1x6xf32>
      %568 = vector.shape_cast %567 : vector<1x1x6xf32> to vector<1x6xf32>
      %569 = vector.broadcast %566 : vector<28x1xf32> to vector<28x6xf32>
      %570 = vector.broadcast %568 : vector<1x6xf32> to vector<28x6xf32>
      %571 = arith.mulf %569, %570 : vector<28x6xf32>
      %572 = arith.addf %565, %571 : vector<28x6xf32>
      %573 = vector.extract_strided_slice %551 {offsets = [3, 0], sizes = [28, 1], strides = [1, 1]} : vector<32x1xf32> to vector<28x1xf32>
      %c23_304 = arith.constant 23 : index
      %c0_305 = arith.constant 0 : index
      %c0_306 = arith.constant 0 : index
      %574 = vector.load %arg2[%c23_304, %c0_305, %c0_306] : memref<25x1x6xf32, #tpu.memory_space<vmem>>, vector<1x1x6xf32>
      %575 = vector.shape_cast %574 : vector<1x1x6xf32> to vector<1x6xf32>
      %576 = vector.broadcast %573 : vector<28x1xf32> to vector<28x6xf32>
      %577 = vector.broadcast %575 : vector<1x6xf32> to vector<28x6xf32>
      %578 = arith.mulf %576, %577 : vector<28x6xf32>
      %579 = arith.addf %572, %578 : vector<28x6xf32>
      %580 = vector.extract_strided_slice %551 {offsets = [4, 0], sizes = [28, 1], strides = [1, 1]} : vector<32x1xf32> to vector<28x1xf32>
      %c24_307 = arith.constant 24 : index
      %c0_308 = arith.constant 0 : index
      %c0_309 = arith.constant 0 : index
      %581 = vector.load %arg2[%c24_307, %c0_308, %c0_309] : memref<25x1x6xf32, #tpu.memory_space<vmem>>, vector<1x1x6xf32>
      %582 = vector.shape_cast %581 : vector<1x1x6xf32> to vector<1x6xf32>
      %583 = vector.broadcast %580 : vector<28x1xf32> to vector<28x6xf32>
      %584 = vector.broadcast %582 : vector<1x6xf32> to vector<28x6xf32>
      %585 = arith.mulf %583, %584 : vector<28x6xf32>
      %586 = arith.addf %579, %585 : vector<28x6xf32>
      %c0_310 = arith.constant 0 : index
      %c0_311 = arith.constant 0 : index
      %587 = vector.load %arg3[%c0_310, %c0_311] : memref<1x6xf32, #tpu.memory_space<vmem>>, vector<1x6xf32>
      %588 = vector.broadcast %587 : vector<1x6xf32> to vector<28x6xf32>
      %589 = arith.addf %586, %588 : vector<28x6xf32>
      %590 = math.tanh %589 : vector<28x6xf32>
      %591 = arith.addf %389, %590 : vector<28x6xf32>
      %cst_312 = arith.constant dense<0.000000e+00> : vector<14x6xf32>
      %592 = tpu.matmul %12, %591, %cst_312 {dimension_numbers = #tpu.dot_dimension_numbers<[1], [0], [0], [1], [0, 0, 1, 1], [], []>} : vector<14x28xf32>, vector<28x6xf32>, vector<14x6xf32> -> vector<14x6xf32>
      %cst_313 = arith.constant 2.500000e-01 : f32
      %593 = vector.broadcast %cst_313 : f32 to vector<14x6xf32>
      %594 = arith.mulf %593, %592 : vector<14x6xf32>
      %595 = arith.index_cast %arg15 : i32 to index
      %c0_314 = arith.constant 0 : index
      %c0_315 = arith.constant 0 : index
      %596 = vector.load %arg13[%595, %c0_314, %c0_315] : memref<14x14x6xf32, #tpu.memory_space<vmem>>, vector<1x14x6xf32>
      %597 = vector.shape_cast %596 : vector<1x14x6xf32> to vector<14x6xf32>
      %598 = vector.shape_cast %594 : vector<14x6xf32> to vector<1x14x6xf32>
      tpu.vector_store %arg13[%595, %c0_314, %c0_315], %598 {strides = array<i32>} : memref<14x14x6xf32, #tpu.memory_space<vmem>>, vector<1x14x6xf32>,
    }
    %c14_i32_2 = arith.constant 14 : i32
    %14 = tpu.iota {dimensions = array<i32: 0>} : vector<5x10xi32>
    %15 = tpu.iota {dimensions = array<i32: 1>} : vector<5x10xi32>
    %c2_i32_3 = arith.constant 2 : i32
    %16 = vector.broadcast %c2_i32_3 : i32 to vector<5x10xi32>
    %17 = arith.muli %16, %14 : vector<5x10xi32>
    %18 = arith.cmpi eq, %15, %17 : vector<5x10xi32>
    %c2_i32_4 = arith.constant 2 : i32
    %19 = vector.broadcast %c2_i32_4 : i32 to vector<5x10xi32>
    %20 = arith.muli %19, %14 : vector<5x10xi32>
    %c1_i32_5 = arith.constant 1 : i32
    %21 = vector.broadcast %c1_i32_5 : i32 to vector<5x10xi32>
    %22 = arith.addi %20, %21 : vector<5x10xi32>
    %23 = arith.cmpi eq, %15, %22 : vector<5x10xi32>
    %24 = arith.ori %18, %23 : vector<5x10xi1>
    %25 = arith.extui %24 : vector<5x10xi1> to vector<5x10xi32>
    %26 = arith.sitofp %25 : vector<5x10xi32> to vector<5x10xf32>
    %c0_i32_6 = arith.constant 0 : i32
    %c5_i32 = arith.constant 5 : i32
    %27 = arith.addi %c0_i32_6, %c5_i32 : i32
    %c1_i32_7 = arith.constant 1 : i32
    scf.for %arg15 = %c0_i32_6 to %27 step %c1_i32_7  : i32 {
      %c2_i32_116 = arith.constant 2 : i32
      %189 = arith.muli %c2_i32_116, %arg15 : i32
      %cst_117 = arith.constant 0.000000e+00 : f32
      %190 = vector.broadcast %cst_117 : f32 to vector<10x16xf32>
      %c0_i32_118 = arith.constant 0 : i32
      %191 = arith.addi %189, %c0_i32_118 : i32
      %192 = arith.index_cast %191 : i32 to index
      %c0_119 = arith.constant 0 : index
      %c0_120 = arith.constant 0 : index
      %193 = vector.load %arg13[%192, %c0_119, %c0_120] : memref<14x14x6xf32, #tpu.memory_space<vmem>>, vector<1x14x6xf32>
      %194 = vector.shape_cast %193 : vector<1x14x6xf32> to vector<14x6xf32>
      %195 = vector.extract_strided_slice %194 {offsets = [0, 0], sizes = [10, 6], strides = [1, 1]} : vector<14x6xf32> to vector<10x6xf32>
      %c0_121 = arith.constant 0 : index
      %c0_122 = arith.constant 0 : index
      %c0_123 = arith.constant 0 : index
      %196 = vector.load %arg4[%c0_121, %c0_122, %c0_123] : memref<25x6x16xf32, #tpu.memory_space<vmem>>, vector<1x6x16xf32>
      %197 = vector.shape_cast %196 : vector<1x6x16xf32> to vector<6x16xf32>
      %cst_124 = arith.constant dense<0.000000e+00> : vector<10x16xf32>
      %198 = tpu.matmul %195, %197, %cst_124 {dimension_numbers = #tpu.dot_dimension_numbers<[1], [0], [0], [1], [0, 0, 1, 1], [], []>} : vector<10x6xf32>, vector<6x16xf32>, vector<10x16xf32> -> vector<10x16xf32>
      %199 = arith.addf %190, %198 : vector<10x16xf32>
      %200 = vector.extract_strided_slice %194 {offsets = [1, 0], sizes = [10, 6], strides = [1, 1]} : vector<14x6xf32> to vector<10x6xf32>
      %c1_125 = arith.constant 1 : index
      %c0_126 = arith.constant 0 : index
      %c0_127 = arith.constant 0 : index
      %201 = vector.load %arg4[%c1_125, %c0_126, %c0_127] : memref<25x6x16xf32, #tpu.memory_space<vmem>>, vector<1x6x16xf32>
      %202 = vector.shape_cast %201 : vector<1x6x16xf32> to vector<6x16xf32>
      %cst_128 = arith.constant dense<0.000000e+00> : vector<10x16xf32>
      %203 = tpu.matmul %200, %202, %cst_128 {dimension_numbers = #tpu.dot_dimension_numbers<[1], [0], [0], [1], [0, 0, 1, 1], [], []>} : vector<10x6xf32>, vector<6x16xf32>, vector<10x16xf32> -> vector<10x16xf32>
      %204 = arith.addf %199, %203 : vector<10x16xf32>
      %205 = vector.extract_strided_slice %194 {offsets = [2, 0], sizes = [10, 6], strides = [1, 1]} : vector<14x6xf32> to vector<10x6xf32>
      %c2_129 = arith.constant 2 : index
      %c0_130 = arith.constant 0 : index
      %c0_131 = arith.constant 0 : index
      %206 = vector.load %arg4[%c2_129, %c0_130, %c0_131] : memref<25x6x16xf32, #tpu.memory_space<vmem>>, vector<1x6x16xf32>
      %207 = vector.shape_cast %206 : vector<1x6x16xf32> to vector<6x16xf32>
      %cst_132 = arith.constant dense<0.000000e+00> : vector<10x16xf32>
      %208 = tpu.matmul %205, %207, %cst_132 {dimension_numbers = #tpu.dot_dimension_numbers<[1], [0], [0], [1], [0, 0, 1, 1], [], []>} : vector<10x6xf32>, vector<6x16xf32>, vector<10x16xf32> -> vector<10x16xf32>
      %209 = arith.addf %204, %208 : vector<10x16xf32>
      %210 = vector.extract_strided_slice %194 {offsets = [3, 0], sizes = [10, 6], strides = [1, 1]} : vector<14x6xf32> to vector<10x6xf32>
      %c3_133 = arith.constant 3 : index
      %c0_134 = arith.constant 0 : index
      %c0_135 = arith.constant 0 : index
      %211 = vector.load %arg4[%c3_133, %c0_134, %c0_135] : memref<25x6x16xf32, #tpu.memory_space<vmem>>, vector<1x6x16xf32>
      %212 = vector.shape_cast %211 : vector<1x6x16xf32> to vector<6x16xf32>
      %cst_136 = arith.constant dense<0.000000e+00> : vector<10x16xf32>
      %213 = tpu.matmul %210, %212, %cst_136 {dimension_numbers = #tpu.dot_dimension_numbers<[1], [0], [0], [1], [0, 0, 1, 1], [], []>} : vector<10x6xf32>, vector<6x16xf32>, vector<10x16xf32> -> vector<10x16xf32>
      %214 = arith.addf %209, %213 : vector<10x16xf32>
      %215 = vector.extract_strided_slice %194 {offsets = [4, 0], sizes = [10, 6], strides = [1, 1]} : vector<14x6xf32> to vector<10x6xf32>
      %c4_137 = arith.constant 4 : index
      %c0_138 = arith.constant 0 : index
      %c0_139 = arith.constant 0 : index
      %216 = vector.load %arg4[%c4_137, %c0_138, %c0_139] : memref<25x6x16xf32, #tpu.memory_space<vmem>>, vector<1x6x16xf32>
      %217 = vector.shape_cast %216 : vector<1x6x16xf32> to vector<6x16xf32>
      %cst_140 = arith.constant dense<0.000000e+00> : vector<10x16xf32>
      %218 = tpu.matmul %215, %217, %cst_140 {dimension_numbers = #tpu.dot_dimension_numbers<[1], [0], [0], [1], [0, 0, 1, 1], [], []>} : vector<10x6xf32>, vector<6x16xf32>, vector<10x16xf32> -> vector<10x16xf32>
      %219 = arith.addf %214, %218 : vector<10x16xf32>
      %c1_i32_141 = arith.constant 1 : i32
      %220 = arith.addi %189, %c1_i32_141 : i32
      %221 = arith.index_cast %220 : i32 to index
      %c0_142 = arith.constant 0 : index
      %c0_143 = arith.constant 0 : index
      %222 = vector.load %arg13[%221, %c0_142, %c0_143] : memref<14x14x6xf32, #tpu.memory_space<vmem>>, vector<1x14x6xf32>
      %223 = vector.shape_cast %222 : vector<1x14x6xf32> to vector<14x6xf32>
      %224 = vector.extract_strided_slice %223 {offsets = [0, 0], sizes = [10, 6], strides = [1, 1]} : vector<14x6xf32> to vector<10x6xf32>
      %c5_144 = arith.constant 5 : index
      %c0_145 = arith.constant 0 : index
      %c0_146 = arith.constant 0 : index
      %225 = vector.load %arg4[%c5_144, %c0_145, %c0_146] : memref<25x6x16xf32, #tpu.memory_space<vmem>>, vector<1x6x16xf32>
      %226 = vector.shape_cast %225 : vector<1x6x16xf32> to vector<6x16xf32>
      %cst_147 = arith.constant dense<0.000000e+00> : vector<10x16xf32>
      %227 = tpu.matmul %224, %226, %cst_147 {dimension_numbers = #tpu.dot_dimension_numbers<[1], [0], [0], [1], [0, 0, 1, 1], [], []>} : vector<10x6xf32>, vector<6x16xf32>, vector<10x16xf32> -> vector<10x16xf32>
      %228 = arith.addf %219, %227 : vector<10x16xf32>
      %229 = vector.extract_strided_slice %223 {offsets = [1, 0], sizes = [10, 6], strides = [1, 1]} : vector<14x6xf32> to vector<10x6xf32>
      %c6_148 = arith.constant 6 : index
      %c0_149 = arith.constant 0 : index
      %c0_150 = arith.constant 0 : index
      %230 = vector.load %arg4[%c6_148, %c0_149, %c0_150] : memref<25x6x16xf32, #tpu.memory_space<vmem>>, vector<1x6x16xf32>
      %231 = vector.shape_cast %230 : vector<1x6x16xf32> to vector<6x16xf32>
      %cst_151 = arith.constant dense<0.000000e+00> : vector<10x16xf32>
      %232 = tpu.matmul %229, %231, %cst_151 {dimension_numbers = #tpu.dot_dimension_numbers<[1], [0], [0], [1], [0, 0, 1, 1], [], []>} : vector<10x6xf32>, vector<6x16xf32>, vector<10x16xf32> -> vector<10x16xf32>
      %233 = arith.addf %228, %232 : vector<10x16xf32>
      %234 = vector.extract_strided_slice %223 {offsets = [2, 0], sizes = [10, 6], strides = [1, 1]} : vector<14x6xf32> to vector<10x6xf32>
      %c7_152 = arith.constant 7 : index
      %c0_153 = arith.constant 0 : index
      %c0_154 = arith.constant 0 : index
      %235 = vector.load %arg4[%c7_152, %c0_153, %c0_154] : memref<25x6x16xf32, #tpu.memory_space<vmem>>, vector<1x6x16xf32>
      %236 = vector.shape_cast %235 : vector<1x6x16xf32> to vector<6x16xf32>
      %cst_155 = arith.constant dense<0.000000e+00> : vector<10x16xf32>
      %237 = tpu.matmul %234, %236, %cst_155 {dimension_numbers = #tpu.dot_dimension_numbers<[1], [0], [0], [1], [0, 0, 1, 1], [], []>} : vector<10x6xf32>, vector<6x16xf32>, vector<10x16xf32> -> vector<10x16xf32>
      %238 = arith.addf %233, %237 : vector<10x16xf32>
      %239 = vector.extract_strided_slice %223 {offsets = [3, 0], sizes = [10, 6], strides = [1, 1]} : vector<14x6xf32> to vector<10x6xf32>
      %c8_156 = arith.constant 8 : index
      %c0_157 = arith.constant 0 : index
      %c0_158 = arith.constant 0 : index
      %240 = vector.load %arg4[%c8_156, %c0_157, %c0_158] : memref<25x6x16xf32, #tpu.memory_space<vmem>>, vector<1x6x16xf32>
      %241 = vector.shape_cast %240 : vector<1x6x16xf32> to vector<6x16xf32>
      %cst_159 = arith.constant dense<0.000000e+00> : vector<10x16xf32>
      %242 = tpu.matmul %239, %241, %cst_159 {dimension_numbers = #tpu.dot_dimension_numbers<[1], [0], [0], [1], [0, 0, 1, 1], [], []>} : vector<10x6xf32>, vector<6x16xf32>, vector<10x16xf32> -> vector<10x16xf32>
      %243 = arith.addf %238, %242 : vector<10x16xf32>
      %244 = vector.extract_strided_slice %223 {offsets = [4, 0], sizes = [10, 6], strides = [1, 1]} : vector<14x6xf32> to vector<10x6xf32>
      %c9_160 = arith.constant 9 : index
      %c0_161 = arith.constant 0 : index
      %c0_162 = arith.constant 0 : index
      %245 = vector.load %arg4[%c9_160, %c0_161, %c0_162] : memref<25x6x16xf32, #tpu.memory_space<vmem>>, vector<1x6x16xf32>
      %246 = vector.shape_cast %245 : vector<1x6x16xf32> to vector<6x16xf32>
      %cst_163 = arith.constant dense<0.000000e+00> : vector<10x16xf32>
      %247 = tpu.matmul %244, %246, %cst_163 {dimension_numbers = #tpu.dot_dimension_numbers<[1], [0], [0], [1], [0, 0, 1, 1], [], []>} : vector<10x6xf32>, vector<6x16xf32>, vector<10x16xf32> -> vector<10x16xf32>
      %248 = arith.addf %243, %247 : vector<10x16xf32>
      %c2_i32_164 = arith.constant 2 : i32
      %249 = arith.addi %189, %c2_i32_164 : i32
      %250 = arith.index_cast %249 : i32 to index
      %c0_165 = arith.constant 0 : index
      %c0_166 = arith.constant 0 : index
      %251 = vector.load %arg13[%250, %c0_165, %c0_166] : memref<14x14x6xf32, #tpu.memory_space<vmem>>, vector<1x14x6xf32>
      %252 = vector.shape_cast %251 : vector<1x14x6xf32> to vector<14x6xf32>
      %253 = vector.extract_strided_slice %252 {offsets = [0, 0], sizes = [10, 6], strides = [1, 1]} : vector<14x6xf32> to vector<10x6xf32>
      %c10_167 = arith.constant 10 : index
      %c0_168 = arith.constant 0 : index
      %c0_169 = arith.constant 0 : index
      %254 = vector.load %arg4[%c10_167, %c0_168, %c0_169] : memref<25x6x16xf32, #tpu.memory_space<vmem>>, vector<1x6x16xf32>
      %255 = vector.shape_cast %254 : vector<1x6x16xf32> to vector<6x16xf32>
      %cst_170 = arith.constant dense<0.000000e+00> : vector<10x16xf32>
      %256 = tpu.matmul %253, %255, %cst_170 {dimension_numbers = #tpu.dot_dimension_numbers<[1], [0], [0], [1], [0, 0, 1, 1], [], []>} : vector<10x6xf32>, vector<6x16xf32>, vector<10x16xf32> -> vector<10x16xf32>
      %257 = arith.addf %248, %256 : vector<10x16xf32>
      %258 = vector.extract_strided_slice %252 {offsets = [1, 0], sizes = [10, 6], strides = [1, 1]} : vector<14x6xf32> to vector<10x6xf32>
      %c11_171 = arith.constant 11 : index
      %c0_172 = arith.constant 0 : index
      %c0_173 = arith.constant 0 : index
      %259 = vector.load %arg4[%c11_171, %c0_172, %c0_173] : memref<25x6x16xf32, #tpu.memory_space<vmem>>, vector<1x6x16xf32>
      %260 = vector.shape_cast %259 : vector<1x6x16xf32> to vector<6x16xf32>
      %cst_174 = arith.constant dense<0.000000e+00> : vector<10x16xf32>
      %261 = tpu.matmul %258, %260, %cst_174 {dimension_numbers = #tpu.dot_dimension_numbers<[1], [0], [0], [1], [0, 0, 1, 1], [], []>} : vector<10x6xf32>, vector<6x16xf32>, vector<10x16xf32> -> vector<10x16xf32>
      %262 = arith.addf %257, %261 : vector<10x16xf32>
      %263 = vector.extract_strided_slice %252 {offsets = [2, 0], sizes = [10, 6], strides = [1, 1]} : vector<14x6xf32> to vector<10x6xf32>
      %c12_175 = arith.constant 12 : index
      %c0_176 = arith.constant 0 : index
      %c0_177 = arith.constant 0 : index
      %264 = vector.load %arg4[%c12_175, %c0_176, %c0_177] : memref<25x6x16xf32, #tpu.memory_space<vmem>>, vector<1x6x16xf32>
      %265 = vector.shape_cast %264 : vector<1x6x16xf32> to vector<6x16xf32>
      %cst_178 = arith.constant dense<0.000000e+00> : vector<10x16xf32>
      %266 = tpu.matmul %263, %265, %cst_178 {dimension_numbers = #tpu.dot_dimension_numbers<[1], [0], [0], [1], [0, 0, 1, 1], [], []>} : vector<10x6xf32>, vector<6x16xf32>, vector<10x16xf32> -> vector<10x16xf32>
      %267 = arith.addf %262, %266 : vector<10x16xf32>
      %268 = vector.extract_strided_slice %252 {offsets = [3, 0], sizes = [10, 6], strides = [1, 1]} : vector<14x6xf32> to vector<10x6xf32>
      %c13_179 = arith.constant 13 : index
      %c0_180 = arith.constant 0 : index
      %c0_181 = arith.constant 0 : index
      %269 = vector.load %arg4[%c13_179, %c0_180, %c0_181] : memref<25x6x16xf32, #tpu.memory_space<vmem>>, vector<1x6x16xf32>
      %270 = vector.shape_cast %269 : vector<1x6x16xf32> to vector<6x16xf32>
      %cst_182 = arith.constant dense<0.000000e+00> : vector<10x16xf32>
      %271 = tpu.matmul %268, %270, %cst_182 {dimension_numbers = #tpu.dot_dimension_numbers<[1], [0], [0], [1], [0, 0, 1, 1], [], []>} : vector<10x6xf32>, vector<6x16xf32>, vector<10x16xf32> -> vector<10x16xf32>
      %272 = arith.addf %267, %271 : vector<10x16xf32>
      %273 = vector.extract_strided_slice %252 {offsets = [4, 0], sizes = [10, 6], strides = [1, 1]} : vector<14x6xf32> to vector<10x6xf32>
      %c14_183 = arith.constant 14 : index
      %c0_184 = arith.constant 0 : index
      %c0_185 = arith.constant 0 : index
      %274 = vector.load %arg4[%c14_183, %c0_184, %c0_185] : memref<25x6x16xf32, #tpu.memory_space<vmem>>, vector<1x6x16xf32>
      %275 = vector.shape_cast %274 : vector<1x6x16xf32> to vector<6x16xf32>
      %cst_186 = arith.constant dense<0.000000e+00> : vector<10x16xf32>
      %276 = tpu.matmul %273, %275, %cst_186 {dimension_numbers = #tpu.dot_dimension_numbers<[1], [0], [0], [1], [0, 0, 1, 1], [], []>} : vector<10x6xf32>, vector<6x16xf32>, vector<10x16xf32> -> vector<10x16xf32>
      %277 = arith.addf %272, %276 : vector<10x16xf32>
      %c3_i32 = arith.constant 3 : i32
      %278 = arith.addi %189, %c3_i32 : i32
      %279 = arith.index_cast %278 : i32 to index
      %c0_187 = arith.constant 0 : index
      %c0_188 = arith.constant 0 : index
      %280 = vector.load %arg13[%279, %c0_187, %c0_188] : memref<14x14x6xf32, #tpu.memory_space<vmem>>, vector<1x14x6xf32>
      %281 = vector.shape_cast %280 : vector<1x14x6xf32> to vector<14x6xf32>
      %282 = vector.extract_strided_slice %281 {offsets = [0, 0], sizes = [10, 6], strides = [1, 1]} : vector<14x6xf32> to vector<10x6xf32>
      %c15_189 = arith.constant 15 : index
      %c0_190 = arith.constant 0 : index
      %c0_191 = arith.constant 0 : index
      %283 = vector.load %arg4[%c15_189, %c0_190, %c0_191] : memref<25x6x16xf32, #tpu.memory_space<vmem>>, vector<1x6x16xf32>
      %284 = vector.shape_cast %283 : vector<1x6x16xf32> to vector<6x16xf32>
      %cst_192 = arith.constant dense<0.000000e+00> : vector<10x16xf32>
      %285 = tpu.matmul %282, %284, %cst_192 {dimension_numbers = #tpu.dot_dimension_numbers<[1], [0], [0], [1], [0, 0, 1, 1], [], []>} : vector<10x6xf32>, vector<6x16xf32>, vector<10x16xf32> -> vector<10x16xf32>
      %286 = arith.addf %277, %285 : vector<10x16xf32>
      %287 = vector.extract_strided_slice %281 {offsets = [1, 0], sizes = [10, 6], strides = [1, 1]} : vector<14x6xf32> to vector<10x6xf32>
      %c16_193 = arith.constant 16 : index
      %c0_194 = arith.constant 0 : index
      %c0_195 = arith.constant 0 : index
      %288 = vector.load %arg4[%c16_193, %c0_194, %c0_195] : memref<25x6x16xf32, #tpu.memory_space<vmem>>, vector<1x6x16xf32>
      %289 = vector.shape_cast %288 : vector<1x6x16xf32> to vector<6x16xf32>
      %cst_196 = arith.constant dense<0.000000e+00> : vector<10x16xf32>
      %290 = tpu.matmul %287, %289, %cst_196 {dimension_numbers = #tpu.dot_dimension_numbers<[1], [0], [0], [1], [0, 0, 1, 1], [], []>} : vector<10x6xf32>, vector<6x16xf32>, vector<10x16xf32> -> vector<10x16xf32>
      %291 = arith.addf %286, %290 : vector<10x16xf32>
      %292 = vector.extract_strided_slice %281 {offsets = [2, 0], sizes = [10, 6], strides = [1, 1]} : vector<14x6xf32> to vector<10x6xf32>
      %c17_197 = arith.constant 17 : index
      %c0_198 = arith.constant 0 : index
      %c0_199 = arith.constant 0 : index
      %293 = vector.load %arg4[%c17_197, %c0_198, %c0_199] : memref<25x6x16xf32, #tpu.memory_space<vmem>>, vector<1x6x16xf32>
      %294 = vector.shape_cast %293 : vector<1x6x16xf32> to vector<6x16xf32>
      %cst_200 = arith.constant dense<0.000000e+00> : vector<10x16xf32>
      %295 = tpu.matmul %292, %294, %cst_200 {dimension_numbers = #tpu.dot_dimension_numbers<[1], [0], [0], [1], [0, 0, 1, 1], [], []>} : vector<10x6xf32>, vector<6x16xf32>, vector<10x16xf32> -> vector<10x16xf32>
      %296 = arith.addf %291, %295 : vector<10x16xf32>
      %297 = vector.extract_strided_slice %281 {offsets = [3, 0], sizes = [10, 6], strides = [1, 1]} : vector<14x6xf32> to vector<10x6xf32>
      %c18_201 = arith.constant 18 : index
      %c0_202 = arith.constant 0 : index
      %c0_203 = arith.constant 0 : index
      %298 = vector.load %arg4[%c18_201, %c0_202, %c0_203] : memref<25x6x16xf32, #tpu.memory_space<vmem>>, vector<1x6x16xf32>
      %299 = vector.shape_cast %298 : vector<1x6x16xf32> to vector<6x16xf32>
      %cst_204 = arith.constant dense<0.000000e+00> : vector<10x16xf32>
      %300 = tpu.matmul %297, %299, %cst_204 {dimension_numbers = #tpu.dot_dimension_numbers<[1], [0], [0], [1], [0, 0, 1, 1], [], []>} : vector<10x6xf32>, vector<6x16xf32>, vector<10x16xf32> -> vector<10x16xf32>
      %301 = arith.addf %296, %300 : vector<10x16xf32>
      %302 = vector.extract_strided_slice %281 {offsets = [4, 0], sizes = [10, 6], strides = [1, 1]} : vector<14x6xf32> to vector<10x6xf32>
      %c19_205 = arith.constant 19 : index
      %c0_206 = arith.constant 0 : index
      %c0_207 = arith.constant 0 : index
      %303 = vector.load %arg4[%c19_205, %c0_206, %c0_207] : memref<25x6x16xf32, #tpu.memory_space<vmem>>, vector<1x6x16xf32>
      %304 = vector.shape_cast %303 : vector<1x6x16xf32> to vector<6x16xf32>
      %cst_208 = arith.constant dense<0.000000e+00> : vector<10x16xf32>
      %305 = tpu.matmul %302, %304, %cst_208 {dimension_numbers = #tpu.dot_dimension_numbers<[1], [0], [0], [1], [0, 0, 1, 1], [], []>} : vector<10x6xf32>, vector<6x16xf32>, vector<10x16xf32> -> vector<10x16xf32>
      %306 = arith.addf %301, %305 : vector<10x16xf32>
      %c4_i32 = arith.constant 4 : i32
      %307 = arith.addi %189, %c4_i32 : i32
      %308 = arith.index_cast %307 : i32 to index
      %c0_209 = arith.constant 0 : index
      %c0_210 = arith.constant 0 : index
      %309 = vector.load %arg13[%308, %c0_209, %c0_210] : memref<14x14x6xf32, #tpu.memory_space<vmem>>, vector<1x14x6xf32>
      %310 = vector.shape_cast %309 : vector<1x14x6xf32> to vector<14x6xf32>
      %311 = vector.extract_strided_slice %310 {offsets = [0, 0], sizes = [10, 6], strides = [1, 1]} : vector<14x6xf32> to vector<10x6xf32>
      %c20_211 = arith.constant 20 : index
      %c0_212 = arith.constant 0 : index
      %c0_213 = arith.constant 0 : index
      %312 = vector.load %arg4[%c20_211, %c0_212, %c0_213] : memref<25x6x16xf32, #tpu.memory_space<vmem>>, vector<1x6x16xf32>
      %313 = vector.shape_cast %312 : vector<1x6x16xf32> to vector<6x16xf32>
      %cst_214 = arith.constant dense<0.000000e+00> : vector<10x16xf32>
      %314 = tpu.matmul %311, %313, %cst_214 {dimension_numbers = #tpu.dot_dimension_numbers<[1], [0], [0], [1], [0, 0, 1, 1], [], []>} : vector<10x6xf32>, vector<6x16xf32>, vector<10x16xf32> -> vector<10x16xf32>
      %315 = arith.addf %306, %314 : vector<10x16xf32>
      %316 = vector.extract_strided_slice %310 {offsets = [1, 0], sizes = [10, 6], strides = [1, 1]} : vector<14x6xf32> to vector<10x6xf32>
      %c21_215 = arith.constant 21 : index
      %c0_216 = arith.constant 0 : index
      %c0_217 = arith.constant 0 : index
      %317 = vector.load %arg4[%c21_215, %c0_216, %c0_217] : memref<25x6x16xf32, #tpu.memory_space<vmem>>, vector<1x6x16xf32>
      %318 = vector.shape_cast %317 : vector<1x6x16xf32> to vector<6x16xf32>
      %cst_218 = arith.constant dense<0.000000e+00> : vector<10x16xf32>
      %319 = tpu.matmul %316, %318, %cst_218 {dimension_numbers = #tpu.dot_dimension_numbers<[1], [0], [0], [1], [0, 0, 1, 1], [], []>} : vector<10x6xf32>, vector<6x16xf32>, vector<10x16xf32> -> vector<10x16xf32>
      %320 = arith.addf %315, %319 : vector<10x16xf32>
      %321 = vector.extract_strided_slice %310 {offsets = [2, 0], sizes = [10, 6], strides = [1, 1]} : vector<14x6xf32> to vector<10x6xf32>
      %c22_219 = arith.constant 22 : index
      %c0_220 = arith.constant 0 : index
      %c0_221 = arith.constant 0 : index
      %322 = vector.load %arg4[%c22_219, %c0_220, %c0_221] : memref<25x6x16xf32, #tpu.memory_space<vmem>>, vector<1x6x16xf32>
      %323 = vector.shape_cast %322 : vector<1x6x16xf32> to vector<6x16xf32>
      %cst_222 = arith.constant dense<0.000000e+00> : vector<10x16xf32>
      %324 = tpu.matmul %321, %323, %cst_222 {dimension_numbers = #tpu.dot_dimension_numbers<[1], [0], [0], [1], [0, 0, 1, 1], [], []>} : vector<10x6xf32>, vector<6x16xf32>, vector<10x16xf32> -> vector<10x16xf32>
      %325 = arith.addf %320, %324 : vector<10x16xf32>
      %326 = vector.extract_strided_slice %310 {offsets = [3, 0], sizes = [10, 6], strides = [1, 1]} : vector<14x6xf32> to vector<10x6xf32>
      %c23_223 = arith.constant 23 : index
      %c0_224 = arith.constant 0 : index
      %c0_225 = arith.constant 0 : index
      %327 = vector.load %arg4[%c23_223, %c0_224, %c0_225] : memref<25x6x16xf32, #tpu.memory_space<vmem>>, vector<1x6x16xf32>
      %328 = vector.shape_cast %327 : vector<1x6x16xf32> to vector<6x16xf32>
      %cst_226 = arith.constant dense<0.000000e+00> : vector<10x16xf32>
      %329 = tpu.matmul %326, %328, %cst_226 {dimension_numbers = #tpu.dot_dimension_numbers<[1], [0], [0], [1], [0, 0, 1, 1], [], []>} : vector<10x6xf32>, vector<6x16xf32>, vector<10x16xf32> -> vector<10x16xf32>
      %330 = arith.addf %325, %329 : vector<10x16xf32>
      %331 = vector.extract_strided_slice %310 {offsets = [4, 0], sizes = [10, 6], strides = [1, 1]} : vector<14x6xf32> to vector<10x6xf32>
      %c24_227 = arith.constant 24 : index
      %c0_228 = arith.constant 0 : index
      %c0_229 = arith.constant 0 : index
      %332 = vector.load %arg4[%c24_227, %c0_228, %c0_229] : memref<25x6x16xf32, #tpu.memory_space<vmem>>, vector<1x6x16xf32>
      %333 = vector.shape_cast %332 : vector<1x6x16xf32> to vector<6x16xf32>
      %cst_230 = arith.constant dense<0.000000e+00> : vector<10x16xf32>
      %334 = tpu.matmul %331, %333, %cst_230 {dimension_numbers = #tpu.dot_dimension_numbers<[1], [0], [0], [1], [0, 0, 1, 1], [], []>} : vector<10x6xf32>, vector<6x16xf32>, vector<10x16xf32> -> vector<10x16xf32>
      %335 = arith.addf %330, %334 : vector<10x16xf32>
      %c0_231 = arith.constant 0 : index
      %c0_232 = arith.constant 0 : index
      %336 = vector.load %arg5[%c0_231, %c0_232] : memref<1x16xf32, #tpu.memory_space<vmem>>, vector<1x16xf32>
      %337 = vector.broadcast %336 : vector<1x16xf32> to vector<10x16xf32>
      %338 = arith.addf %335, %337 : vector<10x16xf32>
      %339 = math.tanh %338 : vector<10x16xf32>
      %c1_i32_233 = arith.constant 1 : i32
      %340 = arith.addi %189, %c1_i32_233 : i32
      %cst_234 = arith.constant 0.000000e+00 : f32
      %341 = vector.broadcast %cst_234 : f32 to vector<10x16xf32>
      %c0_i32_235 = arith.constant 0 : i32
      %342 = arith.addi %340, %c0_i32_235 : i32
      %343 = arith.index_cast %342 : i32 to index
      %c0_236 = arith.constant 0 : index
      %c0_237 = arith.constant 0 : index
      %344 = vector.load %arg13[%343, %c0_236, %c0_237] : memref<14x14x6xf32, #tpu.memory_space<vmem>>, vector<1x14x6xf32>
      %345 = vector.shape_cast %344 : vector<1x14x6xf32> to vector<14x6xf32>
      %346 = vector.extract_strided_slice %345 {offsets = [0, 0], sizes = [10, 6], strides = [1, 1]} : vector<14x6xf32> to vector<10x6xf32>
      %c0_238 = arith.constant 0 : index
      %c0_239 = arith.constant 0 : index
      %c0_240 = arith.constant 0 : index
      %347 = vector.load %arg4[%c0_238, %c0_239, %c0_240] : memref<25x6x16xf32, #tpu.memory_space<vmem>>, vector<1x6x16xf32>
      %348 = vector.shape_cast %347 : vector<1x6x16xf32> to vector<6x16xf32>
      %cst_241 = arith.constant dense<0.000000e+00> : vector<10x16xf32>
      %349 = tpu.matmul %346, %348, %cst_241 {dimension_numbers = #tpu.dot_dimension_numbers<[1], [0], [0], [1], [0, 0, 1, 1], [], []>} : vector<10x6xf32>, vector<6x16xf32>, vector<10x16xf32> -> vector<10x16xf32>
      %350 = arith.addf %341, %349 : vector<10x16xf32>
      %351 = vector.extract_strided_slice %345 {offsets = [1, 0], sizes = [10, 6], strides = [1, 1]} : vector<14x6xf32> to vector<10x6xf32>
      %c1_242 = arith.constant 1 : index
      %c0_243 = arith.constant 0 : index
      %c0_244 = arith.constant 0 : index
      %352 = vector.load %arg4[%c1_242, %c0_243, %c0_244] : memref<25x6x16xf32, #tpu.memory_space<vmem>>, vector<1x6x16xf32>
      %353 = vector.shape_cast %352 : vector<1x6x16xf32> to vector<6x16xf32>
      %cst_245 = arith.constant dense<0.000000e+00> : vector<10x16xf32>
      %354 = tpu.matmul %351, %353, %cst_245 {dimension_numbers = #tpu.dot_dimension_numbers<[1], [0], [0], [1], [0, 0, 1, 1], [], []>} : vector<10x6xf32>, vector<6x16xf32>, vector<10x16xf32> -> vector<10x16xf32>
      %355 = arith.addf %350, %354 : vector<10x16xf32>
      %356 = vector.extract_strided_slice %345 {offsets = [2, 0], sizes = [10, 6], strides = [1, 1]} : vector<14x6xf32> to vector<10x6xf32>
      %c2_246 = arith.constant 2 : index
      %c0_247 = arith.constant 0 : index
      %c0_248 = arith.constant 0 : index
      %357 = vector.load %arg4[%c2_246, %c0_247, %c0_248] : memref<25x6x16xf32, #tpu.memory_space<vmem>>, vector<1x6x16xf32>
      %358 = vector.shape_cast %357 : vector<1x6x16xf32> to vector<6x16xf32>
      %cst_249 = arith.constant dense<0.000000e+00> : vector<10x16xf32>
      %359 = tpu.matmul %356, %358, %cst_249 {dimension_numbers = #tpu.dot_dimension_numbers<[1], [0], [0], [1], [0, 0, 1, 1], [], []>} : vector<10x6xf32>, vector<6x16xf32>, vector<10x16xf32> -> vector<10x16xf32>
      %360 = arith.addf %355, %359 : vector<10x16xf32>
      %361 = vector.extract_strided_slice %345 {offsets = [3, 0], sizes = [10, 6], strides = [1, 1]} : vector<14x6xf32> to vector<10x6xf32>
      %c3_250 = arith.constant 3 : index
      %c0_251 = arith.constant 0 : index
      %c0_252 = arith.constant 0 : index
      %362 = vector.load %arg4[%c3_250, %c0_251, %c0_252] : memref<25x6x16xf32, #tpu.memory_space<vmem>>, vector<1x6x16xf32>
      %363 = vector.shape_cast %362 : vector<1x6x16xf32> to vector<6x16xf32>
      %cst_253 = arith.constant dense<0.000000e+00> : vector<10x16xf32>
      %364 = tpu.matmul %361, %363, %cst_253 {dimension_numbers = #tpu.dot_dimension_numbers<[1], [0], [0], [1], [0, 0, 1, 1], [], []>} : vector<10x6xf32>, vector<6x16xf32>, vector<10x16xf32> -> vector<10x16xf32>
      %365 = arith.addf %360, %364 : vector<10x16xf32>
      %366 = vector.extract_strided_slice %345 {offsets = [4, 0], sizes = [10, 6], strides = [1, 1]} : vector<14x6xf32> to vector<10x6xf32>
      %c4_254 = arith.constant 4 : index
      %c0_255 = arith.constant 0 : index
      %c0_256 = arith.constant 0 : index
      %367 = vector.load %arg4[%c4_254, %c0_255, %c0_256] : memref<25x6x16xf32, #tpu.memory_space<vmem>>, vector<1x6x16xf32>
      %368 = vector.shape_cast %367 : vector<1x6x16xf32> to vector<6x16xf32>
      %cst_257 = arith.constant dense<0.000000e+00> : vector<10x16xf32>
      %369 = tpu.matmul %366, %368, %cst_257 {dimension_numbers = #tpu.dot_dimension_numbers<[1], [0], [0], [1], [0, 0, 1, 1], [], []>} : vector<10x6xf32>, vector<6x16xf32>, vector<10x16xf32> -> vector<10x16xf32>
      %370 = arith.addf %365, %369 : vector<10x16xf32>
      %c1_i32_258 = arith.constant 1 : i32
      %371 = arith.addi %340, %c1_i32_258 : i32
      %372 = arith.index_cast %371 : i32 to index
      %c0_259 = arith.constant 0 : index
      %c0_260 = arith.constant 0 : index
      %373 = vector.load %arg13[%372, %c0_259, %c0_260] : memref<14x14x6xf32, #tpu.memory_space<vmem>>, vector<1x14x6xf32>
      %374 = vector.shape_cast %373 : vector<1x14x6xf32> to vector<14x6xf32>
      %375 = vector.extract_strided_slice %374 {offsets = [0, 0], sizes = [10, 6], strides = [1, 1]} : vector<14x6xf32> to vector<10x6xf32>
      %c5_261 = arith.constant 5 : index
      %c0_262 = arith.constant 0 : index
      %c0_263 = arith.constant 0 : index
      %376 = vector.load %arg4[%c5_261, %c0_262, %c0_263] : memref<25x6x16xf32, #tpu.memory_space<vmem>>, vector<1x6x16xf32>
      %377 = vector.shape_cast %376 : vector<1x6x16xf32> to vector<6x16xf32>
      %cst_264 = arith.constant dense<0.000000e+00> : vector<10x16xf32>
      %378 = tpu.matmul %375, %377, %cst_264 {dimension_numbers = #tpu.dot_dimension_numbers<[1], [0], [0], [1], [0, 0, 1, 1], [], []>} : vector<10x6xf32>, vector<6x16xf32>, vector<10x16xf32> -> vector<10x16xf32>
      %379 = arith.addf %370, %378 : vector<10x16xf32>
      %380 = vector.extract_strided_slice %374 {offsets = [1, 0], sizes = [10, 6], strides = [1, 1]} : vector<14x6xf32> to vector<10x6xf32>
      %c6_265 = arith.constant 6 : index
      %c0_266 = arith.constant 0 : index
      %c0_267 = arith.constant 0 : index
      %381 = vector.load %arg4[%c6_265, %c0_266, %c0_267] : memref<25x6x16xf32, #tpu.memory_space<vmem>>, vector<1x6x16xf32>
      %382 = vector.shape_cast %381 : vector<1x6x16xf32> to vector<6x16xf32>
      %cst_268 = arith.constant dense<0.000000e+00> : vector<10x16xf32>
      %383 = tpu.matmul %380, %382, %cst_268 {dimension_numbers = #tpu.dot_dimension_numbers<[1], [0], [0], [1], [0, 0, 1, 1], [], []>} : vector<10x6xf32>, vector<6x16xf32>, vector<10x16xf32> -> vector<10x16xf32>
      %384 = arith.addf %379, %383 : vector<10x16xf32>
      %385 = vector.extract_strided_slice %374 {offsets = [2, 0], sizes = [10, 6], strides = [1, 1]} : vector<14x6xf32> to vector<10x6xf32>
      %c7_269 = arith.constant 7 : index
      %c0_270 = arith.constant 0 : index
      %c0_271 = arith.constant 0 : index
      %386 = vector.load %arg4[%c7_269, %c0_270, %c0_271] : memref<25x6x16xf32, #tpu.memory_space<vmem>>, vector<1x6x16xf32>
      %387 = vector.shape_cast %386 : vector<1x6x16xf32> to vector<6x16xf32>
      %cst_272 = arith.constant dense<0.000000e+00> : vector<10x16xf32>
      %388 = tpu.matmul %385, %387, %cst_272 {dimension_numbers = #tpu.dot_dimension_numbers<[1], [0], [0], [1], [0, 0, 1, 1], [], []>} : vector<10x6xf32>, vector<6x16xf32>, vector<10x16xf32> -> vector<10x16xf32>
      %389 = arith.addf %384, %388 : vector<10x16xf32>
      %390 = vector.extract_strided_slice %374 {offsets = [3, 0], sizes = [10, 6], strides = [1, 1]} : vector<14x6xf32> to vector<10x6xf32>
      %c8_273 = arith.constant 8 : index
      %c0_274 = arith.constant 0 : index
      %c0_275 = arith.constant 0 : index
      %391 = vector.load %arg4[%c8_273, %c0_274, %c0_275] : memref<25x6x16xf32, #tpu.memory_space<vmem>>, vector<1x6x16xf32>
      %392 = vector.shape_cast %391 : vector<1x6x16xf32> to vector<6x16xf32>
      %cst_276 = arith.constant dense<0.000000e+00> : vector<10x16xf32>
      %393 = tpu.matmul %390, %392, %cst_276 {dimension_numbers = #tpu.dot_dimension_numbers<[1], [0], [0], [1], [0, 0, 1, 1], [], []>} : vector<10x6xf32>, vector<6x16xf32>, vector<10x16xf32> -> vector<10x16xf32>
      %394 = arith.addf %389, %393 : vector<10x16xf32>
      %395 = vector.extract_strided_slice %374 {offsets = [4, 0], sizes = [10, 6], strides = [1, 1]} : vector<14x6xf32> to vector<10x6xf32>
      %c9_277 = arith.constant 9 : index
      %c0_278 = arith.constant 0 : index
      %c0_279 = arith.constant 0 : index
      %396 = vector.load %arg4[%c9_277, %c0_278, %c0_279] : memref<25x6x16xf32, #tpu.memory_space<vmem>>, vector<1x6x16xf32>
      %397 = vector.shape_cast %396 : vector<1x6x16xf32> to vector<6x16xf32>
      %cst_280 = arith.constant dense<0.000000e+00> : vector<10x16xf32>
      %398 = tpu.matmul %395, %397, %cst_280 {dimension_numbers = #tpu.dot_dimension_numbers<[1], [0], [0], [1], [0, 0, 1, 1], [], []>} : vector<10x6xf32>, vector<6x16xf32>, vector<10x16xf32> -> vector<10x16xf32>
      %399 = arith.addf %394, %398 : vector<10x16xf32>
      %c2_i32_281 = arith.constant 2 : i32
      %400 = arith.addi %340, %c2_i32_281 : i32
      %401 = arith.index_cast %400 : i32 to index
      %c0_282 = arith.constant 0 : index
      %c0_283 = arith.constant 0 : index
      %402 = vector.load %arg13[%401, %c0_282, %c0_283] : memref<14x14x6xf32, #tpu.memory_space<vmem>>, vector<1x14x6xf32>
      %403 = vector.shape_cast %402 : vector<1x14x6xf32> to vector<14x6xf32>
      %404 = vector.extract_strided_slice %403 {offsets = [0, 0], sizes = [10, 6], strides = [1, 1]} : vector<14x6xf32> to vector<10x6xf32>
      %c10_284 = arith.constant 10 : index
      %c0_285 = arith.constant 0 : index
      %c0_286 = arith.constant 0 : index
      %405 = vector.load %arg4[%c10_284, %c0_285, %c0_286] : memref<25x6x16xf32, #tpu.memory_space<vmem>>, vector<1x6x16xf32>
      %406 = vector.shape_cast %405 : vector<1x6x16xf32> to vector<6x16xf32>
      %cst_287 = arith.constant dense<0.000000e+00> : vector<10x16xf32>
      %407 = tpu.matmul %404, %406, %cst_287 {dimension_numbers = #tpu.dot_dimension_numbers<[1], [0], [0], [1], [0, 0, 1, 1], [], []>} : vector<10x6xf32>, vector<6x16xf32>, vector<10x16xf32> -> vector<10x16xf32>
      %408 = arith.addf %399, %407 : vector<10x16xf32>
      %409 = vector.extract_strided_slice %403 {offsets = [1, 0], sizes = [10, 6], strides = [1, 1]} : vector<14x6xf32> to vector<10x6xf32>
      %c11_288 = arith.constant 11 : index
      %c0_289 = arith.constant 0 : index
      %c0_290 = arith.constant 0 : index
      %410 = vector.load %arg4[%c11_288, %c0_289, %c0_290] : memref<25x6x16xf32, #tpu.memory_space<vmem>>, vector<1x6x16xf32>
      %411 = vector.shape_cast %410 : vector<1x6x16xf32> to vector<6x16xf32>
      %cst_291 = arith.constant dense<0.000000e+00> : vector<10x16xf32>
      %412 = tpu.matmul %409, %411, %cst_291 {dimension_numbers = #tpu.dot_dimension_numbers<[1], [0], [0], [1], [0, 0, 1, 1], [], []>} : vector<10x6xf32>, vector<6x16xf32>, vector<10x16xf32> -> vector<10x16xf32>
      %413 = arith.addf %408, %412 : vector<10x16xf32>
      %414 = vector.extract_strided_slice %403 {offsets = [2, 0], sizes = [10, 6], strides = [1, 1]} : vector<14x6xf32> to vector<10x6xf32>
      %c12_292 = arith.constant 12 : index
      %c0_293 = arith.constant 0 : index
      %c0_294 = arith.constant 0 : index
      %415 = vector.load %arg4[%c12_292, %c0_293, %c0_294] : memref<25x6x16xf32, #tpu.memory_space<vmem>>, vector<1x6x16xf32>
      %416 = vector.shape_cast %415 : vector<1x6x16xf32> to vector<6x16xf32>
      %cst_295 = arith.constant dense<0.000000e+00> : vector<10x16xf32>
      %417 = tpu.matmul %414, %416, %cst_295 {dimension_numbers = #tpu.dot_dimension_numbers<[1], [0], [0], [1], [0, 0, 1, 1], [], []>} : vector<10x6xf32>, vector<6x16xf32>, vector<10x16xf32> -> vector<10x16xf32>
      %418 = arith.addf %413, %417 : vector<10x16xf32>
      %419 = vector.extract_strided_slice %403 {offsets = [3, 0], sizes = [10, 6], strides = [1, 1]} : vector<14x6xf32> to vector<10x6xf32>
      %c13_296 = arith.constant 13 : index
      %c0_297 = arith.constant 0 : index
      %c0_298 = arith.constant 0 : index
      %420 = vector.load %arg4[%c13_296, %c0_297, %c0_298] : memref<25x6x16xf32, #tpu.memory_space<vmem>>, vector<1x6x16xf32>
      %421 = vector.shape_cast %420 : vector<1x6x16xf32> to vector<6x16xf32>
      %cst_299 = arith.constant dense<0.000000e+00> : vector<10x16xf32>
      %422 = tpu.matmul %419, %421, %cst_299 {dimension_numbers = #tpu.dot_dimension_numbers<[1], [0], [0], [1], [0, 0, 1, 1], [], []>} : vector<10x6xf32>, vector<6x16xf32>, vector<10x16xf32> -> vector<10x16xf32>
      %423 = arith.addf %418, %422 : vector<10x16xf32>
      %424 = vector.extract_strided_slice %403 {offsets = [4, 0], sizes = [10, 6], strides = [1, 1]} : vector<14x6xf32> to vector<10x6xf32>
      %c14_300 = arith.constant 14 : index
      %c0_301 = arith.constant 0 : index
      %c0_302 = arith.constant 0 : index
      %425 = vector.load %arg4[%c14_300, %c0_301, %c0_302] : memref<25x6x16xf32, #tpu.memory_space<vmem>>, vector<1x6x16xf32>
      %426 = vector.shape_cast %425 : vector<1x6x16xf32> to vector<6x16xf32>
      %cst_303 = arith.constant dense<0.000000e+00> : vector<10x16xf32>
      %427 = tpu.matmul %424, %426, %cst_303 {dimension_numbers = #tpu.dot_dimension_numbers<[1], [0], [0], [1], [0, 0, 1, 1], [], []>} : vector<10x6xf32>, vector<6x16xf32>, vector<10x16xf32> -> vector<10x16xf32>
      %428 = arith.addf %423, %427 : vector<10x16xf32>
      %c3_i32_304 = arith.constant 3 : i32
      %429 = arith.addi %340, %c3_i32_304 : i32
      %430 = arith.index_cast %429 : i32 to index
      %c0_305 = arith.constant 0 : index
      %c0_306 = arith.constant 0 : index
      %431 = vector.load %arg13[%430, %c0_305, %c0_306] : memref<14x14x6xf32, #tpu.memory_space<vmem>>, vector<1x14x6xf32>
      %432 = vector.shape_cast %431 : vector<1x14x6xf32> to vector<14x6xf32>
      %433 = vector.extract_strided_slice %432 {offsets = [0, 0], sizes = [10, 6], strides = [1, 1]} : vector<14x6xf32> to vector<10x6xf32>
      %c15_307 = arith.constant 15 : index
      %c0_308 = arith.constant 0 : index
      %c0_309 = arith.constant 0 : index
      %434 = vector.load %arg4[%c15_307, %c0_308, %c0_309] : memref<25x6x16xf32, #tpu.memory_space<vmem>>, vector<1x6x16xf32>
      %435 = vector.shape_cast %434 : vector<1x6x16xf32> to vector<6x16xf32>
      %cst_310 = arith.constant dense<0.000000e+00> : vector<10x16xf32>
      %436 = tpu.matmul %433, %435, %cst_310 {dimension_numbers = #tpu.dot_dimension_numbers<[1], [0], [0], [1], [0, 0, 1, 1], [], []>} : vector<10x6xf32>, vector<6x16xf32>, vector<10x16xf32> -> vector<10x16xf32>
      %437 = arith.addf %428, %436 : vector<10x16xf32>
      %438 = vector.extract_strided_slice %432 {offsets = [1, 0], sizes = [10, 6], strides = [1, 1]} : vector<14x6xf32> to vector<10x6xf32>
      %c16_311 = arith.constant 16 : index
      %c0_312 = arith.constant 0 : index
      %c0_313 = arith.constant 0 : index
      %439 = vector.load %arg4[%c16_311, %c0_312, %c0_313] : memref<25x6x16xf32, #tpu.memory_space<vmem>>, vector<1x6x16xf32>
      %440 = vector.shape_cast %439 : vector<1x6x16xf32> to vector<6x16xf32>
      %cst_314 = arith.constant dense<0.000000e+00> : vector<10x16xf32>
      %441 = tpu.matmul %438, %440, %cst_314 {dimension_numbers = #tpu.dot_dimension_numbers<[1], [0], [0], [1], [0, 0, 1, 1], [], []>} : vector<10x6xf32>, vector<6x16xf32>, vector<10x16xf32> -> vector<10x16xf32>
      %442 = arith.addf %437, %441 : vector<10x16xf32>
      %443 = vector.extract_strided_slice %432 {offsets = [2, 0], sizes = [10, 6], strides = [1, 1]} : vector<14x6xf32> to vector<10x6xf32>
      %c17_315 = arith.constant 17 : index
      %c0_316 = arith.constant 0 : index
      %c0_317 = arith.constant 0 : index
      %444 = vector.load %arg4[%c17_315, %c0_316, %c0_317] : memref<25x6x16xf32, #tpu.memory_space<vmem>>, vector<1x6x16xf32>
      %445 = vector.shape_cast %444 : vector<1x6x16xf32> to vector<6x16xf32>
      %cst_318 = arith.constant dense<0.000000e+00> : vector<10x16xf32>
      %446 = tpu.matmul %443, %445, %cst_318 {dimension_numbers = #tpu.dot_dimension_numbers<[1], [0], [0], [1], [0, 0, 1, 1], [], []>} : vector<10x6xf32>, vector<6x16xf32>, vector<10x16xf32> -> vector<10x16xf32>
      %447 = arith.addf %442, %446 : vector<10x16xf32>
      %448 = vector.extract_strided_slice %432 {offsets = [3, 0], sizes = [10, 6], strides = [1, 1]} : vector<14x6xf32> to vector<10x6xf32>
      %c18_319 = arith.constant 18 : index
      %c0_320 = arith.constant 0 : index
      %c0_321 = arith.constant 0 : index
      %449 = vector.load %arg4[%c18_319, %c0_320, %c0_321] : memref<25x6x16xf32, #tpu.memory_space<vmem>>, vector<1x6x16xf32>
      %450 = vector.shape_cast %449 : vector<1x6x16xf32> to vector<6x16xf32>
      %cst_322 = arith.constant dense<0.000000e+00> : vector<10x16xf32>
      %451 = tpu.matmul %448, %450, %cst_322 {dimension_numbers = #tpu.dot_dimension_numbers<[1], [0], [0], [1], [0, 0, 1, 1], [], []>} : vector<10x6xf32>, vector<6x16xf32>, vector<10x16xf32> -> vector<10x16xf32>
      %452 = arith.addf %447, %451 : vector<10x16xf32>
      %453 = vector.extract_strided_slice %432 {offsets = [4, 0], sizes = [10, 6], strides = [1, 1]} : vector<14x6xf32> to vector<10x6xf32>
      %c19_323 = arith.constant 19 : index
      %c0_324 = arith.constant 0 : index
      %c0_325 = arith.constant 0 : index
      %454 = vector.load %arg4[%c19_323, %c0_324, %c0_325] : memref<25x6x16xf32, #tpu.memory_space<vmem>>, vector<1x6x16xf32>
      %455 = vector.shape_cast %454 : vector<1x6x16xf32> to vector<6x16xf32>
      %cst_326 = arith.constant dense<0.000000e+00> : vector<10x16xf32>
      %456 = tpu.matmul %453, %455, %cst_326 {dimension_numbers = #tpu.dot_dimension_numbers<[1], [0], [0], [1], [0, 0, 1, 1], [], []>} : vector<10x6xf32>, vector<6x16xf32>, vector<10x16xf32> -> vector<10x16xf32>
      %457 = arith.addf %452, %456 : vector<10x16xf32>
      %c4_i32_327 = arith.constant 4 : i32
      %458 = arith.addi %340, %c4_i32_327 : i32
      %459 = arith.index_cast %458 : i32 to index
      %c0_328 = arith.constant 0 : index
      %c0_329 = arith.constant 0 : index
      %460 = vector.load %arg13[%459, %c0_328, %c0_329] : memref<14x14x6xf32, #tpu.memory_space<vmem>>, vector<1x14x6xf32>
      %461 = vector.shape_cast %460 : vector<1x14x6xf32> to vector<14x6xf32>
      %462 = vector.extract_strided_slice %461 {offsets = [0, 0], sizes = [10, 6], strides = [1, 1]} : vector<14x6xf32> to vector<10x6xf32>
      %c20_330 = arith.constant 20 : index
      %c0_331 = arith.constant 0 : index
      %c0_332 = arith.constant 0 : index
      %463 = vector.load %arg4[%c20_330, %c0_331, %c0_332] : memref<25x6x16xf32, #tpu.memory_space<vmem>>, vector<1x6x16xf32>
      %464 = vector.shape_cast %463 : vector<1x6x16xf32> to vector<6x16xf32>
      %cst_333 = arith.constant dense<0.000000e+00> : vector<10x16xf32>
      %465 = tpu.matmul %462, %464, %cst_333 {dimension_numbers = #tpu.dot_dimension_numbers<[1], [0], [0], [1], [0, 0, 1, 1], [], []>} : vector<10x6xf32>, vector<6x16xf32>, vector<10x16xf32> -> vector<10x16xf32>
      %466 = arith.addf %457, %465 : vector<10x16xf32>
      %467 = vector.extract_strided_slice %461 {offsets = [1, 0], sizes = [10, 6], strides = [1, 1]} : vector<14x6xf32> to vector<10x6xf32>
      %c21_334 = arith.constant 21 : index
      %c0_335 = arith.constant 0 : index
      %c0_336 = arith.constant 0 : index
      %468 = vector.load %arg4[%c21_334, %c0_335, %c0_336] : memref<25x6x16xf32, #tpu.memory_space<vmem>>, vector<1x6x16xf32>
      %469 = vector.shape_cast %468 : vector<1x6x16xf32> to vector<6x16xf32>
      %cst_337 = arith.constant dense<0.000000e+00> : vector<10x16xf32>
      %470 = tpu.matmul %467, %469, %cst_337 {dimension_numbers = #tpu.dot_dimension_numbers<[1], [0], [0], [1], [0, 0, 1, 1], [], []>} : vector<10x6xf32>, vector<6x16xf32>, vector<10x16xf32> -> vector<10x16xf32>
      %471 = arith.addf %466, %470 : vector<10x16xf32>
      %472 = vector.extract_strided_slice %461 {offsets = [2, 0], sizes = [10, 6], strides = [1, 1]} : vector<14x6xf32> to vector<10x6xf32>
      %c22_338 = arith.constant 22 : index
      %c0_339 = arith.constant 0 : index
      %c0_340 = arith.constant 0 : index
      %473 = vector.load %arg4[%c22_338, %c0_339, %c0_340] : memref<25x6x16xf32, #tpu.memory_space<vmem>>, vector<1x6x16xf32>
      %474 = vector.shape_cast %473 : vector<1x6x16xf32> to vector<6x16xf32>
      %cst_341 = arith.constant dense<0.000000e+00> : vector<10x16xf32>
      %475 = tpu.matmul %472, %474, %cst_341 {dimension_numbers = #tpu.dot_dimension_numbers<[1], [0], [0], [1], [0, 0, 1, 1], [], []>} : vector<10x6xf32>, vector<6x16xf32>, vector<10x16xf32> -> vector<10x16xf32>
      %476 = arith.addf %471, %475 : vector<10x16xf32>
      %477 = vector.extract_strided_slice %461 {offsets = [3, 0], sizes = [10, 6], strides = [1, 1]} : vector<14x6xf32> to vector<10x6xf32>
      %c23_342 = arith.constant 23 : index
      %c0_343 = arith.constant 0 : index
      %c0_344 = arith.constant 0 : index
      %478 = vector.load %arg4[%c23_342, %c0_343, %c0_344] : memref<25x6x16xf32, #tpu.memory_space<vmem>>, vector<1x6x16xf32>
      %479 = vector.shape_cast %478 : vector<1x6x16xf32> to vector<6x16xf32>
      %cst_345 = arith.constant dense<0.000000e+00> : vector<10x16xf32>
      %480 = tpu.matmul %477, %479, %cst_345 {dimension_numbers = #tpu.dot_dimension_numbers<[1], [0], [0], [1], [0, 0, 1, 1], [], []>} : vector<10x6xf32>, vector<6x16xf32>, vector<10x16xf32> -> vector<10x16xf32>
      %481 = arith.addf %476, %480 : vector<10x16xf32>
      %482 = vector.extract_strided_slice %461 {offsets = [4, 0], sizes = [10, 6], strides = [1, 1]} : vector<14x6xf32> to vector<10x6xf32>
      %c24_346 = arith.constant 24 : index
      %c0_347 = arith.constant 0 : index
      %c0_348 = arith.constant 0 : index
      %483 = vector.load %arg4[%c24_346, %c0_347, %c0_348] : memref<25x6x16xf32, #tpu.memory_space<vmem>>, vector<1x6x16xf32>
      %484 = vector.shape_cast %483 : vector<1x6x16xf32> to vector<6x16xf32>
      %cst_349 = arith.constant dense<0.000000e+00> : vector<10x16xf32>
      %485 = tpu.matmul %482, %484, %cst_349 {dimension_numbers = #tpu.dot_dimension_numbers<[1], [0], [0], [1], [0, 0, 1, 1], [], []>} : vector<10x6xf32>, vector<6x16xf32>, vector<10x16xf32> -> vector<10x16xf32>
      %486 = arith.addf %481, %485 : vector<10x16xf32>
      %c0_350 = arith.constant 0 : index
      %c0_351 = arith.constant 0 : index
      %487 = vector.load %arg5[%c0_350, %c0_351] : memref<1x16xf32, #tpu.memory_space<vmem>>, vector<1x16xf32>
      %488 = vector.broadcast %487 : vector<1x16xf32> to vector<10x16xf32>
      %489 = arith.addf %486, %488 : vector<10x16xf32>
      %490 = math.tanh %489 : vector<10x16xf32>
      %491 = arith.addf %339, %490 : vector<10x16xf32>
      %cst_352 = arith.constant dense<0.000000e+00> : vector<5x16xf32>
      %492 = tpu.matmul %26, %491, %cst_352 {dimension_numbers = #tpu.dot_dimension_numbers<[1], [0], [0], [1], [0, 0, 1, 1], [], []>} : vector<5x10xf32>, vector<10x16xf32>, vector<5x16xf32> -> vector<5x16xf32>
      %cst_353 = arith.constant 2.500000e-01 : f32
      %493 = vector.broadcast %cst_353 : f32 to vector<5x16xf32>
      %494 = arith.mulf %493, %492 : vector<5x16xf32>
      %495 = arith.index_cast %arg15 : i32 to index
      %c0_354 = arith.constant 0 : index
      %c0_355 = arith.constant 0 : index
      %496 = vector.load %arg14[%495, %c0_354, %c0_355] : memref<5x5x16xf32, #tpu.memory_space<vmem>>, vector<1x5x16xf32>
      %497 = vector.shape_cast %496 : vector<1x5x16xf32> to vector<5x16xf32>
      %498 = vector.shape_cast %494 : vector<5x16xf32> to vector<1x5x16xf32>
      tpu.vector_store %arg14[%495, %c0_354, %c0_355], %498 {strides = array<i32>} : memref<5x5x16xf32, #tpu.memory_space<vmem>>, vector<1x5x16xf32>,
    }
    %c5_i32_8 = arith.constant 5 : i32
    %cst = arith.constant 0.000000e+00 : f32
    %28 = vector.broadcast %cst : f32 to vector<1x120xf32>
    %c0 = arith.constant 0 : index
    %c0_9 = arith.constant 0 : index
    %c0_10 = arith.constant 0 : index
    %29 = vector.load %arg14[%c0, %c0_9, %c0_10] : memref<5x5x16xf32, #tpu.memory_space<vmem>>, vector<1x5x16xf32>
    %30 = vector.shape_cast %29 : vector<1x5x16xf32> to vector<5x16xf32>
    %31 = vector.extract_strided_slice %30 {offsets = [0, 0], sizes = [1, 16], strides = [1, 1]} : vector<5x16xf32> to vector<1x16xf32>
    %c0_11 = arith.constant 0 : index
    %c0_12 = arith.constant 0 : index
    %c0_13 = arith.constant 0 : index
    %32 = vector.load %arg6[%c0_11, %c0_12, %c0_13] : memref<25x16x120xf32, #tpu.memory_space<vmem>>, vector<1x16x120xf32>
    %33 = vector.shape_cast %32 : vector<1x16x120xf32> to vector<16x120xf32>
    %cst_14 = arith.constant dense<0.000000e+00> : vector<1x120xf32>
    %34 = tpu.matmul %31, %33, %cst_14 {dimension_numbers = #tpu.dot_dimension_numbers<[1], [0], [0], [1], [0, 0, 1, 1], [], []>} : vector<1x16xf32>, vector<16x120xf32>, vector<1x120xf32> -> vector<1x120xf32>
    %35 = arith.addf %28, %34 : vector<1x120xf32>
    %36 = vector.extract_strided_slice %30 {offsets = [1, 0], sizes = [1, 16], strides = [1, 1]} : vector<5x16xf32> to vector<1x16xf32>
    %c1 = arith.constant 1 : index
    %c0_15 = arith.constant 0 : index
    %c0_16 = arith.constant 0 : index
    %37 = vector.load %arg6[%c1, %c0_15, %c0_16] : memref<25x16x120xf32, #tpu.memory_space<vmem>>, vector<1x16x120xf32>
    %38 = vector.shape_cast %37 : vector<1x16x120xf32> to vector<16x120xf32>
    %cst_17 = arith.constant dense<0.000000e+00> : vector<1x120xf32>
    %39 = tpu.matmul %36, %38, %cst_17 {dimension_numbers = #tpu.dot_dimension_numbers<[1], [0], [0], [1], [0, 0, 1, 1], [], []>} : vector<1x16xf32>, vector<16x120xf32>, vector<1x120xf32> -> vector<1x120xf32>
    %40 = arith.addf %35, %39 : vector<1x120xf32>
    %41 = vector.extract_strided_slice %30 {offsets = [2, 0], sizes = [1, 16], strides = [1, 1]} : vector<5x16xf32> to vector<1x16xf32>
    %c2 = arith.constant 2 : index
    %c0_18 = arith.constant 0 : index
    %c0_19 = arith.constant 0 : index
    %42 = vector.load %arg6[%c2, %c0_18, %c0_19] : memref<25x16x120xf32, #tpu.memory_space<vmem>>, vector<1x16x120xf32>
    %43 = vector.shape_cast %42 : vector<1x16x120xf32> to vector<16x120xf32>
    %cst_20 = arith.constant dense<0.000000e+00> : vector<1x120xf32>
    %44 = tpu.matmul %41, %43, %cst_20 {dimension_numbers = #tpu.dot_dimension_numbers<[1], [0], [0], [1], [0, 0, 1, 1], [], []>} : vector<1x16xf32>, vector<16x120xf32>, vector<1x120xf32> -> vector<1x120xf32>
    %45 = arith.addf %40, %44 : vector<1x120xf32>
    %46 = vector.extract_strided_slice %30 {offsets = [3, 0], sizes = [1, 16], strides = [1, 1]} : vector<5x16xf32> to vector<1x16xf32>
    %c3 = arith.constant 3 : index
    %c0_21 = arith.constant 0 : index
    %c0_22 = arith.constant 0 : index
    %47 = vector.load %arg6[%c3, %c0_21, %c0_22] : memref<25x16x120xf32, #tpu.memory_space<vmem>>, vector<1x16x120xf32>
    %48 = vector.shape_cast %47 : vector<1x16x120xf32> to vector<16x120xf32>
    %cst_23 = arith.constant dense<0.000000e+00> : vector<1x120xf32>
    %49 = tpu.matmul %46, %48, %cst_23 {dimension_numbers = #tpu.dot_dimension_numbers<[1], [0], [0], [1], [0, 0, 1, 1], [], []>} : vector<1x16xf32>, vector<16x120xf32>, vector<1x120xf32> -> vector<1x120xf32>
    %50 = arith.addf %45, %49 : vector<1x120xf32>
    %51 = vector.extract_strided_slice %30 {offsets = [4, 0], sizes = [1, 16], strides = [1, 1]} : vector<5x16xf32> to vector<1x16xf32>
    %c4 = arith.constant 4 : index
    %c0_24 = arith.constant 0 : index
    %c0_25 = arith.constant 0 : index
    %52 = vector.load %arg6[%c4, %c0_24, %c0_25] : memref<25x16x120xf32, #tpu.memory_space<vmem>>, vector<1x16x120xf32>
    %53 = vector.shape_cast %52 : vector<1x16x120xf32> to vector<16x120xf32>
    %cst_26 = arith.constant dense<0.000000e+00> : vector<1x120xf32>
    %54 = tpu.matmul %51, %53, %cst_26 {dimension_numbers = #tpu.dot_dimension_numbers<[1], [0], [0], [1], [0, 0, 1, 1], [], []>} : vector<1x16xf32>, vector<16x120xf32>, vector<1x120xf32> -> vector<1x120xf32>
    %55 = arith.addf %50, %54 : vector<1x120xf32>
    %c1_27 = arith.constant 1 : index
    %c0_28 = arith.constant 0 : index
    %c0_29 = arith.constant 0 : index
    %56 = vector.load %arg14[%c1_27, %c0_28, %c0_29] : memref<5x5x16xf32, #tpu.memory_space<vmem>>, vector<1x5x16xf32>
    %57 = vector.shape_cast %56 : vector<1x5x16xf32> to vector<5x16xf32>
    %58 = vector.extract_strided_slice %57 {offsets = [0, 0], sizes = [1, 16], strides = [1, 1]} : vector<5x16xf32> to vector<1x16xf32>
    %c5 = arith.constant 5 : index
    %c0_30 = arith.constant 0 : index
    %c0_31 = arith.constant 0 : index
    %59 = vector.load %arg6[%c5, %c0_30, %c0_31] : memref<25x16x120xf32, #tpu.memory_space<vmem>>, vector<1x16x120xf32>
    %60 = vector.shape_cast %59 : vector<1x16x120xf32> to vector<16x120xf32>
    %cst_32 = arith.constant dense<0.000000e+00> : vector<1x120xf32>
    %61 = tpu.matmul %58, %60, %cst_32 {dimension_numbers = #tpu.dot_dimension_numbers<[1], [0], [0], [1], [0, 0, 1, 1], [], []>} : vector<1x16xf32>, vector<16x120xf32>, vector<1x120xf32> -> vector<1x120xf32>
    %62 = arith.addf %55, %61 : vector<1x120xf32>
    %63 = vector.extract_strided_slice %57 {offsets = [1, 0], sizes = [1, 16], strides = [1, 1]} : vector<5x16xf32> to vector<1x16xf32>
    %c6 = arith.constant 6 : index
    %c0_33 = arith.constant 0 : index
    %c0_34 = arith.constant 0 : index
    %64 = vector.load %arg6[%c6, %c0_33, %c0_34] : memref<25x16x120xf32, #tpu.memory_space<vmem>>, vector<1x16x120xf32>
    %65 = vector.shape_cast %64 : vector<1x16x120xf32> to vector<16x120xf32>
    %cst_35 = arith.constant dense<0.000000e+00> : vector<1x120xf32>
    %66 = tpu.matmul %63, %65, %cst_35 {dimension_numbers = #tpu.dot_dimension_numbers<[1], [0], [0], [1], [0, 0, 1, 1], [], []>} : vector<1x16xf32>, vector<16x120xf32>, vector<1x120xf32> -> vector<1x120xf32>
    %67 = arith.addf %62, %66 : vector<1x120xf32>
    %68 = vector.extract_strided_slice %57 {offsets = [2, 0], sizes = [1, 16], strides = [1, 1]} : vector<5x16xf32> to vector<1x16xf32>
    %c7 = arith.constant 7 : index
    %c0_36 = arith.constant 0 : index
    %c0_37 = arith.constant 0 : index
    %69 = vector.load %arg6[%c7, %c0_36, %c0_37] : memref<25x16x120xf32, #tpu.memory_space<vmem>>, vector<1x16x120xf32>
    %70 = vector.shape_cast %69 : vector<1x16x120xf32> to vector<16x120xf32>
    %cst_38 = arith.constant dense<0.000000e+00> : vector<1x120xf32>
    %71 = tpu.matmul %68, %70, %cst_38 {dimension_numbers = #tpu.dot_dimension_numbers<[1], [0], [0], [1], [0, 0, 1, 1], [], []>} : vector<1x16xf32>, vector<16x120xf32>, vector<1x120xf32> -> vector<1x120xf32>
    %72 = arith.addf %67, %71 : vector<1x120xf32>
    %73 = vector.extract_strided_slice %57 {offsets = [3, 0], sizes = [1, 16], strides = [1, 1]} : vector<5x16xf32> to vector<1x16xf32>
    %c8 = arith.constant 8 : index
    %c0_39 = arith.constant 0 : index
    %c0_40 = arith.constant 0 : index
    %74 = vector.load %arg6[%c8, %c0_39, %c0_40] : memref<25x16x120xf32, #tpu.memory_space<vmem>>, vector<1x16x120xf32>
    %75 = vector.shape_cast %74 : vector<1x16x120xf32> to vector<16x120xf32>
    %cst_41 = arith.constant dense<0.000000e+00> : vector<1x120xf32>
    %76 = tpu.matmul %73, %75, %cst_41 {dimension_numbers = #tpu.dot_dimension_numbers<[1], [0], [0], [1], [0, 0, 1, 1], [], []>} : vector<1x16xf32>, vector<16x120xf32>, vector<1x120xf32> -> vector<1x120xf32>
    %77 = arith.addf %72, %76 : vector<1x120xf32>
    %78 = vector.extract_strided_slice %57 {offsets = [4, 0], sizes = [1, 16], strides = [1, 1]} : vector<5x16xf32> to vector<1x16xf32>
    %c9 = arith.constant 9 : index
    %c0_42 = arith.constant 0 : index
    %c0_43 = arith.constant 0 : index
    %79 = vector.load %arg6[%c9, %c0_42, %c0_43] : memref<25x16x120xf32, #tpu.memory_space<vmem>>, vector<1x16x120xf32>
    %80 = vector.shape_cast %79 : vector<1x16x120xf32> to vector<16x120xf32>
    %cst_44 = arith.constant dense<0.000000e+00> : vector<1x120xf32>
    %81 = tpu.matmul %78, %80, %cst_44 {dimension_numbers = #tpu.dot_dimension_numbers<[1], [0], [0], [1], [0, 0, 1, 1], [], []>} : vector<1x16xf32>, vector<16x120xf32>, vector<1x120xf32> -> vector<1x120xf32>
    %82 = arith.addf %77, %81 : vector<1x120xf32>
    %c2_45 = arith.constant 2 : index
    %c0_46 = arith.constant 0 : index
    %c0_47 = arith.constant 0 : index
    %83 = vector.load %arg14[%c2_45, %c0_46, %c0_47] : memref<5x5x16xf32, #tpu.memory_space<vmem>>, vector<1x5x16xf32>
    %84 = vector.shape_cast %83 : vector<1x5x16xf32> to vector<5x16xf32>
    %85 = vector.extract_strided_slice %84 {offsets = [0, 0], sizes = [1, 16], strides = [1, 1]} : vector<5x16xf32> to vector<1x16xf32>
    %c10 = arith.constant 10 : index
    %c0_48 = arith.constant 0 : index
    %c0_49 = arith.constant 0 : index
    %86 = vector.load %arg6[%c10, %c0_48, %c0_49] : memref<25x16x120xf32, #tpu.memory_space<vmem>>, vector<1x16x120xf32>
    %87 = vector.shape_cast %86 : vector<1x16x120xf32> to vector<16x120xf32>
    %cst_50 = arith.constant dense<0.000000e+00> : vector<1x120xf32>
    %88 = tpu.matmul %85, %87, %cst_50 {dimension_numbers = #tpu.dot_dimension_numbers<[1], [0], [0], [1], [0, 0, 1, 1], [], []>} : vector<1x16xf32>, vector<16x120xf32>, vector<1x120xf32> -> vector<1x120xf32>
    %89 = arith.addf %82, %88 : vector<1x120xf32>
    %90 = vector.extract_strided_slice %84 {offsets = [1, 0], sizes = [1, 16], strides = [1, 1]} : vector<5x16xf32> to vector<1x16xf32>
    %c11 = arith.constant 11 : index
    %c0_51 = arith.constant 0 : index
    %c0_52 = arith.constant 0 : index
    %91 = vector.load %arg6[%c11, %c0_51, %c0_52] : memref<25x16x120xf32, #tpu.memory_space<vmem>>, vector<1x16x120xf32>
    %92 = vector.shape_cast %91 : vector<1x16x120xf32> to vector<16x120xf32>
    %cst_53 = arith.constant dense<0.000000e+00> : vector<1x120xf32>
    %93 = tpu.matmul %90, %92, %cst_53 {dimension_numbers = #tpu.dot_dimension_numbers<[1], [0], [0], [1], [0, 0, 1, 1], [], []>} : vector<1x16xf32>, vector<16x120xf32>, vector<1x120xf32> -> vector<1x120xf32>
    %94 = arith.addf %89, %93 : vector<1x120xf32>
    %95 = vector.extract_strided_slice %84 {offsets = [2, 0], sizes = [1, 16], strides = [1, 1]} : vector<5x16xf32> to vector<1x16xf32>
    %c12 = arith.constant 12 : index
    %c0_54 = arith.constant 0 : index
    %c0_55 = arith.constant 0 : index
    %96 = vector.load %arg6[%c12, %c0_54, %c0_55] : memref<25x16x120xf32, #tpu.memory_space<vmem>>, vector<1x16x120xf32>
    %97 = vector.shape_cast %96 : vector<1x16x120xf32> to vector<16x120xf32>
    %cst_56 = arith.constant dense<0.000000e+00> : vector<1x120xf32>
    %98 = tpu.matmul %95, %97, %cst_56 {dimension_numbers = #tpu.dot_dimension_numbers<[1], [0], [0], [1], [0, 0, 1, 1], [], []>} : vector<1x16xf32>, vector<16x120xf32>, vector<1x120xf32> -> vector<1x120xf32>
    %99 = arith.addf %94, %98 : vector<1x120xf32>
    %100 = vector.extract_strided_slice %84 {offsets = [3, 0], sizes = [1, 16], strides = [1, 1]} : vector<5x16xf32> to vector<1x16xf32>
    %c13 = arith.constant 13 : index
    %c0_57 = arith.constant 0 : index
    %c0_58 = arith.constant 0 : index
    %101 = vector.load %arg6[%c13, %c0_57, %c0_58] : memref<25x16x120xf32, #tpu.memory_space<vmem>>, vector<1x16x120xf32>
    %102 = vector.shape_cast %101 : vector<1x16x120xf32> to vector<16x120xf32>
    %cst_59 = arith.constant dense<0.000000e+00> : vector<1x120xf32>
    %103 = tpu.matmul %100, %102, %cst_59 {dimension_numbers = #tpu.dot_dimension_numbers<[1], [0], [0], [1], [0, 0, 1, 1], [], []>} : vector<1x16xf32>, vector<16x120xf32>, vector<1x120xf32> -> vector<1x120xf32>
    %104 = arith.addf %99, %103 : vector<1x120xf32>
    %105 = vector.extract_strided_slice %84 {offsets = [4, 0], sizes = [1, 16], strides = [1, 1]} : vector<5x16xf32> to vector<1x16xf32>
    %c14 = arith.constant 14 : index
    %c0_60 = arith.constant 0 : index
    %c0_61 = arith.constant 0 : index
    %106 = vector.load %arg6[%c14, %c0_60, %c0_61] : memref<25x16x120xf32, #tpu.memory_space<vmem>>, vector<1x16x120xf32>
    %107 = vector.shape_cast %106 : vector<1x16x120xf32> to vector<16x120xf32>
    %cst_62 = arith.constant dense<0.000000e+00> : vector<1x120xf32>
    %108 = tpu.matmul %105, %107, %cst_62 {dimension_numbers = #tpu.dot_dimension_numbers<[1], [0], [0], [1], [0, 0, 1, 1], [], []>} : vector<1x16xf32>, vector<16x120xf32>, vector<1x120xf32> -> vector<1x120xf32>
    %109 = arith.addf %104, %108 : vector<1x120xf32>
    %c3_63 = arith.constant 3 : index
    %c0_64 = arith.constant 0 : index
    %c0_65 = arith.constant 0 : index
    %110 = vector.load %arg14[%c3_63, %c0_64, %c0_65] : memref<5x5x16xf32, #tpu.memory_space<vmem>>, vector<1x5x16xf32>
    %111 = vector.shape_cast %110 : vector<1x5x16xf32> to vector<5x16xf32>
    %112 = vector.extract_strided_slice %111 {offsets = [0, 0], sizes = [1, 16], strides = [1, 1]} : vector<5x16xf32> to vector<1x16xf32>
    %c15 = arith.constant 15 : index
    %c0_66 = arith.constant 0 : index
    %c0_67 = arith.constant 0 : index
    %113 = vector.load %arg6[%c15, %c0_66, %c0_67] : memref<25x16x120xf32, #tpu.memory_space<vmem>>, vector<1x16x120xf32>
    %114 = vector.shape_cast %113 : vector<1x16x120xf32> to vector<16x120xf32>
    %cst_68 = arith.constant dense<0.000000e+00> : vector<1x120xf32>
    %115 = tpu.matmul %112, %114, %cst_68 {dimension_numbers = #tpu.dot_dimension_numbers<[1], [0], [0], [1], [0, 0, 1, 1], [], []>} : vector<1x16xf32>, vector<16x120xf32>, vector<1x120xf32> -> vector<1x120xf32>
    %116 = arith.addf %109, %115 : vector<1x120xf32>
    %117 = vector.extract_strided_slice %111 {offsets = [1, 0], sizes = [1, 16], strides = [1, 1]} : vector<5x16xf32> to vector<1x16xf32>
    %c16 = arith.constant 16 : index
    %c0_69 = arith.constant 0 : index
    %c0_70 = arith.constant 0 : index
    %118 = vector.load %arg6[%c16, %c0_69, %c0_70] : memref<25x16x120xf32, #tpu.memory_space<vmem>>, vector<1x16x120xf32>
    %119 = vector.shape_cast %118 : vector<1x16x120xf32> to vector<16x120xf32>
    %cst_71 = arith.constant dense<0.000000e+00> : vector<1x120xf32>
    %120 = tpu.matmul %117, %119, %cst_71 {dimension_numbers = #tpu.dot_dimension_numbers<[1], [0], [0], [1], [0, 0, 1, 1], [], []>} : vector<1x16xf32>, vector<16x120xf32>, vector<1x120xf32> -> vector<1x120xf32>
    %121 = arith.addf %116, %120 : vector<1x120xf32>
    %122 = vector.extract_strided_slice %111 {offsets = [2, 0], sizes = [1, 16], strides = [1, 1]} : vector<5x16xf32> to vector<1x16xf32>
    %c17 = arith.constant 17 : index
    %c0_72 = arith.constant 0 : index
    %c0_73 = arith.constant 0 : index
    %123 = vector.load %arg6[%c17, %c0_72, %c0_73] : memref<25x16x120xf32, #tpu.memory_space<vmem>>, vector<1x16x120xf32>
    %124 = vector.shape_cast %123 : vector<1x16x120xf32> to vector<16x120xf32>
    %cst_74 = arith.constant dense<0.000000e+00> : vector<1x120xf32>
    %125 = tpu.matmul %122, %124, %cst_74 {dimension_numbers = #tpu.dot_dimension_numbers<[1], [0], [0], [1], [0, 0, 1, 1], [], []>} : vector<1x16xf32>, vector<16x120xf32>, vector<1x120xf32> -> vector<1x120xf32>
    %126 = arith.addf %121, %125 : vector<1x120xf32>
    %127 = vector.extract_strided_slice %111 {offsets = [3, 0], sizes = [1, 16], strides = [1, 1]} : vector<5x16xf32> to vector<1x16xf32>
    %c18 = arith.constant 18 : index
    %c0_75 = arith.constant 0 : index
    %c0_76 = arith.constant 0 : index
    %128 = vector.load %arg6[%c18, %c0_75, %c0_76] : memref<25x16x120xf32, #tpu.memory_space<vmem>>, vector<1x16x120xf32>
    %129 = vector.shape_cast %128 : vector<1x16x120xf32> to vector<16x120xf32>
    %cst_77 = arith.constant dense<0.000000e+00> : vector<1x120xf32>
    %130 = tpu.matmul %127, %129, %cst_77 {dimension_numbers = #tpu.dot_dimension_numbers<[1], [0], [0], [1], [0, 0, 1, 1], [], []>} : vector<1x16xf32>, vector<16x120xf32>, vector<1x120xf32> -> vector<1x120xf32>
    %131 = arith.addf %126, %130 : vector<1x120xf32>
    %132 = vector.extract_strided_slice %111 {offsets = [4, 0], sizes = [1, 16], strides = [1, 1]} : vector<5x16xf32> to vector<1x16xf32>
    %c19 = arith.constant 19 : index
    %c0_78 = arith.constant 0 : index
    %c0_79 = arith.constant 0 : index
    %133 = vector.load %arg6[%c19, %c0_78, %c0_79] : memref<25x16x120xf32, #tpu.memory_space<vmem>>, vector<1x16x120xf32>
    %134 = vector.shape_cast %133 : vector<1x16x120xf32> to vector<16x120xf32>
    %cst_80 = arith.constant dense<0.000000e+00> : vector<1x120xf32>
    %135 = tpu.matmul %132, %134, %cst_80 {dimension_numbers = #tpu.dot_dimension_numbers<[1], [0], [0], [1], [0, 0, 1, 1], [], []>} : vector<1x16xf32>, vector<16x120xf32>, vector<1x120xf32> -> vector<1x120xf32>
    %136 = arith.addf %131, %135 : vector<1x120xf32>
    %c4_81 = arith.constant 4 : index
    %c0_82 = arith.constant 0 : index
    %c0_83 = arith.constant 0 : index
    %137 = vector.load %arg14[%c4_81, %c0_82, %c0_83] : memref<5x5x16xf32, #tpu.memory_space<vmem>>, vector<1x5x16xf32>
    %138 = vector.shape_cast %137 : vector<1x5x16xf32> to vector<5x16xf32>
    %139 = vector.extract_strided_slice %138 {offsets = [0, 0], sizes = [1, 16], strides = [1, 1]} : vector<5x16xf32> to vector<1x16xf32>
    %c20 = arith.constant 20 : index
    %c0_84 = arith.constant 0 : index
    %c0_85 = arith.constant 0 : index
    %140 = vector.load %arg6[%c20, %c0_84, %c0_85] : memref<25x16x120xf32, #tpu.memory_space<vmem>>, vector<1x16x120xf32>
    %141 = vector.shape_cast %140 : vector<1x16x120xf32> to vector<16x120xf32>
    %cst_86 = arith.constant dense<0.000000e+00> : vector<1x120xf32>
    %142 = tpu.matmul %139, %141, %cst_86 {dimension_numbers = #tpu.dot_dimension_numbers<[1], [0], [0], [1], [0, 0, 1, 1], [], []>} : vector<1x16xf32>, vector<16x120xf32>, vector<1x120xf32> -> vector<1x120xf32>
    %143 = arith.addf %136, %142 : vector<1x120xf32>
    %144 = vector.extract_strided_slice %138 {offsets = [1, 0], sizes = [1, 16], strides = [1, 1]} : vector<5x16xf32> to vector<1x16xf32>
    %c21 = arith.constant 21 : index
    %c0_87 = arith.constant 0 : index
    %c0_88 = arith.constant 0 : index
    %145 = vector.load %arg6[%c21, %c0_87, %c0_88] : memref<25x16x120xf32, #tpu.memory_space<vmem>>, vector<1x16x120xf32>
    %146 = vector.shape_cast %145 : vector<1x16x120xf32> to vector<16x120xf32>
    %cst_89 = arith.constant dense<0.000000e+00> : vector<1x120xf32>
    %147 = tpu.matmul %144, %146, %cst_89 {dimension_numbers = #tpu.dot_dimension_numbers<[1], [0], [0], [1], [0, 0, 1, 1], [], []>} : vector<1x16xf32>, vector<16x120xf32>, vector<1x120xf32> -> vector<1x120xf32>
    %148 = arith.addf %143, %147 : vector<1x120xf32>
    %149 = vector.extract_strided_slice %138 {offsets = [2, 0], sizes = [1, 16], strides = [1, 1]} : vector<5x16xf32> to vector<1x16xf32>
    %c22 = arith.constant 22 : index
    %c0_90 = arith.constant 0 : index
    %c0_91 = arith.constant 0 : index
    %150 = vector.load %arg6[%c22, %c0_90, %c0_91] : memref<25x16x120xf32, #tpu.memory_space<vmem>>, vector<1x16x120xf32>
    %151 = vector.shape_cast %150 : vector<1x16x120xf32> to vector<16x120xf32>
    %cst_92 = arith.constant dense<0.000000e+00> : vector<1x120xf32>
    %152 = tpu.matmul %149, %151, %cst_92 {dimension_numbers = #tpu.dot_dimension_numbers<[1], [0], [0], [1], [0, 0, 1, 1], [], []>} : vector<1x16xf32>, vector<16x120xf32>, vector<1x120xf32> -> vector<1x120xf32>
    %153 = arith.addf %148, %152 : vector<1x120xf32>
    %154 = vector.extract_strided_slice %138 {offsets = [3, 0], sizes = [1, 16], strides = [1, 1]} : vector<5x16xf32> to vector<1x16xf32>
    %c23 = arith.constant 23 : index
    %c0_93 = arith.constant 0 : index
    %c0_94 = arith.constant 0 : index
    %155 = vector.load %arg6[%c23, %c0_93, %c0_94] : memref<25x16x120xf32, #tpu.memory_space<vmem>>, vector<1x16x120xf32>
    %156 = vector.shape_cast %155 : vector<1x16x120xf32> to vector<16x120xf32>
    %cst_95 = arith.constant dense<0.000000e+00> : vector<1x120xf32>
    %157 = tpu.matmul %154, %156, %cst_95 {dimension_numbers = #tpu.dot_dimension_numbers<[1], [0], [0], [1], [0, 0, 1, 1], [], []>} : vector<1x16xf32>, vector<16x120xf32>, vector<1x120xf32> -> vector<1x120xf32>
    %158 = arith.addf %153, %157 : vector<1x120xf32>
    %159 = vector.extract_strided_slice %138 {offsets = [4, 0], sizes = [1, 16], strides = [1, 1]} : vector<5x16xf32> to vector<1x16xf32>
    %c24 = arith.constant 24 : index
    %c0_96 = arith.constant 0 : index
    %c0_97 = arith.constant 0 : index
    %160 = vector.load %arg6[%c24, %c0_96, %c0_97] : memref<25x16x120xf32, #tpu.memory_space<vmem>>, vector<1x16x120xf32>
    %161 = vector.shape_cast %160 : vector<1x16x120xf32> to vector<16x120xf32>
    %cst_98 = arith.constant dense<0.000000e+00> : vector<1x120xf32>
    %162 = tpu.matmul %159, %161, %cst_98 {dimension_numbers = #tpu.dot_dimension_numbers<[1], [0], [0], [1], [0, 0, 1, 1], [], []>} : vector<1x16xf32>, vector<16x120xf32>, vector<1x120xf32> -> vector<1x120xf32>
    %163 = arith.addf %158, %162 : vector<1x120xf32>
    %c0_99 = arith.constant 0 : index
    %c0_100 = arith.constant 0 : index
    %164 = vector.load %arg7[%c0_99, %c0_100] : memref<1x120xf32, #tpu.memory_space<vmem>>, vector<1x120xf32>
    %165 = arith.addf %163, %164 : vector<1x120xf32>
    %166 = math.tanh %165 : vector<1x120xf32>
    %c0_101 = arith.constant 0 : index
    %c0_102 = arith.constant 0 : index
    %167 = vector.load %arg8[%c0_101, %c0_102] : memref<120x84xf32, #tpu.memory_space<vmem>>, vector<120x84xf32>
    %cst_103 = arith.constant dense<0.000000e+00> : vector<1x84xf32>
    %168 = tpu.matmul %166, %167, %cst_103 {dimension_numbers = #tpu.dot_dimension_numbers<[1], [0], [0], [1], [0, 0, 1, 1], [], []>} : vector<1x120xf32>, vector<120x84xf32>, vector<1x84xf32> -> vector<1x84xf32>
    %c0_104 = arith.constant 0 : index
    %c0_105 = arith.constant 0 : index
    %169 = vector.load %arg9[%c0_104, %c0_105] : memref<1x84xf32, #tpu.memory_space<vmem>>, vector<1x84xf32>
    %170 = arith.addf %168, %169 : vector<1x84xf32>
    %171 = math.tanh %170 : vector<1x84xf32>
    %c0_106 = arith.constant 0 : index
    %c0_107 = arith.constant 0 : index
    %172 = vector.load %arg10[%c0_106, %c0_107] : memref<84x10xf32, #tpu.memory_space<vmem>>, vector<84x10xf32>
    %cst_108 = arith.constant dense<0.000000e+00> : vector<1x10xf32>
    %173 = tpu.matmul %171, %172, %cst_108 {dimension_numbers = #tpu.dot_dimension_numbers<[1], [0], [0], [1], [0, 0, 1, 1], [], []>} : vector<1x84xf32>, vector<84x10xf32>, vector<1x10xf32> -> vector<1x10xf32>
    %c0_109 = arith.constant 0 : index
    %c0_110 = arith.constant 0 : index
    %174 = vector.load %arg11[%c0_109, %c0_110] : memref<1x10xf32, #tpu.memory_space<vmem>>, vector<1x10xf32>
    %175 = arith.addf %173, %174 : vector<1x10xf32>
    %cst_111 = arith.constant dense<0xFF800000> : vector<1xf32>
    %176 = vector.multi_reduction <maximumf>, %175, %cst_111 [1] : vector<1x10xf32> to vector<1xf32>
    %177 = vector.shape_cast %176 : vector<1xf32> to vector<1x1xf32>
    %178 = vector.broadcast %177 : vector<1x1xf32> to vector<1x10xf32>
    %179 = arith.subf %175, %178 : vector<1x10xf32>
    %180 = math.exp %179 : vector<1x10xf32>
    %cst_112 = arith.constant dense<0.000000e+00> : vector<1xf32>
    %181 = vector.multi_reduction <add>, %180, %cst_112 [1] : vector<1x10xf32> to vector<1xf32>
    %182 = vector.shape_cast %181 : vector<1xf32> to vector<1x1xf32>
    %183 = tpu.reciprocal %182 {approx = true} : vector<1x1xf32> -> vector<1x1xf32>
    %184 = vector.broadcast %183 : vector<1x1xf32> to vector<1x10xf32>
    %185 = arith.mulf %180, %184 : vector<1x10xf32>
    %c0_113 = arith.constant 0 : index
    %c0_114 = arith.constant 0 : index
    %c0_115 = arith.constant 0 : index
    %186 = vector.load %arg12[%c0_113, %c0_114, %c0_115] : memref<1x1x10xf32, #tpu.memory_space<vmem>>, vector<1x1x10xf32>
    %187 = vector.shape_cast %186 : vector<1x1x10xf32> to vector<1x10xf32>
    %188 = vector.shape_cast %185 : vector<1x10xf32> to vector<1x1x10xf32>
    tpu.vector_store %arg12[%c0_113, %c0_114, %c0_115], %188 {strides = array<i32>} : memref<1x1x10xf32, #tpu.memory_space<vmem>>, vector<1x1x10xf32>,
    return
  }
  func.func @transform_0(%arg0: i32) -> (i32, i32, i32, i32) {
    %c0_i32 = arith.constant 0 : i32
    %c0_i32_0 = arith.constant 0 : i32
    %c0_i32_1 = arith.constant 0 : i32
    %c0_i32_2 = arith.constant 0 : i32
    return %arg0, %c0_i32, %c0_i32_0, %c0_i32_1 : i32, i32, i32, i32
  }
  func.func @transform_1(%arg0: i32) -> (i32, i32, i32) {
    %c0_i32 = arith.constant 0 : i32
    %c0_i32_0 = arith.constant 0 : i32
    %c0_i32_1 = arith.constant 0 : i32
    %c0_i32_2 = arith.constant 0 : i32
    return %c0_i32, %c0_i32_0, %c0_i32_1 : i32, i32, i32
  }
  func.func @transform_2(%arg0: i32) -> (i32, i32) {
    %c0_i32 = arith.constant 0 : i32
    %c0_i32_0 = arith.constant 0 : i32
    %c0_i32_1 = arith.constant 0 : i32
    return %c0_i32, %c0_i32_0 : i32, i32
  }
  func.func @transform_3(%arg0: i32) -> (i32, i32, i32) {
    %c0_i32 = arith.constant 0 : i32
    %c0_i32_0 = arith.constant 0 : i32
    %c0_i32_1 = arith.constant 0 : i32
    %c0_i32_2 = arith.constant 0 : i32
    return %c0_i32, %c0_i32_0, %c0_i32_1 : i32, i32, i32
  }
  func.func @transform_4(%arg0: i32) -> (i32, i32) {
    %c0_i32 = arith.constant 0 : i32
    %c0_i32_0 = arith.constant 0 : i32
    %c0_i32_1 = arith.constant 0 : i32
    return %c0_i32, %c0_i32_0 : i32, i32
  }
  func.func @transform_5(%arg0: i32) -> (i32, i32, i32) {
    %c0_i32 = arith.constant 0 : i32
    %c0_i32_0 = arith.constant 0 : i32
    %c0_i32_1 = arith.constant 0 : i32
    %c0_i32_2 = arith.constant 0 : i32
    return %c0_i32, %c0_i32_0, %c0_i32_1 : i32, i32, i32
  }
  func.func @transform_6(%arg0: i32) -> (i32, i32) {
    %c0_i32 = arith.constant 0 : i32
    %c0_i32_0 = arith.constant 0 : i32
    %c0_i32_1 = arith.constant 0 : i32
    return %c0_i32, %c0_i32_0 : i32, i32
  }
  func.func @transform_7(%arg0: i32) -> (i32, i32) {
    %c0_i32 = arith.constant 0 : i32
    %c0_i32_0 = arith.constant 0 : i32
    %c0_i32_1 = arith.constant 0 : i32
    return %c0_i32, %c0_i32_0 : i32, i32
  }
  func.func @transform_8(%arg0: i32) -> (i32, i32) {
    %c0_i32 = arith.constant 0 : i32
    %c0_i32_0 = arith.constant 0 : i32
    %c0_i32_1 = arith.constant 0 : i32
    return %c0_i32, %c0_i32_0 : i32, i32
  }
  func.func @transform_9(%arg0: i32) -> (i32, i32) {
    %c0_i32 = arith.constant 0 : i32
    %c0_i32_0 = arith.constant 0 : i32
    %c0_i32_1 = arith.constant 0 : i32
    return %c0_i32, %c0_i32_0 : i32, i32
  }
  func.func @transform_10(%arg0: i32) -> (i32, i32) {
    %c0_i32 = arith.constant 0 : i32
    %c0_i32_0 = arith.constant 0 : i32
    %c0_i32_1 = arith.constant 0 : i32
    return %c0_i32, %c0_i32_0 : i32, i32
  }
  func.func @transform_11(%arg0: i32) -> (i32, i32, i32) {
    %c0_i32 = arith.constant 0 : i32
    %c0_i32_0 = arith.constant 0 : i32
    %c0_i32_1 = arith.constant 0 : i32
    return %arg0, %c0_i32, %c0_i32_0 : i32, i32, i32
  }
}

</mosaic_0001>

<llo_original>
// kernel: lenet5_forward.1
$region0: #{lenet5_forward.1}
  #allocation0 [shape = 'u32[]', space=smem, size = 0x4, offset = 0x4, fixed_abs, tag = 'smem constant byte address 0x4 - core index']
  #allocation1 [shape = 'u32[144,128]{1,0:T(1,128)}', space=vmem, size = 0x12000, scoped, tag = 'internal scratch']
  #allocation2 [shape = 'f32[14,14,6]{2,1,0:T(8,128)}', space=vmem, size = 0x1c000, scoped, tag = 'scratch operand']
  #allocation3 [shape = 'f32[5,5,16]{2,1,0:T(8,128)}', space=vmem, size = 0x5000, scoped, tag = 'scratch operand']
  %s0 = inlined_call_operand.vmem [shape: f32[2,32,32,1], index: 0, kind: input, shape index: {}]
  %s1 = inlined_call_operand.vmem [shape: f32[25,1,6], index: 1, kind: input, shape index: {}]
  %s2 = inlined_call_operand.vmem [shape: f32[1,6], index: 2, kind: input, shape index: {}]
  %s3 = inlined_call_operand.vmem [shape: f32[25,6,16], index: 3, kind: input, shape index: {}]
  %s4 = inlined_call_operand.vmem [shape: f32[1,16], index: 4, kind: input, shape index: {}]
  %s5 = inlined_call_operand.vmem [shape: f32[25,16,120], index: 5, kind: input, shape index: {}]
  %s6 = inlined_call_operand.vmem [shape: f32[1,120], index: 6, kind: input, shape index: {}]
  %s7 = inlined_call_operand.vmem [shape: f32[120,84], index: 7, kind: input, shape index: {}]
  %s8 = inlined_call_operand.vmem [shape: f32[1,84], index: 8, kind: input, shape index: {}]
  %s9 = inlined_call_operand.vmem [shape: f32[84,10], index: 9, kind: input, shape index: {}]
  %s10 = inlined_call_operand.vmem [shape: f32[1,10], index: 10, kind: input, shape index: {}]
  %s11 = inlined_call_operand.hbm [shape: f32[2,1,10], index: 11, kind: output, shape index: {}]
  %s12 = sld [smem:[#allocation0]]
  $region91: #{lenet5_forward.1} parent=0
    _
  %s14 = ssub.s32 1, %s12
  %s15 = scalar_select 0, %s14, %s12
  $region1: #{lenet5_forward.1} parent=0
    #allocation4 [shape = 'u8[1024]{0}', space=vmem, size = 0x400, scoped, tag = 'output window, operand 0']
    #allocation5 [shape = 's32[2]{0}', space=sflag, size = 0x8, scoped, tag = 'scoped memory for lenet5_forward.1']
    %16 = vsyncpa [#allocation5], 0
    %s17 = scalar_lea.sflag [#allocation5], 1
    %18 = vsyncpa %s17, 0
    loop: start=0, step=1, limit=4
    $region2: #{lenet5_forward.1} parent=1 // loop_pre_header
      _
    $region3: #{lenet5_forward.1} parent=1 // loop_header
      %s20 = sphi 0, %s24
      %p21 = scmp.ge.s32.totalorder %s20, 4
      %s30 = sphi 0, %s32
      %s33 = sphi 0, %s30
      %s34 = sphi 0, %s33
      %s50 = sphi 0, %s34
      %s54 = sphi 0, %s54
      %s56 = sphi 0, %s54
      %s57 = sphi 0, %s56
      %s71 = sphi 0, %s57
      %s75 = sphi 0, %s75
      %s77 = sphi 0, %s75
      %s78 = sphi 0, %s77
      %s92 = sphi 0, %s78
      %s96 = sphi 0, %s96
      %s98 = sphi 0, %s96
      %s99 = sphi 0, %s98
      %s113 = sphi 0, %s99
      %s117 = sphi 0, %s117
      %s119 = sphi 0, %s117
      %s120 = sphi 0, %s119
      %s134 = sphi 0, %s120
      %s138 = sphi 0, %s138
      %s140 = sphi 0, %s138
      %s141 = sphi 0, %s140
      %s155 = sphi 0, %s141
      %s159 = sphi 0, %s159
      %s161 = sphi 0, %s159
      %s162 = sphi 0, %s161
      %s176 = sphi 0, %s162
      %s180 = sphi 0, %s180
      %s182 = sphi 0, %s180
      %s183 = sphi 0, %s182
      %s197 = sphi 0, %s183
      %s201 = sphi 0, %s201
      %s203 = sphi 0, %s201
      %s204 = sphi 0, %s203
      %s218 = sphi 0, %s204
      %s222 = sphi 0, %s222
      %s224 = sphi 0, %s222
      %s225 = sphi 0, %s224
      %s239 = sphi 0, %s225
      %s243 = sphi 0, %s243
      %s245 = sphi 0, %s243
      %s246 = sphi 0, %s245
      %s260 = sphi 0, %s246
      %s266 = sphi 0, %s268
      %s269 = sphi 0, %s266
      %s270 = sphi 0, %s269
      %s286 = sphi 0, %s270
    $region4: #{lenet5_forward.1} parent=1 // loop_header_branch
      %23 = sbr.rel (%p21) target = $region8
    $region5: #{lenet5_forward.1} parent=1 // loop_body
      %s25 = ssub.s32 %s20, 1
      %s26 = ssub.s32 %s20, 2
      %s27 = sadd.s32 %s20, 1
      %s28 = ssub.s32 %s20, %s27
      %p29 = scmp.eq.s32.totalorder %s28, 0
      %s31 = sadd.s32 %s30, 1
      %s32 = scalar_select %p29, %s30, %s31
      %p35 = pneg %p29
      %p36 = scmp.eq.s32.totalorder %s20, 1
      %p37 = por %p35, %p36
      %p38 = scmp.ne.s32.totalorder %s30, %s33
      %p39 = scmp.eq.s32.totalorder %s20, 0
      %p40 = por %p38, %p39
      %p41 = scmp.ne.s32.totalorder %s30, %s33
      %p42 = scmp.eq.s32.totalorder %s25, 1
      %p43 = por %p41, %p42
      %p44 = scmp.ne.s32.totalorder %s33, %s34
      %p45 = scmp.eq.s32.totalorder %s25, 0
      %p46 = por %p44, %p45
      %p47 = scmp.ne.s32.totalorder %s33, %s34
      %p48 = scmp.eq.s32.totalorder %s26, 1
      %p49 = por %p47, %p48
      %p51 = scmp.ne.s32.totalorder %s34, %s50
      %p52 = scmp.eq.s32.totalorder %s26, 0
      %p53 = por %p51, %p52
      %s55 = sadd.s32 %s54, 1
      %p58 = scmp.eq.s32.totalorder %s20, 1
      %p59 = scmp.ne.s32.totalorder %s54, %s56
      %p60 = scmp.eq.s32.totalorder %s20, 0
      %p61 = por %p59, %p60
      %p62 = scmp.ne.s32.totalorder %s54, %s56
      %p63 = scmp.eq.s32.totalorder %s25, 1
      %p64 = por %p62, %p63
      %p65 = scmp.ne.s32.totalorder %s56, %s57
      %p66 = scmp.eq.s32.totalorder %s25, 0
      %p67 = por %p65, %p66
      %p68 = scmp.ne.s32.totalorder %s56, %s57
      %p69 = scmp.eq.s32.totalorder %s26, 1
      %p70 = por %p68, %p69
      %p72 = scmp.ne.s32.totalorder %s57, %s71
      %p73 = scmp.eq.s32.totalorder %s26, 0
      %p74 = por %p72, %p73
      %s76 = sadd.s32 %s75, 1
      %p79 = scmp.eq.s32.totalorder %s20, 1
      %p80 = scmp.ne.s32.totalorder %s75, %s77
      %p81 = scmp.eq.s32.totalorder %s20, 0
      %p82 = por %p80, %p81
      %p83 = scmp.ne.s32.totalorder %s75, %s77
      %p84 = scmp.eq.s32.totalorder %s25, 1
      %p85 = por %p83, %p84
      %p86 = scmp.ne.s32.totalorder %s77, %s78
      %p87 = scmp.eq.s32.totalorder %s25, 0
      %p88 = por %p86, %p87
      %p89 = scmp.ne.s32.totalorder %s77, %s78
      %p90 = scmp.eq.s32.totalorder %s26, 1
      %p91 = por %p89, %p90
      %p93 = scmp.ne.s32.totalorder %s78, %s92
      %p94 = scmp.eq.s32.totalorder %s26, 0
      %p95 = por %p93, %p94
      %s97 = sadd.s32 %s96, 1
      %p100 = scmp.eq.s32.totalorder %s20, 1
      %p101 = scmp.ne.s32.totalorder %s96, %s98
      %p102 = scmp.eq.s32.totalorder %s20, 0
      %p103 = por %p101, %p102
      %p104 = scmp.ne.s32.totalorder %s96, %s98
      %p105 = scmp.eq.s32.totalorder %s25, 1
      %p106 = por %p104, %p105
      %p107 = scmp.ne.s32.totalorder %s98, %s99
      %p108 = scmp.eq.s32.totalorder %s25, 0
      %p109 = por %p107, %p108
      %p110 = scmp.ne.s32.totalorder %s98, %s99
      %p111 = scmp.eq.s32.totalorder %s26, 1
      %p112 = por %p110, %p111
      %p114 = scmp.ne.s32.totalorder %s99, %s113
      %p115 = scmp.eq.s32.totalorder %s26, 0
      %p116 = por %p114, %p115
      %s118 = sadd.s32 %s117, 1
      %p121 = scmp.eq.s32.totalorder %s20, 1
      %p122 = scmp.ne.s32.totalorder %s117, %s119
      %p123 = scmp.eq.s32.totalorder %s20, 0
      %p124 = por %p122, %p123
      %p125 = scmp.ne.s32.totalorder %s117, %s119
      %p126 = scmp.eq.s32.totalorder %s25, 1
      %p127 = por %p125, %p126
      %p128 = scmp.ne.s32.totalorder %s119, %s120
      %p129 = scmp.eq.s32.totalorder %s25, 0
      %p130 = por %p128, %p129
      %p131 = scmp.ne.s32.totalorder %s119, %s120
      %p132 = scmp.eq.s32.totalorder %s26, 1
      %p133 = por %p131, %p132
      %p135 = scmp.ne.s32.totalorder %s120, %s134
      %p136 = scmp.eq.s32.totalorder %s26, 0
      %p137 = por %p135, %p136
      %s139 = sadd.s32 %s138, 1
      %p142 = scmp.eq.s32.totalorder %s20, 1
      %p143 = scmp.ne.s32.totalorder %s138, %s140
      %p144 = scmp.eq.s32.totalorder %s20, 0
      %p145 = por %p143, %p144
      %p146 = scmp.ne.s32.totalorder %s138, %s140
      %p147 = scmp.eq.s32.totalorder %s25, 1
      %p148 = por %p146, %p147
      %p149 = scmp.ne.s32.totalorder %s140, %s141
      %p150 = scmp.eq.s32.totalorder %s25, 0
      %p151 = por %p149, %p150
      %p152 = scmp.ne.s32.totalorder %s140, %s141
      %p153 = scmp.eq.s32.totalorder %s26, 1
      %p154 = por %p152, %p153
      %p156 = scmp.ne.s32.totalorder %s141, %s155
      %p157 = scmp.eq.s32.totalorder %s26, 0
      %p158 = por %p156, %p157
      %s160 = sadd.s32 %s159, 1
      %p163 = scmp.eq.s32.totalorder %s20, 1
      %p164 = scmp.ne.s32.totalorder %s159, %s161
      %p165 = scmp.eq.s32.totalorder %s20, 0
      %p166 = por %p164, %p165
      %p167 = scmp.ne.s32.totalorder %s159, %s161
      %p168 = scmp.eq.s32.totalorder %s25, 1
      %p169 = por %p167, %p168
      %p170 = scmp.ne.s32.totalorder %s161, %s162
      %p171 = scmp.eq.s32.totalorder %s25, 0
      %p172 = por %p170, %p171
      %p173 = scmp.ne.s32.totalorder %s161, %s162
      %p174 = scmp.eq.s32.totalorder %s26, 1
      %p175 = por %p173, %p174
      %p177 = scmp.ne.s32.totalorder %s162, %s176
      %p178 = scmp.eq.s32.totalorder %s26, 0
      %p179 = por %p177, %p178
      %s181 = sadd.s32 %s180, 1
      %p184 = scmp.eq.s32.totalorder %s20, 1
      %p185 = scmp.ne.s32.totalorder %s180, %s182
      %p186 = scmp.eq.s32.totalorder %s20, 0
      %p187 = por %p185, %p186
      %p188 = scmp.ne.s32.totalorder %s180, %s182
      %p189 = scmp.eq.s32.totalorder %s25, 1
      %p190 = por %p188, %p189
      %p191 = scmp.ne.s32.totalorder %s182, %s183
      %p192 = scmp.eq.s32.totalorder %s25, 0
      %p193 = por %p191, %p192
      %p194 = scmp.ne.s32.totalorder %s182, %s183
      %p195 = scmp.eq.s32.totalorder %s26, 1
      %p196 = por %p194, %p195
      %p198 = scmp.ne.s32.totalorder %s183, %s197
      %p199 = scmp.eq.s32.totalorder %s26, 0
      %p200 = por %p198, %p199
      %s202 = sadd.s32 %s201, 1
      %p205 = scmp.eq.s32.totalorder %s20, 1
      %p206 = scmp.ne.s32.totalorder %s201, %s203
      %p207 = scmp.eq.s32.totalorder %s20, 0
      %p208 = por %p206, %p207
      %p209 = scmp.ne.s32.totalorder %s201, %s203
      %p210 = scmp.eq.s32.totalorder %s25, 1
      %p211 = por %p209, %p210
      %p212 = scmp.ne.s32.totalorder %s203, %s204
      %p213 = scmp.eq.s32.totalorder %s25, 0
      %p214 = por %p212, %p213
      %p215 = scmp.ne.s32.totalorder %s203, %s204
      %p216 = scmp.eq.s32.totalorder %s26, 1
      %p217 = por %p215, %p216
      %p219 = scmp.ne.s32.totalorder %s204, %s218
      %p220 = scmp.eq.s32.totalorder %s26, 0
      %p221 = por %p219, %p220
      %s223 = sadd.s32 %s222, 1
      %p226 = scmp.eq.s32.totalorder %s20, 1
      %p227 = scmp.ne.s32.totalorder %s222, %s224
      %p228 = scmp.eq.s32.totalorder %s20, 0
      %p229 = por %p227, %p228
      %p230 = scmp.ne.s32.totalorder %s222, %s224
      %p231 = scmp.eq.s32.totalorder %s25, 1
      %p232 = por %p230, %p231
      %p233 = scmp.ne.s32.totalorder %s224, %s225
      %p234 = scmp.eq.s32.totalorder %s25, 0
      %p235 = por %p233, %p234
      %p236 = scmp.ne.s32.totalorder %s224, %s225
      %p237 = scmp.eq.s32.totalorder %s26, 1
      %p238 = por %p236, %p237
      %p240 = scmp.ne.s32.totalorder %s225, %s239
      %p241 = scmp.eq.s32.totalorder %s26, 0
      %p242 = por %p240, %p241
      %s244 = sadd.s32 %s243, 1
      %p247 = scmp.eq.s32.totalorder %s20, 1
      %p248 = scmp.ne.s32.totalorder %s243, %s245
      %p249 = scmp.eq.s32.totalorder %s20, 0
      %p250 = por %p248, %p249
      %p251 = scmp.ne.s32.totalorder %s243, %s245
      %p252 = scmp.eq.s32.totalorder %s25, 1
      %p253 = por %p251, %p252
      %p254 = scmp.ne.s32.totalorder %s245, %s246
      %p255 = scmp.eq.s32.totalorder %s25, 0
      %p256 = por %p254, %p255
      %p257 = scmp.ne.s32.totalorder %s245, %s246
      %p258 = scmp.eq.s32.totalorder %s26, 1
      %p259 = por %p257, %p258
      %p261 = scmp.ne.s32.totalorder %s246, %s260
      %p262 = scmp.eq.s32.totalorder %s26, 0
      %p263 = por %p261, %p262
      %s264 = ssub.s32 %s20, %s27
      %p265 = scmp.eq.s32.totalorder %s264, 0
      %s267 = sadd.s32 %s266, 1
      %s268 = scalar_select %p265, %s266, %s267
      %p271 = pneg %p265
      %p272 = scmp.eq.s32.totalorder %s20, 1
      %p273 = por %p271, %p272
      %p274 = scmp.ne.s32.totalorder %s266, %s269
      %p275 = scmp.eq.s32.totalorder %s20, 0
      %p276 = por %p274, %p275
      %p277 = scmp.ne.s32.totalorder %s266, %s269
      %p278 = scmp.eq.s32.totalorder %s25, 1
      %p279 = por %p277, %p278
      %p280 = scmp.ne.s32.totalorder %s269, %s270
      %p281 = scmp.eq.s32.totalorder %s25, 0
      %p282 = por %p280, %p281
      %p283 = scmp.ne.s32.totalorder %s269, %s270
      %p284 = scmp.eq.s32.totalorder %s26, 1
      %p285 = por %p283, %p284
      %p287 = scmp.ne.s32.totalorder %s270, %s286
      %p288 = scmp.eq.s32.totalorder %s26, 0
      %p289 = por %p287, %p288
      %p290 = scmp.le.s32.totalorder 1, %s20
      %p291 = scmp.lt.s32.totalorder %s20, 3
      %p292 = pnand %p290, %p291
      %p293 = pneg %p292
      // Predicated region
      $region9: #{lenet5_forward.1} parent=5 // pred_check
        _
      $region10: #{lenet5_forward.1} parent=5 // pred_check_branch
        %295 = sbr.rel (%p292) target = $region12
      $region11: #{lenet5_forward.1} parent=5 // pred_region
        %s296 = ssub.s32 %s20, 1
        // Predicated region
        $region13: #{lenet5_forward.1} parent=11 // pred_check
          %p297 = pneg %p67
        $region14: #{lenet5_forward.1} parent=11 // pred_check_branch
          %299 = sbr.rel (%p297) target = $region16
        $region15: #{lenet5_forward.1} parent=11 // pred_region
          _
        $region16: #{lenet5_forward.1} parent=11 // pred_fallthru
          _
        // Predicated region
        $region17: #{lenet5_forward.1} parent=11 // pred_check
          %p300 = pneg %p88
        $region18: #{lenet5_forward.1} parent=11 // pred_check_branch
          %302 = sbr.rel (%p300) target = $region20
        $region19: #{lenet5_forward.1} parent=11 // pred_region
          _
        $region20: #{lenet5_forward.1} parent=11 // pred_fallthru
          _
        // Predicated region
        $region21: #{lenet5_forward.1} parent=11 // pred_check
          %p303 = pneg %p109
        $region22: #{lenet5_forward.1} parent=11 // pred_check_branch
          %305 = sbr.rel (%p303) target = $region24
        $region23: #{lenet5_forward.1} parent=11 // pred_region
          _
        $region24: #{lenet5_forward.1} parent=11 // pred_fallthru
          _
        // Predicated region
        $region25: #{lenet5_forward.1} parent=11 // pred_check
          %p306 = pneg %p130
        $region26: #{lenet5_forward.1} parent=11 // pred_check_branch
          %308 = sbr.rel (%p306) target = $region28
        $region27: #{lenet5_forward.1} parent=11 // pred_region
          _
        $region28: #{lenet5_forward.1} parent=11 // pred_fallthru
          _
        // Predicated region
        $region29: #{lenet5_forward.1} parent=11 // pred_check
          %p309 = pneg %p151
        $region30: #{lenet5_forward.1} parent=11 // pred_check_branch
          %311 = sbr.rel (%p309) target = $region32
        $region31: #{lenet5_forward.1} parent=11 // pred_region
          _
        $region32: #{lenet5_forward.1} parent=11 // pred_fallthru
          _
        // Predicated region
        $region33: #{lenet5_forward.1} parent=11 // pred_check
          %p312 = pneg %p172
        $region34: #{lenet5_forward.1} parent=11 // pred_check_branch
          %314 = sbr.rel (%p312) target = $region36
        $region35: #{lenet5_forward.1} parent=11 // pred_region
          _
        $region36: #{lenet5_forward.1} parent=11 // pred_fallthru
          _
        // Predicated region
        $region37: #{lenet5_forward.1} parent=11 // pred_check
          %p315 = pneg %p193
        $region38: #{lenet5_forward.1} parent=11 // pred_check_branch
          %317 = sbr.rel (%p315) target = $region40
        $region39: #{lenet5_forward.1} parent=11 // pred_region
          _
        $region40: #{lenet5_forward.1} parent=11 // pred_fallthru
          _
        // Predicated region
        $region41: #{lenet5_forward.1} parent=11 // pred_check
          %p318 = pneg %p214
        $region42: #{lenet5_forward.1} parent=11 // pred_check_branch
          %320 = sbr.rel (%p318) target = $region44
        $region43: #{lenet5_forward.1} parent=11 // pred_region
          _
        $region44: #{lenet5_forward.1} parent=11 // pred_fallthru
          _
        // Predicated region
        $region45: #{lenet5_forward.1} parent=11 // pred_check
          %p321 = pneg %p235
        $region46: #{lenet5_forward.1} parent=11 // pred_check_branch
          %323 = sbr.rel (%p321) target = $region48
        $region47: #{lenet5_forward.1} parent=11 // pred_region
          _
        $region48: #{lenet5_forward.1} parent=11 // pred_fallthru
          _
        // Predicated region
        $region49: #{lenet5_forward.1} parent=11 // pred_check
          %p324 = pneg %p256
        $region50: #{lenet5_forward.1} parent=11 // pred_check_branch
          %326 = sbr.rel (%p324) target = $region52
        $region51: #{lenet5_forward.1} parent=11 // pred_region
          _
        $region52: #{lenet5_forward.1} parent=11 // pred_fallthru
          _
      $region12: #{lenet5_forward.1} parent=5 // pred_fallthru
        _
      %p327 = scmp.lt.s32.totalorder %s20, 2
      // Predicated region
      $region53: #{lenet5_forward.1} parent=5 // pred_check
        %p328 = pneg %p327
      $region54: #{lenet5_forward.1} parent=5 // pred_check_branch
        %330 = sbr.rel (%p328) target = $region56
      $region55: #{lenet5_forward.1} parent=5 // pred_region
        // Predicated region
        $region57: #{lenet5_forward.1} parent=55 // pred_check
          %p331 = pneg %p40
        $region58: #{lenet5_forward.1} parent=55 // pred_check_branch
          %333 = sbr.rel (%p331) target = $region60
        $region59: #{lenet5_forward.1} parent=55 // pred_region
          %p334 = scmp.lt.s32.totalorder %s20, 1
          %s335 = scalar_select %p334, %s20, 1
          %s336 = smul.addr %s335, 128
          %s337 = smul.addr %s336, 8
          %s338 = scalar_lea.vmem %s0, %s337
        $region60: #{lenet5_forward.1} parent=55 // pred_fallthru
          _
      $region56: #{lenet5_forward.1} parent=5 // pred_fallthru
        _
      %p339 = scmp.le.s32.totalorder 1, %s20
      %p340 = scmp.lt.s32.totalorder %s20, 3
      %p341 = pnand %p339, %p340
      %p342 = pneg %p341
      // Predicated region
      $region61: #{lenet5_forward.1} parent=5 // pred_check
        _
      $region62: #{lenet5_forward.1} parent=5 // pred_check_branch
        %344 = sbr.rel (%p341) target = $region64
      $region63: #{lenet5_forward.1} parent=5 // pred_region
        %s345 = ssub.s32 %s20, 1
        %p346 = scmp.lt.s32.totalorder %s25, 1
        %s347 = scalar_select %p346, %s25, 1
        %s348 = smul.addr %s347, 128
        %s349 = smul.addr %s348, 8
        %s350 = scalar_lea.vmem %s0, %s349
        %p351 = pneg %p46
        %p352 = pneg %p43
        %p353 = pneg %p67
        %p354 = pneg %p64
        %p355 = pneg %p88
        %p356 = pneg %p85
        %p357 = pneg %p109
        %p358 = pneg %p106
        %p359 = pneg %p130
        %p360 = pneg %p127
        %p361 = pneg %p151
        %p362 = pneg %p148
        %p363 = pneg %p172
        %p364 = pneg %p169
        %p365 = pneg %p193
        %p366 = pneg %p190
        %p367 = pneg %p214
        %p368 = pneg %p211
        %p369 = pneg %p235
        %p370 = pneg %p232
        %p371 = pneg %p256
        %p372 = pneg %p253
        %p373 = pneg %p282
        %p374 = pneg %p279
        %s375 = sand.u32 %s269, 1
        %s376 = scalar_lea.sflag [#allocation5], %s375
        %s377 = sand.u32 %s269, 1
        %s378 = scalar_lea.vmem [#allocation4], %s377
        %p379 = scmp.lt.s32.totalorder %s25, 1
        %s380 = scalar_select %p379, %s25, 1
        %s381 = smul.addr %s380, 128
        %s382 = smul.addr %s381, 8
        %s383 = scalar_lea.vmem %s0, %s382
        %v384 = vlaneseq
        %v385 = vshrl.u32 %v384, 7
        %v386 = vadd.s32 %v385, 8
        %v387 = vlaneseq
        %v388 = vand.u32 %v387, 127
        %v389 = vmul.u32 %v385, 2
        %v390 = vmul.u32 %v386, 2
        %vm391 = vcmp.eq.s32.totalorder %v388, %v389
        %vm392 = vcmp.eq.s32.totalorder %v388, %v390
        %v393 = vadd.s32 %v389, 1
        %v394 = vadd.s32 %v390, 1
        %vm395 = vcmp.eq.s32.totalorder %v388, %v393
        %vm396 = vcmp.eq.s32.totalorder %v388, %v394
        %vm397 = vmor %vm391, %vm395
        %vm398 = vmor %vm392, %vm396
        %v399 = vsel %vm397, 1, 0
        %v400 = vsel %vm398, 1, 0
        %v401 = vcvt.s32.f32 %v399
        %v402 = vcvt.s32.f32 %v400
        loop: start=0, step=1, limit=14
        $region65: #{lenet5_forward.1} parent=63 // loop_pre_header
          _
        $region66: #{lenet5_forward.1} parent=63 // loop_header
          %s404 = sphi 0, %s408
          %p405 = scmp.ge.s32.totalorder %s404, 14
        $region67: #{lenet5_forward.1} parent=63 // loop_header_branch
          %407 = sbr.rel (%p405) target = $region71
        $region68: #{lenet5_forward.1} parent=63 // loop_body
          %s409 = smul.u32 %s404, 2
          %s410 = smul.u32 %s409, 32
          %s411 = scalar_lea.vmem %s383, %s410
          %v412 = vld [vmem:[%s411] sm:$0xff]
          %v413 = vld [vmem:[%s411 + $0x8] sm:$0xff]
          %v414 = vld [vmem:[%s411 + $0x10] sm:$0xff]
          %v415 = vld [vmem:[%s411 + $0x18] sm:$0xff]
          %v416 = vld [vmem:[%s1] sm:$0x1]
          %418 = vset.pattern.permute.xlu0 0
          %419 = vperm.xlu0 %418, %v412
          %v420 = vpop.permute.xlu0 %419
          %423 = vset.pattern.permute.xlu0 0
          %424 = vperm.xlu0 %423, %v413
          %v425 = vpop.permute.xlu0 %424
          %428 = vset.pattern.permute.xlu0 0
          %429 = vperm.xlu0 %428, %v414
          %v430 = vpop.permute.xlu0 %429
          %433 = vset.pattern.permute.xlu0 0
          %434 = vperm.xlu0 %433, %v415
          %v435 = vpop.permute.xlu0 %434
          %v438 = vlaneseq
          %v439 = vshrl.u32 %v438, 7
          %v440 = vsub.s32 0, %v439
          %v441 = vrot.slane %v416, %v440
          %v443 = vmul.f32 %v420, %v441
          %v444 = vmul.f32 %v425, %v441
          %v445 = vmul.f32 %v430, %v441
          %v446 = vmul.f32 %v435, %v441
          %v447 = vadd.f32 %v443, 0.0
          %v448 = vadd.f32 %v444, 0.0
          %v449 = vadd.f32 %v445, 0.0
          %v450 = vadd.f32 %v446, 0.0
          %s451 = scalar_lea.vmem %s1, 1
          %v452 = vld [vmem:[%s451] sm:$0x1]
          %v454 = vlaneseq
          %v455 = vshrl.u32 %v454, 7
          %v456 = vsub.s32 0, %v455
          %v457 = vrot.slane %v452, %v456
          %v459 = vmul.f32 %v420, %v457
          %v460 = vmul.f32 %v425, %v457
          %v461 = vmul.f32 %v430, %v457
          %v462 = vmul.f32 %v435, %v457
          %vm467 = vcmask 1046528
          %v468 = vrot.slane %v459, 1
          %v469 = vrot.slane %v460, 1
          %v470 = vsel %vm467, %v468, %v469
          %v471 = vrot.slane %v461, 1
          %v472 = vsel %vm467, %v469, %v471
          %v473 = vrot.slane %v462, 1
          %v474 = vsel %vm467, %v471, %v473
          %v479 = vadd.f32 %v447, %v470
          %v480 = vadd.f32 %v448, %v472
          %v481 = vadd.f32 %v449, %v474
          %v482 = vadd.f32 %v450, %v473
          %s483 = scalar_lea.vmem %s1, 2
          %v484 = vld [vmem:[%s483] sm:$0x1]
          %v486 = vlaneseq
          %v487 = vshrl.u32 %v486, 7
          %v488 = vsub.s32 0, %v487
          %v489 = vrot.slane %v484, %v488
          %v491 = vmul.f32 %v420, %v489
          %v492 = vmul.f32 %v425, %v489
          %v493 = vmul.f32 %v430, %v489
          %v494 = vmul.f32 %v435, %v489
          %vm499 = vcmask 1045504
          %v500 = vrot.slane %v491, 2
          %v501 = vrot.slane %v492, 2
          %v502 = vsel %vm499, %v500, %v501
          %v503 = vrot.slane %v493, 2
          %v504 = vsel %vm499, %v501, %v503
          %v505 = vrot.slane %v494, 2
          %v506 = vsel %vm499, %v503, %v505
          %v511 = vadd.f32 %v479, %v502
          %v512 = vadd.f32 %v480, %v504
          %v513 = vadd.f32 %v481, %v506
          %v514 = vadd.f32 %v482, %v505
          %s515 = scalar_lea.vmem %s1, 3
          %v516 = vld [vmem:[%s515] sm:$0x1]
          %v518 = vlaneseq
          %v519 = vshrl.u32 %v518, 7
          %v520 = vsub.s32 0, %v519
          %v521 = vrot.slane %v516, %v520
          %v523 = vmul.f32 %v420, %v521
          %v524 = vmul.f32 %v425, %v521
          %v525 = vmul.f32 %v430, %v521
          %v526 = vmul.f32 %v435, %v521
          %vm531 = vcmask 1044480
          %v532 = vrot.slane %v523, 3
          %v533 = vrot.slane %v524, 3
          %v534 = vsel %vm531, %v532, %v533
          %v535 = vrot.slane %v525, 3
          %v536 = vsel %vm531, %v533, %v535
          %v537 = vrot.slane %v526, 3
          %v538 = vsel %vm531, %v535, %v537
          %v543 = vadd.f32 %v511, %v534
          %v544 = vadd.f32 %v512, %v536
          %v545 = vadd.f32 %v513, %v538
          %v546 = vadd.f32 %v514, %v537
          %s547 = scalar_lea.vmem %s1, 4
          %v548 = vld [vmem:[%s547] sm:$0x1]
          %v550 = vlaneseq
          %v551 = vshrl.u32 %v550, 7
          %v552 = vsub.s32 0, %v551
          %v553 = vrot.slane %v548, %v552
          %v555 = vmul.f32 %v420, %v553
          %v556 = vmul.f32 %v425, %v553
          %v557 = vmul.f32 %v430, %v553
          %v558 = vmul.f32 %v435, %v553
          %vm563 = vcmask 1043456
          %v564 = vrot.slane %v555, 4
          %v565 = vrot.slane %v556, 4
          %v566 = vsel %vm563, %v564, %v565
          %v567 = vrot.slane %v557, 4
          %v568 = vsel %vm563, %v565, %v567
          %v569 = vrot.slane %v558, 4
          %v570 = vsel %vm563, %v567, %v569
          %v575 = vadd.f32 %v543, %v566
          %v576 = vadd.f32 %v544, %v568
          %v577 = vadd.f32 %v545, %v570
          %v578 = vadd.f32 %v546, %v569
          %s579 = sadd.s32 %s409, 1
          %s580 = smul.u32 %s579, 32
          %s581 = scalar_lea.vmem %s383, %s580
          %v582 = vld [vmem:[%s581] sm:$0xff]
          %v583 = vld [vmem:[%s581 + $0x8] sm:$0xff]
          %v584 = vld [vmem:[%s581 + $0x10] sm:$0xff]
          %v585 = vld [vmem:[%s581 + $0x18] sm:$0xff]
          %s586 = scalar_lea.vmem %s1, 5
          %v587 = vld [vmem:[%s586] sm:$0x1]
          %589 = vset.pattern.permute.xlu0 0
          %590 = vperm.xlu0 %589, %v582
          %v591 = vpop.permute.xlu0 %590
          %594 = vset.pattern.permute.xlu0 0
          %595 = vperm.xlu0 %594, %v583
          %v596 = vpop.permute.xlu0 %595
          %599 = vset.pattern.permute.xlu0 0
          %600 = vperm.xlu0 %599, %v584
          %v601 = vpop.permute.xlu0 %600
          %604 = vset.pattern.permute.xlu0 0
          %605 = vperm.xlu0 %604, %v585
          %v606 = vpop.permute.xlu0 %605
          %v609 = vlaneseq
          %v610 = vshrl.u32 %v609, 7
          %v611 = vsub.s32 0, %v610
          %v612 = vrot.slane %v587, %v611
          %v614 = vmul.f32 %v591, %v612
          %v615 = vmul.f32 %v596, %v612
          %v616 = vmul.f32 %v601, %v612
          %v617 = vmul.f32 %v606, %v612
          %v618 = vadd.f32 %v575, %v614
          %v619 = vadd.f32 %v576, %v615
          %v620 = vadd.f32 %v577, %v616
          %v621 = vadd.f32 %v578, %v617
          %s622 = scalar_lea.vmem %s1, 6
          %v623 = vld [vmem:[%s622] sm:$0x1]
          %v625 = vlaneseq
          %v626 = vshrl.u32 %v625, 7
          %v627 = vsub.s32 0, %v626
          %v628 = vrot.slane %v623, %v627
          %v630 = vmul.f32 %v591, %v628
          %v631 = vmul.f32 %v596, %v628
          %v632 = vmul.f32 %v601, %v628
          %v633 = vmul.f32 %v606, %v628
          %v638 = vrot.slane %v630, 1
          %v639 = vrot.slane %v631, 1
          %v640 = vsel %vm467, %v638, %v639
          %v641 = vrot.slane %v632, 1
          %v642 = vsel %vm467, %v639, %v641
          %v643 = vrot.slane %v633, 1
          %v644 = vsel %vm467, %v641, %v643
          %v649 = vadd.f32 %v618, %v640
          %v650 = vadd.f32 %v619, %v642
          %v651 = vadd.f32 %v620, %v644
          %v652 = vadd.f32 %v621, %v643
          %s653 = scalar_lea.vmem %s1, 7
          %v654 = vld [vmem:[%s653] sm:$0x1]
          %v656 = vlaneseq
          %v657 = vshrl.u32 %v656, 7
          %v658 = vsub.s32 0, %v657
          %v659 = vrot.slane %v654, %v658
          %v661 = vmul.f32 %v591, %v659
          %v662 = vmul.f32 %v596, %v659
          %v663 = vmul.f32 %v601, %v659
          %v664 = vmul.f32 %v606, %v659
          %v669 = vrot.slane %v661, 2
          %v670 = vrot.slane %v662, 2
          %v671 = vsel %vm499, %v669, %v670
          %v672 = vrot.slane %v663, 2
          %v673 = vsel %vm499, %v670, %v672
          %v674 = vrot.slane %v664, 2
          %v675 = vsel %vm499, %v672, %v674
          %v680 = vadd.f32 %v649, %v671
          %v681 = vadd.f32 %v650, %v673
          %v682 = vadd.f32 %v651, %v675
          %v683 = vadd.f32 %v652, %v674
          %s684 = scalar_lea.vmem %s1, 8
          %v685 = vld [vmem:[%s684] sm:$0x1]
          %v687 = vlaneseq
          %v688 = vshrl.u32 %v687, 7
          %v689 = vsub.s32 0, %v688
          %v690 = vrot.slane %v685, %v689
          %v692 = vmul.f32 %v591, %v690
          %v693 = vmul.f32 %v596, %v690
          %v694 = vmul.f32 %v601, %v690
          %v695 = vmul.f32 %v606, %v690
          %v700 = vrot.slane %v692, 3
          %v701 = vrot.slane %v693, 3
          %v702 = vsel %vm531, %v700, %v701
          %v703 = vrot.slane %v694, 3
          %v704 = vsel %vm531, %v701, %v703
          %v705 = vrot.slane %v695, 3
          %v706 = vsel %vm531, %v703, %v705
          %v711 = vadd.f32 %v680, %v702
          %v712 = vadd.f32 %v681, %v704
          %v713 = vadd.f32 %v682, %v706
          %v714 = vadd.f32 %v683, %v705
          %s715 = scalar_lea.vmem %s1, 9
          %v716 = vld [vmem:[%s715] sm:$0x1]
          %v718 = vlaneseq
          %v719 = vshrl.u32 %v718, 7
          %v720 = vsub.s32 0, %v719
          %v721 = vrot.slane %v716, %v720
          %v723 = vmul.f32 %v591, %v721
          %v724 = vmul.f32 %v596, %v721
          %v725 = vmul.f32 %v601, %v721
          %v726 = vmul.f32 %v606, %v721
          %v731 = vrot.slane %v723, 4
          %v732 = vrot.slane %v724, 4
          %v733 = vsel %vm563, %v731, %v732
          %v734 = vrot.slane %v725, 4
          %v735 = vsel %vm563, %v732, %v734
          %v736 = vrot.slane %v726, 4
          %v737 = vsel %vm563, %v734, %v736
          %v742 = vadd.f32 %v711, %v733
          %v743 = vadd.f32 %v712, %v735
          %v744 = vadd.f32 %v713, %v737
          %v745 = vadd.f32 %v714, %v736
          %s746 = sadd.s32 %s409, 2
          %s747 = smul.u32 %s746, 32
          %s748 = scalar_lea.vmem %s383, %s747
          %v749 = vld [vmem:[%s748] sm:$0xff]
          %v750 = vld [vmem:[%s748 + $0x8] sm:$0xff]
          %v751 = vld [vmem:[%s748 + $0x10] sm:$0xff]
          %v752 = vld [vmem:[%s748 + $0x18] sm:$0xff]
          %s753 = scalar_lea.vmem %s1, 10
          %v754 = vld [vmem:[%s753] sm:$0x1]
          %756 = vset.pattern.permute.xlu0 0
          %757 = vperm.xlu0 %756, %v749
          %v758 = vpop.permute.xlu0 %757
          %761 = vset.pattern.permute.xlu0 0
          %762 = vperm.xlu0 %761, %v750
          %v763 = vpop.permute.xlu0 %762
          %766 = vset.pattern.permute.xlu0 0
          %767 = vperm.xlu0 %766, %v751
          %v768 = vpop.permute.xlu0 %767
          %771 = vset.pattern.permute.xlu0 0
          %772 = vperm.xlu0 %771, %v752
          %v773 = vpop.permute.xlu0 %772
          %v776 = vlaneseq
          %v777 = vshrl.u32 %v776, 7
          %v778 = vsub.s32 0, %v777
          %v779 = vrot.slane %v754, %v778
          %v781 = vmul.f32 %v758, %v779
          %v782 = vmul.f32 %v763, %v779
          %v783 = vmul.f32 %v768, %v779
          %v784 = vmul.f32 %v773, %v779
          %v785 = vadd.f32 %v742, %v781
          %v786 = vadd.f32 %v743, %v782
          %v787 = vadd.f32 %v744, %v783
          %v788 = vadd.f32 %v745, %v784
          %s789 = scalar_lea.vmem %s1, 11
          %v790 = vld [vmem:[%s789] sm:$0x1]
          %v792 = vlaneseq
          %v793 = vshrl.u32 %v792, 7
          %v794 = vsub.s32 0, %v793
          %v795 = vrot.slane %v790, %v794
          %v797 = vmul.f32 %v758, %v795
          %v798 = vmul.f32 %v763, %v795
          %v799 = vmul.f32 %v768, %v795
          %v800 = vmul.f32 %v773, %v795
          %v805 = vrot.slane %v797, 1
          %v806 = vrot.slane %v798, 1
          %v807 = vsel %vm467, %v805, %v806
          %v808 = vrot.slane %v799, 1
          %v809 = vsel %vm467, %v806, %v808
          %v810 = vrot.slane %v800, 1
          %v811 = vsel %vm467, %v808, %v810
          %v816 = vadd.f32 %v785, %v807
          %v817 = vadd.f32 %v786, %v809
          %v818 = vadd.f32 %v787, %v811
          %v819 = vadd.f32 %v788, %v810
          %s820 = scalar_lea.vmem %s1, 12
          %v821 = vld [vmem:[%s820] sm:$0x1]
          %v823 = vlaneseq
          %v824 = vshrl.u32 %v823, 7
          %v825 = vsub.s32 0, %v824
          %v826 = vrot.slane %v821, %v825
          %v828 = vmul.f32 %v758, %v826
          %v829 = vmul.f32 %v763, %v826
          %v830 = vmul.f32 %v768, %v826
          %v831 = vmul.f32 %v773, %v826
          %v836 = vrot.slane %v828, 2
          %v837 = vrot.slane %v829, 2
          %v838 = vsel %vm499, %v836, %v837
          %v839 = vrot.slane %v830, 2
          %v840 = vsel %vm499, %v837, %v839
          %v841 = vrot.slane %v831, 2
          %v842 = vsel %vm499, %v839, %v841
          %v847 = vadd.f32 %v816, %v838
          %v848 = vadd.f32 %v817, %v840
          %v849 = vadd.f32 %v818, %v842
          %v850 = vadd.f32 %v819, %v841
          %s851 = scalar_lea.vmem %s1, 13
          %v852 = vld [vmem:[%s851] sm:$0x1]
          %v854 = vlaneseq
          %v855 = vshrl.u32 %v854, 7
          %v856 = vsub.s32 0, %v855
          %v857 = vrot.slane %v852, %v856
          %v859 = vmul.f32 %v758, %v857
          %v860 = vmul.f32 %v763, %v857
          %v861 = vmul.f32 %v768, %v857
          %v862 = vmul.f32 %v773, %v857
          %v867 = vrot.slane %v859, 3
          %v868 = vrot.slane %v860, 3
          %v869 = vsel %vm531, %v867, %v868
          %v870 = vrot.slane %v861, 3
          %v871 = vsel %vm531, %v868, %v870
          %v872 = vrot.slane %v862, 3
          %v873 = vsel %vm531, %v870, %v872
          %v878 = vadd.f32 %v847, %v869
          %v879 = vadd.f32 %v848, %v871
          %v880 = vadd.f32 %v849, %v873
          %v881 = vadd.f32 %v850, %v872
          %s882 = scalar_lea.vmem %s1, 14
          %v883 = vld [vmem:[%s882] sm:$0x1]
          %v885 = vlaneseq
          %v886 = vshrl.u32 %v885, 7
          %v887 = vsub.s32 0, %v886
          %v888 = vrot.slane %v883, %v887
          %v890 = vmul.f32 %v758, %v888
          %v891 = vmul.f32 %v763, %v888
          %v892 = vmul.f32 %v768, %v888
          %v893 = vmul.f32 %v773, %v888
          %v898 = vrot.slane %v890, 4
          %v899 = vrot.slane %v891, 4
          %v900 = vsel %vm563, %v898, %v899
          %v901 = vrot.slane %v892, 4
          %v902 = vsel %vm563, %v899, %v901
          %v903 = vrot.slane %v893, 4
          %v904 = vsel %vm563, %v901, %v903
          %v909 = vadd.f32 %v878, %v900
          %v910 = vadd.f32 %v879, %v902
          %v911 = vadd.f32 %v880, %v904
          %v912 = vadd.f32 %v881, %v903
          %s913 = sadd.s32 %s409, 3
          %s914 = smul.u32 %s913, 32
          %s915 = scalar_lea.vmem %s383, %s914
          %v916 = vld [vmem:[%s915] sm:$0xff]
          %v917 = vld [vmem:[%s915 + $0x8] sm:$0xff]
          %v918 = vld [vmem:[%s915 + $0x10] sm:$0xff]
          %v919 = vld [vmem:[%s915 + $0x18] sm:$0xff]
          %s920 = scalar_lea.vmem %s1, 15
          %v921 = vld [vmem:[%s920] sm:$0x1]
          %923 = vset.pattern.permute.xlu0 0
          %924 = vperm.xlu0 %923, %v916
          %v925 = vpop.permute.xlu0 %924
          %928 = vset.pattern.permute.xlu0 0
          %929 = vperm.xlu0 %928, %v917
          %v930 = vpop.permute.xlu0 %929
          %933 = vset.pattern.permute.xlu0 0
          %934 = vperm.xlu0 %933, %v918
          %v935 = vpop.permute.xlu0 %934
          %938 = vset.pattern.permute.xlu0 0
          %939 = vperm.xlu0 %938, %v919
          %v940 = vpop.permute.xlu0 %939
          %v943 = vlaneseq
          %v944 = vshrl.u32 %v943, 7
          %v945 = vsub.s32 0, %v944
          %v946 = vrot.slane %v921, %v945
          %v948 = vmul.f32 %v925, %v946
          %v949 = vmul.f32 %v930, %v946
          %v950 = vmul.f32 %v935, %v946
          %v951 = vmul.f32 %v940, %v946
          %v952 = vadd.f32 %v909, %v948
          %v953 = vadd.f32 %v910, %v949
          %v954 = vadd.f32 %v911, %v950
          %v955 = vadd.f32 %v912, %v951
          %s956 = scalar_lea.vmem %s1, 16
          %v957 = vld [vmem:[%s956] sm:$0x1]
          %v959 = vlaneseq
          %v960 = vshrl.u32 %v959, 7
          %v961 = vsub.s32 0, %v960
          %v962 = vrot.slane %v957, %v961
          %v964 = vmul.f32 %v925, %v962
          %v965 = vmul.f32 %v930, %v962
          %v966 = vmul.f32 %v935, %v962
          %v967 = vmul.f32 %v940, %v962
          %v972 = vrot.slane %v964, 1
          %v973 = vrot.slane %v965, 1
          %v974 = vsel %vm467, %v972, %v973
          %v975 = vrot.slane %v966, 1
          %v976 = vsel %vm467, %v973, %v975
          %v977 = vrot.slane %v967, 1
          %v978 = vsel %vm467, %v975, %v977
          %v983 = vadd.f32 %v952, %v974
          %v984 = vadd.f32 %v953, %v976
          %v985 = vadd.f32 %v954, %v978
          %v986 = vadd.f32 %v955, %v977
          %s987 = scalar_lea.vmem %s1, 17
          %v988 = vld [vmem:[%s987] sm:$0x1]
          %v990 = vlaneseq
          %v991 = vshrl.u32 %v990, 7
          %v992 = vsub.s32 0, %v991
          %v993 = vrot.slane %v988, %v992
          %v995 = vmul.f32 %v925, %v993
          %v996 = vmul.f32 %v930, %v993
          %v997 = vmul.f32 %v935, %v993
          %v998 = vmul.f32 %v940, %v993
          %v1003 = vrot.slane %v995, 2
          %v1004 = vrot.slane %v996, 2
          %v1005 = vsel %vm499, %v1003, %v1004
          %v1006 = vrot.slane %v997, 2
          %v1007 = vsel %vm499, %v1004, %v1006
          %v1008 = vrot.slane %v998, 2
          %v1009 = vsel %vm499, %v1006, %v1008
          %v1014 = vadd.f32 %v983, %v1005
          %v1015 = vadd.f32 %v984, %v1007
          %v1016 = vadd.f32 %v985, %v1009
          %v1017 = vadd.f32 %v986, %v1008
          %s1018 = scalar_lea.vmem %s1, 18
          %v1019 = vld [vmem:[%s1018] sm:$0x1]
          %v1021 = vlaneseq
          %v1022 = vshrl.u32 %v1021, 7
          %v1023 = vsub.s32 0, %v1022
          %v1024 = vrot.slane %v1019, %v1023
          %v1026 = vmul.f32 %v925, %v1024
          %v1027 = vmul.f32 %v930, %v1024
          %v1028 = vmul.f32 %v935, %v1024
          %v1029 = vmul.f32 %v940, %v1024
          %v1034 = vrot.slane %v1026, 3
          %v1035 = vrot.slane %v1027, 3
          %v1036 = vsel %vm531, %v1034, %v1035
          %v1037 = vrot.slane %v1028, 3
          %v1038 = vsel %vm531, %v1035, %v1037
          %v1039 = vrot.slane %v1029, 3
          %v1040 = vsel %vm531, %v1037, %v1039
          %v1045 = vadd.f32 %v1014, %v1036
          %v1046 = vadd.f32 %v1015, %v1038
          %v1047 = vadd.f32 %v1016, %v1040
          %v1048 = vadd.f32 %v1017, %v1039
          %s1049 = scalar_lea.vmem %s1, 19
          %v1050 = vld [vmem:[%s1049] sm:$0x1]
          %v1052 = vlaneseq
          %v1053 = vshrl.u32 %v1052, 7
          %v1054 = vsub.s32 0, %v1053
          %v1055 = vrot.slane %v1050, %v1054
          %v1057 = vmul.f32 %v925, %v1055
          %v1058 = vmul.f32 %v930, %v1055
          %v1059 = vmul.f32 %v935, %v1055
          %v1060 = vmul.f32 %v940, %v1055
          %v1065 = vrot.slane %v1057, 4
          %v1066 = vrot.slane %v1058, 4
          %v1067 = vsel %vm563, %v1065, %v1066
          %v1068 = vrot.slane %v1059, 4
          %v1069 = vsel %vm563, %v1066, %v1068
          %v1070 = vrot.slane %v1060, 4
          %v1071 = vsel %vm563, %v1068, %v1070
          %v1076 = vadd.f32 %v1045, %v1067
          %v1077 = vadd.f32 %v1046, %v1069
          %v1078 = vadd.f32 %v1047, %v1071
          %v1079 = vadd.f32 %v1048, %v1070
          %s1080 = sadd.s32 %s409, 4
          %s1081 = smul.u32 %s1080, 32
          %s1082 = scalar_lea.vmem %s383, %s1081
          %v1083 = vld [vmem:[%s1082] sm:$0xff]
          %v1084 = vld [vmem:[%s1082 + $0x8] sm:$0xff]
          %v1085 = vld [vmem:[%s1082 + $0x10] sm:$0xff]
          %v1086 = vld [vmem:[%s1082 + $0x18] sm:$0xff]
          %s1087 = scalar_lea.vmem %s1, 20
          %v1088 = vld [vmem:[%s1087] sm:$0x1]
          %1090 = vset.pattern.permute.xlu0 0
          %1091 = vperm.xlu0 %1090, %v1083
          %v1092 = vpop.permute.xlu0 %1091
          %1095 = vset.pattern.permute.xlu0 0
          %1096 = vperm.xlu0 %1095, %v1084
          %v1097 = vpop.permute.xlu0 %1096
          %1100 = vset.pattern.permute.xlu0 0
          %1101 = vperm.xlu0 %1100, %v1085
          %v1102 = vpop.permute.xlu0 %1101
          %1105 = vset.pattern.permute.xlu0 0
          %1106 = vperm.xlu0 %1105, %v1086
          %v1107 = vpop.permute.xlu0 %1106
          %v1110 = vlaneseq
          %v1111 = vshrl.u32 %v1110, 7
          %v1112 = vsub.s32 0, %v1111
          %v1113 = vrot.slane %v1088, %v1112
          %v1115 = vmul.f32 %v1092, %v1113
          %v1116 = vmul.f32 %v1097, %v1113
          %v1117 = vmul.f32 %v1102, %v1113
          %v1118 = vmul.f32 %v1107, %v1113
          %v1119 = vadd.f32 %v1076, %v1115
          %v1120 = vadd.f32 %v1077, %v1116
          %v1121 = vadd.f32 %v1078, %v1117
          %v1122 = vadd.f32 %v1079, %v1118
          %s1123 = scalar_lea.vmem %s1, 21
          %v1124 = vld [vmem:[%s1123] sm:$0x1]
          %v1126 = vlaneseq
          %v1127 = vshrl.u32 %v1126, 7
          %v1128 = vsub.s32 0, %v1127
          %v1129 = vrot.slane %v1124, %v1128
          %v1131 = vmul.f32 %v1092, %v1129
          %v1132 = vmul.f32 %v1097, %v1129
          %v1133 = vmul.f32 %v1102, %v1129
          %v1134 = vmul.f32 %v1107, %v1129
          %v1139 = vrot.slane %v1131, 1
          %v1140 = vrot.slane %v1132, 1
          %v1141 = vsel %vm467, %v1139, %v1140
          %v1142 = vrot.slane %v1133, 1
          %v1143 = vsel %vm467, %v1140, %v1142
          %v1144 = vrot.slane %v1134, 1
          %v1145 = vsel %vm467, %v1142, %v1144
          %v1150 = vadd.f32 %v1119, %v1141
          %v1151 = vadd.f32 %v1120, %v1143
          %v1152 = vadd.f32 %v1121, %v1145
          %v1153 = vadd.f32 %v1122, %v1144
          %s1154 = scalar_lea.vmem %s1, 22
          %v1155 = vld [vmem:[%s1154] sm:$0x1]
          %v1157 = vlaneseq
          %v1158 = vshrl.u32 %v1157, 7
          %v1159 = vsub.s32 0, %v1158
          %v1160 = vrot.slane %v1155, %v1159
          %v1162 = vmul.f32 %v1092, %v1160
          %v1163 = vmul.f32 %v1097, %v1160
          %v1164 = vmul.f32 %v1102, %v1160
          %v1165 = vmul.f32 %v1107, %v1160
          %v1170 = vrot.slane %v1162, 2
          %v1171 = vrot.slane %v1163, 2
          %v1172 = vsel %vm499, %v1170, %v1171
          %v1173 = vrot.slane %v1164, 2
          %v1174 = vsel %vm499, %v1171, %v1173
          %v1175 = vrot.slane %v1165, 2
          %v1176 = vsel %vm499, %v1173, %v1175
          %v1181 = vadd.f32 %v1150, %v1172
          %v1182 = vadd.f32 %v1151, %v1174
          %v1183 = vadd.f32 %v1152, %v1176
          %v1184 = vadd.f32 %v1153, %v1175
          %s1185 = scalar_lea.vmem %s1, 23
          %v1186 = vld [vmem:[%s1185] sm:$0x1]
          %v1188 = vlaneseq
          %v1189 = vshrl.u32 %v1188, 7
          %v1190 = vsub.s32 0, %v1189
          %v1191 = vrot.slane %v1186, %v1190
          %v1193 = vmul.f32 %v1092, %v1191
          %v1194 = vmul.f32 %v1097, %v1191
          %v1195 = vmul.f32 %v1102, %v1191
          %v1196 = vmul.f32 %v1107, %v1191
          %v1201 = vrot.slane %v1193, 3
          %v1202 = vrot.slane %v1194, 3
          %v1203 = vsel %vm531, %v1201, %v1202
          %v1204 = vrot.slane %v1195, 3
          %v1205 = vsel %vm531, %v1202, %v1204
          %v1206 = vrot.slane %v1196, 3
          %v1207 = vsel %vm531, %v1204, %v1206
          %v1212 = vadd.f32 %v1181, %v1203
          %v1213 = vadd.f32 %v1182, %v1205
          %v1214 = vadd.f32 %v1183, %v1207
          %v1215 = vadd.f32 %v1184, %v1206
          %s1216 = scalar_lea.vmem %s1, 24
          %v1217 = vld [vmem:[%s1216] sm:$0x1]
          %v1219 = vlaneseq
          %v1220 = vshrl.u32 %v1219, 7
          %v1221 = vsub.s32 0, %v1220
          %v1222 = vrot.slane %v1217, %v1221
          %v1224 = vmul.f32 %v1092, %v1222
          %v1225 = vmul.f32 %v1097, %v1222
          %v1226 = vmul.f32 %v1102, %v1222
          %v1227 = vmul.f32 %v1107, %v1222
          %v1232 = vrot.slane %v1224, 4
          %v1233 = vrot.slane %v1225, 4
          %v1234 = vsel %vm563, %v1232, %v1233
          %v1235 = vrot.slane %v1226, 4
          %v1236 = vsel %vm563, %v1233, %v1235
          %v1237 = vrot.slane %v1227, 4
          %v1238 = vsel %vm563, %v1235, %v1237
          %v1243 = vadd.f32 %v1212, %v1234
          %v1244 = vadd.f32 %v1213, %v1236
          %v1245 = vadd.f32 %v1214, %v1238
          %v1246 = vadd.f32 %v1215, %v1237
          %v1247 = vld [vmem:[%s2] sm:$0x1]
          %v1249 = vlaneseq
          %v1250 = vshrl.u32 %v1249, 7
          %v1251 = vsub.s32 0, %v1250
          %v1252 = vrot.slane %v1247, %v1251
          %v1254 = vadd.f32 %v1243, %v1252
          %v1255 = vadd.f32 %v1244, %v1252
          %v1256 = vadd.f32 %v1245, %v1252
          %v1257 = vadd.f32 %v1246, %v1252
          %v1258 = vtanh.pop %v1254
          %v1259 = vtanh.pop %v1255
          %v1260 = vtanh.pop %v1256
          %v1261 = vtanh.pop %v1257
          %v1262 = vmul.f32 %v591, %v441
          %v1263 = vmul.f32 %v596, %v441
          %v1264 = vmul.f32 %v601, %v441
          %v1265 = vmul.f32 %v606, %v441
          %v1266 = vadd.f32 %v1262, 0.0
          %v1267 = vadd.f32 %v1263, 0.0
          %v1268 = vadd.f32 %v1264, 0.0
          %v1269 = vadd.f32 %v1265, 0.0
          %v1270 = vmul.f32 %v591, %v457
          %v1271 = vmul.f32 %v596, %v457
          %v1272 = vmul.f32 %v601, %v457
          %v1273 = vmul.f32 %v606, %v457
          %v1278 = vrot.slane %v1270, 1
          %v1279 = vrot.slane %v1271, 1
          %v1280 = vsel %vm467, %v1278, %v1279
          %v1281 = vrot.slane %v1272, 1
          %v1282 = vsel %vm467, %v1279, %v1281
          %v1283 = vrot.slane %v1273, 1
          %v1284 = vsel %vm467, %v1281, %v1283
          %v1289 = vadd.f32 %v1266, %v1280
          %v1290 = vadd.f32 %v1267, %v1282
          %v1291 = vadd.f32 %v1268, %v1284
          %v1292 = vadd.f32 %v1269, %v1283
          %v1293 = vmul.f32 %v591, %v489
          %v1294 = vmul.f32 %v596, %v489
          %v1295 = vmul.f32 %v601, %v489
          %v1296 = vmul.f32 %v606, %v489
          %v1301 = vrot.slane %v1293, 2
          %v1302 = vrot.slane %v1294, 2
          %v1303 = vsel %vm499, %v1301, %v1302
          %v1304 = vrot.slane %v1295, 2
          %v1305 = vsel %vm499, %v1302, %v1304
          %v1306 = vrot.slane %v1296, 2
          %v1307 = vsel %vm499, %v1304, %v1306
          %v1312 = vadd.f32 %v1289, %v1303
          %v1313 = vadd.f32 %v1290, %v1305
          %v1314 = vadd.f32 %v1291, %v1307
          %v1315 = vadd.f32 %v1292, %v1306
          %v1316 = vmul.f32 %v591, %v521
          %v1317 = vmul.f32 %v596, %v521
          %v1318 = vmul.f32 %v601, %v521
          %v1319 = vmul.f32 %v606, %v521
          %v1324 = vrot.slane %v1316, 3
          %v1325 = vrot.slane %v1317, 3
          %v1326 = vsel %vm531, %v1324, %v1325
          %v1327 = vrot.slane %v1318, 3
          %v1328 = vsel %vm531, %v1325, %v1327
          %v1329 = vrot.slane %v1319, 3
          %v1330 = vsel %vm531, %v1327, %v1329
          %v1335 = vadd.f32 %v1312, %v1326
          %v1336 = vadd.f32 %v1313, %v1328
          %v1337 = vadd.f32 %v1314, %v1330
          %v1338 = vadd.f32 %v1315, %v1329
          %v1339 = vmul.f32 %v591, %v553
          %v1340 = vmul.f32 %v596, %v553
          %v1341 = vmul.f32 %v601, %v553
          %v1342 = vmul.f32 %v606, %v553
          %v1347 = vrot.slane %v1339, 4
          %v1348 = vrot.slane %v1340, 4
          %v1349 = vsel %vm563, %v1347, %v1348
          %v1350 = vrot.slane %v1341, 4
          %v1351 = vsel %vm563, %v1348, %v1350
          %v1352 = vrot.slane %v1342, 4
          %v1353 = vsel %vm563, %v1350, %v1352
          %v1358 = vadd.f32 %v1335, %v1349
          %v1359 = vadd.f32 %v1336, %v1351
          %v1360 = vadd.f32 %v1337, %v1353
          %v1361 = vadd.f32 %v1338, %v1352
          %v1362 = vmul.f32 %v758, %v612
          %v1363 = vmul.f32 %v763, %v612
          %v1364 = vmul.f32 %v768, %v612
          %v1365 = vmul.f32 %v773, %v612
          %v1366 = vadd.f32 %v1358, %v1362
          %v1367 = vadd.f32 %v1359, %v1363
          %v1368 = vadd.f32 %v1360, %v1364
          %v1369 = vadd.f32 %v1361, %v1365
          %v1370 = vmul.f32 %v758, %v628
          %v1371 = vmul.f32 %v763, %v628
          %v1372 = vmul.f32 %v768, %v628
          %v1373 = vmul.f32 %v773, %v628
          %v1378 = vrot.slane %v1370, 1
          %v1379 = vrot.slane %v1371, 1
          %v1380 = vsel %vm467, %v1378, %v1379
          %v1381 = vrot.slane %v1372, 1
          %v1382 = vsel %vm467, %v1379, %v1381
          %v1383 = vrot.slane %v1373, 1
          %v1384 = vsel %vm467, %v1381, %v1383
          %v1389 = vadd.f32 %v1366, %v1380
          %v1390 = vadd.f32 %v1367, %v1382
          %v1391 = vadd.f32 %v1368, %v1384
          %v1392 = vadd.f32 %v1369, %v1383
          %v1393 = vmul.f32 %v758, %v659
          %v1394 = vmul.f32 %v763, %v659
          %v1395 = vmul.f32 %v768, %v659
          %v1396 = vmul.f32 %v773, %v659
          %v1401 = vrot.slane %v1393, 2
          %v1402 = vrot.slane %v1394, 2
          %v1403 = vsel %vm499, %v1401, %v1402
          %v1404 = vrot.slane %v1395, 2
          %v1405 = vsel %vm499, %v1402, %v1404
          %v1406 = vrot.slane %v1396, 2
          %v1407 = vsel %vm499, %v1404, %v1406
          %v1412 = vadd.f32 %v1389, %v1403
          %v1413 = vadd.f32 %v1390, %v1405
          %v1414 = vadd.f32 %v1391, %v1407
          %v1415 = vadd.f32 %v1392, %v1406
          %v1416 = vmul.f32 %v758, %v690
          %v1417 = vmul.f32 %v763, %v690
          %v1418 = vmul.f32 %v768, %v690
          %v1419 = vmul.f32 %v773, %v690
          %v1424 = vrot.slane %v1416, 3
          %v1425 = vrot.slane %v1417, 3
          %v1426 = vsel %vm531, %v1424, %v1425
          %v1427 = vrot.slane %v1418, 3
          %v1428 = vsel %vm531, %v1425, %v1427
          %v1429 = vrot.slane %v1419, 3
          %v1430 = vsel %vm531, %v1427, %v1429
          %v1435 = vadd.f32 %v1412, %v1426
          %v1436 = vadd.f32 %v1413, %v1428
          %v1437 = vadd.f32 %v1414, %v1430
          %v1438 = vadd.f32 %v1415, %v1429
          %v1439 = vmul.f32 %v758, %v721
          %v1440 = vmul.f32 %v763, %v721
          %v1441 = vmul.f32 %v768, %v721
          %v1442 = vmul.f32 %v773, %v721
          %v1447 = vrot.slane %v1439, 4
          %v1448 = vrot.slane %v1440, 4
          %v1449 = vsel %vm563, %v1447, %v1448
          %v1450 = vrot.slane %v1441, 4
          %v1451 = vsel %vm563, %v1448, %v1450
          %v1452 = vrot.slane %v1442, 4
          %v1453 = vsel %vm563, %v1450, %v1452
          %v1458 = vadd.f32 %v1435, %v1449
          %v1459 = vadd.f32 %v1436, %v1451
          %v1460 = vadd.f32 %v1437, %v1453
          %v1461 = vadd.f32 %v1438, %v1452
          %v1462 = vmul.f32 %v925, %v779
          %v1463 = vmul.f32 %v930, %v779
          %v1464 = vmul.f32 %v935, %v779
          %v1465 = vmul.f32 %v940, %v779
          %v1466 = vadd.f32 %v1458, %v1462
          %v1467 = vadd.f32 %v1459, %v1463
          %v1468 = vadd.f32 %v1460, %v1464
          %v1469 = vadd.f32 %v1461, %v1465
          %v1470 = vmul.f32 %v925, %v795
          %v1471 = vmul.f32 %v930, %v795
          %v1472 = vmul.f32 %v935, %v795
          %v1473 = vmul.f32 %v940, %v795
          %v1478 = vrot.slane %v1470, 1
          %v1479 = vrot.slane %v1471, 1
          %v1480 = vsel %vm467, %v1478, %v1479
          %v1481 = vrot.slane %v1472, 1
          %v1482 = vsel %vm467, %v1479, %v1481
          %v1483 = vrot.slane %v1473, 1
          %v1484 = vsel %vm467, %v1481, %v1483
          %v1489 = vadd.f32 %v1466, %v1480
          %v1490 = vadd.f32 %v1467, %v1482
          %v1491 = vadd.f32 %v1468, %v1484
          %v1492 = vadd.f32 %v1469, %v1483
          %v1493 = vmul.f32 %v925, %v826
          %v1494 = vmul.f32 %v930, %v826
          %v1495 = vmul.f32 %v935, %v826
          %v1496 = vmul.f32 %v940, %v826
          %v1501 = vrot.slane %v1493, 2
          %v1502 = vrot.slane %v1494, 2
          %v1503 = vsel %vm499, %v1501, %v1502
          %v1504 = vrot.slane %v1495, 2
          %v1505 = vsel %vm499, %v1502, %v1504
          %v1506 = vrot.slane %v1496, 2
          %v1507 = vsel %vm499, %v1504, %v1506
          %v1512 = vadd.f32 %v1489, %v1503
          %v1513 = vadd.f32 %v1490, %v1505
          %v1514 = vadd.f32 %v1491, %v1507
          %v1515 = vadd.f32 %v1492, %v1506
          %v1516 = vmul.f32 %v925, %v857
          %v1517 = vmul.f32 %v930, %v857
          %v1518 = vmul.f32 %v935, %v857
          %v1519 = vmul.f32 %v940, %v857
          %v1524 = vrot.slane %v1516, 3
          %v1525 = vrot.slane %v1517, 3
          %v1526 = vsel %vm531, %v1524, %v1525
          %v1527 = vrot.slane %v1518, 3
          %v1528 = vsel %vm531, %v1525, %v1527
          %v1529 = vrot.slane %v1519, 3
          %v1530 = vsel %vm531, %v1527, %v1529
          %v1535 = vadd.f32 %v1512, %v1526
          %v1536 = vadd.f32 %v1513, %v1528
          %v1537 = vadd.f32 %v1514, %v1530
          %v1538 = vadd.f32 %v1515, %v1529
          %v1539 = vmul.f32 %v925, %v888
          %v1540 = vmul.f32 %v930, %v888
          %v1541 = vmul.f32 %v935, %v888
          %v1542 = vmul.f32 %v940, %v888
          %v1547 = vrot.slane %v1539, 4
          %v1548 = vrot.slane %v1540, 4
          %v1549 = vsel %vm563, %v1547, %v1548
          %v1550 = vrot.slane %v1541, 4
          %v1551 = vsel %vm563, %v1548, %v1550
          %v1552 = vrot.slane %v1542, 4
          %v1553 = vsel %vm563, %v1550, %v1552
          %v1558 = vadd.f32 %v1535, %v1549
          %v1559 = vadd.f32 %v1536, %v1551
          %v1560 = vadd.f32 %v1537, %v1553
          %v1561 = vadd.f32 %v1538, %v1552
          %v1562 = vmul.f32 %v1092, %v946
          %v1563 = vmul.f32 %v1097, %v946
          %v1564 = vmul.f32 %v1102, %v946
          %v1565 = vmul.f32 %v1107, %v946
          %v1566 = vadd.f32 %v1558, %v1562
          %v1567 = vadd.f32 %v1559, %v1563
          %v1568 = vadd.f32 %v1560, %v1564
          %v1569 = vadd.f32 %v1561, %v1565
          %v1570 = vmul.f32 %v1092, %v962
          %v1571 = vmul.f32 %v1097, %v962
          %v1572 = vmul.f32 %v1102, %v962
          %v1573 = vmul.f32 %v1107, %v962
          %v1578 = vrot.slane %v1570, 1
          %v1579 = vrot.slane %v1571, 1
          %v1580 = vsel %vm467, %v1578, %v1579
          %v1581 = vrot.slane %v1572, 1
          %v1582 = vsel %vm467, %v1579, %v1581
          %v1583 = vrot.slane %v1573, 1
          %v1584 = vsel %vm467, %v1581, %v1583
          %v1589 = vadd.f32 %v1566, %v1580
          %v1590 = vadd.f32 %v1567, %v1582
          %v1591 = vadd.f32 %v1568, %v1584
          %v1592 = vadd.f32 %v1569, %v1583
          %v1593 = vmul.f32 %v1092, %v993
          %v1594 = vmul.f32 %v1097, %v993
          %v1595 = vmul.f32 %v1102, %v993
          %v1596 = vmul.f32 %v1107, %v993
          %v1601 = vrot.slane %v1593, 2
          %v1602 = vrot.slane %v1594, 2
          %v1603 = vsel %vm499, %v1601, %v1602
          %v1604 = vrot.slane %v1595, 2
          %v1605 = vsel %vm499, %v1602, %v1604
          %v1606 = vrot.slane %v1596, 2
          %v1607 = vsel %vm499, %v1604, %v1606
          %v1612 = vadd.f32 %v1589, %v1603
          %v1613 = vadd.f32 %v1590, %v1605
          %v1614 = vadd.f32 %v1591, %v1607
          %v1615 = vadd.f32 %v1592, %v1606
          %v1616 = vmul.f32 %v1092, %v1024
          %v1617 = vmul.f32 %v1097, %v1024
          %v1618 = vmul.f32 %v1102, %v1024
          %v1619 = vmul.f32 %v1107, %v1024
          %v1624 = vrot.slane %v1616, 3
          %v1625 = vrot.slane %v1617, 3
          %v1626 = vsel %vm531, %v1624, %v1625
          %v1627 = vrot.slane %v1618, 3
          %v1628 = vsel %vm531, %v1625, %v1627
          %v1629 = vrot.slane %v1619, 3
          %v1630 = vsel %vm531, %v1627, %v1629
          %v1635 = vadd.f32 %v1612, %v1626
          %v1636 = vadd.f32 %v1613, %v1628
          %v1637 = vadd.f32 %v1614, %v1630
          %v1638 = vadd.f32 %v1615, %v1629
          %v1639 = vmul.f32 %v1092, %v1055
          %v1640 = vmul.f32 %v1097, %v1055
          %v1641 = vmul.f32 %v1102, %v1055
          %v1642 = vmul.f32 %v1107, %v1055
          %v1647 = vrot.slane %v1639, 4
          %v1648 = vrot.slane %v1640, 4
          %v1649 = vsel %vm563, %v1647, %v1648
          %v1650 = vrot.slane %v1641, 4
          %v1651 = vsel %vm563, %v1648, %v1650
          %v1652 = vrot.slane %v1642, 4
          %v1653 = vsel %vm563, %v1650, %v1652
          %v1658 = vadd.f32 %v1635, %v1649
          %v1659 = vadd.f32 %v1636, %v1651
          %v1660 = vadd.f32 %v1637, %v1653
          %v1661 = vadd.f32 %v1638, %v1652
          %s1662 = sadd.s32 %s409, 5
          %s1663 = smul.u32 %s1662, 32
          %s1664 = scalar_lea.vmem %s383, %s1663
          %v1665 = vld [vmem:[%s1664] sm:$0xff]
          %v1666 = vld [vmem:[%s1664 + $0x8] sm:$0xff]
          %v1667 = vld [vmem:[%s1664 + $0x10] sm:$0xff]
          %v1668 = vld [vmem:[%s1664 + $0x18] sm:$0xff]
          %1670 = vset.pattern.permute.xlu0 0
          %1671 = vperm.xlu0 %1670, %v1665
          %v1672 = vpop.permute.xlu0 %1671
          %1675 = vset.pattern.permute.xlu0 0
          %1676 = vperm.xlu0 %1675, %v1666
          %v1677 = vpop.permute.xlu0 %1676
          %1680 = vset.pattern.permute.xlu0 0
          %1681 = vperm.xlu0 %1680, %v1667
          %v1682 = vpop.permute.xlu0 %1681
          %1685 = vset.pattern.permute.xlu0 0
          %1686 = vperm.xlu0 %1685, %v1668
          %v1687 = vpop.permute.xlu0 %1686
          %v1689 = vmul.f32 %v1672, %v1113
          %v1690 = vmul.f32 %v1677, %v1113
          %v1691 = vmul.f32 %v1682, %v1113
          %v1692 = vmul.f32 %v1687, %v1113
          %v1693 = vadd.f32 %v1658, %v1689
          %v1694 = vadd.f32 %v1659, %v1690
          %v1695 = vadd.f32 %v1660, %v1691
          %v1696 = vadd.f32 %v1661, %v1692
          %v1697 = vmul.f32 %v1672, %v1129
          %v1698 = vmul.f32 %v1677, %v1129
          %v1699 = vmul.f32 %v1682, %v1129
          %v1700 = vmul.f32 %v1687, %v1129
          %v1705 = vrot.slane %v1697, 1
          %v1706 = vrot.slane %v1698, 1
          %v1707 = vsel %vm467, %v1705, %v1706
          %v1708 = vrot.slane %v1699, 1
          %v1709 = vsel %vm467, %v1706, %v1708
          %v1710 = vrot.slane %v1700, 1
          %v1711 = vsel %vm467, %v1708, %v1710
          %v1716 = vadd.f32 %v1693, %v1707
          %v1717 = vadd.f32 %v1694, %v1709
          %v1718 = vadd.f32 %v1695, %v1711
          %v1719 = vadd.f32 %v1696, %v1710
          %v1720 = vmul.f32 %v1672, %v1160
          %v1721 = vmul.f32 %v1677, %v1160
          %v1722 = vmul.f32 %v1682, %v1160
          %v1723 = vmul.f32 %v1687, %v1160
          %v1728 = vrot.slane %v1720, 2
          %v1729 = vrot.slane %v1721, 2
          %v1730 = vsel %vm499, %v1728, %v1729
          %v1731 = vrot.slane %v1722, 2
          %v1732 = vsel %vm499, %v1729, %v1731
          %v1733 = vrot.slane %v1723, 2
          %v1734 = vsel %vm499, %v1731, %v1733
          %v1739 = vadd.f32 %v1716, %v1730
          %v1740 = vadd.f32 %v1717, %v1732
          %v1741 = vadd.f32 %v1718, %v1734
          %v1742 = vadd.f32 %v1719, %v1733
          %v1743 = vmul.f32 %v1672, %v1191
          %v1744 = vmul.f32 %v1677, %v1191
          %v1745 = vmul.f32 %v1682, %v1191
          %v1746 = vmul.f32 %v1687, %v1191
          %v1751 = vrot.slane %v1743, 3
          %v1752 = vrot.slane %v1744, 3
          %v1753 = vsel %vm531, %v1751, %v1752
          %v1754 = vrot.slane %v1745, 3
          %v1755 = vsel %vm531, %v1752, %v1754
          %v1756 = vrot.slane %v1746, 3
          %v1757 = vsel %vm531, %v1754, %v1756
          %v1762 = vadd.f32 %v1739, %v1753
          %v1763 = vadd.f32 %v1740, %v1755
          %v1764 = vadd.f32 %v1741, %v1757
          %v1765 = vadd.f32 %v1742, %v1756
          %v1766 = vmul.f32 %v1672, %v1222
          %v1767 = vmul.f32 %v1677, %v1222
          %v1768 = vmul.f32 %v1682, %v1222
          %v1769 = vmul.f32 %v1687, %v1222
          %v1774 = vrot.slane %v1766, 4
          %v1775 = vrot.slane %v1767, 4
          %v1776 = vsel %vm563, %v1774, %v1775
          %v1777 = vrot.slane %v1768, 4
          %v1778 = vsel %vm563, %v1775, %v1777
          %v1779 = vrot.slane %v1769, 4
          %v1780 = vsel %vm563, %v1777, %v1779
          %v1785 = vadd.f32 %v1762, %v1776
          %v1786 = vadd.f32 %v1763, %v1778
          %v1787 = vadd.f32 %v1764, %v1780
          %v1788 = vadd.f32 %v1765, %v1779
          %v1789 = vadd.f32 %v1785, %v1252
          %v1790 = vadd.f32 %v1786, %v1252
          %v1791 = vadd.f32 %v1787, %v1252
          %v1792 = vadd.f32 %v1788, %v1252
          %v1793 = vtanh.pop %v1789
          %v1794 = vtanh.pop %v1790
          %v1795 = vtanh.pop %v1791
          %v1796 = vtanh.pop %v1792
          %v1797 = vadd.f32 %v1258, %v1793
          %v1798 = vadd.f32 %v1259, %v1794
          %v1799 = vadd.f32 %v1260, %v1795
          %v1800 = vadd.f32 %v1261, %v1796
          %vm1801 = vcmask 228352
          %v1803 = vsel %vm1801, %v401, 0
          %v1806 = vsel %vm1801, %v402, 0
          %v1809 = vsel %vm563, %v1800, 0
          %1811 = vmatprep.subr.mxu0 0.0
          %1812 = vmatpush1.msra.mxu0 0.0
          %1813 = vmatprep.subr.mxu0 0.0
          %1814 = vmatpush1.msra.mxu0 0.0
          %1815 = vmatprep.subr.mxu0 0.0
          %1816 = vmatpush1.msra.mxu0 0.0
          %1817 = vmatprep.subr.mxu0 0.0
          %1818 = vmatpush1.msra.mxu0 0.0
          %1819 = vmatprep.subr.mxu0 0.0
          %1820 = vmatpush1.msra.mxu0 0.0
          %1821 = vmatprep.subr.mxu0 0.0
          %1822 = vmatpush1.msra.mxu0 0.0
          %1823 = vmatprep.subr.mxu0 0.0
          %1824 = vmatpush1.msra.mxu0 0.0
          %1825 = vmatprep.subr.mxu0 0.0
          %1826 = vmatpush1.msra.mxu0 0.0
          %1827 = vmatprep.subr.mxu0 0.0
          %1828 = vmatpush1.msra.mxu0 0.0
          %1829 = vmatprep.subr.mxu0 0.0
          %1830 = vmatpush1.msra.mxu0 0.0
          %1831 = vmatprep.subr.mxu0 0.0
          %1832 = vmatpush1.msra.mxu0 0.0
          %1833 = vmatprep.subr.mxu0 0.0
          %1834 = vmatpush1.msra.mxu0 0.0
          %1835 = vmatprep.subr.mxu0 0.0
          %1836 = vmatpush1.msra.mxu0 %v1809
          %1837 = vmatprep.subr.mxu0 0.0
          %1838 = vmatpush1.msra.mxu0 %v1799
          %1839 = vmatprep.subr.mxu0 0.0
          %1840 = vmatpush1.msra.mxu0 %v1798
          %1841 = vmatprep.subr.mxu0 0.0
          %1842 = vmatpush1.msra.mxu0 %v1797
          %1843 = vmatprep.subr.mxu0 0.0
          %1844 = vmatpush2.msra.mxu0 0.0
          %1845 = vmatprep.subr.mxu0 0.0
          %1846 = vmatpush2.msra.mxu0 0.0
          %1847 = vmatprep.subr.mxu0 0.0
          %1848 = vmatpush2.msra.mxu0 0.0
          %1849 = vmatprep.subr.mxu0 0.0
          %1850 = vmatpush2.msra.mxu0 0.0
          %1851 = vmatprep.subr.mxu0 0.0
          %1852 = vmatpush2.msra.mxu0 0.0
          %1853 = vmatprep.subr.mxu0 0.0
          %1854 = vmatpush2.msra.mxu0 0.0
          %1855 = vmatprep.subr.mxu0 0.0
          %1856 = vmatpush2.msra.mxu0 0.0
          %1857 = vmatprep.subr.mxu0 0.0
          %1858 = vmatpush2.msra.mxu0 0.0
          %1859 = vmatprep.subr.mxu0 0.0
          %1860 = vmatpush2.msra.mxu0 0.0
          %1861 = vmatprep.subr.mxu0 0.0
          %1862 = vmatpush2.msra.mxu0 0.0
          %1863 = vmatprep.subr.mxu0 0.0
          %1864 = vmatpush2.msra.mxu0 0.0
          %1865 = vmatprep.subr.mxu0 0.0
          %1866 = vmatpush2.msra.mxu0 0.0
          %1867 = vmatprep.subr.mxu0 0.0
          %1868 = vmatpush2.msra.mxu0 0.0
          %1869 = vmatprep.subr.mxu0 0.0
          %1870 = vmatpush2.msra.mxu0 0.0
          %1871 = vmatprep.subr.mxu0 0.0
          %1872 = vmatpush2.msra.mxu0 0.0
          %1873 = vmatprep.subr.mxu0 0.0
          %1874 = vmatpush2.msra.mxu0 0.0
          %1875 = vmatprep.mubr.f32.mxu0 0.0
          %1876 = vmatmul.mubr.f32.gmra.mxu0 %v1803
          %v1877 = vpop.f32.mrf.mxu0
          %v1878 = vadd.f32 0.0, %v1877
          %v1879 = vpop.f32.mrf.mxu0
          %1880 = vmatprep.mubr.f32.mxu0 0.0
          %1881 = vmatmul.mubr.f32.gmra.mxu0 %v1806
          %v1882 = vpop.f32.mrf.mxu0
          %v1883 = vadd.f32 0.0, %v1882
          %v1884 = vpop.f32.mrf.mxu0
          %1885 = vdwg.mxu0
          %v1886 = vmul.f32 %v1878, 0.25
          %v1887 = vmul.f32 %v1883, 0.25
          %s1888 = smul.u32 %s404, 16
          %s1889 = scalar_lea.vmem [#allocation2], %s1888
          %vm1890 = vcmask 48128
          %1891 = vst.msk [vmem:[%s1889] sm:$0xff] %vm1890, %v1886
          %vm1892 = vcmask 46080
          %1893 = vst.msk [vmem:[%s1889 + $0x8] sm:$0x3f] %vm1892, %v1887
        $region69: #{lenet5_forward.1} parent=63 // loop_footer
          %s408 = sadd.s32 1, %s404
        $region70: #{lenet5_forward.1} parent=63 // loop_footer_branch
          %403 = sbr.rel target = $region66
        $region71: #{lenet5_forward.1} parent=63 // loop_exit
          _
        loop: start=0, step=1, limit=5
        $region72: #{lenet5_forward.1} parent=63 // loop_pre_header
          _
        $region73: #{lenet5_forward.1} parent=63 // loop_header
          %s1895 = sphi 0, %s1899
          %p1896 = scmp.ge.s32.totalorder %s1895, 5
        $region74: #{lenet5_forward.1} parent=63 // loop_header_branch
          %1898 = sbr.rel (%p1896) target = $region78
        $region75: #{lenet5_forward.1} parent=63 // loop_body
          %s1900 = smul.u32 %s1895, 2
          %s1901 = smul.u32 %s1900, 16
          %s1902 = scalar_lea.vmem [#allocation2], %s1901
          %v1903 = vld [vmem:[%s1902] sm:$0xff]
          %v1904 = vld [vmem:[%s1902 + $0x8] sm:$0x3f]
          %v1905 = vld [vmem:[%s3] sm:$0x3f]
          %s1906 = scalar_lea.vmem %s3, 8
          %v1907 = vld [vmem:[%s1906] sm:$0x3f]
          %vm1910 = vcmask 1046528
          %v1911 = vrot.slane %v1903, 1
          %v1912 = vrot.slane %v1904, 1
          %v1913 = vsel %vm1910, %v1911, %v1912
          %vm1914 = vcmask 48128
          %v1915 = vsel %vm1914, %v1913, 0
          %v1917 = vsel %vm1914, %v1912, 0
          %vm1919 = vcmask 1045504
          %v1921 = vsel %vm1919, %v1907, 0
          %1923 = vmatprep.subr.mxu0 0.0
          %1924 = vmatpush1.msra.mxu0 0.0
          %1925 = vmatprep.subr.mxu0 0.0
          %1926 = vmatpush1.msra.mxu0 0.0
          %1927 = vmatprep.subr.mxu0 0.0
          %1928 = vmatpush1.msra.mxu0 0.0
          %1929 = vmatprep.subr.mxu0 0.0
          %1930 = vmatpush1.msra.mxu0 0.0
          %1931 = vmatprep.subr.mxu0 0.0
          %1932 = vmatpush1.msra.mxu0 0.0
          %1933 = vmatprep.subr.mxu0 0.0
          %1934 = vmatpush1.msra.mxu0 0.0
          %1935 = vmatprep.subr.mxu0 0.0
          %1936 = vmatpush1.msra.mxu0 0.0
          %1937 = vmatprep.subr.mxu0 0.0
          %1938 = vmatpush1.msra.mxu0 0.0
          %1939 = vmatprep.subr.mxu0 0.0
          %1940 = vmatpush1.msra.mxu0 0.0
          %1941 = vmatprep.subr.mxu0 0.0
          %1942 = vmatpush1.msra.mxu0 0.0
          %1943 = vmatprep.subr.mxu0 0.0
          %1944 = vmatpush1.msra.mxu0 0.0
          %1945 = vmatprep.subr.mxu0 0.0
          %1946 = vmatpush1.msra.mxu0 0.0
          %1947 = vmatprep.subr.mxu0 0.0
          %1948 = vmatpush1.msra.mxu0 0.0
          %1949 = vmatprep.subr.mxu0 0.0
          %1950 = vmatpush1.msra.mxu0 0.0
          %1951 = vmatprep.subr.mxu0 0.0
          %1952 = vmatpush1.msra.mxu0 0.0
          %1953 = vmatprep.subr.mxu0 0.0
          %1954 = vmatpush1.msra.mxu0 %v1921
          %1955 = vmatprep.subr.mxu0 0.0
          %1956 = vmatpush2.msra.mxu0 0.0
          %1957 = vmatprep.subr.mxu0 0.0
          %1958 = vmatpush2.msra.mxu0 0.0
          %1959 = vmatprep.subr.mxu0 0.0
          %1960 = vmatpush2.msra.mxu0 0.0
          %1961 = vmatprep.subr.mxu0 0.0
          %1962 = vmatpush2.msra.mxu0 0.0
          %1963 = vmatprep.subr.mxu0 0.0
          %1964 = vmatpush2.msra.mxu0 0.0
          %1965 = vmatprep.subr.mxu0 0.0
          %1966 = vmatpush2.msra.mxu0 0.0
          %1967 = vmatprep.subr.mxu0 0.0
          %1968 = vmatpush2.msra.mxu0 0.0
          %1969 = vmatprep.subr.mxu0 0.0
          %1970 = vmatpush2.msra.mxu0 0.0
          %1971 = vmatprep.subr.mxu0 0.0
          %1972 = vmatpush2.msra.mxu0 0.0
          %1973 = vmatprep.subr.mxu0 0.0
          %1974 = vmatpush2.msra.mxu0 0.0
          %1975 = vmatprep.subr.mxu0 0.0
          %1976 = vmatpush2.msra.mxu0 0.0
          %1977 = vmatprep.subr.mxu0 0.0
          %1978 = vmatpush2.msra.mxu0 0.0
          %1979 = vmatprep.subr.mxu0 0.0
          %1980 = vmatpush2.msra.mxu0 0.0
          %1981 = vmatprep.subr.mxu0 0.0
          %1982 = vmatpush2.msra.mxu0 0.0
          %1983 = vmatprep.subr.mxu0 0.0
          %1984 = vmatpush2.msra.mxu0 0.0
          %1985 = vmatprep.subr.mxu0 0.0
          %1986 = vmatpush2.msra.mxu0 0.0
          %1987 = vmatprep.mubr.f32.mxu0 0.0
          %1988 = vmatmul.mubr.f32.gmra.mxu0 %v1915
          %v1989 = vpop.f32.mrf.mxu0
          %v1990 = vadd.f32 0.0, %v1989
          %v1991 = vpop.f32.mrf.mxu0
          %1992 = vmatprep.mubr.f32.mxu0 0.0
          %1993 = vmatmul.mubr.f32.gmra.mxu0 %v1917
          %v1994 = vpop.f32.mrf.mxu0
          %v1995 = vadd.f32 0.0, %v1994
          %v1996 = vpop.f32.mrf.mxu0
          %1997 = vdwg.mxu0
          %v1998 = vsel %vm1914, %v1903, 0
          %v2000 = vsel %vm1914, %v1904, 0
          %v2003 = vsel %vm1919, %v1905, 0
          %2005 = vmatprep.subr.mxu0 0.0
          %2006 = vmatpush1.msra.mxu0 0.0
          %2007 = vmatprep.subr.mxu0 0.0
          %2008 = vmatpush1.msra.mxu0 0.0
          %2009 = vmatprep.subr.mxu0 0.0
          %2010 = vmatpush1.msra.mxu0 0.0
          %2011 = vmatprep.subr.mxu0 0.0
          %2012 = vmatpush1.msra.mxu0 0.0
          %2013 = vmatprep.subr.mxu0 0.0
          %2014 = vmatpush1.msra.mxu0 0.0
          %2015 = vmatprep.subr.mxu0 0.0
          %2016 = vmatpush1.msra.mxu0 0.0
          %2017 = vmatprep.subr.mxu0 0.0
          %2018 = vmatpush1.msra.mxu0 0.0
          %2019 = vmatprep.subr.mxu0 0.0
          %2020 = vmatpush1.msra.mxu0 0.0
          %2021 = vmatprep.subr.mxu0 0.0
          %2022 = vmatpush1.msra.mxu0 0.0
          %2023 = vmatprep.subr.mxu0 0.0
          %2024 = vmatpush1.msra.mxu0 0.0
          %2025 = vmatprep.subr.mxu0 0.0
          %2026 = vmatpush1.msra.mxu0 0.0
          %2027 = vmatprep.subr.mxu0 0.0
          %2028 = vmatpush1.msra.mxu0 0.0
          %2029 = vmatprep.subr.mxu0 0.0
          %2030 = vmatpush1.msra.mxu0 0.0
          %2031 = vmatprep.subr.mxu0 0.0
          %2032 = vmatpush1.msra.mxu0 0.0
          %2033 = vmatprep.subr.mxu0 0.0
          %2034 = vmatpush1.msra.mxu0 0.0
          %2035 = vmatprep.subr.mxu0 0.0
          %2036 = vmatpush1.msra.mxu0 %v2003
          %2037 = vmatprep.subr.mxu0 0.0
          %2038 = vmatpush2.msra.mxu0 0.0
          %2039 = vmatprep.subr.mxu0 0.0
          %2040 = vmatpush2.msra.mxu0 0.0
          %2041 = vmatprep.subr.mxu0 0.0
          %2042 = vmatpush2.msra.mxu0 0.0
          %2043 = vmatprep.subr.mxu0 0.0
          %2044 = vmatpush2.msra.mxu0 0.0
          %2045 = vmatprep.subr.mxu0 0.0
          %2046 = vmatpush2.msra.mxu0 0.0
          %2047 = vmatprep.subr.mxu0 0.0
          %2048 = vmatpush2.msra.mxu0 0.0
          %2049 = vmatprep.subr.mxu0 0.0
          %2050 = vmatpush2.msra.mxu0 0.0
          %2051 = vmatprep.subr.mxu0 0.0
          %2052 = vmatpush2.msra.mxu0 0.0
          %2053 = vmatprep.subr.mxu0 0.0
          %2054 = vmatpush2.msra.mxu0 0.0
          %2055 = vmatprep.subr.mxu0 0.0
          %2056 = vmatpush2.msra.mxu0 0.0
          %2057 = vmatprep.subr.mxu0 0.0
          %2058 = vmatpush2.msra.mxu0 0.0
          %2059 = vmatprep.subr.mxu0 0.0
          %2060 = vmatpush2.msra.mxu0 0.0
          %2061 = vmatprep.subr.mxu0 0.0
          %2062 = vmatpush2.msra.mxu0 0.0
          %2063 = vmatprep.subr.mxu0 0.0
          %2064 = vmatpush2.msra.mxu0 0.0
          %2065 = vmatprep.subr.mxu0 0.0
          %2066 = vmatpush2.msra.mxu0 0.0
          %2067 = vmatprep.subr.mxu0 0.0
          %2068 = vmatpush2.msra.mxu0 0.0
          %2069 = vmatprep.mubr.f32.mxu0 0.0
          %2070 = vmatmul.mubr.f32.gmra.mxu0 %v1998
          %v2071 = vpop.f32.mrf.mxu0
          %v2072 = vadd.f32 %v1990, %v2071
          %v2073 = vpop.f32.mrf.mxu0
          %2074 = vmatprep.mubr.f32.mxu0 0.0
          %2075 = vmatmul.mubr.f32.gmra.mxu0 %v2000
          %v2076 = vpop.f32.mrf.mxu0
          %v2077 = vadd.f32 %v1995, %v2076
          %v2078 = vpop.f32.mrf.mxu0
          %2079 = vdwg.mxu0
          %s2080 = scalar_lea.vmem %s3, 16
          %v2081 = vld [vmem:[%s2080] sm:$0x3f]
          %v2082 = vrot.slane %v1903, 2
          %v2083 = vrot.slane %v1904, 2
          %v2084 = vsel %vm1919, %v2082, %v2083
          %v2085 = vsel %vm1914, %v2084, 0
          %v2087 = vsel %vm1914, %v2083, 0
          %v2090 = vsel %vm1919, %v2081, 0
          %2092 = vmatprep.subr.mxu0 0.0
          %2093 = vmatpush1.msra.mxu0 0.0
          %2094 = vmatprep.subr.mxu0 0.0
          %2095 = vmatpush1.msra.mxu0 0.0
          %2096 = vmatprep.subr.mxu0 0.0
          %2097 = vmatpush1.msra.mxu0 0.0
          %2098 = vmatprep.subr.mxu0 0.0
          %2099 = vmatpush1.msra.mxu0 0.0
          %2100 = vmatprep.subr.mxu0 0.0
          %2101 = vmatpush1.msra.mxu0 0.0
          %2102 = vmatprep.subr.mxu0 0.0
          %2103 = vmatpush1.msra.mxu0 0.0
          %2104 = vmatprep.subr.mxu0 0.0
          %2105 = vmatpush1.msra.mxu0 0.0
          %2106 = vmatprep.subr.mxu0 0.0
          %2107 = vmatpush1.msra.mxu0 0.0
          %2108 = vmatprep.subr.mxu0 0.0
          %2109 = vmatpush1.msra.mxu0 0.0
          %2110 = vmatprep.subr.mxu0 0.0
          %2111 = vmatpush1.msra.mxu0 0.0
          %2112 = vmatprep.subr.mxu0 0.0
          %2113 = vmatpush1.msra.mxu0 0.0
          %2114 = vmatprep.subr.mxu0 0.0
          %2115 = vmatpush1.msra.mxu0 0.0
          %2116 = vmatprep.subr.mxu0 0.0
          %2117 = vmatpush1.msra.mxu0 0.0
          %2118 = vmatprep.subr.mxu0 0.0
          %2119 = vmatpush1.msra.mxu0 0.0
          %2120 = vmatprep.subr.mxu0 0.0
          %2121 = vmatpush1.msra.mxu0 0.0
          %2122 = vmatprep.subr.mxu0 0.0
          %2123 = vmatpush1.msra.mxu0 %v2090
          %2124 = vmatprep.subr.mxu0 0.0
          %2125 = vmatpush2.msra.mxu0 0.0
          %2126 = vmatprep.subr.mxu0 0.0
          %2127 = vmatpush2.msra.mxu0 0.0
          %2128 = vmatprep.subr.mxu0 0.0
          %2129 = vmatpush2.msra.mxu0 0.0
          %2130 = vmatprep.subr.mxu0 0.0
          %2131 = vmatpush2.msra.mxu0 0.0
          %2132 = vmatprep.subr.mxu0 0.0
          %2133 = vmatpush2.msra.mxu0 0.0
          %2134 = vmatprep.subr.mxu0 0.0
          %2135 = vmatpush2.msra.mxu0 0.0
          %2136 = vmatprep.subr.mxu0 0.0
          %2137 = vmatpush2.msra.mxu0 0.0
          %2138 = vmatprep.subr.mxu0 0.0
          %2139 = vmatpush2.msra.mxu0 0.0
          %2140 = vmatprep.subr.mxu0 0.0
          %2141 = vmatpush2.msra.mxu0 0.0
          %2142 = vmatprep.subr.mxu0 0.0
          %2143 = vmatpush2.msra.mxu0 0.0
          %2144 = vmatprep.subr.mxu0 0.0
          %2145 = vmatpush2.msra.mxu0 0.0
          %2146 = vmatprep.subr.mxu0 0.0
          %2147 = vmatpush2.msra.mxu0 0.0
          %2148 = vmatprep.subr.mxu0 0.0
          %2149 = vmatpush2.msra.mxu0 0.0
          %2150 = vmatprep.subr.mxu0 0.0
          %2151 = vmatpush2.msra.mxu0 0.0
          %2152 = vmatprep.subr.mxu0 0.0
          %2153 = vmatpush2.msra.mxu0 0.0
          %2154 = vmatprep.subr.mxu0 0.0
          %2155 = vmatpush2.msra.mxu0 0.0
          %2156 = vmatprep.mubr.f32.mxu0 0.0
          %2157 = vmatmul.mubr.f32.gmra.mxu0 %v2085
          %v2158 = vpop.f32.mrf.mxu0
          %v2159 = vadd.f32 0.0, %v2158
          %v2160 = vpop.f32.mrf.mxu0
          %2161 = vmatprep.mubr.f32.mxu0 0.0
          %2162 = vmatmul.mubr.f32.gmra.mxu0 %v2087
          %v2163 = vpop.f32.mrf.mxu0
          %v2164 = vadd.f32 0.0, %v2163
          %v2165 = vpop.f32.mrf.mxu0
          %2166 = vdwg.mxu0
          %v2167 = vadd.f32 %v2072, %v2159
          %v2168 = vadd.f32 %v2077, %v2164
          %s2169 = scalar_lea.vmem %s3, 24
          %v2170 = vld [vmem:[%s2169] sm:$0x3f]
          %vm2171 = vcmask 1044480
          %v2172 = vrot.slane %v1903, 3
          %v2173 = vrot.slane %v1904, 3
          %v2174 = vsel %vm2171, %v2172, %v2173
          %v2175 = vsel %vm1914, %v2174, 0
          %v2177 = vsel %vm1914, %v2173, 0
          %v2180 = vsel %vm1919, %v2170, 0
          %2182 = vmatprep.subr.mxu0 0.0
          %2183 = vmatpush1.msra.mxu0 0.0
          %2184 = vmatprep.subr.mxu0 0.0
          %2185 = vmatpush1.msra.mxu0 0.0
          %2186 = vmatprep.subr.mxu0 0.0
          %2187 = vmatpush1.msra.mxu0 0.0
          %2188 = vmatprep.subr.mxu0 0.0
          %2189 = vmatpush1.msra.mxu0 0.0
          %2190 = vmatprep.subr.mxu0 0.0
          %2191 = vmatpush1.msra.mxu0 0.0
          %2192 = vmatprep.subr.mxu0 0.0
          %2193 = vmatpush1.msra.mxu0 0.0
          %2194 = vmatprep.subr.mxu0 0.0
          %2195 = vmatpush1.msra.mxu0 0.0
          %2196 = vmatprep.subr.mxu0 0.0
          %2197 = vmatpush1.msra.mxu0 0.0
          %2198 = vmatprep.subr.mxu0 0.0
          %2199 = vmatpush1.msra.mxu0 0.0
          %2200 = vmatprep.subr.mxu0 0.0
          %2201 = vmatpush1.msra.mxu0 0.0
          %2202 = vmatprep.subr.mxu0 0.0
          %2203 = vmatpush1.msra.mxu0 0.0
          %2204 = vmatprep.subr.mxu0 0.0
          %2205 = vmatpush1.msra.mxu0 0.0
          %2206 = vmatprep.subr.mxu0 0.0
          %2207 = vmatpush1.msra.mxu0 0.0
          %2208 = vmatprep.subr.mxu0 0.0
          %2209 = vmatpush1.msra.mxu0 0.0
          %2210 = vmatprep.subr.mxu0 0.0
          %2211 = vmatpush1.msra.mxu0 0.0
          %2212 = vmatprep.subr.mxu0 0.0
          %2213 = vmatpush1.msra.mxu0 %v2180
          %2214 = vmatprep.subr.mxu0 0.0
          %2215 = vmatpush2.msra.mxu0 0.0
          %2216 = vmatprep.subr.mxu0 0.0
          %2217 = vmatpush2.msra.mxu0 0.0
          %2218 = vmatprep.subr.mxu0 0.0
          %2219 = vmatpush2.msra.mxu0 0.0
          %2220 = vmatprep.subr.mxu0 0.0
          %2221 = vmatpush2.msra.mxu0 0.0
          %2222 = vmatprep.subr.mxu0 0.0
          %2223 = vmatpush2.msra.mxu0 0.0
          %2224 = vmatprep.subr.mxu0 0.0
          %2225 = vmatpush2.msra.mxu0 0.0
          %2226 = vmatprep.subr.mxu0 0.0
          %2227 = vmatpush2.msra.mxu0 0.0
          %2228 = vmatprep.subr.mxu0 0.0
          %2229 = vmatpush2.msra.mxu0 0.0
          %2230 = vmatprep.subr.mxu0 0.0
          %2231 = vmatpush2.msra.mxu0 0.0
          %2232 = vmatprep.subr.mxu0 0.0
          %2233 = vmatpush2.msra.mxu0 0.0
          %2234 = vmatprep.subr.mxu0 0.0
          %2235 = vmatpush2.msra.mxu0 0.0
          %2236 = vmatprep.subr.mxu0 0.0
          %2237 = vmatpush2.msra.mxu0 0.0
          %2238 = vmatprep.subr.mxu0 0.0
          %2239 = vmatpush2.msra.mxu0 0.0
          %2240 = vmatprep.subr.mxu0 0.0
          %2241 = vmatpush2.msra.mxu0 0.0
          %2242 = vmatprep.subr.mxu0 0.0
          %2243 = vmatpush2.msra.mxu0 0.0
          %2244 = vmatprep.subr.mxu0 0.0
          %2245 = vmatpush2.msra.mxu0 0.0
          %2246 = vmatprep.mubr.f32.mxu0 0.0
          %2247 = vmatmul.mubr.f32.gmra.mxu0 %v2175
          %v2248 = vpop.f32.mrf.mxu0
          %v2249 = vadd.f32 0.0, %v2248
          %v2250 = vpop.f32.mrf.mxu0
          %2251 = vmatprep.mubr.f32.mxu0 0.0
          %2252 = vmatmul.mubr.f32.gmra.mxu0 %v2177
          %v2253 = vpop.f32.mrf.mxu0
          %v2254 = vadd.f32 0.0, %v2253
          %v2255 = vpop.f32.mrf.mxu0
          %2256 = vdwg.mxu0
          %v2257 = vadd.f32 %v2167, %v2249
          %v2258 = vadd.f32 %v2168, %v2254
          %s2259 = scalar_lea.vmem %s3, 32
          %v2260 = vld [vmem:[%s2259] sm:$0x3f]
          %vm2261 = vcmask 1043456
          %v2262 = vrot.slane %v1903, 4
          %v2263 = vrot.slane %v1904, 4
          %v2264 = vsel %vm2261, %v2262, %v2263
          %v2265 = vsel %vm1914, %v2264, 0
          %v2267 = vsel %vm1914, %v2263, 0
          %v2270 = vsel %vm1919, %v2260, 0
          %2272 = vmatprep.subr.mxu0 0.0
          %2273 = vmatpush1.msra.mxu0 0.0
          %2274 = vmatprep.subr.mxu0 0.0
          %2275 = vmatpush1.msra.mxu0 0.0
          %2276 = vmatprep.subr.mxu0 0.0
          %2277 = vmatpush1.msra.mxu0 0.0
          %2278 = vmatprep.subr.mxu0 0.0
          %2279 = vmatpush1.msra.mxu0 0.0
          %2280 = vmatprep.subr.mxu0 0.0
          %2281 = vmatpush1.msra.mxu0 0.0
          %2282 = vmatprep.subr.mxu0 0.0
          %2283 = vmatpush1.msra.mxu0 0.0
          %2284 = vmatprep.subr.mxu0 0.0
          %2285 = vmatpush1.msra.mxu0 0.0
          %2286 = vmatprep.subr.mxu0 0.0
          %2287 = vmatpush1.msra.mxu0 0.0
          %2288 = vmatprep.subr.mxu0 0.0
          %2289 = vmatpush1.msra.mxu0 0.0
          %2290 = vmatprep.subr.mxu0 0.0
          %2291 = vmatpush1.msra.mxu0 0.0
          %2292 = vmatprep.subr.mxu0 0.0
          %2293 = vmatpush1.msra.mxu0 0.0
          %2294 = vmatprep.subr.mxu0 0.0
          %2295 = vmatpush1.msra.mxu0 0.0
          %2296 = vmatprep.subr.mxu0 0.0
          %2297 = vmatpush1.msra.mxu0 0.0
          %2298 = vmatprep.subr.mxu0 0.0
          %2299 = vmatpush1.msra.mxu0 0.0
          %2300 = vmatprep.subr.mxu0 0.0
          %2301 = vmatpush1.msra.mxu0 0.0
          %2302 = vmatprep.subr.mxu0 0.0
          %2303 = vmatpush1.msra.mxu0 %v2270
          %2304 = vmatprep.subr.mxu0 0.0
          %2305 = vmatpush2.msra.mxu0 0.0
          %2306 = vmatprep.subr.mxu0 0.0
          %2307 = vmatpush2.msra.mxu0 0.0
          %2308 = vmatprep.subr.mxu0 0.0
          %2309 = vmatpush2.msra.mxu0 0.0
          %2310 = vmatprep.subr.mxu0 0.0
          %2311 = vmatpush2.msra.mxu0 0.0
          %2312 = vmatprep.subr.mxu0 0.0
          %2313 = vmatpush2.msra.mxu0 0.0
          %2314 = vmatprep.subr.mxu0 0.0
          %2315 = vmatpush2.msra.mxu0 0.0
          %2316 = vmatprep.subr.mxu0 0.0
          %2317 = vmatpush2.msra.mxu0 0.0
          %2318 = vmatprep.subr.mxu0 0.0
          %2319 = vmatpush2.msra.mxu0 0.0
          %2320 = vmatprep.subr.mxu0 0.0
          %2321 = vmatpush2.msra.mxu0 0.0
          %2322 = vmatprep.subr.mxu0 0.0
          %2323 = vmatpush2.msra.mxu0 0.0
          %2324 = vmatprep.subr.mxu0 0.0
          %2325 = vmatpush2.msra.mxu0 0.0
          %2326 = vmatprep.subr.mxu0 0.0
          %2327 = vmatpush2.msra.mxu0 0.0
          %2328 = vmatprep.subr.mxu0 0.0
          %2329 = vmatpush2.msra.mxu0 0.0
          %2330 = vmatprep.subr.mxu0 0.0
          %2331 = vmatpush2.msra.mxu0 0.0
          %2332 = vmatprep.subr.mxu0 0.0
          %2333 = vmatpush2.msra.mxu0 0.0
          %2334 = vmatprep.subr.mxu0 0.0
          %2335 = vmatpush2.msra.mxu0 0.0
          %2336 = vmatprep.mubr.f32.mxu0 0.0
          %2337 = vmatmul.mubr.f32.gmra.mxu0 %v2265
          %v2338 = vpop.f32.mrf.mxu0
          %v2339 = vadd.f32 0.0, %v2338
          %v2340 = vpop.f32.mrf.mxu0
          %2341 = vmatprep.mubr.f32.mxu0 0.0
          %2342 = vmatmul.mubr.f32.gmra.mxu0 %v2267
          %v2343 = vpop.f32.mrf.mxu0
          %v2344 = vadd.f32 0.0, %v2343
          %v2345 = vpop.f32.mrf.mxu0
          %2346 = vdwg.mxu0
          %v2347 = vadd.f32 %v2257, %v2339
          %v2348 = vadd.f32 %v2258, %v2344
          %s2349 = sadd.s32 %s1900, 1
          %s2350 = smul.u32 %s2349, 16
          %s2351 = scalar_lea.vmem [#allocation2], %s2350
          %v2352 = vld [vmem:[%s2351] sm:$0xff]
          %v2353 = vld [vmem:[%s2351 + $0x8] sm:$0x3f]
          %s2354 = scalar_lea.vmem %s3, 40
          %v2355 = vld [vmem:[%s2354] sm:$0x3f]
          %v2357 = vsel %vm1914, %v2352, 0
          %v2360 = vsel %vm1914, %v2353, 0
          %v2363 = vsel %vm1919, %v2355, 0
          %2365 = vmatprep.subr.mxu0 0.0
          %2366 = vmatpush1.msra.mxu0 0.0
          %2367 = vmatprep.subr.mxu0 0.0
          %2368 = vmatpush1.msra.mxu0 0.0
          %2369 = vmatprep.subr.mxu0 0.0
          %2370 = vmatpush1.msra.mxu0 0.0
          %2371 = vmatprep.subr.mxu0 0.0
          %2372 = vmatpush1.msra.mxu0 0.0
          %2373 = vmatprep.subr.mxu0 0.0
          %2374 = vmatpush1.msra.mxu0 0.0
          %2375 = vmatprep.subr.mxu0 0.0
          %2376 = vmatpush1.msra.mxu0 0.0
          %2377 = vmatprep.subr.mxu0 0.0
          %2378 = vmatpush1.msra.mxu0 0.0
          %2379 = vmatprep.subr.mxu0 0.0
          %2380 = vmatpush1.msra.mxu0 0.0
          %2381 = vmatprep.subr.mxu0 0.0
          %2382 = vmatpush1.msra.mxu0 0.0
          %2383 = vmatprep.subr.mxu0 0.0
          %2384 = vmatpush1.msra.mxu0 0.0
          %2385 = vmatprep.subr.mxu0 0.0
          %2386 = vmatpush1.msra.mxu0 0.0
          %2387 = vmatprep.subr.mxu0 0.0
          %2388 = vmatpush1.msra.mxu0 0.0
          %2389 = vmatprep.subr.mxu0 0.0
          %2390 = vmatpush1.msra.mxu0 0.0
          %2391 = vmatprep.subr.mxu0 0.0
          %2392 = vmatpush1.msra.mxu0 0.0
          %2393 = vmatprep.subr.mxu0 0.0
          %2394 = vmatpush1.msra.mxu0 0.0
          %2395 = vmatprep.subr.mxu0 0.0
          %2396 = vmatpush1.msra.mxu0 %v2363
          %2397 = vmatprep.subr.mxu0 0.0
          %2398 = vmatpush2.msra.mxu0 0.0
          %2399 = vmatprep.subr.mxu0 0.0
          %2400 = vmatpush2.msra.mxu0 0.0
          %2401 = vmatprep.subr.mxu0 0.0
          %2402 = vmatpush2.msra.mxu0 0.0
          %2403 = vmatprep.subr.mxu0 0.0
          %2404 = vmatpush2.msra.mxu0 0.0
          %2405 = vmatprep.subr.mxu0 0.0
          %2406 = vmatpush2.msra.mxu0 0.0
          %2407 = vmatprep.subr.mxu0 0.0
          %2408 = vmatpush2.msra.mxu0 0.0
          %2409 = vmatprep.subr.mxu0 0.0
          %2410 = vmatpush2.msra.mxu0 0.0
          %2411 = vmatprep.subr.mxu0 0.0
          %2412 = vmatpush2.msra.mxu0 0.0
          %2413 = vmatprep.subr.mxu0 0.0
          %2414 = vmatpush2.msra.mxu0 0.0
          %2415 = vmatprep.subr.mxu0 0.0
          %2416 = vmatpush2.msra.mxu0 0.0
          %2417 = vmatprep.subr.mxu0 0.0
          %2418 = vmatpush2.msra.mxu0 0.0
          %2419 = vmatprep.subr.mxu0 0.0
          %2420 = vmatpush2.msra.mxu0 0.0
          %2421 = vmatprep.subr.mxu0 0.0
          %2422 = vmatpush2.msra.mxu0 0.0
          %2423 = vmatprep.subr.mxu0 0.0
          %2424 = vmatpush2.msra.mxu0 0.0
          %2425 = vmatprep.subr.mxu0 0.0
          %2426 = vmatpush2.msra.mxu0 0.0
          %2427 = vmatprep.subr.mxu0 0.0
          %2428 = vmatpush2.msra.mxu0 0.0
          %2429 = vmatprep.mubr.f32.mxu0 0.0
          %2430 = vmatmul.mubr.f32.gmra.mxu0 %v2357
          %v2431 = vpop.f32.mrf.mxu0
          %v2432 = vadd.f32 0.0, %v2431
          %v2433 = vpop.f32.mrf.mxu0
          %2434 = vmatprep.mubr.f32.mxu0 0.0
          %2435 = vmatmul.mubr.f32.gmra.mxu0 %v2360
          %v2436 = vpop.f32.mrf.mxu0
          %v2437 = vadd.f32 0.0, %v2436
          %v2438 = vpop.f32.mrf.mxu0
          %2439 = vdwg.mxu0
          %v2440 = vadd.f32 %v2347, %v2432
          %v2441 = vadd.f32 %v2348, %v2437
          %s2442 = scalar_lea.vmem %s3, 48
          %v2443 = vld [vmem:[%s2442] sm:$0x3f]
          %v2444 = vrot.slane %v2352, 1
          %v2445 = vrot.slane %v2353, 1
          %v2446 = vsel %vm1910, %v2444, %v2445
          %v2447 = vsel %vm1914, %v2446, 0
          %v2449 = vsel %vm1914, %v2445, 0
          %v2452 = vsel %vm1919, %v2443, 0
          %2454 = vmatprep.subr.mxu0 0.0
          %2455 = vmatpush1.msra.mxu0 0.0
          %2456 = vmatprep.subr.mxu0 0.0
          %2457 = vmatpush1.msra.mxu0 0.0
          %2458 = vmatprep.subr.mxu0 0.0
          %2459 = vmatpush1.msra.mxu0 0.0
          %2460 = vmatprep.subr.mxu0 0.0
          %2461 = vmatpush1.msra.mxu0 0.0
          %2462 = vmatprep.subr.mxu0 0.0
          %2463 = vmatpush1.msra.mxu0 0.0
          %2464 = vmatprep.subr.mxu0 0.0
          %2465 = vmatpush1.msra.mxu0 0.0
          %2466 = vmatprep.subr.mxu0 0.0
          %2467 = vmatpush1.msra.mxu0 0.0
          %2468 = vmatprep.subr.mxu0 0.0
          %2469 = vmatpush1.msra.mxu0 0.0
          %2470 = vmatprep.subr.mxu0 0.0
          %2471 = vmatpush1.msra.mxu0 0.0
          %2472 = vmatprep.subr.mxu0 0.0
          %2473 = vmatpush1.msra.mxu0 0.0
          %2474 = vmatprep.subr.mxu0 0.0
          %2475 = vmatpush1.msra.mxu0 0.0
          %2476 = vmatprep.subr.mxu0 0.0
          %2477 = vmatpush1.msra.mxu0 0.0
          %2478 = vmatprep.subr.mxu0 0.0
          %2479 = vmatpush1.msra.mxu0 0.0
          %2480 = vmatprep.subr.mxu0 0.0
          %2481 = vmatpush1.msra.mxu0 0.0
          %2482 = vmatprep.subr.mxu0 0.0
          %2483 = vmatpush1.msra.mxu0 0.0
          %2484 = vmatprep.subr.mxu0 0.0
          %2485 = vmatpush1.msra.mxu0 %v2452
          %2486 = vmatprep.subr.mxu0 0.0
          %2487 = vmatpush2.msra.mxu0 0.0
          %2488 = vmatprep.subr.mxu0 0.0
          %2489 = vmatpush2.msra.mxu0 0.0
          %2490 = vmatprep.subr.mxu0 0.0
          %2491 = vmatpush2.msra.mxu0 0.0
          %2492 = vmatprep.subr.mxu0 0.0
          %2493 = vmatpush2.msra.mxu0 0.0
          %2494 = vmatprep.subr.mxu0 0.0
          %2495 = vmatpush2.msra.mxu0 0.0
          %2496 = vmatprep.subr.mxu0 0.0
          %2497 = vmatpush2.msra.mxu0 0.0
          %2498 = vmatprep.subr.mxu0 0.0
          %2499 = vmatpush2.msra.mxu0 0.0
          %2500 = vmatprep.subr.mxu0 0.0
          %2501 = vmatpush2.msra.mxu0 0.0
          %2502 = vmatprep.subr.mxu0 0.0
          %2503 = vmatpush2.msra.mxu0 0.0
          %2504 = vmatprep.subr.mxu0 0.0
          %2505 = vmatpush2.msra.mxu0 0.0
          %2506 = vmatprep.subr.mxu0 0.0
          %2507 = vmatpush2.msra.mxu0 0.0
          %2508 = vmatprep.subr.mxu0 0.0
          %2509 = vmatpush2.msra.mxu0 0.0
          %2510 = vmatprep.subr.mxu0 0.0
          %2511 = vmatpush2.msra.mxu0 0.0
          %2512 = vmatprep.subr.mxu0 0.0
          %2513 = vmatpush2.msra.mxu0 0.0
          %2514 = vmatprep.subr.mxu0 0.0
          %2515 = vmatpush2.msra.mxu0 0.0
          %2516 = vmatprep.subr.mxu0 0.0
          %2517 = vmatpush2.msra.mxu0 0.0
          %2518 = vmatprep.mubr.f32.mxu0 0.0
          %2519 = vmatmul.mubr.f32.gmra.mxu0 %v2447
          %v2520 = vpop.f32.mrf.mxu0
          %v2521 = vadd.f32 0.0, %v2520
          %v2522 = vpop.f32.mrf.mxu0
          %2523 = vmatprep.mubr.f32.mxu0 0.0
          %2524 = vmatmul.mubr.f32.gmra.mxu0 %v2449
          %v2525 = vpop.f32.mrf.mxu0
          %v2526 = vadd.f32 0.0, %v2525
          %v2527 = vpop.f32.mrf.mxu0
          %2528 = vdwg.mxu0
          %v2529 = vadd.f32 %v2440, %v2521
          %v2530 = vadd.f32 %v2441, %v2526
          %s2531 = scalar_lea.vmem %s3, 56
          %v2532 = vld [vmem:[%s2531] sm:$0x3f]
          %v2533 = vrot.slane %v2352, 2
          %v2534 = vrot.slane %v2353, 2
          %v2535 = vsel %vm1919, %v2533, %v2534
          %v2536 = vsel %vm1914, %v2535, 0
          %v2538 = vsel %vm1914, %v2534, 0
          %v2541 = vsel %vm1919, %v2532, 0
          %2543 = vmatprep.subr.mxu0 0.0
          %2544 = vmatpush1.msra.mxu0 0.0
          %2545 = vmatprep.subr.mxu0 0.0
          %2546 = vmatpush1.msra.mxu0 0.0
          %2547 = vmatprep.subr.mxu0 0.0
          %2548 = vmatpush1.msra.mxu0 0.0
          %2549 = vmatprep.subr.mxu0 0.0
          %2550 = vmatpush1.msra.mxu0 0.0
          %2551 = vmatprep.subr.mxu0 0.0
          %2552 = vmatpush1.msra.mxu0 0.0
          %2553 = vmatprep.subr.mxu0 0.0
          %2554 = vmatpush1.msra.mxu0 0.0
          %2555 = vmatprep.subr.mxu0 0.0
          %2556 = vmatpush1.msra.mxu0 0.0
          %2557 = vmatprep.subr.mxu0 0.0
          %2558 = vmatpush1.msra.mxu0 0.0
          %2559 = vmatprep.subr.mxu0 0.0
          %2560 = vmatpush1.msra.mxu0 0.0
          %2561 = vmatprep.subr.mxu0 0.0
          %2562 = vmatpush1.msra.mxu0 0.0
          %2563 = vmatprep.subr.mxu0 0.0
          %2564 = vmatpush1.msra.mxu0 0.0
          %2565 = vmatprep.subr.mxu0 0.0
          %2566 = vmatpush1.msra.mxu0 0.0
          %2567 = vmatprep.subr.mxu0 0.0
          %2568 = vmatpush1.msra.mxu0 0.0
          %2569 = vmatprep.subr.mxu0 0.0
          %2570 = vmatpush1.msra.mxu0 0.0
          %2571 = vmatprep.subr.mxu0 0.0
          %2572 = vmatpush1.msra.mxu0 0.0
          %2573 = vmatprep.subr.mxu0 0.0
          %2574 = vmatpush1.msra.mxu0 %v2541
          %2575 = vmatprep.subr.mxu0 0.0
          %2576 = vmatpush2.msra.mxu0 0.0
          %2577 = vmatprep.subr.mxu0 0.0
          %2578 = vmatpush2.msra.mxu0 0.0
          %2579 = vmatprep.subr.mxu0 0.0
          %2580 = vmatpush2.msra.mxu0 0.0
          %2581 = vmatprep.subr.mxu0 0.0
          %2582 = vmatpush2.msra.mxu0 0.0
          %2583 = vmatprep.subr.mxu0 0.0
          %2584 = vmatpush2.msra.mxu0 0.0
          %2585 = vmatprep.subr.mxu0 0.0
          %2586 = vmatpush2.msra.mxu0 0.0
          %2587 = vmatprep.subr.mxu0 0.0
          %2588 = vmatpush2.msra.mxu0 0.0
          %2589 = vmatprep.subr.mxu0 0.0
          %2590 = vmatpush2.msra.mxu0 0.0
          %2591 = vmatprep.subr.mxu0 0.0
          %2592 = vmatpush2.msra.mxu0 0.0
          %2593 = vmatprep.subr.mxu0 0.0
          %2594 = vmatpush2.msra.mxu0 0.0
          %2595 = vmatprep.subr.mxu0 0.0
          %2596 = vmatpush2.msra.mxu0 0.0
          %2597 = vmatprep.subr.mxu0 0.0
          %2598 = vmatpush2.msra.mxu0 0.0
          %2599 = vmatprep.subr.mxu0 0.0
          %2600 = vmatpush2.msra.mxu0 0.0
          %2601 = vmatprep.subr.mxu0 0.0
          %2602 = vmatpush2.msra.mxu0 0.0
          %2603 = vmatprep.subr.mxu0 0.0
          %2604 = vmatpush2.msra.mxu0 0.0
          %2605 = vmatprep.subr.mxu0 0.0
          %2606 = vmatpush2.msra.mxu0 0.0
          %2607 = vmatprep.mubr.f32.mxu0 0.0
          %2608 = vmatmul.mubr.f32.gmra.mxu0 %v2536
          %v2609 = vpop.f32.mrf.mxu0
          %v2610 = vadd.f32 0.0, %v2609
          %v2611 = vpop.f32.mrf.mxu0
          %2612 = vmatprep.mubr.f32.mxu0 0.0
          %2613 = vmatmul.mubr.f32.gmra.mxu0 %v2538
          %v2614 = vpop.f32.mrf.mxu0
          %v2615 = vadd.f32 0.0, %v2614
          %v2616 = vpop.f32.mrf.mxu0
          %2617 = vdwg.mxu0
          %v2618 = vadd.f32 %v2529, %v2610
          %v2619 = vadd.f32 %v2530, %v2615
          %s2620 = scalar_lea.vmem %s3, 64
          %v2621 = vld [vmem:[%s2620] sm:$0x3f]
          %v2622 = vrot.slane %v2352, 3
          %v2623 = vrot.slane %v2353, 3
          %v2624 = vsel %vm2171, %v2622, %v2623
          %v2625 = vsel %vm1914, %v2624, 0
          %v2627 = vsel %vm1914, %v2623, 0
          %v2630 = vsel %vm1919, %v2621, 0
          %2632 = vmatprep.subr.mxu0 0.0
          %2633 = vmatpush1.msra.mxu0 0.0
          %2634 = vmatprep.subr.mxu0 0.0
          %2635 = vmatpush1.msra.mxu0 0.0
          %2636 = vmatprep.subr.mxu0 0.0
          %2637 = vmatpush1.msra.mxu0 0.0
          %2638 = vmatprep.subr.mxu0 0.0
          %2639 = vmatpush1.msra.mxu0 0.0
          %2640 = vmatprep.subr.mxu0 0.0
          %2641 = vmatpush1.msra.mxu0 0.0
          %2642 = vmatprep.subr.mxu0 0.0
          %2643 = vmatpush1.msra.mxu0 0.0
          %2644 = vmatprep.subr.mxu0 0.0
          %2645 = vmatpush1.msra.mxu0 0.0
          %2646 = vmatprep.subr.mxu0 0.0
          %2647 = vmatpush1.msra.mxu0 0.0
          %2648 = vmatprep.subr.mxu0 0.0
          %2649 = vmatpush1.msra.mxu0 0.0
          %2650 = vmatprep.subr.mxu0 0.0
          %2651 = vmatpush1.msra.mxu0 0.0
          %2652 = vmatprep.subr.mxu0 0.0
          %2653 = vmatpush1.msra.mxu0 0.0
          %2654 = vmatprep.subr.mxu0 0.0
          %2655 = vmatpush1.msra.mxu0 0.0
          %2656 = vmatprep.subr.mxu0 0.0
          %2657 = vmatpush1.msra.mxu0 0.0
          %2658 = vmatprep.subr.mxu0 0.0
          %2659 = vmatpush1.msra.mxu0 0.0
          %2660 = vmatprep.subr.mxu0 0.0
          %2661 = vmatpush1.msra.mxu0 0.0
          %2662 = vmatprep.subr.mxu0 0.0
          %2663 = vmatpush1.msra.mxu0 %v2630
          %2664 = vmatprep.subr.mxu0 0.0
          %2665 = vmatpush2.msra.mxu0 0.0
          %2666 = vmatprep.subr.mxu0 0.0
          %2667 = vmatpush2.msra.mxu0 0.0
          %2668 = vmatprep.subr.mxu0 0.0
          %2669 = vmatpush2.msra.mxu0 0.0
          %2670 = vmatprep.subr.mxu0 0.0
          %2671 = vmatpush2.msra.mxu0 0.0
          %2672 = vmatprep.subr.mxu0 0.0
          %2673 = vmatpush2.msra.mxu0 0.0
          %2674 = vmatprep.subr.mxu0 0.0
          %2675 = vmatpush2.msra.mxu0 0.0
          %2676 = vmatprep.subr.mxu0 0.0
          %2677 = vmatpush2.msra.mxu0 0.0
          %2678 = vmatprep.subr.mxu0 0.0
          %2679 = vmatpush2.msra.mxu0 0.0
          %2680 = vmatprep.subr.mxu0 0.0
          %2681 = vmatpush2.msra.mxu0 0.0
          %2682 = vmatprep.subr.mxu0 0.0
          %2683 = vmatpush2.msra.mxu0 0.0
          %2684 = vmatprep.subr.mxu0 0.0
          %2685 = vmatpush2.msra.mxu0 0.0
          %2686 = vmatprep.subr.mxu0 0.0
          %2687 = vmatpush2.msra.mxu0 0.0
          %2688 = vmatprep.subr.mxu0 0.0
          %2689 = vmatpush2.msra.mxu0 0.0
          %2690 = vmatprep.subr.mxu0 0.0
          %2691 = vmatpush2.msra.mxu0 0.0
          %2692 = vmatprep.subr.mxu0 0.0
          %2693 = vmatpush2.msra.mxu0 0.0
          %2694 = vmatprep.subr.mxu0 0.0
          %2695 = vmatpush2.msra.mxu0 0.0
          %2696 = vmatprep.mubr.f32.mxu0 0.0
          %2697 = vmatmul.mubr.f32.gmra.mxu0 %v2625
          %v2698 = vpop.f32.mrf.mxu0
          %v2699 = vadd.f32 0.0, %v2698
          %v2700 = vpop.f32.mrf.mxu0
          %2701 = vmatprep.mubr.f32.mxu0 0.0
          %2702 = vmatmul.mubr.f32.gmra.mxu0 %v2627
          %v2703 = vpop.f32.mrf.mxu0
          %v2704 = vadd.f32 0.0, %v2703
          %v2705 = vpop.f32.mrf.mxu0
          %2706 = vdwg.mxu0
          %v2707 = vadd.f32 %v2618, %v2699
          %v2708 = vadd.f32 %v2619, %v2704
          %s2709 = scalar_lea.vmem %s3, 72
          %v2710 = vld [vmem:[%s2709] sm:$0x3f]
          %v2711 = vrot.slane %v2352, 4
          %v2712 = vrot.slane %v2353, 4
          %v2713 = vsel %vm2261, %v2711, %v2712
          %v2714 = vsel %vm1914, %v2713, 0
          %v2716 = vsel %vm1914, %v2712, 0
          %v2719 = vsel %vm1919, %v2710, 0
          %2721 = vmatprep.subr.mxu0 0.0
          %2722 = vmatpush1.msra.mxu0 0.0
          %2723 = vmatprep.subr.mxu0 0.0
          %2724 = vmatpush1.msra.mxu0 0.0
          %2725 = vmatprep.subr.mxu0 0.0
          %2726 = vmatpush1.msra.mxu0 0.0
          %2727 = vmatprep.subr.mxu0 0.0
          %2728 = vmatpush1.msra.mxu0 0.0
          %2729 = vmatprep.subr.mxu0 0.0
          %2730 = vmatpush1.msra.mxu0 0.0
          %2731 = vmatprep.subr.mxu0 0.0
          %2732 = vmatpush1.msra.mxu0 0.0
          %2733 = vmatprep.subr.mxu0 0.0
          %2734 = vmatpush1.msra.mxu0 0.0
          %2735 = vmatprep.subr.mxu0 0.0
          %2736 = vmatpush1.msra.mxu0 0.0
          %2737 = vmatprep.subr.mxu0 0.0
          %2738 = vmatpush1.msra.mxu0 0.0
          %2739 = vmatprep.subr.mxu0 0.0
          %2740 = vmatpush1.msra.mxu0 0.0
          %2741 = vmatprep.subr.mxu0 0.0
          %2742 = vmatpush1.msra.mxu0 0.0
          %2743 = vmatprep.subr.mxu0 0.0
          %2744 = vmatpush1.msra.mxu0 0.0
          %2745 = vmatprep.subr.mxu0 0.0
          %2746 = vmatpush1.msra.mxu0 0.0
          %2747 = vmatprep.subr.mxu0 0.0
          %2748 = vmatpush1.msra.mxu0 0.0
          %2749 = vmatprep.subr.mxu0 0.0
          %2750 = vmatpush1.msra.mxu0 0.0
          %2751 = vmatprep.subr.mxu0 0.0
          %2752 = vmatpush1.msra.mxu0 %v2719
          %2753 = vmatprep.subr.mxu0 0.0
          %2754 = vmatpush2.msra.mxu0 0.0
          %2755 = vmatprep.subr.mxu0 0.0
          %2756 = vmatpush2.msra.mxu0 0.0
          %2757 = vmatprep.subr.mxu0 0.0
          %2758 = vmatpush2.msra.mxu0 0.0
          %2759 = vmatprep.subr.mxu0 0.0
          %2760 = vmatpush2.msra.mxu0 0.0
          %2761 = vmatprep.subr.mxu0 0.0
          %2762 = vmatpush2.msra.mxu0 0.0
          %2763 = vmatprep.subr.mxu0 0.0
          %2764 = vmatpush2.msra.mxu0 0.0
          %2765 = vmatprep.subr.mxu0 0.0
          %2766 = vmatpush2.msra.mxu0 0.0
          %2767 = vmatprep.subr.mxu0 0.0
          %2768 = vmatpush2.msra.mxu0 0.0
          %2769 = vmatprep.subr.mxu0 0.0
          %2770 = vmatpush2.msra.mxu0 0.0
          %2771 = vmatprep.subr.mxu0 0.0
          %2772 = vmatpush2.msra.mxu0 0.0
          %2773 = vmatprep.subr.mxu0 0.0
          %2774 = vmatpush2.msra.mxu0 0.0
          %2775 = vmatprep.subr.mxu0 0.0
          %2776 = vmatpush2.msra.mxu0 0.0
          %2777 = vmatprep.subr.mxu0 0.0
          %2778 = vmatpush2.msra.mxu0 0.0
          %2779 = vmatprep.subr.mxu0 0.0
          %2780 = vmatpush2.msra.mxu0 0.0
          %2781 = vmatprep.subr.mxu0 0.0
          %2782 = vmatpush2.msra.mxu0 0.0
          %2783 = vmatprep.subr.mxu0 0.0
          %2784 = vmatpush2.msra.mxu0 0.0
          %2785 = vmatprep.mubr.f32.mxu0 0.0
          %2786 = vmatmul.mubr.f32.gmra.mxu0 %v2714
          %v2787 = vpop.f32.mrf.mxu0
          %v2788 = vadd.f32 0.0, %v2787
          %v2789 = vpop.f32.mrf.mxu0
          %2790 = vmatprep.mubr.f32.mxu0 0.0
          %2791 = vmatmul.mubr.f32.gmra.mxu0 %v2716
          %v2792 = vpop.f32.mrf.mxu0
          %v2793 = vadd.f32 0.0, %v2792
          %v2794 = vpop.f32.mrf.mxu0
          %2795 = vdwg.mxu0
          %v2796 = vadd.f32 %v2707, %v2788
          %v2797 = vadd.f32 %v2708, %v2793
          %s2798 = sadd.s32 %s1900, 2
          %s2799 = smul.u32 %s2798, 16
          %s2800 = scalar_lea.vmem [#allocation2], %s2799
          %v2801 = vld [vmem:[%s2800] sm:$0xff]
          %v2802 = vld [vmem:[%s2800 + $0x8] sm:$0x3f]
          %s2803 = scalar_lea.vmem %s3, 80
          %v2804 = vld [vmem:[%s2803] sm:$0x3f]
          %v2806 = vsel %vm1914, %v2801, 0
          %v2809 = vsel %vm1914, %v2802, 0
          %v2812 = vsel %vm1919, %v2804, 0
          %2814 = vmatprep.subr.mxu0 0.0
          %2815 = vmatpush1.msra.mxu0 0.0
          %2816 = vmatprep.subr.mxu0 0.0
          %2817 = vmatpush1.msra.mxu0 0.0
          %2818 = vmatprep.subr.mxu0 0.0
          %2819 = vmatpush1.msra.mxu0 0.0
          %2820 = vmatprep.subr.mxu0 0.0
          %2821 = vmatpush1.msra.mxu0 0.0
          %2822 = vmatprep.subr.mxu0 0.0
          %2823 = vmatpush1.msra.mxu0 0.0
          %2824 = vmatprep.subr.mxu0 0.0
          %2825 = vmatpush1.msra.mxu0 0.0
          %2826 = vmatprep.subr.mxu0 0.0
          %2827 = vmatpush1.msra.mxu0 0.0
          %2828 = vmatprep.subr.mxu0 0.0
          %2829 = vmatpush1.msra.mxu0 0.0
          %2830 = vmatprep.subr.mxu0 0.0
          %2831 = vmatpush1.msra.mxu0 0.0
          %2832 = vmatprep.subr.mxu0 0.0
          %2833 = vmatpush1.msra.mxu0 0.0
          %2834 = vmatprep.subr.mxu0 0.0
          %2835 = vmatpush1.msra.mxu0 0.0
          %2836 = vmatprep.subr.mxu0 0.0
          %2837 = vmatpush1.msra.mxu0 0.0
          %2838 = vmatprep.subr.mxu0 0.0
          %2839 = vmatpush1.msra.mxu0 0.0
          %2840 = vmatprep.subr.mxu0 0.0
          %2841 = vmatpush1.msra.mxu0 0.0
          %2842 = vmatprep.subr.mxu0 0.0
          %2843 = vmatpush1.msra.mxu0 0.0
          %2844 = vmatprep.subr.mxu0 0.0
          %2845 = vmatpush1.msra.mxu0 %v2812
          %2846 = vmatprep.subr.mxu0 0.0
          %2847 = vmatpush2.msra.mxu0 0.0
          %2848 = vmatprep.subr.mxu0 0.0
          %2849 = vmatpush2.msra.mxu0 0.0
          %2850 = vmatprep.subr.mxu0 0.0
          %2851 = vmatpush2.msra.mxu0 0.0
          %2852 = vmatprep.subr.mxu0 0.0
          %2853 = vmatpush2.msra.mxu0 0.0
          %2854 = vmatprep.subr.mxu0 0.0
          %2855 = vmatpush2.msra.mxu0 0.0
          %2856 = vmatprep.subr.mxu0 0.0
          %2857 = vmatpush2.msra.mxu0 0.0
          %2858 = vmatprep.subr.mxu0 0.0
          %2859 = vmatpush2.msra.mxu0 0.0
          %2860 = vmatprep.subr.mxu0 0.0
          %2861 = vmatpush2.msra.mxu0 0.0
          %2862 = vmatprep.subr.mxu0 0.0
          %2863 = vmatpush2.msra.mxu0 0.0
          %2864 = vmatprep.subr.mxu0 0.0
          %2865 = vmatpush2.msra.mxu0 0.0
          %2866 = vmatprep.subr.mxu0 0.0
          %2867 = vmatpush2.msra.mxu0 0.0
          %2868 = vmatprep.subr.mxu0 0.0
          %2869 = vmatpush2.msra.mxu0 0.0
          %2870 = vmatprep.subr.mxu0 0.0
          %2871 = vmatpush2.msra.mxu0 0.0
          %2872 = vmatprep.subr.mxu0 0.0
          %2873 = vmatpush2.msra.mxu0 0.0
          %2874 = vmatprep.subr.mxu0 0.0
          %2875 = vmatpush2.msra.mxu0 0.0
          %2876 = vmatprep.subr.mxu0 0.0
          %2877 = vmatpush2.msra.mxu0 0.0
          %2878 = vmatprep.mubr.f32.mxu0 0.0
          %2879 = vmatmul.mubr.f32.gmra.mxu0 %v2806
          %v2880 = vpop.f32.mrf.mxu0
          %v2881 = vadd.f32 0.0, %v2880
          %v2882 = vpop.f32.mrf.mxu0
          %2883 = vmatprep.mubr.f32.mxu0 0.0
          %2884 = vmatmul.mubr.f32.gmra.mxu0 %v2809
          %v2885 = vpop.f32.mrf.mxu0
          %v2886 = vadd.f32 0.0, %v2885
          %v2887 = vpop.f32.mrf.mxu0
          %2888 = vdwg.mxu0
          %v2889 = vadd.f32 %v2796, %v2881
          %v2890 = vadd.f32 %v2797, %v2886
          %s2891 = scalar_lea.vmem %s3, 88
          %v2892 = vld [vmem:[%s2891] sm:$0x3f]
          %v2893 = vrot.slane %v2801, 1
          %v2894 = vrot.slane %v2802, 1
          %v2895 = vsel %vm1910, %v2893, %v2894
          %v2896 = vsel %vm1914, %v2895, 0
          %v2898 = vsel %vm1914, %v2894, 0
          %v2901 = vsel %vm1919, %v2892, 0
          %2903 = vmatprep.subr.mxu0 0.0
          %2904 = vmatpush1.msra.mxu0 0.0
          %2905 = vmatprep.subr.mxu0 0.0
          %2906 = vmatpush1.msra.mxu0 0.0
          %2907 = vmatprep.subr.mxu0 0.0
          %2908 = vmatpush1.msra.mxu0 0.0
          %2909 = vmatprep.subr.mxu0 0.0
          %2910 = vmatpush1.msra.mxu0 0.0
          %2911 = vmatprep.subr.mxu0 0.0
          %2912 = vmatpush1.msra.mxu0 0.0
          %2913 = vmatprep.subr.mxu0 0.0
          %2914 = vmatpush1.msra.mxu0 0.0
          %2915 = vmatprep.subr.mxu0 0.0
          %2916 = vmatpush1.msra.mxu0 0.0
          %2917 = vmatprep.subr.mxu0 0.0
          %2918 = vmatpush1.msra.mxu0 0.0
          %2919 = vmatprep.subr.mxu0 0.0
          %2920 = vmatpush1.msra.mxu0 0.0
          %2921 = vmatprep.subr.mxu0 0.0
          %2922 = vmatpush1.msra.mxu0 0.0
          %2923 = vmatprep.subr.mxu0 0.0
          %2924 = vmatpush1.msra.mxu0 0.0
          %2925 = vmatprep.subr.mxu0 0.0
          %2926 = vmatpush1.msra.mxu0 0.0
          %2927 = vmatprep.subr.mxu0 0.0
          %2928 = vmatpush1.msra.mxu0 0.0
          %2929 = vmatprep.subr.mxu0 0.0
          %2930 = vmatpush1.msra.mxu0 0.0
          %2931 = vmatprep.subr.mxu0 0.0
          %2932 = vmatpush1.msra.mxu0 0.0
          %2933 = vmatprep.subr.mxu0 0.0
          %2934 = vmatpush1.msra.mxu0 %v2901
          %2935 = vmatprep.subr.mxu0 0.0
          %2936 = vmatpush2.msra.mxu0 0.0
          %2937 = vmatprep.subr.mxu0 0.0
          %2938 = vmatpush2.msra.mxu0 0.0
          %2939 = vmatprep.subr.mxu0 0.0
          %2940 = vmatpush2.msra.mxu0 0.0
          %2941 = vmatprep.subr.mxu0 0.0
          %2942 = vmatpush2.msra.mxu0 0.0
          %2943 = vmatprep.subr.mxu0 0.0
          %2944 = vmatpush2.msra.mxu0 0.0
          %2945 = vmatprep.subr.mxu0 0.0
          %2946 = vmatpush2.msra.mxu0 0.0
          %2947 = vmatprep.subr.mxu0 0.0
          %2948 = vmatpush2.msra.mxu0 0.0
          %2949 = vmatprep.subr.mxu0 0.0
          %2950 = vmatpush2.msra.mxu0 0.0
          %2951 = vmatprep.subr.mxu0 0.0
          %2952 = vmatpush2.msra.mxu0 0.0
          %2953 = vmatprep.subr.mxu0 0.0
          %2954 = vmatpush2.msra.mxu0 0.0
          %2955 = vmatprep.subr.mxu0 0.0
          %2956 = vmatpush2.msra.mxu0 0.0
          %2957 = vmatprep.subr.mxu0 0.0
          %2958 = vmatpush2.msra.mxu0 0.0
          %2959 = vmatprep.subr.mxu0 0.0
          %2960 = vmatpush2.msra.mxu0 0.0
          %2961 = vmatprep.subr.mxu0 0.0
          %2962 = vmatpush2.msra.mxu0 0.0
          %2963 = vmatprep.subr.mxu0 0.0
          %2964 = vmatpush2.msra.mxu0 0.0
          %2965 = vmatprep.subr.mxu0 0.0
          %2966 = vmatpush2.msra.mxu0 0.0
          %2967 = vmatprep.mubr.f32.mxu0 0.0
          %2968 = vmatmul.mubr.f32.gmra.mxu0 %v2896
          %v2969 = vpop.f32.mrf.mxu0
          %v2970 = vadd.f32 0.0, %v2969
          %v2971 = vpop.f32.mrf.mxu0
          %2972 = vmatprep.mubr.f32.mxu0 0.0
          %2973 = vmatmul.mubr.f32.gmra.mxu0 %v2898
          %v2974 = vpop.f32.mrf.mxu0
          %v2975 = vadd.f32 0.0, %v2974
          %v2976 = vpop.f32.mrf.mxu0
          %2977 = vdwg.mxu0
          %v2978 = vadd.f32 %v2889, %v2970
          %v2979 = vadd.f32 %v2890, %v2975
          %s2980 = scalar_lea.vmem %s3, 96
          %v2981 = vld [vmem:[%s2980] sm:$0x3f]
          %v2982 = vrot.slane %v2801, 2
          %v2983 = vrot.slane %v2802, 2
          %v2984 = vsel %vm1919, %v2982, %v2983
          %v2985 = vsel %vm1914, %v2984, 0
          %v2987 = vsel %vm1914, %v2983, 0
          %v2990 = vsel %vm1919, %v2981, 0
          %2992 = vmatprep.subr.mxu0 0.0
          %2993 = vmatpush1.msra.mxu0 0.0
          %2994 = vmatprep.subr.mxu0 0.0
          %2995 = vmatpush1.msra.mxu0 0.0
          %2996 = vmatprep.subr.mxu0 0.0
          %2997 = vmatpush1.msra.mxu0 0.0
          %2998 = vmatprep.subr.mxu0 0.0
          %2999 = vmatpush1.msra.mxu0 0.0
          %3000 = vmatprep.subr.mxu0 0.0
          %3001 = vmatpush1.msra.mxu0 0.0
          %3002 = vmatprep.subr.mxu0 0.0
          %3003 = vmatpush1.msra.mxu0 0.0
          %3004 = vmatprep.subr.mxu0 0.0
          %3005 = vmatpush1.msra.mxu0 0.0
          %3006 = vmatprep.subr.mxu0 0.0
          %3007 = vmatpush1.msra.mxu0 0.0
          %3008 = vmatprep.subr.mxu0 0.0
          %3009 = vmatpush1.msra.mxu0 0.0
          %3010 = vmatprep.subr.mxu0 0.0
          %3011 = vmatpush1.msra.mxu0 0.0
          %3012 = vmatprep.subr.mxu0 0.0
          %3013 = vmatpush1.msra.mxu0 0.0
          %3014 = vmatprep.subr.mxu0 0.0
          %3015 = vmatpush1.msra.mxu0 0.0
          %3016 = vmatprep.subr.mxu0 0.0
          %3017 = vmatpush1.msra.mxu0 0.0
          %3018 = vmatprep.subr.mxu0 0.0
          %3019 = vmatpush1.msra.mxu0 0.0
          %3020 = vmatprep.subr.mxu0 0.0
          %3021 = vmatpush1.msra.mxu0 0.0
          %3022 = vmatprep.subr.mxu0 0.0
          %3023 = vmatpush1.msra.mxu0 %v2990
          %3024 = vmatprep.subr.mxu0 0.0
          %3025 = vmatpush2.msra.mxu0 0.0
          %3026 = vmatprep.subr.mxu0 0.0
          %3027 = vmatpush2.msra.mxu0 0.0
          %3028 = vmatprep.subr.mxu0 0.0
          %3029 = vmatpush2.msra.mxu0 0.0
          %3030 = vmatprep.subr.mxu0 0.0
          %3031 = vmatpush2.msra.mxu0 0.0
          %3032 = vmatprep.subr.mxu0 0.0
          %3033 = vmatpush2.msra.mxu0 0.0
          %3034 = vmatprep.subr.mxu0 0.0
          %3035 = vmatpush2.msra.mxu0 0.0
          %3036 = vmatprep.subr.mxu0 0.0
          %3037 = vmatpush2.msra.mxu0 0.0
          %3038 = vmatprep.subr.mxu0 0.0
          %3039 = vmatpush2.msra.mxu0 0.0
          %3040 = vmatprep.subr.mxu0 0.0
          %3041 = vmatpush2.msra.mxu0 0.0
          %3042 = vmatprep.subr.mxu0 0.0
          %3043 = vmatpush2.msra.mxu0 0.0
          %3044 = vmatprep.subr.mxu0 0.0
          %3045 = vmatpush2.msra.mxu0 0.0
          %3046 = vmatprep.subr.mxu0 0.0
          %3047 = vmatpush2.msra.mxu0 0.0
          %3048 = vmatprep.subr.mxu0 0.0
          %3049 = vmatpush2.msra.mxu0 0.0
          %3050 = vmatprep.subr.mxu0 0.0
          %3051 = vmatpush2.msra.mxu0 0.0
          %3052 = vmatprep.subr.mxu0 0.0
          %3053 = vmatpush2.msra.mxu0 0.0
          %3054 = vmatprep.subr.mxu0 0.0
          %3055 = vmatpush2.msra.mxu0 0.0
          %3056 = vmatprep.mubr.f32.mxu0 0.0
          %3057 = vmatmul.mubr.f32.gmra.mxu0 %v2985
          %v3058 = vpop.f32.mrf.mxu0
          %v3059 = vadd.f32 0.0, %v3058
          %v3060 = vpop.f32.mrf.mxu0
          %3061 = vmatprep.mubr.f32.mxu0 0.0
          %3062 = vmatmul.mubr.f32.gmra.mxu0 %v2987
          %v3063 = vpop.f32.mrf.mxu0
          %v3064 = vadd.f32 0.0, %v3063
          %v3065 = vpop.f32.mrf.mxu0
          %3066 = vdwg.mxu0
          %v3067 = vadd.f32 %v2978, %v3059
          %v3068 = vadd.f32 %v2979, %v3064
          %s3069 = scalar_lea.vmem %s3, 104
          %v3070 = vld [vmem:[%s3069] sm:$0x3f]
          %v3071 = vrot.slane %v2801, 3
          %v3072 = vrot.slane %v2802, 3
          %v3073 = vsel %vm2171, %v3071, %v3072
          %v3074 = vsel %vm1914, %v3073, 0
          %v3076 = vsel %vm1914, %v3072, 0
          %v3079 = vsel %vm1919, %v3070, 0
          %3081 = vmatprep.subr.mxu0 0.0
          %3082 = vmatpush1.msra.mxu0 0.0
          %3083 = vmatprep.subr.mxu0 0.0
          %3084 = vmatpush1.msra.mxu0 0.0
          %3085 = vmatprep.subr.mxu0 0.0
          %3086 = vmatpush1.msra.mxu0 0.0
          %3087 = vmatprep.subr.mxu0 0.0
          %3088 = vmatpush1.msra.mxu0 0.0
          %3089 = vmatprep.subr.mxu0 0.0
          %3090 = vmatpush1.msra.mxu0 0.0
          %3091 = vmatprep.subr.mxu0 0.0
          %3092 = vmatpush1.msra.mxu0 0.0
          %3093 = vmatprep.subr.mxu0 0.0
          %3094 = vmatpush1.msra.mxu0 0.0
          %3095 = vmatprep.subr.mxu0 0.0
          %3096 = vmatpush1.msra.mxu0 0.0
          %3097 = vmatprep.subr.mxu0 0.0
          %3098 = vmatpush1.msra.mxu0 0.0
          %3099 = vmatprep.subr.mxu0 0.0
          %3100 = vmatpush1.msra.mxu0 0.0
          %3101 = vmatprep.subr.mxu0 0.0
          %3102 = vmatpush1.msra.mxu0 0.0
          %3103 = vmatprep.subr.mxu0 0.0
          %3104 = vmatpush1.msra.mxu0 0.0
          %3105 = vmatprep.subr.mxu0 0.0
          %3106 = vmatpush1.msra.mxu0 0.0
          %3107 = vmatprep.subr.mxu0 0.0
          %3108 = vmatpush1.msra.mxu0 0.0
          %3109 = vmatprep.subr.mxu0 0.0
          %3110 = vmatpush1.msra.mxu0 0.0
          %3111 = vmatprep.subr.mxu0 0.0
          %3112 = vmatpush1.msra.mxu0 %v3079
          %3113 = vmatprep.subr.mxu0 0.0
          %3114 = vmatpush2.msra.mxu0 0.0
          %3115 = vmatprep.subr.mxu0 0.0
          %3116 = vmatpush2.msra.mxu0 0.0
          %3117 = vmatprep.subr.mxu0 0.0
          %3118 = vmatpush2.msra.mxu0 0.0
          %3119 = vmatprep.subr.mxu0 0.0
          %3120 = vmatpush2.msra.mxu0 0.0
          %3121 = vmatprep.subr.mxu0 0.0
          %3122 = vmatpush2.msra.mxu0 0.0
          %3123 = vmatprep.subr.mxu0 0.0
          %3124 = vmatpush2.msra.mxu0 0.0
          %3125 = vmatprep.subr.mxu0 0.0
          %3126 = vmatpush2.msra.mxu0 0.0
          %3127 = vmatprep.subr.mxu0 0.0
          %3128 = vmatpush2.msra.mxu0 0.0
          %3129 = vmatprep.subr.mxu0 0.0
          %3130 = vmatpush2.msra.mxu0 0.0
          %3131 = vmatprep.subr.mxu0 0.0
          %3132 = vmatpush2.msra.mxu0 0.0
          %3133 = vmatprep.subr.mxu0 0.0
          %3134 = vmatpush2.msra.mxu0 0.0
          %3135 = vmatprep.subr.mxu0 0.0
          %3136 = vmatpush2.msra.mxu0 0.0
          %3137 = vmatprep.subr.mxu0 0.0
          %3138 = vmatpush2.msra.mxu0 0.0
          %3139 = vmatprep.subr.mxu0 0.0
          %3140 = vmatpush2.msra.mxu0 0.0
          %3141 = vmatprep.subr.mxu0 0.0
          %3142 = vmatpush2.msra.mxu0 0.0
          %3143 = vmatprep.subr.mxu0 0.0
          %3144 = vmatpush2.msra.mxu0 0.0
          %3145 = vmatprep.mubr.f32.mxu0 0.0
          %3146 = vmatmul.mubr.f32.gmra.mxu0 %v3074
          %v3147 = vpop.f32.mrf.mxu0
          %v3148 = vadd.f32 0.0, %v3147
          %v3149 = vpop.f32.mrf.mxu0
          %3150 = vmatprep.mubr.f32.mxu0 0.0
          %3151 = vmatmul.mubr.f32.gmra.mxu0 %v3076
          %v3152 = vpop.f32.mrf.mxu0
          %v3153 = vadd.f32 0.0, %v3152
          %v3154 = vpop.f32.mrf.mxu0
          %3155 = vdwg.mxu0
          %v3156 = vadd.f32 %v3067, %v3148
          %v3157 = vadd.f32 %v3068, %v3153
          %s3158 = scalar_lea.vmem %s3, 112
          %v3159 = vld [vmem:[%s3158] sm:$0x3f]
          %v3160 = vrot.slane %v2801, 4
          %v3161 = vrot.slane %v2802, 4
          %v3162 = vsel %vm2261, %v3160, %v3161
          %v3163 = vsel %vm1914, %v3162, 0
          %v3165 = vsel %vm1914, %v3161, 0
          %v3168 = vsel %vm1919, %v3159, 0
          %3170 = vmatprep.subr.mxu0 0.0
          %3171 = vmatpush1.msra.mxu0 0.0
          %3172 = vmatprep.subr.mxu0 0.0
          %3173 = vmatpush1.msra.mxu0 0.0
          %3174 = vmatprep.subr.mxu0 0.0
          %3175 = vmatpush1.msra.mxu0 0.0
          %3176 = vmatprep.subr.mxu0 0.0
          %3177 = vmatpush1.msra.mxu0 0.0
          %3178 = vmatprep.subr.mxu0 0.0
          %3179 = vmatpush1.msra.mxu0 0.0
          %3180 = vmatprep.subr.mxu0 0.0
          %3181 = vmatpush1.msra.mxu0 0.0
          %3182 = vmatprep.subr.mxu0 0.0
          %3183 = vmatpush1.msra.mxu0 0.0
          %3184 = vmatprep.subr.mxu0 0.0
          %3185 = vmatpush1.msra.mxu0 0.0
          %3186 = vmatprep.subr.mxu0 0.0
          %3187 = vmatpush1.msra.mxu0 0.0
          %3188 = vmatprep.subr.mxu0 0.0
          %3189 = vmatpush1.msra.mxu0 0.0
          %3190 = vmatprep.subr.mxu0 0.0
          %3191 = vmatpush1.msra.mxu0 0.0
          %3192 = vmatprep.subr.mxu0 0.0
          %3193 = vmatpush1.msra.mxu0 0.0
          %3194 = vmatprep.subr.mxu0 0.0
          %3195 = vmatpush1.msra.mxu0 0.0
          %3196 = vmatprep.subr.mxu0 0.0
          %3197 = vmatpush1.msra.mxu0 0.0
          %3198 = vmatprep.subr.mxu0 0.0
          %3199 = vmatpush1.msra.mxu0 0.0
          %3200 = vmatprep.subr.mxu0 0.0
          %3201 = vmatpush1.msra.mxu0 %v3168
          %3202 = vmatprep.subr.mxu0 0.0
          %3203 = vmatpush2.msra.mxu0 0.0
          %3204 = vmatprep.subr.mxu0 0.0
          %3205 = vmatpush2.msra.mxu0 0.0
          %3206 = vmatprep.subr.mxu0 0.0
          %3207 = vmatpush2.msra.mxu0 0.0
          %3208 = vmatprep.subr.mxu0 0.0
          %3209 = vmatpush2.msra.mxu0 0.0
          %3210 = vmatprep.subr.mxu0 0.0
          %3211 = vmatpush2.msra.mxu0 0.0
          %3212 = vmatprep.subr.mxu0 0.0
          %3213 = vmatpush2.msra.mxu0 0.0
          %3214 = vmatprep.subr.mxu0 0.0
          %3215 = vmatpush2.msra.mxu0 0.0
          %3216 = vmatprep.subr.mxu0 0.0
          %3217 = vmatpush2.msra.mxu0 0.0
          %3218 = vmatprep.subr.mxu0 0.0
          %3219 = vmatpush2.msra.mxu0 0.0
          %3220 = vmatprep.subr.mxu0 0.0
          %3221 = vmatpush2.msra.mxu0 0.0
          %3222 = vmatprep.subr.mxu0 0.0
          %3223 = vmatpush2.msra.mxu0 0.0
          %3224 = vmatprep.subr.mxu0 0.0
          %3225 = vmatpush2.msra.mxu0 0.0
          %3226 = vmatprep.subr.mxu0 0.0
          %3227 = vmatpush2.msra.mxu0 0.0
          %3228 = vmatprep.subr.mxu0 0.0
          %3229 = vmatpush2.msra.mxu0 0.0
          %3230 = vmatprep.subr.mxu0 0.0
          %3231 = vmatpush2.msra.mxu0 0.0
          %3232 = vmatprep.subr.mxu0 0.0
          %3233 = vmatpush2.msra.mxu0 0.0
          %3234 = vmatprep.mubr.f32.mxu0 0.0
          %3235 = vmatmul.mubr.f32.gmra.mxu0 %v3163
          %v3236 = vpop.f32.mrf.mxu0
          %v3237 = vadd.f32 0.0, %v3236
          %v3238 = vpop.f32.mrf.mxu0
          %3239 = vmatprep.mubr.f32.mxu0 0.0
          %3240 = vmatmul.mubr.f32.gmra.mxu0 %v3165
          %v3241 = vpop.f32.mrf.mxu0
          %v3242 = vadd.f32 0.0, %v3241
          %v3243 = vpop.f32.mrf.mxu0
          %3244 = vdwg.mxu0
          %v3245 = vadd.f32 %v3156, %v3237
          %v3246 = vadd.f32 %v3157, %v3242
          %s3247 = sadd.s32 %s1900, 3
          %s3248 = smul.u32 %s3247, 16
          %s3249 = scalar_lea.vmem [#allocation2], %s3248
          %v3250 = vld [vmem:[%s3249] sm:$0xff]
          %v3251 = vld [vmem:[%s3249 + $0x8] sm:$0x3f]
          %s3252 = scalar_lea.vmem %s3, 120
          %v3253 = vld [vmem:[%s3252] sm:$0x3f]
          %v3255 = vsel %vm1914, %v3250, 0
          %v3258 = vsel %vm1914, %v3251, 0
          %v3261 = vsel %vm1919, %v3253, 0
          %3263 = vmatprep.subr.mxu0 0.0
          %3264 = vmatpush1.msra.mxu0 0.0
          %3265 = vmatprep.subr.mxu0 0.0
          %3266 = vmatpush1.msra.mxu0 0.0
          %3267 = vmatprep.subr.mxu0 0.0
          %3268 = vmatpush1.msra.mxu0 0.0
          %3269 = vmatprep.subr.mxu0 0.0
          %3270 = vmatpush1.msra.mxu0 0.0
          %3271 = vmatprep.subr.mxu0 0.0
          %3272 = vmatpush1.msra.mxu0 0.0
          %3273 = vmatprep.subr.mxu0 0.0
          %3274 = vmatpush1.msra.mxu0 0.0
          %3275 = vmatprep.subr.mxu0 0.0
          %3276 = vmatpush1.msra.mxu0 0.0
          %3277 = vmatprep.subr.mxu0 0.0
          %3278 = vmatpush1.msra.mxu0 0.0
          %3279 = vmatprep.subr.mxu0 0.0
          %3280 = vmatpush1.msra.mxu0 0.0
          %3281 = vmatprep.subr.mxu0 0.0
          %3282 = vmatpush1.msra.mxu0 0.0
          %3283 = vmatprep.subr.mxu0 0.0
          %3284 = vmatpush1.msra.mxu0 0.0
          %3285 = vmatprep.subr.mxu0 0.0
          %3286 = vmatpush1.msra.mxu0 0.0
          %3287 = vmatprep.subr.mxu0 0.0
          %3288 = vmatpush1.msra.mxu0 0.0
          %3289 = vmatprep.subr.mxu0 0.0
          %3290 = vmatpush1.msra.mxu0 0.0
          %3291 = vmatprep.subr.mxu0 0.0
          %3292 = vmatpush1.msra.mxu0 0.0
          %3293 = vmatprep.subr.mxu0 0.0
          %3294 = vmatpush1.msra.mxu0 %v3261
          %3295 = vmatprep.subr.mxu0 0.0
          %3296 = vmatpush2.msra.mxu0 0.0
          %3297 = vmatprep.subr.mxu0 0.0
          %3298 = vmatpush2.msra.mxu0 0.0
          %3299 = vmatprep.subr.mxu0 0.0
          %3300 = vmatpush2.msra.mxu0 0.0
          %3301 = vmatprep.subr.mxu0 0.0
          %3302 = vmatpush2.msra.mxu0 0.0
          %3303 = vmatprep.subr.mxu0 0.0
          %3304 = vmatpush2.msra.mxu0 0.0
          %3305 = vmatprep.subr.mxu0 0.0
          %3306 = vmatpush2.msra.mxu0 0.0
          %3307 = vmatprep.subr.mxu0 0.0
          %3308 = vmatpush2.msra.mxu0 0.0
          %3309 = vmatprep.subr.mxu0 0.0
          %3310 = vmatpush2.msra.mxu0 0.0
          %3311 = vmatprep.subr.mxu0 0.0
          %3312 = vmatpush2.msra.mxu0 0.0
          %3313 = vmatprep.subr.mxu0 0.0
          %3314 = vmatpush2.msra.mxu0 0.0
          %3315 = vmatprep.subr.mxu0 0.0
          %3316 = vmatpush2.msra.mxu0 0.0
          %3317 = vmatprep.subr.mxu0 0.0
          %3318 = vmatpush2.msra.mxu0 0.0
          %3319 = vmatprep.subr.mxu0 0.0
          %3320 = vmatpush2.msra.mxu0 0.0
          %3321 = vmatprep.subr.mxu0 0.0
          %3322 = vmatpush2.msra.mxu0 0.0
          %3323 = vmatprep.subr.mxu0 0.0
          %3324 = vmatpush2.msra.mxu0 0.0
          %3325 = vmatprep.subr.mxu0 0.0
          %3326 = vmatpush2.msra.mxu0 0.0
          %3327 = vmatprep.mubr.f32.mxu0 0.0
          %3328 = vmatmul.mubr.f32.gmra.mxu0 %v3255
          %v3329 = vpop.f32.mrf.mxu0
          %v3330 = vadd.f32 0.0, %v3329
          %v3331 = vpop.f32.mrf.mxu0
          %3332 = vmatprep.mubr.f32.mxu0 0.0
          %3333 = vmatmul.mubr.f32.gmra.mxu0 %v3258
          %v3334 = vpop.f32.mrf.mxu0
          %v3335 = vadd.f32 0.0, %v3334
          %v3336 = vpop.f32.mrf.mxu0
          %3337 = vdwg.mxu0
          %v3338 = vadd.f32 %v3245, %v3330
          %v3339 = vadd.f32 %v3246, %v3335
          %s3340 = scalar_lea.vmem %s3, 128
          %v3341 = vld [vmem:[%s3340] sm:$0x3f]
          %v3342 = vrot.slane %v3250, 1
          %v3343 = vrot.slane %v3251, 1
          %v3344 = vsel %vm1910, %v3342, %v3343
          %v3345 = vsel %vm1914, %v3344, 0
          %v3347 = vsel %vm1914, %v3343, 0
          %v3350 = vsel %vm1919, %v3341, 0
          %3352 = vmatprep.subr.mxu0 0.0
          %3353 = vmatpush1.msra.mxu0 0.0
          %3354 = vmatprep.subr.mxu0 0.0
          %3355 = vmatpush1.msra.mxu0 0.0
          %3356 = vmatprep.subr.mxu0 0.0
          %3357 = vmatpush1.msra.mxu0 0.0
          %3358 = vmatprep.subr.mxu0 0.0
          %3359 = vmatpush1.msra.mxu0 0.0
          %3360 = vmatprep.subr.mxu0 0.0
          %3361 = vmatpush1.msra.mxu0 0.0
          %3362 = vmatprep.subr.mxu0 0.0
          %3363 = vmatpush1.msra.mxu0 0.0
          %3364 = vmatprep.subr.mxu0 0.0
          %3365 = vmatpush1.msra.mxu0 0.0
          %3366 = vmatprep.subr.mxu0 0.0
          %3367 = vmatpush1.msra.mxu0 0.0
          %3368 = vmatprep.subr.mxu0 0.0
          %3369 = vmatpush1.msra.mxu0 0.0
          %3370 = vmatprep.subr.mxu0 0.0
          %3371 = vmatpush1.msra.mxu0 0.0
          %3372 = vmatprep.subr.mxu0 0.0
          %3373 = vmatpush1.msra.mxu0 0.0
          %3374 = vmatprep.subr.mxu0 0.0
          %3375 = vmatpush1.msra.mxu0 0.0
          %3376 = vmatprep.subr.mxu0 0.0
          %3377 = vmatpush1.msra.mxu0 0.0
          %3378 = vmatprep.subr.mxu0 0.0
          %3379 = vmatpush1.msra.mxu0 0.0
          %3380 = vmatprep.subr.mxu0 0.0
          %3381 = vmatpush1.msra.mxu0 0.0
          %3382 = vmatprep.subr.mxu0 0.0
          %3383 = vmatpush1.msra.mxu0 %v3350
          %3384 = vmatprep.subr.mxu0 0.0
          %3385 = vmatpush2.msra.mxu0 0.0
          %3386 = vmatprep.subr.mxu0 0.0
          %3387 = vmatpush2.msra.mxu0 0.0
          %3388 = vmatprep.subr.mxu0 0.0
          %3389 = vmatpush2.msra.mxu0 0.0
          %3390 = vmatprep.subr.mxu0 0.0
          %3391 = vmatpush2.msra.mxu0 0.0
          %3392 = vmatprep.subr.mxu0 0.0
          %3393 = vmatpush2.msra.mxu0 0.0
          %3394 = vmatprep.subr.mxu0 0.0
          %3395 = vmatpush2.msra.mxu0 0.0
          %3396 = vmatprep.subr.mxu0 0.0
          %3397 = vmatpush2.msra.mxu0 0.0
          %3398 = vmatprep.subr.mxu0 0.0
          %3399 = vmatpush2.msra.mxu0 0.0
          %3400 = vmatprep.subr.mxu0 0.0
          %3401 = vmatpush2.msra.mxu0 0.0
          %3402 = vmatprep.subr.mxu0 0.0
          %3403 = vmatpush2.msra.mxu0 0.0
          %3404 = vmatprep.subr.mxu0 0.0
          %3405 = vmatpush2.msra.mxu0 0.0
          %3406 = vmatprep.subr.mxu0 0.0
          %3407 = vmatpush2.msra.mxu0 0.0
          %3408 = vmatprep.subr.mxu0 0.0
          %3409 = vmatpush2.msra.mxu0 0.0
          %3410 = vmatprep.subr.mxu0 0.0
          %3411 = vmatpush2.msra.mxu0 0.0
          %3412 = vmatprep.subr.mxu0 0.0
          %3413 = vmatpush2.msra.mxu0 0.0
          %3414 = vmatprep.subr.mxu0 0.0
          %3415 = vmatpush2.msra.mxu0 0.0
          %3416 = vmatprep.mubr.f32.mxu0 0.0
          %3417 = vmatmul.mubr.f32.gmra.mxu0 %v3345
          %v3418 = vpop.f32.mrf.mxu0
          %v3419 = vadd.f32 0.0, %v3418
          %v3420 = vpop.f32.mrf.mxu0
          %3421 = vmatprep.mubr.f32.mxu0 0.0
          %3422 = vmatmul.mubr.f32.gmra.mxu0 %v3347
          %v3423 = vpop.f32.mrf.mxu0
          %v3424 = vadd.f32 0.0, %v3423
          %v3425 = vpop.f32.mrf.mxu0
          %3426 = vdwg.mxu0
          %v3427 = vadd.f32 %v3338, %v3419
          %v3428 = vadd.f32 %v3339, %v3424
          %s3429 = scalar_lea.vmem %s3, 136
          %v3430 = vld [vmem:[%s3429] sm:$0x3f]
          %v3431 = vrot.slane %v3250, 2
          %v3432 = vrot.slane %v3251, 2
          %v3433 = vsel %vm1919, %v3431, %v3432
          %v3434 = vsel %vm1914, %v3433, 0
          %v3436 = vsel %vm1914, %v3432, 0
          %v3439 = vsel %vm1919, %v3430, 0
          %3441 = vmatprep.subr.mxu0 0.0
          %3442 = vmatpush1.msra.mxu0 0.0
          %3443 = vmatprep.subr.mxu0 0.0
          %3444 = vmatpush1.msra.mxu0 0.0
          %3445 = vmatprep.subr.mxu0 0.0
          %3446 = vmatpush1.msra.mxu0 0.0
          %3447 = vmatprep.subr.mxu0 0.0
          %3448 = vmatpush1.msra.mxu0 0.0
          %3449 = vmatprep.subr.mxu0 0.0
          %3450 = vmatpush1.msra.mxu0 0.0
          %3451 = vmatprep.subr.mxu0 0.0
          %3452 = vmatpush1.msra.mxu0 0.0
          %3453 = vmatprep.subr.mxu0 0.0
          %3454 = vmatpush1.msra.mxu0 0.0
          %3455 = vmatprep.subr.mxu0 0.0
          %3456 = vmatpush1.msra.mxu0 0.0
          %3457 = vmatprep.subr.mxu0 0.0
          %3458 = vmatpush1.msra.mxu0 0.0
          %3459 = vmatprep.subr.mxu0 0.0
          %3460 = vmatpush1.msra.mxu0 0.0
          %3461 = vmatprep.subr.mxu0 0.0
          %3462 = vmatpush1.msra.mxu0 0.0
          %3463 = vmatprep.subr.mxu0 0.0
          %3464 = vmatpush1.msra.mxu0 0.0
          %3465 = vmatprep.subr.mxu0 0.0
          %3466 = vmatpush1.msra.mxu0 0.0
          %3467 = vmatprep.subr.mxu0 0.0
          %3468 = vmatpush1.msra.mxu0 0.0
          %3469 = vmatprep.subr.mxu0 0.0
          %3470 = vmatpush1.msra.mxu0 0.0
          %3471 = vmatprep.subr.mxu0 0.0
          %3472 = vmatpush1.msra.mxu0 %v3439
          %3473 = vmatprep.subr.mxu0 0.0
          %3474 = vmatpush2.msra.mxu0 0.0
          %3475 = vmatprep.subr.mxu0 0.0
          %3476 = vmatpush2.msra.mxu0 0.0
          %3477 = vmatprep.subr.mxu0 0.0
          %3478 = vmatpush2.msra.mxu0 0.0
          %3479 = vmatprep.subr.mxu0 0.0
          %3480 = vmatpush2.msra.mxu0 0.0
          %3481 = vmatprep.subr.mxu0 0.0
          %3482 = vmatpush2.msra.mxu0 0.0
          %3483 = vmatprep.subr.mxu0 0.0
          %3484 = vmatpush2.msra.mxu0 0.0
          %3485 = vmatprep.subr.mxu0 0.0
          %3486 = vmatpush2.msra.mxu0 0.0
          %3487 = vmatprep.subr.mxu0 0.0
          %3488 = vmatpush2.msra.mxu0 0.0
          %3489 = vmatprep.subr.mxu0 0.0
          %3490 = vmatpush2.msra.mxu0 0.0
          %3491 = vmatprep.subr.mxu0 0.0
          %3492 = vmatpush2.msra.mxu0 0.0
          %3493 = vmatprep.subr.mxu0 0.0
          %3494 = vmatpush2.msra.mxu0 0.0
          %3495 = vmatprep.subr.mxu0 0.0
          %3496 = vmatpush2.msra.mxu0 0.0
          %3497 = vmatprep.subr.mxu0 0.0
          %3498 = vmatpush2.msra.mxu0 0.0
          %3499 = vmatprep.subr.mxu0 0.0
          %3500 = vmatpush2.msra.mxu0 0.0
          %3501 = vmatprep.subr.mxu0 0.0
          %3502 = vmatpush2.msra.mxu0 0.0
          %3503 = vmatprep.subr.mxu0 0.0
          %3504 = vmatpush2.msra.mxu0 0.0
          %3505 = vmatprep.mubr.f32.mxu0 0.0
          %3506 = vmatmul.mubr.f32.gmra.mxu0 %v3434
          %v3507 = vpop.f32.mrf.mxu0
          %v3508 = vadd.f32 0.0, %v3507
          %v3509 = vpop.f32.mrf.mxu0
          %3510 = vmatprep.mubr.f32.mxu0 0.0
          %3511 = vmatmul.mubr.f32.gmra.mxu0 %v3436
          %v3512 = vpop.f32.mrf.mxu0
          %v3513 = vadd.f32 0.0, %v3512
          %v3514 = vpop.f32.mrf.mxu0
          %3515 = vdwg.mxu0
          %v3516 = vadd.f32 %v3427, %v3508
          %v3517 = vadd.f32 %v3428, %v3513
          %s3518 = scalar_lea.vmem %s3, 144
          %v3519 = vld [vmem:[%s3518] sm:$0x3f]
          %v3520 = vrot.slane %v3250, 3
          %v3521 = vrot.slane %v3251, 3
          %v3522 = vsel %vm2171, %v3520, %v3521
          %v3523 = vsel %vm1914, %v3522, 0
          %v3525 = vsel %vm1914, %v3521, 0
          %v3528 = vsel %vm1919, %v3519, 0
          %3530 = vmatprep.subr.mxu0 0.0
          %3531 = vmatpush1.msra.mxu0 0.0
          %3532 = vmatprep.subr.mxu0 0.0
          %3533 = vmatpush1.msra.mxu0 0.0
          %3534 = vmatprep.subr.mxu0 0.0
          %3535 = vmatpush1.msra.mxu0 0.0
          %3536 = vmatprep.subr.mxu0 0.0
          %3537 = vmatpush1.msra.mxu0 0.0
          %3538 = vmatprep.subr.mxu0 0.0
          %3539 = vmatpush1.msra.mxu0 0.0
          %3540 = vmatprep.subr.mxu0 0.0
          %3541 = vmatpush1.msra.mxu0 0.0
          %3542 = vmatprep.subr.mxu0 0.0
          %3543 = vmatpush1.msra.mxu0 0.0
          %3544 = vmatprep.subr.mxu0 0.0
          %3545 = vmatpush1.msra.mxu0 0.0
          %3546 = vmatprep.subr.mxu0 0.0
          %3547 = vmatpush1.msra.mxu0 0.0
          %3548 = vmatprep.subr.mxu0 0.0
          %3549 = vmatpush1.msra.mxu0 0.0
          %3550 = vmatprep.subr.mxu0 0.0
          %3551 = vmatpush1.msra.mxu0 0.0
          %3552 = vmatprep.subr.mxu0 0.0
          %3553 = vmatpush1.msra.mxu0 0.0
          %3554 = vmatprep.subr.mxu0 0.0
          %3555 = vmatpush1.msra.mxu0 0.0
          %3556 = vmatprep.subr.mxu0 0.0
          %3557 = vmatpush1.msra.mxu0 0.0
          %3558 = vmatprep.subr.mxu0 0.0
          %3559 = vmatpush1.msra.mxu0 0.0
          %3560 = vmatprep.subr.mxu0 0.0
          %3561 = vmatpush1.msra.mxu0 %v3528
          %3562 = vmatprep.subr.mxu0 0.0
          %3563 = vmatpush2.msra.mxu0 0.0
          %3564 = vmatprep.subr.mxu0 0.0
          %3565 = vmatpush2.msra.mxu0 0.0
          %3566 = vmatprep.subr.mxu0 0.0
          %3567 = vmatpush2.msra.mxu0 0.0
          %3568 = vmatprep.subr.mxu0 0.0
          %3569 = vmatpush2.msra.mxu0 0.0
          %3570 = vmatprep.subr.mxu0 0.0
          %3571 = vmatpush2.msra.mxu0 0.0
          %3572 = vmatprep.subr.mxu0 0.0
          %3573 = vmatpush2.msra.mxu0 0.0
          %3574 = vmatprep.subr.mxu0 0.0
          %3575 = vmatpush2.msra.mxu0 0.0
          %3576 = vmatprep.subr.mxu0 0.0
          %3577 = vmatpush2.msra.mxu0 0.0
          %3578 = vmatprep.subr.mxu0 0.0
          %3579 = vmatpush2.msra.mxu0 0.0
          %3580 = vmatprep.subr.mxu0 0.0
          %3581 = vmatpush2.msra.mxu0 0.0
          %3582 = vmatprep.subr.mxu0 0.0
          %3583 = vmatpush2.msra.mxu0 0.0
          %3584 = vmatprep.subr.mxu0 0.0
          %3585 = vmatpush2.msra.mxu0 0.0
          %3586 = vmatprep.subr.mxu0 0.0
          %3587 = vmatpush2.msra.mxu0 0.0
          %3588 = vmatprep.subr.mxu0 0.0
          %3589 = vmatpush2.msra.mxu0 0.0
          %3590 = vmatprep.subr.mxu0 0.0
          %3591 = vmatpush2.msra.mxu0 0.0
          %3592 = vmatprep.subr.mxu0 0.0
          %3593 = vmatpush2.msra.mxu0 0.0
          %3594 = vmatprep.mubr.f32.mxu0 0.0
          %3595 = vmatmul.mubr.f32.gmra.mxu0 %v3523
          %v3596 = vpop.f32.mrf.mxu0
          %v3597 = vadd.f32 0.0, %v3596
          %v3598 = vpop.f32.mrf.mxu0
          %3599 = vmatprep.mubr.f32.mxu0 0.0
          %3600 = vmatmul.mubr.f32.gmra.mxu0 %v3525
          %v3601 = vpop.f32.mrf.mxu0
          %v3602 = vadd.f32 0.0, %v3601
          %v3603 = vpop.f32.mrf.mxu0
          %3604 = vdwg.mxu0
          %v3605 = vadd.f32 %v3516, %v3597
          %v3606 = vadd.f32 %v3517, %v3602
          %s3607 = scalar_lea.vmem %s3, 152
          %v3608 = vld [vmem:[%s3607] sm:$0x3f]
          %v3609 = vrot.slane %v3250, 4
          %v3610 = vrot.slane %v3251, 4
          %v3611 = vsel %vm2261, %v3609, %v3610
          %v3612 = vsel %vm1914, %v3611, 0
          %v3614 = vsel %vm1914, %v3610, 0
          %v3617 = vsel %vm1919, %v3608, 0
          %3619 = vmatprep.subr.mxu0 0.0
          %3620 = vmatpush1.msra.mxu0 0.0
          %3621 = vmatprep.subr.mxu0 0.0
          %3622 = vmatpush1.msra.mxu0 0.0
          %3623 = vmatprep.subr.mxu0 0.0
          %3624 = vmatpush1.msra.mxu0 0.0
          %3625 = vmatprep.subr.mxu0 0.0
          %3626 = vmatpush1.msra.mxu0 0.0
          %3627 = vmatprep.subr.mxu0 0.0
          %3628 = vmatpush1.msra.mxu0 0.0
          %3629 = vmatprep.subr.mxu0 0.0
          %3630 = vmatpush1.msra.mxu0 0.0
          %3631 = vmatprep.subr.mxu0 0.0
          %3632 = vmatpush1.msra.mxu0 0.0
          %3633 = vmatprep.subr.mxu0 0.0
          %3634 = vmatpush1.msra.mxu0 0.0
          %3635 = vmatprep.subr.mxu0 0.0
          %3636 = vmatpush1.msra.mxu0 0.0
          %3637 = vmatprep.subr.mxu0 0.0
          %3638 = vmatpush1.msra.mxu0 0.0
          %3639 = vmatprep.subr.mxu0 0.0
          %3640 = vmatpush1.msra.mxu0 0.0
          %3641 = vmatprep.subr.mxu0 0.0
          %3642 = vmatpush1.msra.mxu0 0.0
          %3643 = vmatprep.subr.mxu0 0.0
          %3644 = vmatpush1.msra.mxu0 0.0
          %3645 = vmatprep.subr.mxu0 0.0
          %3646 = vmatpush1.msra.mxu0 0.0
          %3647 = vmatprep.subr.mxu0 0.0
          %3648 = vmatpush1.msra.mxu0 0.0
          %3649 = vmatprep.subr.mxu0 0.0
          %3650 = vmatpush1.msra.mxu0 %v3617
          %3651 = vmatprep.subr.mxu0 0.0
          %3652 = vmatpush2.msra.mxu0 0.0
          %3653 = vmatprep.subr.mxu0 0.0
          %3654 = vmatpush2.msra.mxu0 0.0
          %3655 = vmatprep.subr.mxu0 0.0
          %3656 = vmatpush2.msra.mxu0 0.0
          %3657 = vmatprep.subr.mxu0 0.0
          %3658 = vmatpush2.msra.mxu0 0.0
          %3659 = vmatprep.subr.mxu0 0.0
          %3660 = vmatpush2.msra.mxu0 0.0
          %3661 = vmatprep.subr.mxu0 0.0
          %3662 = vmatpush2.msra.mxu0 0.0
          %3663 = vmatprep.subr.mxu0 0.0
          %3664 = vmatpush2.msra.mxu0 0.0
          %3665 = vmatprep.subr.mxu0 0.0
          %3666 = vmatpush2.msra.mxu0 0.0
          %3667 = vmatprep.subr.mxu0 0.0
          %3668 = vmatpush2.msra.mxu0 0.0
          %3669 = vmatprep.subr.mxu0 0.0
          %3670 = vmatpush2.msra.mxu0 0.0
          %3671 = vmatprep.subr.mxu0 0.0
          %3672 = vmatpush2.msra.mxu0 0.0
          %3673 = vmatprep.subr.mxu0 0.0
          %3674 = vmatpush2.msra.mxu0 0.0
          %3675 = vmatprep.subr.mxu0 0.0
          %3676 = vmatpush2.msra.mxu0 0.0
          %3677 = vmatprep.subr.mxu0 0.0
          %3678 = vmatpush2.msra.mxu0 0.0
          %3679 = vmatprep.subr.mxu0 0.0
          %3680 = vmatpush2.msra.mxu0 0.0
          %3681 = vmatprep.subr.mxu0 0.0
          %3682 = vmatpush2.msra.mxu0 0.0
          %3683 = vmatprep.mubr.f32.mxu0 0.0
          %3684 = vmatmul.mubr.f32.gmra.mxu0 %v3612
          %v3685 = vpop.f32.mrf.mxu0
          %v3686 = vadd.f32 0.0, %v3685
          %v3687 = vpop.f32.mrf.mxu0
          %3688 = vmatprep.mubr.f32.mxu0 0.0
          %3689 = vmatmul.mubr.f32.gmra.mxu0 %v3614
          %v3690 = vpop.f32.mrf.mxu0
          %v3691 = vadd.f32 0.0, %v3690
          %v3692 = vpop.f32.mrf.mxu0
          %3693 = vdwg.mxu0
          %v3694 = vadd.f32 %v3605, %v3686
          %v3695 = vadd.f32 %v3606, %v3691
          %s3696 = sadd.s32 %s1900, 4
          %s3697 = smul.u32 %s3696, 16
          %s3698 = scalar_lea.vmem [#allocation2], %s3697
          %v3699 = vld [vmem:[%s3698] sm:$0xff]
          %v3700 = vld [vmem:[%s3698 + $0x8] sm:$0x3f]
          %s3701 = scalar_lea.vmem %s3, 160
          %v3702 = vld [vmem:[%s3701] sm:$0x3f]
          %v3704 = vsel %vm1914, %v3699, 0
          %v3707 = vsel %vm1914, %v3700, 0
          %v3710 = vsel %vm1919, %v3702, 0
          %3712 = vmatprep.subr.mxu0 0.0
          %3713 = vmatpush1.msra.mxu0 0.0
          %3714 = vmatprep.subr.mxu0 0.0
          %3715 = vmatpush1.msra.mxu0 0.0
          %3716 = vmatprep.subr.mxu0 0.0
          %3717 = vmatpush1.msra.mxu0 0.0
          %3718 = vmatprep.subr.mxu0 0.0
          %3719 = vmatpush1.msra.mxu0 0.0
          %3720 = vmatprep.subr.mxu0 0.0
          %3721 = vmatpush1.msra.mxu0 0.0
          %3722 = vmatprep.subr.mxu0 0.0
          %3723 = vmatpush1.msra.mxu0 0.0
          %3724 = vmatprep.subr.mxu0 0.0
          %3725 = vmatpush1.msra.mxu0 0.0
          %3726 = vmatprep.subr.mxu0 0.0
          %3727 = vmatpush1.msra.mxu0 0.0
          %3728 = vmatprep.subr.mxu0 0.0
          %3729 = vmatpush1.msra.mxu0 0.0
          %3730 = vmatprep.subr.mxu0 0.0
          %3731 = vmatpush1.msra.mxu0 0.0
          %3732 = vmatprep.subr.mxu0 0.0
          %3733 = vmatpush1.msra.mxu0 0.0
          %3734 = vmatprep.subr.mxu0 0.0
          %3735 = vmatpush1.msra.mxu0 0.0
          %3736 = vmatprep.subr.mxu0 0.0
          %3737 = vmatpush1.msra.mxu0 0.0
          %3738 = vmatprep.subr.mxu0 0.0
          %3739 = vmatpush1.msra.mxu0 0.0
          %3740 = vmatprep.subr.mxu0 0.0
          %3741 = vmatpush1.msra.mxu0 0.0
          %3742 = vmatprep.subr.mxu0 0.0
          %3743 = vmatpush1.msra.mxu0 %v3710
          %3744 = vmatprep.subr.mxu0 0.0
          %3745 = vmatpush2.msra.mxu0 0.0
          %3746 = vmatprep.subr.mxu0 0.0
          %3747 = vmatpush2.msra.mxu0 0.0
          %3748 = vmatprep.subr.mxu0 0.0
          %3749 = vmatpush2.msra.mxu0 0.0
          %3750 = vmatprep.subr.mxu0 0.0
          %3751 = vmatpush2.msra.mxu0 0.0
          %3752 = vmatprep.subr.mxu0 0.0
          %3753 = vmatpush2.msra.mxu0 0.0
          %3754 = vmatprep.subr.mxu0 0.0
          %3755 = vmatpush2.msra.mxu0 0.0
          %3756 = vmatprep.subr.mxu0 0.0
          %3757 = vmatpush2.msra.mxu0 0.0
          %3758 = vmatprep.subr.mxu0 0.0
          %3759 = vmatpush2.msra.mxu0 0.0
          %3760 = vmatprep.subr.mxu0 0.0
          %3761 = vmatpush2.msra.mxu0 0.0
          %3762 = vmatprep.subr.mxu0 0.0
          %3763 = vmatpush2.msra.mxu0 0.0
          %3764 = vmatprep.subr.mxu0 0.0
          %3765 = vmatpush2.msra.mxu0 0.0
          %3766 = vmatprep.subr.mxu0 0.0
          %3767 = vmatpush2.msra.mxu0 0.0
          %3768 = vmatprep.subr.mxu0 0.0
          %3769 = vmatpush2.msra.mxu0 0.0
          %3770 = vmatprep.subr.mxu0 0.0
          %3771 = vmatpush2.msra.mxu0 0.0
          %3772 = vmatprep.subr.mxu0 0.0
          %3773 = vmatpush2.msra.mxu0 0.0
          %3774 = vmatprep.subr.mxu0 0.0
          %3775 = vmatpush2.msra.mxu0 0.0
          %3776 = vmatprep.mubr.f32.mxu0 0.0
          %3777 = vmatmul.mubr.f32.gmra.mxu0 %v3704
          %v3778 = vpop.f32.mrf.mxu0
          %v3779 = vadd.f32 0.0, %v3778
          %v3780 = vpop.f32.mrf.mxu0
          %3781 = vmatprep.mubr.f32.mxu0 0.0
          %3782 = vmatmul.mubr.f32.gmra.mxu0 %v3707
          %v3783 = vpop.f32.mrf.mxu0
          %v3784 = vadd.f32 0.0, %v3783
          %v3785 = vpop.f32.mrf.mxu0
          %3786 = vdwg.mxu0
          %v3787 = vadd.f32 %v3694, %v3779
          %v3788 = vadd.f32 %v3695, %v3784
          %s3789 = scalar_lea.vmem %s3, 168
          %v3790 = vld [vmem:[%s3789] sm:$0x3f]
          %v3791 = vrot.slane %v3699, 1
          %v3792 = vrot.slane %v3700, 1
          %v3793 = vsel %vm1910, %v3791, %v3792
          %v3794 = vsel %vm1914, %v3793, 0
          %v3796 = vsel %vm1914, %v3792, 0
          %v3799 = vsel %vm1919, %v3790, 0
          %3801 = vmatprep.subr.mxu0 0.0
          %3802 = vmatpush1.msra.mxu0 0.0
          %3803 = vmatprep.subr.mxu0 0.0
          %3804 = vmatpush1.msra.mxu0 0.0
          %3805 = vmatprep.subr.mxu0 0.0
          %3806 = vmatpush1.msra.mxu0 0.0
          %3807 = vmatprep.subr.mxu0 0.0
          %3808 = vmatpush1.msra.mxu0 0.0
          %3809 = vmatprep.subr.mxu0 0.0
          %3810 = vmatpush1.msra.mxu0 0.0
          %3811 = vmatprep.subr.mxu0 0.0
          %3812 = vmatpush1.msra.mxu0 0.0
          %3813 = vmatprep.subr.mxu0 0.0
          %3814 = vmatpush1.msra.mxu0 0.0
          %3815 = vmatprep.subr.mxu0 0.0
          %3816 = vmatpush1.msra.mxu0 0.0
          %3817 = vmatprep.subr.mxu0 0.0
          %3818 = vmatpush1.msra.mxu0 0.0
          %3819 = vmatprep.subr.mxu0 0.0
          %3820 = vmatpush1.msra.mxu0 0.0
          %3821 = vmatprep.subr.mxu0 0.0
          %3822 = vmatpush1.msra.mxu0 0.0
          %3823 = vmatprep.subr.mxu0 0.0
          %3824 = vmatpush1.msra.mxu0 0.0
          %3825 = vmatprep.subr.mxu0 0.0
          %3826 = vmatpush1.msra.mxu0 0.0
          %3827 = vmatprep.subr.mxu0 0.0
          %3828 = vmatpush1.msra.mxu0 0.0
          %3829 = vmatprep.subr.mxu0 0.0
          %3830 = vmatpush1.msra.mxu0 0.0
          %3831 = vmatprep.subr.mxu0 0.0
          %3832 = vmatpush1.msra.mxu0 %v3799
          %3833 = vmatprep.subr.mxu0 0.0
          %3834 = vmatpush2.msra.mxu0 0.0
          %3835 = vmatprep.subr.mxu0 0.0
          %3836 = vmatpush2.msra.mxu0 0.0
          %3837 = vmatprep.subr.mxu0 0.0
          %3838 = vmatpush2.msra.mxu0 0.0
          %3839 = vmatprep.subr.mxu0 0.0
          %3840 = vmatpush2.msra.mxu0 0.0
          %3841 = vmatprep.subr.mxu0 0.0
          %3842 = vmatpush2.msra.mxu0 0.0
          %3843 = vmatprep.subr.mxu0 0.0
          %3844 = vmatpush2.msra.mxu0 0.0
          %3845 = vmatprep.subr.mxu0 0.0
          %3846 = vmatpush2.msra.mxu0 0.0
          %3847 = vmatprep.subr.mxu0 0.0
          %3848 = vmatpush2.msra.mxu0 0.0
          %3849 = vmatprep.subr.mxu0 0.0
          %3850 = vmatpush2.msra.mxu0 0.0
          %3851 = vmatprep.subr.mxu0 0.0
          %3852 = vmatpush2.msra.mxu0 0.0
          %3853 = vmatprep.subr.mxu0 0.0
          %3854 = vmatpush2.msra.mxu0 0.0
          %3855 = vmatprep.subr.mxu0 0.0
          %3856 = vmatpush2.msra.mxu0 0.0
          %3857 = vmatprep.subr.mxu0 0.0
          %3858 = vmatpush2.msra.mxu0 0.0
          %3859 = vmatprep.subr.mxu0 0.0
          %3860 = vmatpush2.msra.mxu0 0.0
          %3861 = vmatprep.subr.mxu0 0.0
          %3862 = vmatpush2.msra.mxu0 0.0
          %3863 = vmatprep.subr.mxu0 0.0
          %3864 = vmatpush2.msra.mxu0 0.0
          %3865 = vmatprep.mubr.f32.mxu0 0.0
          %3866 = vmatmul.mubr.f32.gmra.mxu0 %v3794
          %v3867 = vpop.f32.mrf.mxu0
          %v3868 = vadd.f32 0.0, %v3867
          %v3869 = vpop.f32.mrf.mxu0
          %3870 = vmatprep.mubr.f32.mxu0 0.0
          %3871 = vmatmul.mubr.f32.gmra.mxu0 %v3796
          %v3872 = vpop.f32.mrf.mxu0
          %v3873 = vadd.f32 0.0, %v3872
          %v3874 = vpop.f32.mrf.mxu0
          %3875 = vdwg.mxu0
          %v3876 = vadd.f32 %v3787, %v3868
          %v3877 = vadd.f32 %v3788, %v3873
          %s3878 = scalar_lea.vmem %s3, 176
          %v3879 = vld [vmem:[%s3878] sm:$0x3f]
          %v3880 = vrot.slane %v3699, 2
          %v3881 = vrot.slane %v3700, 2
          %v3882 = vsel %vm1919, %v3880, %v3881
          %v3883 = vsel %vm1914, %v3882, 0
          %v3885 = vsel %vm1914, %v3881, 0
          %v3888 = vsel %vm1919, %v3879, 0
          %3890 = vmatprep.subr.mxu0 0.0
          %3891 = vmatpush1.msra.mxu0 0.0
          %3892 = vmatprep.subr.mxu0 0.0
          %3893 = vmatpush1.msra.mxu0 0.0
          %3894 = vmatprep.subr.mxu0 0.0
          %3895 = vmatpush1.msra.mxu0 0.0
          %3896 = vmatprep.subr.mxu0 0.0
          %3897 = vmatpush1.msra.mxu0 0.0
          %3898 = vmatprep.subr.mxu0 0.0
          %3899 = vmatpush1.msra.mxu0 0.0
          %3900 = vmatprep.subr.mxu0 0.0
          %3901 = vmatpush1.msra.mxu0 0.0
          %3902 = vmatprep.subr.mxu0 0.0
          %3903 = vmatpush1.msra.mxu0 0.0
          %3904 = vmatprep.subr.mxu0 0.0
          %3905 = vmatpush1.msra.mxu0 0.0
          %3906 = vmatprep.subr.mxu0 0.0
          %3907 = vmatpush1.msra.mxu0 0.0
          %3908 = vmatprep.subr.mxu0 0.0
          %3909 = vmatpush1.msra.mxu0 0.0
          %3910 = vmatprep.subr.mxu0 0.0
          %3911 = vmatpush1.msra.mxu0 0.0
          %3912 = vmatprep.subr.mxu0 0.0
          %3913 = vmatpush1.msra.mxu0 0.0
          %3914 = vmatprep.subr.mxu0 0.0
          %3915 = vmatpush1.msra.mxu0 0.0
          %3916 = vmatprep.subr.mxu0 0.0
          %3917 = vmatpush1.msra.mxu0 0.0
          %3918 = vmatprep.subr.mxu0 0.0
          %3919 = vmatpush1.msra.mxu0 0.0
          %3920 = vmatprep.subr.mxu0 0.0
          %3921 = vmatpush1.msra.mxu0 %v3888
          %3922 = vmatprep.subr.mxu0 0.0
          %3923 = vmatpush2.msra.mxu0 0.0
          %3924 = vmatprep.subr.mxu0 0.0
          %3925 = vmatpush2.msra.mxu0 0.0
          %3926 = vmatprep.subr.mxu0 0.0
          %3927 = vmatpush2.msra.mxu0 0.0
          %3928 = vmatprep.subr.mxu0 0.0
          %3929 = vmatpush2.msra.mxu0 0.0
          %3930 = vmatprep.subr.mxu0 0.0
          %3931 = vmatpush2.msra.mxu0 0.0
          %3932 = vmatprep.subr.mxu0 0.0
          %3933 = vmatpush2.msra.mxu0 0.0
          %3934 = vmatprep.subr.mxu0 0.0
          %3935 = vmatpush2.msra.mxu0 0.0
          %3936 = vmatprep.subr.mxu0 0.0
          %3937 = vmatpush2.msra.mxu0 0.0
          %3938 = vmatprep.subr.mxu0 0.0
          %3939 = vmatpush2.msra.mxu0 0.0
          %3940 = vmatprep.subr.mxu0 0.0
          %3941 = vmatpush2.msra.mxu0 0.0
          %3942 = vmatprep.subr.mxu0 0.0
          %3943 = vmatpush2.msra.mxu0 0.0
          %3944 = vmatprep.subr.mxu0 0.0
          %3945 = vmatpush2.msra.mxu0 0.0
          %3946 = vmatprep.subr.mxu0 0.0
          %3947 = vmatpush2.msra.mxu0 0.0
          %3948 = vmatprep.subr.mxu0 0.0
          %3949 = vmatpush2.msra.mxu0 0.0
          %3950 = vmatprep.subr.mxu0 0.0
          %3951 = vmatpush2.msra.mxu0 0.0
          %3952 = vmatprep.subr.mxu0 0.0
          %3953 = vmatpush2.msra.mxu0 0.0
          %3954 = vmatprep.mubr.f32.mxu0 0.0
          %3955 = vmatmul.mubr.f32.gmra.mxu0 %v3883
          %v3956 = vpop.f32.mrf.mxu0
          %v3957 = vadd.f32 0.0, %v3956
          %v3958 = vpop.f32.mrf.mxu0
          %3959 = vmatprep.mubr.f32.mxu0 0.0
          %3960 = vmatmul.mubr.f32.gmra.mxu0 %v3885
          %v3961 = vpop.f32.mrf.mxu0
          %v3962 = vadd.f32 0.0, %v3961
          %v3963 = vpop.f32.mrf.mxu0
          %3964 = vdwg.mxu0
          %v3965 = vadd.f32 %v3876, %v3957
          %v3966 = vadd.f32 %v3877, %v3962
          %s3967 = scalar_lea.vmem %s3, 184
          %v3968 = vld [vmem:[%s3967] sm:$0x3f]
          %v3969 = vrot.slane %v3699, 3
          %v3970 = vrot.slane %v3700, 3
          %v3971 = vsel %vm2171, %v3969, %v3970
          %v3972 = vsel %vm1914, %v3971, 0
          %v3974 = vsel %vm1914, %v3970, 0
          %v3977 = vsel %vm1919, %v3968, 0
          %3979 = vmatprep.subr.mxu0 0.0
          %3980 = vmatpush1.msra.mxu0 0.0
          %3981 = vmatprep.subr.mxu0 0.0
          %3982 = vmatpush1.msra.mxu0 0.0
          %3983 = vmatprep.subr.mxu0 0.0
          %3984 = vmatpush1.msra.mxu0 0.0
          %3985 = vmatprep.subr.mxu0 0.0
          %3986 = vmatpush1.msra.mxu0 0.0
          %3987 = vmatprep.subr.mxu0 0.0
          %3988 = vmatpush1.msra.mxu0 0.0
          %3989 = vmatprep.subr.mxu0 0.0
          %3990 = vmatpush1.msra.mxu0 0.0
          %3991 = vmatprep.subr.mxu0 0.0
          %3992 = vmatpush1.msra.mxu0 0.0
          %3993 = vmatprep.subr.mxu0 0.0
          %3994 = vmatpush1.msra.mxu0 0.0
          %3995 = vmatprep.subr.mxu0 0.0
          %3996 = vmatpush1.msra.mxu0 0.0
          %3997 = vmatprep.subr.mxu0 0.0
          %3998 = vmatpush1.msra.mxu0 0.0
          %3999 = vmatprep.subr.mxu0 0.0
          %4000 = vmatpush1.msra.mxu0 0.0
          %4001 = vmatprep.subr.mxu0 0.0
          %4002 = vmatpush1.msra.mxu0 0.0
          %4003 = vmatprep.subr.mxu0 0.0
          %4004 = vmatpush1.msra.mxu0 0.0
          %4005 = vmatprep.subr.mxu0 0.0
          %4006 = vmatpush1.msra.mxu0 0.0
          %4007 = vmatprep.subr.mxu0 0.0
          %4008 = vmatpush1.msra.mxu0 0.0
          %4009 = vmatprep.subr.mxu0 0.0
          %4010 = vmatpush1.msra.mxu0 %v3977
          %4011 = vmatprep.subr.mxu0 0.0
          %4012 = vmatpush2.msra.mxu0 0.0
          %4013 = vmatprep.subr.mxu0 0.0
          %4014 = vmatpush2.msra.mxu0 0.0
          %4015 = vmatprep.subr.mxu0 0.0
          %4016 = vmatpush2.msra.mxu0 0.0
          %4017 = vmatprep.subr.mxu0 0.0
          %4018 = vmatpush2.msra.mxu0 0.0
          %4019 = vmatprep.subr.mxu0 0.0
          %4020 = vmatpush2.msra.mxu0 0.0
          %4021 = vmatprep.subr.mxu0 0.0
          %4022 = vmatpush2.msra.mxu0 0.0
          %4023 = vmatprep.subr.mxu0 0.0
          %4024 = vmatpush2.msra.mxu0 0.0
          %4025 = vmatprep.subr.mxu0 0.0
          %4026 = vmatpush2.msra.mxu0 0.0
          %4027 = vmatprep.subr.mxu0 0.0
          %4028 = vmatpush2.msra.mxu0 0.0
          %4029 = vmatprep.subr.mxu0 0.0
          %4030 = vmatpush2.msra.mxu0 0.0
          %4031 = vmatprep.subr.mxu0 0.0
          %4032 = vmatpush2.msra.mxu0 0.0
          %4033 = vmatprep.subr.mxu0 0.0
          %4034 = vmatpush2.msra.mxu0 0.0
          %4035 = vmatprep.subr.mxu0 0.0
          %4036 = vmatpush2.msra.mxu0 0.0
          %4037 = vmatprep.subr.mxu0 0.0
          %4038 = vmatpush2.msra.mxu0 0.0
          %4039 = vmatprep.subr.mxu0 0.0
          %4040 = vmatpush2.msra.mxu0 0.0
          %4041 = vmatprep.subr.mxu0 0.0
          %4042 = vmatpush2.msra.mxu0 0.0
          %4043 = vmatprep.mubr.f32.mxu0 0.0
          %4044 = vmatmul.mubr.f32.gmra.mxu0 %v3972
          %v4045 = vpop.f32.mrf.mxu0
          %v4046 = vadd.f32 0.0, %v4045
          %v4047 = vpop.f32.mrf.mxu0
          %4048 = vmatprep.mubr.f32.mxu0 0.0
          %4049 = vmatmul.mubr.f32.gmra.mxu0 %v3974
          %v4050 = vpop.f32.mrf.mxu0
          %v4051 = vadd.f32 0.0, %v4050
          %v4052 = vpop.f32.mrf.mxu0
          %4053 = vdwg.mxu0
          %v4054 = vadd.f32 %v3965, %v4046
          %v4055 = vadd.f32 %v3966, %v4051
          %s4056 = scalar_lea.vmem %s3, 192
          %v4057 = vld [vmem:[%s4056] sm:$0x3f]
          %v4058 = vrot.slane %v3699, 4
          %v4059 = vrot.slane %v3700, 4
          %v4060 = vsel %vm2261, %v4058, %v4059
          %v4061 = vsel %vm1914, %v4060, 0
          %v4063 = vsel %vm1914, %v4059, 0
          %v4066 = vsel %vm1919, %v4057, 0
          %4068 = vmatprep.subr.mxu0 0.0
          %4069 = vmatpush1.msra.mxu0 0.0
          %4070 = vmatprep.subr.mxu0 0.0
          %4071 = vmatpush1.msra.mxu0 0.0
          %4072 = vmatprep.subr.mxu0 0.0
          %4073 = vmatpush1.msra.mxu0 0.0
          %4074 = vmatprep.subr.mxu0 0.0
          %4075 = vmatpush1.msra.mxu0 0.0
          %4076 = vmatprep.subr.mxu0 0.0
          %4077 = vmatpush1.msra.mxu0 0.0
          %4078 = vmatprep.subr.mxu0 0.0
          %4079 = vmatpush1.msra.mxu0 0.0
          %4080 = vmatprep.subr.mxu0 0.0
          %4081 = vmatpush1.msra.mxu0 0.0
          %4082 = vmatprep.subr.mxu0 0.0
          %4083 = vmatpush1.msra.mxu0 0.0
          %4084 = vmatprep.subr.mxu0 0.0
          %4085 = vmatpush1.msra.mxu0 0.0
          %4086 = vmatprep.subr.mxu0 0.0
          %4087 = vmatpush1.msra.mxu0 0.0
          %4088 = vmatprep.subr.mxu0 0.0
          %4089 = vmatpush1.msra.mxu0 0.0
          %4090 = vmatprep.subr.mxu0 0.0
          %4091 = vmatpush1.msra.mxu0 0.0
          %4092 = vmatprep.subr.mxu0 0.0
          %4093 = vmatpush1.msra.mxu0 0.0
          %4094 = vmatprep.subr.mxu0 0.0
          %4095 = vmatpush1.msra.mxu0 0.0
          %4096 = vmatprep.subr.mxu0 0.0
          %4097 = vmatpush1.msra.mxu0 0.0
          %4098 = vmatprep.subr.mxu0 0.0
          %4099 = vmatpush1.msra.mxu0 %v4066
          %4100 = vmatprep.subr.mxu0 0.0
          %4101 = vmatpush2.msra.mxu0 0.0
          %4102 = vmatprep.subr.mxu0 0.0
          %4103 = vmatpush2.msra.mxu0 0.0
          %4104 = vmatprep.subr.mxu0 0.0
          %4105 = vmatpush2.msra.mxu0 0.0
          %4106 = vmatprep.subr.mxu0 0.0
          %4107 = vmatpush2.msra.mxu0 0.0
          %4108 = vmatprep.subr.mxu0 0.0
          %4109 = vmatpush2.msra.mxu0 0.0
          %4110 = vmatprep.subr.mxu0 0.0
          %4111 = vmatpush2.msra.mxu0 0.0
          %4112 = vmatprep.subr.mxu0 0.0
          %4113 = vmatpush2.msra.mxu0 0.0
          %4114 = vmatprep.subr.mxu0 0.0
          %4115 = vmatpush2.msra.mxu0 0.0
          %4116 = vmatprep.subr.mxu0 0.0
          %4117 = vmatpush2.msra.mxu0 0.0
          %4118 = vmatprep.subr.mxu0 0.0
          %4119 = vmatpush2.msra.mxu0 0.0
          %4120 = vmatprep.subr.mxu0 0.0
          %4121 = vmatpush2.msra.mxu0 0.0
          %4122 = vmatprep.subr.mxu0 0.0
          %4123 = vmatpush2.msra.mxu0 0.0
          %4124 = vmatprep.subr.mxu0 0.0
          %4125 = vmatpush2.msra.mxu0 0.0
          %4126 = vmatprep.subr.mxu0 0.0
          %4127 = vmatpush2.msra.mxu0 0.0
          %4128 = vmatprep.subr.mxu0 0.0
          %4129 = vmatpush2.msra.mxu0 0.0
          %4130 = vmatprep.subr.mxu0 0.0
          %4131 = vmatpush2.msra.mxu0 0.0
          %4132 = vmatprep.mubr.f32.mxu0 0.0
          %4133 = vmatmul.mubr.f32.gmra.mxu0 %v4061
          %v4134 = vpop.f32.mrf.mxu0
          %v4135 = vadd.f32 0.0, %v4134
          %v4136 = vpop.f32.mrf.mxu0
          %4137 = vmatprep.mubr.f32.mxu0 0.0
          %4138 = vmatmul.mubr.f32.gmra.mxu0 %v4063
          %v4139 = vpop.f32.mrf.mxu0
          %v4140 = vadd.f32 0.0, %v4139
          %v4141 = vpop.f32.mrf.mxu0
          %4142 = vdwg.mxu0
          %v4143 = vadd.f32 %v4054, %v4135
          %v4144 = vadd.f32 %v4055, %v4140
          %v4145 = vld [vmem:[%s4] sm:$0x1]
          %v4147 = vlaneseq
          %v4148 = vshrl.u32 %v4147, 7
          %v4149 = vsub.s32 0, %v4148
          %v4150 = vrot.slane %v4145, %v4149
          %v4152 = vadd.f32 %v4143, %v4150
          %v4153 = vadd.f32 %v4144, %v4150
          %v4154 = vtanh.pop %v4152
          %v4155 = vtanh.pop %v4153
          %4156 = vmatprep.subr.mxu0 0.0
          %4157 = vmatpush1.msra.mxu0 0.0
          %4158 = vmatprep.subr.mxu0 0.0
          %4159 = vmatpush1.msra.mxu0 0.0
          %4160 = vmatprep.subr.mxu0 0.0
          %4161 = vmatpush1.msra.mxu0 0.0
          %4162 = vmatprep.subr.mxu0 0.0
          %4163 = vmatpush1.msra.mxu0 0.0
          %4164 = vmatprep.subr.mxu0 0.0
          %4165 = vmatpush1.msra.mxu0 0.0
          %4166 = vmatprep.subr.mxu0 0.0
          %4167 = vmatpush1.msra.mxu0 0.0
          %4168 = vmatprep.subr.mxu0 0.0
          %4169 = vmatpush1.msra.mxu0 0.0
          %4170 = vmatprep.subr.mxu0 0.0
          %4171 = vmatpush1.msra.mxu0 0.0
          %4172 = vmatprep.subr.mxu0 0.0
          %4173 = vmatpush1.msra.mxu0 0.0
          %4174 = vmatprep.subr.mxu0 0.0
          %4175 = vmatpush1.msra.mxu0 0.0
          %4176 = vmatprep.subr.mxu0 0.0
          %4177 = vmatpush1.msra.mxu0 0.0
          %4178 = vmatprep.subr.mxu0 0.0
          %4179 = vmatpush1.msra.mxu0 0.0
          %4180 = vmatprep.subr.mxu0 0.0
          %4181 = vmatpush1.msra.mxu0 0.0
          %4182 = vmatprep.subr.mxu0 0.0
          %4183 = vmatpush1.msra.mxu0 0.0
          %4184 = vmatprep.subr.mxu0 0.0
          %4185 = vmatpush1.msra.mxu0 0.0
          %4186 = vmatprep.subr.mxu0 0.0
          %4187 = vmatpush1.msra.mxu0 %v1921
          %4188 = vmatprep.subr.mxu0 0.0
          %4189 = vmatpush2.msra.mxu0 0.0
          %4190 = vmatprep.subr.mxu0 0.0
          %4191 = vmatpush2.msra.mxu0 0.0
          %4192 = vmatprep.subr.mxu0 0.0
          %4193 = vmatpush2.msra.mxu0 0.0
          %4194 = vmatprep.subr.mxu0 0.0
          %4195 = vmatpush2.msra.mxu0 0.0
          %4196 = vmatprep.subr.mxu0 0.0
          %4197 = vmatpush2.msra.mxu0 0.0
          %4198 = vmatprep.subr.mxu0 0.0
          %4199 = vmatpush2.msra.mxu0 0.0
          %4200 = vmatprep.subr.mxu0 0.0
          %4201 = vmatpush2.msra.mxu0 0.0
          %4202 = vmatprep.subr.mxu0 0.0
          %4203 = vmatpush2.msra.mxu0 0.0
          %4204 = vmatprep.subr.mxu0 0.0
          %4205 = vmatpush2.msra.mxu0 0.0
          %4206 = vmatprep.subr.mxu0 0.0
          %4207 = vmatpush2.msra.mxu0 0.0
          %4208 = vmatprep.subr.mxu0 0.0
          %4209 = vmatpush2.msra.mxu0 0.0
          %4210 = vmatprep.subr.mxu0 0.0
          %4211 = vmatpush2.msra.mxu0 0.0
          %4212 = vmatprep.subr.mxu0 0.0
          %4213 = vmatpush2.msra.mxu0 0.0
          %4214 = vmatprep.subr.mxu0 0.0
          %4215 = vmatpush2.msra.mxu0 0.0
          %4216 = vmatprep.subr.mxu0 0.0
          %4217 = vmatpush2.msra.mxu0 0.0
          %4218 = vmatprep.subr.mxu0 0.0
          %4219 = vmatpush2.msra.mxu0 0.0
          %4220 = vmatprep.mubr.f32.mxu0 0.0
          %4221 = vmatmul.mubr.f32.gmra.mxu0 %v2447
          %v4222 = vpop.f32.mrf.mxu0
          %v4223 = vadd.f32 0.0, %v4222
          %v4224 = vpop.f32.mrf.mxu0
          %4225 = vmatprep.mubr.f32.mxu0 0.0
          %4226 = vmatmul.mubr.f32.gmra.mxu0 %v2449
          %v4227 = vpop.f32.mrf.mxu0
          %v4228 = vadd.f32 0.0, %v4227
          %v4229 = vpop.f32.mrf.mxu0
          %4230 = vdwg.mxu0
          %4231 = vmatprep.subr.mxu0 0.0
          %4232 = vmatpush1.msra.mxu0 0.0
          %4233 = vmatprep.subr.mxu0 0.0
          %4234 = vmatpush1.msra.mxu0 0.0
          %4235 = vmatprep.subr.mxu0 0.0
          %4236 = vmatpush1.msra.mxu0 0.0
          %4237 = vmatprep.subr.mxu0 0.0
          %4238 = vmatpush1.msra.mxu0 0.0
          %4239 = vmatprep.subr.mxu0 0.0
          %4240 = vmatpush1.msra.mxu0 0.0
          %4241 = vmatprep.subr.mxu0 0.0
          %4242 = vmatpush1.msra.mxu0 0.0
          %4243 = vmatprep.subr.mxu0 0.0
          %4244 = vmatpush1.msra.mxu0 0.0
          %4245 = vmatprep.subr.mxu0 0.0
          %4246 = vmatpush1.msra.mxu0 0.0
          %4247 = vmatprep.subr.mxu0 0.0
          %4248 = vmatpush1.msra.mxu0 0.0
          %4249 = vmatprep.subr.mxu0 0.0
          %4250 = vmatpush1.msra.mxu0 0.0
          %4251 = vmatprep.subr.mxu0 0.0
          %4252 = vmatpush1.msra.mxu0 0.0
          %4253 = vmatprep.subr.mxu0 0.0
          %4254 = vmatpush1.msra.mxu0 0.0
          %4255 = vmatprep.subr.mxu0 0.0
          %4256 = vmatpush1.msra.mxu0 0.0
          %4257 = vmatprep.subr.mxu0 0.0
          %4258 = vmatpush1.msra.mxu0 0.0
          %4259 = vmatprep.subr.mxu0 0.0
          %4260 = vmatpush1.msra.mxu0 0.0
          %4261 = vmatprep.subr.mxu0 0.0
          %4262 = vmatpush1.msra.mxu0 %v2003
          %4263 = vmatprep.subr.mxu0 0.0
          %4264 = vmatpush2.msra.mxu0 0.0
          %4265 = vmatprep.subr.mxu0 0.0
          %4266 = vmatpush2.msra.mxu0 0.0
          %4267 = vmatprep.subr.mxu0 0.0
          %4268 = vmatpush2.msra.mxu0 0.0
          %4269 = vmatprep.subr.mxu0 0.0
          %4270 = vmatpush2.msra.mxu0 0.0
          %4271 = vmatprep.subr.mxu0 0.0
          %4272 = vmatpush2.msra.mxu0 0.0
          %4273 = vmatprep.subr.mxu0 0.0
          %4274 = vmatpush2.msra.mxu0 0.0
          %4275 = vmatprep.subr.mxu0 0.0
          %4276 = vmatpush2.msra.mxu0 0.0
          %4277 = vmatprep.subr.mxu0 0.0
          %4278 = vmatpush2.msra.mxu0 0.0
          %4279 = vmatprep.subr.mxu0 0.0
          %4280 = vmatpush2.msra.mxu0 0.0
          %4281 = vmatprep.subr.mxu0 0.0
          %4282 = vmatpush2.msra.mxu0 0.0
          %4283 = vmatprep.subr.mxu0 0.0
          %4284 = vmatpush2.msra.mxu0 0.0
          %4285 = vmatprep.subr.mxu0 0.0
          %4286 = vmatpush2.msra.mxu0 0.0
          %4287 = vmatprep.subr.mxu0 0.0
          %4288 = vmatpush2.msra.mxu0 0.0
          %4289 = vmatprep.subr.mxu0 0.0
          %4290 = vmatpush2.msra.mxu0 0.0
          %4291 = vmatprep.subr.mxu0 0.0
          %4292 = vmatpush2.msra.mxu0 0.0
          %4293 = vmatprep.subr.mxu0 0.0
          %4294 = vmatpush2.msra.mxu0 0.0
          %4295 = vmatprep.mubr.f32.mxu0 0.0
          %4296 = vmatmul.mubr.f32.gmra.mxu0 %v2357
          %v4297 = vpop.f32.mrf.mxu0
          %v4298 = vadd.f32 %v4223, %v4297
          %v4299 = vpop.f32.mrf.mxu0
          %4300 = vmatprep.mubr.f32.mxu0 0.0
          %4301 = vmatmul.mubr.f32.gmra.mxu0 %v2360
          %v4302 = vpop.f32.mrf.mxu0
          %v4303 = vadd.f32 %v4228, %v4302
          %v4304 = vpop.f32.mrf.mxu0
          %4305 = vdwg.mxu0
          %4306 = vmatprep.subr.mxu0 0.0
          %4307 = vmatpush1.msra.mxu0 0.0
          %4308 = vmatprep.subr.mxu0 0.0
          %4309 = vmatpush1.msra.mxu0 0.0
          %4310 = vmatprep.subr.mxu0 0.0
          %4311 = vmatpush1.msra.mxu0 0.0
          %4312 = vmatprep.subr.mxu0 0.0
          %4313 = vmatpush1.msra.mxu0 0.0
          %4314 = vmatprep.subr.mxu0 0.0
          %4315 = vmatpush1.msra.mxu0 0.0
          %4316 = vmatprep.subr.mxu0 0.0
          %4317 = vmatpush1.msra.mxu0 0.0
          %4318 = vmatprep.subr.mxu0 0.0
          %4319 = vmatpush1.msra.mxu0 0.0
          %4320 = vmatprep.subr.mxu0 0.0
          %4321 = vmatpush1.msra.mxu0 0.0
          %4322 = vmatprep.subr.mxu0 0.0
          %4323 = vmatpush1.msra.mxu0 0.0
          %4324 = vmatprep.subr.mxu0 0.0
          %4325 = vmatpush1.msra.mxu0 0.0
          %4326 = vmatprep.subr.mxu0 0.0
          %4327 = vmatpush1.msra.mxu0 0.0
          %4328 = vmatprep.subr.mxu0 0.0
          %4329 = vmatpush1.msra.mxu0 0.0
          %4330 = vmatprep.subr.mxu0 0.0
          %4331 = vmatpush1.msra.mxu0 0.0
          %4332 = vmatprep.subr.mxu0 0.0
          %4333 = vmatpush1.msra.mxu0 0.0
          %4334 = vmatprep.subr.mxu0 0.0
          %4335 = vmatpush1.msra.mxu0 0.0
          %4336 = vmatprep.subr.mxu0 0.0
          %4337 = vmatpush1.msra.mxu0 %v2090
          %4338 = vmatprep.subr.mxu0 0.0
          %4339 = vmatpush2.msra.mxu0 0.0
          %4340 = vmatprep.subr.mxu0 0.0
          %4341 = vmatpush2.msra.mxu0 0.0
          %4342 = vmatprep.subr.mxu0 0.0
          %4343 = vmatpush2.msra.mxu0 0.0
          %4344 = vmatprep.subr.mxu0 0.0
          %4345 = vmatpush2.msra.mxu0 0.0
          %4346 = vmatprep.subr.mxu0 0.0
          %4347 = vmatpush2.msra.mxu0 0.0
          %4348 = vmatprep.subr.mxu0 0.0
          %4349 = vmatpush2.msra.mxu0 0.0
          %4350 = vmatprep.subr.mxu0 0.0
          %4351 = vmatpush2.msra.mxu0 0.0
          %4352 = vmatprep.subr.mxu0 0.0
          %4353 = vmatpush2.msra.mxu0 0.0
          %4354 = vmatprep.subr.mxu0 0.0
          %4355 = vmatpush2.msra.mxu0 0.0
          %4356 = vmatprep.subr.mxu0 0.0
          %4357 = vmatpush2.msra.mxu0 0.0
          %4358 = vmatprep.subr.mxu0 0.0
          %4359 = vmatpush2.msra.mxu0 0.0
          %4360 = vmatprep.subr.mxu0 0.0
          %4361 = vmatpush2.msra.mxu0 0.0
          %4362 = vmatprep.subr.mxu0 0.0
          %4363 = vmatpush2.msra.mxu0 0.0
          %4364 = vmatprep.subr.mxu0 0.0
          %4365 = vmatpush2.msra.mxu0 0.0
          %4366 = vmatprep.subr.mxu0 0.0
          %4367 = vmatpush2.msra.mxu0 0.0
          %4368 = vmatprep.subr.mxu0 0.0
          %4369 = vmatpush2.msra.mxu0 0.0
          %4370 = vmatprep.mubr.f32.mxu0 0.0
          %4371 = vmatmul.mubr.f32.gmra.mxu0 %v2536
          %v4372 = vpop.f32.mrf.mxu0
          %v4373 = vadd.f32 0.0, %v4372
          %v4374 = vpop.f32.mrf.mxu0
          %4375 = vmatprep.mubr.f32.mxu0 0.0
          %4376 = vmatmul.mubr.f32.gmra.mxu0 %v2538
          %v4377 = vpop.f32.mrf.mxu0
          %v4378 = vadd.f32 0.0, %v4377
          %v4379 = vpop.f32.mrf.mxu0
          %4380 = vdwg.mxu0
          %v4381 = vadd.f32 %v4298, %v4373
          %v4382 = vadd.f32 %v4303, %v4378
          %4383 = vmatprep.subr.mxu0 0.0
          %4384 = vmatpush1.msra.mxu0 0.0
          %4385 = vmatprep.subr.mxu0 0.0
          %4386 = vmatpush1.msra.mxu0 0.0
          %4387 = vmatprep.subr.mxu0 0.0
          %4388 = vmatpush1.msra.mxu0 0.0
          %4389 = vmatprep.subr.mxu0 0.0
          %4390 = vmatpush1.msra.mxu0 0.0
          %4391 = vmatprep.subr.mxu0 0.0
          %4392 = vmatpush1.msra.mxu0 0.0
          %4393 = vmatprep.subr.mxu0 0.0
          %4394 = vmatpush1.msra.mxu0 0.0
          %4395 = vmatprep.subr.mxu0 0.0
          %4396 = vmatpush1.msra.mxu0 0.0
          %4397 = vmatprep.subr.mxu0 0.0
          %4398 = vmatpush1.msra.mxu0 0.0
          %4399 = vmatprep.subr.mxu0 0.0
          %4400 = vmatpush1.msra.mxu0 0.0
          %4401 = vmatprep.subr.mxu0 0.0
          %4402 = vmatpush1.msra.mxu0 0.0
          %4403 = vmatprep.subr.mxu0 0.0
          %4404 = vmatpush1.msra.mxu0 0.0
          %4405 = vmatprep.subr.mxu0 0.0
          %4406 = vmatpush1.msra.mxu0 0.0
          %4407 = vmatprep.subr.mxu0 0.0
          %4408 = vmatpush1.msra.mxu0 0.0
          %4409 = vmatprep.subr.mxu0 0.0
          %4410 = vmatpush1.msra.mxu0 0.0
          %4411 = vmatprep.subr.mxu0 0.0
          %4412 = vmatpush1.msra.mxu0 0.0
          %4413 = vmatprep.subr.mxu0 0.0
          %4414 = vmatpush1.msra.mxu0 %v2180
          %4415 = vmatprep.subr.mxu0 0.0
          %4416 = vmatpush2.msra.mxu0 0.0
          %4417 = vmatprep.subr.mxu0 0.0
          %4418 = vmatpush2.msra.mxu0 0.0
          %4419 = vmatprep.subr.mxu0 0.0
          %4420 = vmatpush2.msra.mxu0 0.0
          %4421 = vmatprep.subr.mxu0 0.0
          %4422 = vmatpush2.msra.mxu0 0.0
          %4423 = vmatprep.subr.mxu0 0.0
          %4424 = vmatpush2.msra.mxu0 0.0
          %4425 = vmatprep.subr.mxu0 0.0
          %4426 = vmatpush2.msra.mxu0 0.0
          %4427 = vmatprep.subr.mxu0 0.0
          %4428 = vmatpush2.msra.mxu0 0.0
          %4429 = vmatprep.subr.mxu0 0.0
          %4430 = vmatpush2.msra.mxu0 0.0
          %4431 = vmatprep.subr.mxu0 0.0
          %4432 = vmatpush2.msra.mxu0 0.0
          %4433 = vmatprep.subr.mxu0 0.0
          %4434 = vmatpush2.msra.mxu0 0.0
          %4435 = vmatprep.subr.mxu0 0.0
          %4436 = vmatpush2.msra.mxu0 0.0
          %4437 = vmatprep.subr.mxu0 0.0
          %4438 = vmatpush2.msra.mxu0 0.0
          %4439 = vmatprep.subr.mxu0 0.0
          %4440 = vmatpush2.msra.mxu0 0.0
          %4441 = vmatprep.subr.mxu0 0.0
          %4442 = vmatpush2.msra.mxu0 0.0
          %4443 = vmatprep.subr.mxu0 0.0
          %4444 = vmatpush2.msra.mxu0 0.0
          %4445 = vmatprep.subr.mxu0 0.0
          %4446 = vmatpush2.msra.mxu0 0.0
          %4447 = vmatprep.mubr.f32.mxu0 0.0
          %4448 = vmatmul.mubr.f32.gmra.mxu0 %v2625
          %v4449 = vpop.f32.mrf.mxu0
          %v4450 = vadd.f32 0.0, %v4449
          %v4451 = vpop.f32.mrf.mxu0
          %4452 = vmatprep.mubr.f32.mxu0 0.0
          %4453 = vmatmul.mubr.f32.gmra.mxu0 %v2627
          %v4454 = vpop.f32.mrf.mxu0
          %v4455 = vadd.f32 0.0, %v4454
          %v4456 = vpop.f32.mrf.mxu0
          %4457 = vdwg.mxu0
          %v4458 = vadd.f32 %v4381, %v4450
          %v4459 = vadd.f32 %v4382, %v4455
          %4460 = vmatprep.subr.mxu0 0.0
          %4461 = vmatpush1.msra.mxu0 0.0
          %4462 = vmatprep.subr.mxu0 0.0
          %4463 = vmatpush1.msra.mxu0 0.0
          %4464 = vmatprep.subr.mxu0 0.0
          %4465 = vmatpush1.msra.mxu0 0.0
          %4466 = vmatprep.subr.mxu0 0.0
          %4467 = vmatpush1.msra.mxu0 0.0
          %4468 = vmatprep.subr.mxu0 0.0
          %4469 = vmatpush1.msra.mxu0 0.0
          %4470 = vmatprep.subr.mxu0 0.0
          %4471 = vmatpush1.msra.mxu0 0.0
          %4472 = vmatprep.subr.mxu0 0.0
          %4473 = vmatpush1.msra.mxu0 0.0
          %4474 = vmatprep.subr.mxu0 0.0
          %4475 = vmatpush1.msra.mxu0 0.0
          %4476 = vmatprep.subr.mxu0 0.0
          %4477 = vmatpush1.msra.mxu0 0.0
          %4478 = vmatprep.subr.mxu0 0.0
          %4479 = vmatpush1.msra.mxu0 0.0
          %4480 = vmatprep.subr.mxu0 0.0
          %4481 = vmatpush1.msra.mxu0 0.0
          %4482 = vmatprep.subr.mxu0 0.0
          %4483 = vmatpush1.msra.mxu0 0.0
          %4484 = vmatprep.subr.mxu0 0.0
          %4485 = vmatpush1.msra.mxu0 0.0
          %4486 = vmatprep.subr.mxu0 0.0
          %4487 = vmatpush1.msra.mxu0 0.0
          %4488 = vmatprep.subr.mxu0 0.0
          %4489 = vmatpush1.msra.mxu0 0.0
          %4490 = vmatprep.subr.mxu0 0.0
          %4491 = vmatpush1.msra.mxu0 %v2270
          %4492 = vmatprep.subr.mxu0 0.0
          %4493 = vmatpush2.msra.mxu0 0.0
          %4494 = vmatprep.subr.mxu0 0.0
          %4495 = vmatpush2.msra.mxu0 0.0
          %4496 = vmatprep.subr.mxu0 0.0
          %4497 = vmatpush2.msra.mxu0 0.0
          %4498 = vmatprep.subr.mxu0 0.0
          %4499 = vmatpush2.msra.mxu0 0.0
          %4500 = vmatprep.subr.mxu0 0.0
          %4501 = vmatpush2.msra.mxu0 0.0
          %4502 = vmatprep.subr.mxu0 0.0
          %4503 = vmatpush2.msra.mxu0 0.0
          %4504 = vmatprep.subr.mxu0 0.0
          %4505 = vmatpush2.msra.mxu0 0.0
          %4506 = vmatprep.subr.mxu0 0.0
          %4507 = vmatpush2.msra.mxu0 0.0
          %4508 = vmatprep.subr.mxu0 0.0
          %4509 = vmatpush2.msra.mxu0 0.0
          %4510 = vmatprep.subr.mxu0 0.0
          %4511 = vmatpush2.msra.mxu0 0.0
          %4512 = vmatprep.subr.mxu0 0.0
          %4513 = vmatpush2.msra.mxu0 0.0
          %4514 = vmatprep.subr.mxu0 0.0
          %4515 = vmatpush2.msra.mxu0 0.0
          %4516 = vmatprep.subr.mxu0 0.0
          %4517 = vmatpush2.msra.mxu0 0.0
          %4518 = vmatprep.subr.mxu0 0.0
          %4519 = vmatpush2.msra.mxu0 0.0
          %4520 = vmatprep.subr.mxu0 0.0
          %4521 = vmatpush2.msra.mxu0 0.0
          %4522 = vmatprep.subr.mxu0 0.0
          %4523 = vmatpush2.msra.mxu0 0.0
          %4524 = vmatprep.mubr.f32.mxu0 0.0
          %4525 = vmatmul.mubr.f32.gmra.mxu0 %v2714
          %v4526 = vpop.f32.mrf.mxu0
          %v4527 = vadd.f32 0.0, %v4526
          %v4528 = vpop.f32.mrf.mxu0
          %4529 = vmatprep.mubr.f32.mxu0 0.0
          %4530 = vmatmul.mubr.f32.gmra.mxu0 %v2716
          %v4531 = vpop.f32.mrf.mxu0
          %v4532 = vadd.f32 0.0, %v4531
          %v4533 = vpop.f32.mrf.mxu0
          %4534 = vdwg.mxu0
          %v4535 = vadd.f32 %v4458, %v4527
          %v4536 = vadd.f32 %v4459, %v4532
          %4537 = vmatprep.subr.mxu0 0.0
          %4538 = vmatpush1.msra.mxu0 0.0
          %4539 = vmatprep.subr.mxu0 0.0
          %4540 = vmatpush1.msra.mxu0 0.0
          %4541 = vmatprep.subr.mxu0 0.0
          %4542 = vmatpush1.msra.mxu0 0.0
          %4543 = vmatprep.subr.mxu0 0.0
          %4544 = vmatpush1.msra.mxu0 0.0
          %4545 = vmatprep.subr.mxu0 0.0
          %4546 = vmatpush1.msra.mxu0 0.0
          %4547 = vmatprep.subr.mxu0 0.0
          %4548 = vmatpush1.msra.mxu0 0.0
          %4549 = vmatprep.subr.mxu0 0.0
          %4550 = vmatpush1.msra.mxu0 0.0
          %4551 = vmatprep.subr.mxu0 0.0
          %4552 = vmatpush1.msra.mxu0 0.0
          %4553 = vmatprep.subr.mxu0 0.0
          %4554 = vmatpush1.msra.mxu0 0.0
          %4555 = vmatprep.subr.mxu0 0.0
          %4556 = vmatpush1.msra.mxu0 0.0
          %4557 = vmatprep.subr.mxu0 0.0
          %4558 = vmatpush1.msra.mxu0 0.0
          %4559 = vmatprep.subr.mxu0 0.0
          %4560 = vmatpush1.msra.mxu0 0.0
          %4561 = vmatprep.subr.mxu0 0.0
          %4562 = vmatpush1.msra.mxu0 0.0
          %4563 = vmatprep.subr.mxu0 0.0
          %4564 = vmatpush1.msra.mxu0 0.0
          %4565 = vmatprep.subr.mxu0 0.0
          %4566 = vmatpush1.msra.mxu0 0.0
          %4567 = vmatprep.subr.mxu0 0.0
          %4568 = vmatpush1.msra.mxu0 %v2363
          %4569 = vmatprep.subr.mxu0 0.0
          %4570 = vmatpush2.msra.mxu0 0.0
          %4571 = vmatprep.subr.mxu0 0.0
          %4572 = vmatpush2.msra.mxu0 0.0
          %4573 = vmatprep.subr.mxu0 0.0
          %4574 = vmatpush2.msra.mxu0 0.0
          %4575 = vmatprep.subr.mxu0 0.0
          %4576 = vmatpush2.msra.mxu0 0.0
          %4577 = vmatprep.subr.mxu0 0.0
          %4578 = vmatpush2.msra.mxu0 0.0
          %4579 = vmatprep.subr.mxu0 0.0
          %4580 = vmatpush2.msra.mxu0 0.0
          %4581 = vmatprep.subr.mxu0 0.0
          %4582 = vmatpush2.msra.mxu0 0.0
          %4583 = vmatprep.subr.mxu0 0.0
          %4584 = vmatpush2.msra.mxu0 0.0
          %4585 = vmatprep.subr.mxu0 0.0
          %4586 = vmatpush2.msra.mxu0 0.0
          %4587 = vmatprep.subr.mxu0 0.0
          %4588 = vmatpush2.msra.mxu0 0.0
          %4589 = vmatprep.subr.mxu0 0.0
          %4590 = vmatpush2.msra.mxu0 0.0
          %4591 = vmatprep.subr.mxu0 0.0
          %4592 = vmatpush2.msra.mxu0 0.0
          %4593 = vmatprep.subr.mxu0 0.0
          %4594 = vmatpush2.msra.mxu0 0.0
          %4595 = vmatprep.subr.mxu0 0.0
          %4596 = vmatpush2.msra.mxu0 0.0
          %4597 = vmatprep.subr.mxu0 0.0
          %4598 = vmatpush2.msra.mxu0 0.0
          %4599 = vmatprep.subr.mxu0 0.0
          %4600 = vmatpush2.msra.mxu0 0.0
          %4601 = vmatprep.mubr.f32.mxu0 0.0
          %4602 = vmatmul.mubr.f32.gmra.mxu0 %v2806
          %v4603 = vpop.f32.mrf.mxu0
          %v4604 = vadd.f32 0.0, %v4603
          %v4605 = vpop.f32.mrf.mxu0
          %4606 = vmatprep.mubr.f32.mxu0 0.0
          %4607 = vmatmul.mubr.f32.gmra.mxu0 %v2809
          %v4608 = vpop.f32.mrf.mxu0
          %v4609 = vadd.f32 0.0, %v4608
          %v4610 = vpop.f32.mrf.mxu0
          %4611 = vdwg.mxu0
          %v4612 = vadd.f32 %v4535, %v4604
          %v4613 = vadd.f32 %v4536, %v4609
          %4614 = vmatprep.subr.mxu0 0.0
          %4615 = vmatpush1.msra.mxu0 0.0
          %4616 = vmatprep.subr.mxu0 0.0
          %4617 = vmatpush1.msra.mxu0 0.0
          %4618 = vmatprep.subr.mxu0 0.0
          %4619 = vmatpush1.msra.mxu0 0.0
          %4620 = vmatprep.subr.mxu0 0.0
          %4621 = vmatpush1.msra.mxu0 0.0
          %4622 = vmatprep.subr.mxu0 0.0
          %4623 = vmatpush1.msra.mxu0 0.0
          %4624 = vmatprep.subr.mxu0 0.0
          %4625 = vmatpush1.msra.mxu0 0.0
          %4626 = vmatprep.subr.mxu0 0.0
          %4627 = vmatpush1.msra.mxu0 0.0
          %4628 = vmatprep.subr.mxu0 0.0
          %4629 = vmatpush1.msra.mxu0 0.0
          %4630 = vmatprep.subr.mxu0 0.0
          %4631 = vmatpush1.msra.mxu0 0.0
          %4632 = vmatprep.subr.mxu0 0.0
          %4633 = vmatpush1.msra.mxu0 0.0
          %4634 = vmatprep.subr.mxu0 0.0
          %4635 = vmatpush1.msra.mxu0 0.0
          %4636 = vmatprep.subr.mxu0 0.0
          %4637 = vmatpush1.msra.mxu0 0.0
          %4638 = vmatprep.subr.mxu0 0.0
          %4639 = vmatpush1.msra.mxu0 0.0
          %4640 = vmatprep.subr.mxu0 0.0
          %4641 = vmatpush1.msra.mxu0 0.0
          %4642 = vmatprep.subr.mxu0 0.0
          %4643 = vmatpush1.msra.mxu0 0.0
          %4644 = vmatprep.subr.mxu0 0.0
          %4645 = vmatpush1.msra.mxu0 %v2452
          %4646 = vmatprep.subr.mxu0 0.0
          %4647 = vmatpush2.msra.mxu0 0.0
          %4648 = vmatprep.subr.mxu0 0.0
          %4649 = vmatpush2.msra.mxu0 0.0
          %4650 = vmatprep.subr.mxu0 0.0
          %4651 = vmatpush2.msra.mxu0 0.0
          %4652 = vmatprep.subr.mxu0 0.0
          %4653 = vmatpush2.msra.mxu0 0.0
          %4654 = vmatprep.subr.mxu0 0.0
          %4655 = vmatpush2.msra.mxu0 0.0
          %4656 = vmatprep.subr.mxu0 0.0
          %4657 = vmatpush2.msra.mxu0 0.0
          %4658 = vmatprep.subr.mxu0 0.0
          %4659 = vmatpush2.msra.mxu0 0.0
          %4660 = vmatprep.subr.mxu0 0.0
          %4661 = vmatpush2.msra.mxu0 0.0
          %4662 = vmatprep.subr.mxu0 0.0
          %4663 = vmatpush2.msra.mxu0 0.0
          %4664 = vmatprep.subr.mxu0 0.0
          %4665 = vmatpush2.msra.mxu0 0.0
          %4666 = vmatprep.subr.mxu0 0.0
          %4667 = vmatpush2.msra.mxu0 0.0
          %4668 = vmatprep.subr.mxu0 0.0
          %4669 = vmatpush2.msra.mxu0 0.0
          %4670 = vmatprep.subr.mxu0 0.0
          %4671 = vmatpush2.msra.mxu0 0.0
          %4672 = vmatprep.subr.mxu0 0.0
          %4673 = vmatpush2.msra.mxu0 0.0
          %4674 = vmatprep.subr.mxu0 0.0
          %4675 = vmatpush2.msra.mxu0 0.0
          %4676 = vmatprep.subr.mxu0 0.0
          %4677 = vmatpush2.msra.mxu0 0.0
          %4678 = vmatprep.mubr.f32.mxu0 0.0
          %4679 = vmatmul.mubr.f32.gmra.mxu0 %v2896
          %v4680 = vpop.f32.mrf.mxu0
          %v4681 = vadd.f32 0.0, %v4680
          %v4682 = vpop.f32.mrf.mxu0
          %4683 = vmatprep.mubr.f32.mxu0 0.0
          %4684 = vmatmul.mubr.f32.gmra.mxu0 %v2898
          %v4685 = vpop.f32.mrf.mxu0
          %v4686 = vadd.f32 0.0, %v4685
          %v4687 = vpop.f32.mrf.mxu0
          %4688 = vdwg.mxu0
          %v4689 = vadd.f32 %v4612, %v4681
          %v4690 = vadd.f32 %v4613, %v4686
          %4691 = vmatprep.subr.mxu0 0.0
          %4692 = vmatpush1.msra.mxu0 0.0
          %4693 = vmatprep.subr.mxu0 0.0
          %4694 = vmatpush1.msra.mxu0 0.0
          %4695 = vmatprep.subr.mxu0 0.0
          %4696 = vmatpush1.msra.mxu0 0.0
          %4697 = vmatprep.subr.mxu0 0.0
          %4698 = vmatpush1.msra.mxu0 0.0
          %4699 = vmatprep.subr.mxu0 0.0
          %4700 = vmatpush1.msra.mxu0 0.0
          %4701 = vmatprep.subr.mxu0 0.0
          %4702 = vmatpush1.msra.mxu0 0.0
          %4703 = vmatprep.subr.mxu0 0.0
          %4704 = vmatpush1.msra.mxu0 0.0
          %4705 = vmatprep.subr.mxu0 0.0
          %4706 = vmatpush1.msra.mxu0 0.0
          %4707 = vmatprep.subr.mxu0 0.0
          %4708 = vmatpush1.msra.mxu0 0.0
          %4709 = vmatprep.subr.mxu0 0.0
          %4710 = vmatpush1.msra.mxu0 0.0
          %4711 = vmatprep.subr.mxu0 0.0
          %4712 = vmatpush1.msra.mxu0 0.0
          %4713 = vmatprep.subr.mxu0 0.0
          %4714 = vmatpush1.msra.mxu0 0.0
          %4715 = vmatprep.subr.mxu0 0.0
          %4716 = vmatpush1.msra.mxu0 0.0
          %4717 = vmatprep.subr.mxu0 0.0
          %4718 = vmatpush1.msra.mxu0 0.0
          %4719 = vmatprep.subr.mxu0 0.0
          %4720 = vmatpush1.msra.mxu0 0.0
          %4721 = vmatprep.subr.mxu0 0.0
          %4722 = vmatpush1.msra.mxu0 %v2541
          %4723 = vmatprep.subr.mxu0 0.0
          %4724 = vmatpush2.msra.mxu0 0.0
          %4725 = vmatprep.subr.mxu0 0.0
          %4726 = vmatpush2.msra.mxu0 0.0
          %4727 = vmatprep.subr.mxu0 0.0
          %4728 = vmatpush2.msra.mxu0 0.0
          %4729 = vmatprep.subr.mxu0 0.0
          %4730 = vmatpush2.msra.mxu0 0.0
          %4731 = vmatprep.subr.mxu0 0.0
          %4732 = vmatpush2.msra.mxu0 0.0
          %4733 = vmatprep.subr.mxu0 0.0
          %4734 = vmatpush2.msra.mxu0 0.0
          %4735 = vmatprep.subr.mxu0 0.0
          %4736 = vmatpush2.msra.mxu0 0.0
          %4737 = vmatprep.subr.mxu0 0.0
          %4738 = vmatpush2.msra.mxu0 0.0
          %4739 = vmatprep.subr.mxu0 0.0
          %4740 = vmatpush2.msra.mxu0 0.0
          %4741 = vmatprep.subr.mxu0 0.0
          %4742 = vmatpush2.msra.mxu0 0.0
          %4743 = vmatprep.subr.mxu0 0.0
          %4744 = vmatpush2.msra.mxu0 0.0
          %4745 = vmatprep.subr.mxu0 0.0
          %4746 = vmatpush2.msra.mxu0 0.0
          %4747 = vmatprep.subr.mxu0 0.0
          %4748 = vmatpush2.msra.mxu0 0.0
          %4749 = vmatprep.subr.mxu0 0.0
          %4750 = vmatpush2.msra.mxu0 0.0
          %4751 = vmatprep.subr.mxu0 0.0
          %4752 = vmatpush2.msra.mxu0 0.0
          %4753 = vmatprep.subr.mxu0 0.0
          %4754 = vmatpush2.msra.mxu0 0.0
          %4755 = vmatprep.mubr.f32.mxu0 0.0
          %4756 = vmatmul.mubr.f32.gmra.mxu0 %v2985
          %v4757 = vpop.f32.mrf.mxu0
          %v4758 = vadd.f32 0.0, %v4757
          %v4759 = vpop.f32.mrf.mxu0
          %4760 = vmatprep.mubr.f32.mxu0 0.0
          %4761 = vmatmul.mubr.f32.gmra.mxu0 %v2987
          %v4762 = vpop.f32.mrf.mxu0
          %v4763 = vadd.f32 0.0, %v4762
          %v4764 = vpop.f32.mrf.mxu0
          %4765 = vdwg.mxu0
          %v4766 = vadd.f32 %v4689, %v4758
          %v4767 = vadd.f32 %v4690, %v4763
          %4768 = vmatprep.subr.mxu0 0.0
          %4769 = vmatpush1.msra.mxu0 0.0
          %4770 = vmatprep.subr.mxu0 0.0
          %4771 = vmatpush1.msra.mxu0 0.0
          %4772 = vmatprep.subr.mxu0 0.0
          %4773 = vmatpush1.msra.mxu0 0.0
          %4774 = vmatprep.subr.mxu0 0.0
          %4775 = vmatpush1.msra.mxu0 0.0
          %4776 = vmatprep.subr.mxu0 0.0
          %4777 = vmatpush1.msra.mxu0 0.0
          %4778 = vmatprep.subr.mxu0 0.0
          %4779 = vmatpush1.msra.mxu0 0.0
          %4780 = vmatprep.subr.mxu0 0.0
          %4781 = vmatpush1.msra.mxu0 0.0
          %4782 = vmatprep.subr.mxu0 0.0
          %4783 = vmatpush1.msra.mxu0 0.0
          %4784 = vmatprep.subr.mxu0 0.0
          %4785 = vmatpush1.msra.mxu0 0.0
          %4786 = vmatprep.subr.mxu0 0.0
          %4787 = vmatpush1.msra.mxu0 0.0
          %4788 = vmatprep.subr.mxu0 0.0
          %4789 = vmatpush1.msra.mxu0 0.0
          %4790 = vmatprep.subr.mxu0 0.0
          %4791 = vmatpush1.msra.mxu0 0.0
          %4792 = vmatprep.subr.mxu0 0.0
          %4793 = vmatpush1.msra.mxu0 0.0
          %4794 = vmatprep.subr.mxu0 0.0
          %4795 = vmatpush1.msra.mxu0 0.0
          %4796 = vmatprep.subr.mxu0 0.0
          %4797 = vmatpush1.msra.mxu0 0.0
          %4798 = vmatprep.subr.mxu0 0.0
          %4799 = vmatpush1.msra.mxu0 %v2630
          %4800 = vmatprep.subr.mxu0 0.0
          %4801 = vmatpush2.msra.mxu0 0.0
          %4802 = vmatprep.subr.mxu0 0.0
          %4803 = vmatpush2.msra.mxu0 0.0
          %4804 = vmatprep.subr.mxu0 0.0
          %4805 = vmatpush2.msra.mxu0 0.0
          %4806 = vmatprep.subr.mxu0 0.0
          %4807 = vmatpush2.msra.mxu0 0.0
          %4808 = vmatprep.subr.mxu0 0.0
          %4809 = vmatpush2.msra.mxu0 0.0
          %4810 = vmatprep.subr.mxu0 0.0
          %4811 = vmatpush2.msra.mxu0 0.0
          %4812 = vmatprep.subr.mxu0 0.0
          %4813 = vmatpush2.msra.mxu0 0.0
          %4814 = vmatprep.subr.mxu0 0.0
          %4815 = vmatpush2.msra.mxu0 0.0
          %4816 = vmatprep.subr.mxu0 0.0
          %4817 = vmatpush2.msra.mxu0 0.0
          %4818 = vmatprep.subr.mxu0 0.0
          %4819 = vmatpush2.msra.mxu0 0.0
          %4820 = vmatprep.subr.mxu0 0.0
          %4821 = vmatpush2.msra.mxu0 0.0
          %4822 = vmatprep.subr.mxu0 0.0
          %4823 = vmatpush2.msra.mxu0 0.0
          %4824 = vmatprep.subr.mxu0 0.0
          %4825 = vmatpush2.msra.mxu0 0.0
          %4826 = vmatprep.subr.mxu0 0.0
          %4827 = vmatpush2.msra.mxu0 0.0
          %4828 = vmatprep.subr.mxu0 0.0
          %4829 = vmatpush2.msra.mxu0 0.0
          %4830 = vmatprep.subr.mxu0 0.0
          %4831 = vmatpush2.msra.mxu0 0.0
          %4832 = vmatprep.mubr.f32.mxu0 0.0
          %4833 = vmatmul.mubr.f32.gmra.mxu0 %v3074
          %v4834 = vpop.f32.mrf.mxu0
          %v4835 = vadd.f32 0.0, %v4834
          %v4836 = vpop.f32.mrf.mxu0
          %4837 = vmatprep.mubr.f32.mxu0 0.0
          %4838 = vmatmul.mubr.f32.gmra.mxu0 %v3076
          %v4839 = vpop.f32.mrf.mxu0
          %v4840 = vadd.f32 0.0, %v4839
          %v4841 = vpop.f32.mrf.mxu0
          %4842 = vdwg.mxu0
          %v4843 = vadd.f32 %v4766, %v4835
          %v4844 = vadd.f32 %v4767, %v4840
          %4845 = vmatprep.subr.mxu0 0.0
          %4846 = vmatpush1.msra.mxu0 0.0
          %4847 = vmatprep.subr.mxu0 0.0
          %4848 = vmatpush1.msra.mxu0 0.0
          %4849 = vmatprep.subr.mxu0 0.0
          %4850 = vmatpush1.msra.mxu0 0.0
          %4851 = vmatprep.subr.mxu0 0.0
          %4852 = vmatpush1.msra.mxu0 0.0
          %4853 = vmatprep.subr.mxu0 0.0
          %4854 = vmatpush1.msra.mxu0 0.0
          %4855 = vmatprep.subr.mxu0 0.0
          %4856 = vmatpush1.msra.mxu0 0.0
          %4857 = vmatprep.subr.mxu0 0.0
          %4858 = vmatpush1.msra.mxu0 0.0
          %4859 = vmatprep.subr.mxu0 0.0
          %4860 = vmatpush1.msra.mxu0 0.0
          %4861 = vmatprep.subr.mxu0 0.0
          %4862 = vmatpush1.msra.mxu0 0.0
          %4863 = vmatprep.subr.mxu0 0.0
          %4864 = vmatpush1.msra.mxu0 0.0
          %4865 = vmatprep.subr.mxu0 0.0
          %4866 = vmatpush1.msra.mxu0 0.0
          %4867 = vmatprep.subr.mxu0 0.0
          %4868 = vmatpush1.msra.mxu0 0.0
          %4869 = vmatprep.subr.mxu0 0.0
          %4870 = vmatpush1.msra.mxu0 0.0
          %4871 = vmatprep.subr.mxu0 0.0
          %4872 = vmatpush1.msra.mxu0 0.0
          %4873 = vmatprep.subr.mxu0 0.0
          %4874 = vmatpush1.msra.mxu0 0.0
          %4875 = vmatprep.subr.mxu0 0.0
          %4876 = vmatpush1.msra.mxu0 %v2719
          %4877 = vmatprep.subr.mxu0 0.0
          %4878 = vmatpush2.msra.mxu0 0.0
          %4879 = vmatprep.subr.mxu0 0.0
          %4880 = vmatpush2.msra.mxu0 0.0
          %4881 = vmatprep.subr.mxu0 0.0
          %4882 = vmatpush2.msra.mxu0 0.0
          %4883 = vmatprep.subr.mxu0 0.0
          %4884 = vmatpush2.msra.mxu0 0.0
          %4885 = vmatprep.subr.mxu0 0.0
          %4886 = vmatpush2.msra.mxu0 0.0
          %4887 = vmatprep.subr.mxu0 0.0
          %4888 = vmatpush2.msra.mxu0 0.0
          %4889 = vmatprep.subr.mxu0 0.0
          %4890 = vmatpush2.msra.mxu0 0.0
          %4891 = vmatprep.subr.mxu0 0.0
          %4892 = vmatpush2.msra.mxu0 0.0
          %4893 = vmatprep.subr.mxu0 0.0
          %4894 = vmatpush2.msra.mxu0 0.0
          %4895 = vmatprep.subr.mxu0 0.0
          %4896 = vmatpush2.msra.mxu0 0.0
          %4897 = vmatprep.subr.mxu0 0.0
          %4898 = vmatpush2.msra.mxu0 0.0
          %4899 = vmatprep.subr.mxu0 0.0
          %4900 = vmatpush2.msra.mxu0 0.0
          %4901 = vmatprep.subr.mxu0 0.0
          %4902 = vmatpush2.msra.mxu0 0.0
          %4903 = vmatprep.subr.mxu0 0.0
          %4904 = vmatpush2.msra.mxu0 0.0
          %4905 = vmatprep.subr.mxu0 0.0
          %4906 = vmatpush2.msra.mxu0 0.0
          %4907 = vmatprep.subr.mxu0 0.0
          %4908 = vmatpush2.msra.mxu0 0.0
          %4909 = vmatprep.mubr.f32.mxu0 0.0
          %4910 = vmatmul.mubr.f32.gmra.mxu0 %v3163
          %v4911 = vpop.f32.mrf.mxu0
          %v4912 = vadd.f32 0.0, %v4911
          %v4913 = vpop.f32.mrf.mxu0
          %4914 = vmatprep.mubr.f32.mxu0 0.0
          %4915 = vmatmul.mubr.f32.gmra.mxu0 %v3165
          %v4916 = vpop.f32.mrf.mxu0
          %v4917 = vadd.f32 0.0, %v4916
          %v4918 = vpop.f32.mrf.mxu0
          %4919 = vdwg.mxu0
          %v4920 = vadd.f32 %v4843, %v4912
          %v4921 = vadd.f32 %v4844, %v4917
          %4922 = vmatprep.subr.mxu0 0.0
          %4923 = vmatpush1.msra.mxu0 0.0
          %4924 = vmatprep.subr.mxu0 0.0
          %4925 = vmatpush1.msra.mxu0 0.0
          %4926 = vmatprep.subr.mxu0 0.0
          %4927 = vmatpush1.msra.mxu0 0.0
          %4928 = vmatprep.subr.mxu0 0.0
          %4929 = vmatpush1.msra.mxu0 0.0
          %4930 = vmatprep.subr.mxu0 0.0
          %4931 = vmatpush1.msra.mxu0 0.0
          %4932 = vmatprep.subr.mxu0 0.0
          %4933 = vmatpush1.msra.mxu0 0.0
          %4934 = vmatprep.subr.mxu0 0.0
          %4935 = vmatpush1.msra.mxu0 0.0
          %4936 = vmatprep.subr.mxu0 0.0
          %4937 = vmatpush1.msra.mxu0 0.0
          %4938 = vmatprep.subr.mxu0 0.0
          %4939 = vmatpush1.msra.mxu0 0.0
          %4940 = vmatprep.subr.mxu0 0.0
          %4941 = vmatpush1.msra.mxu0 0.0
          %4942 = vmatprep.subr.mxu0 0.0
          %4943 = vmatpush1.msra.mxu0 0.0
          %4944 = vmatprep.subr.mxu0 0.0
          %4945 = vmatpush1.msra.mxu0 0.0
          %4946 = vmatprep.subr.mxu0 0.0
          %4947 = vmatpush1.msra.mxu0 0.0
          %4948 = vmatprep.subr.mxu0 0.0
          %4949 = vmatpush1.msra.mxu0 0.0
          %4950 = vmatprep.subr.mxu0 0.0
          %4951 = vmatpush1.msra.mxu0 0.0
          %4952 = vmatprep.subr.mxu0 0.0
          %4953 = vmatpush1.msra.mxu0 %v2812
          %4954 = vmatprep.subr.mxu0 0.0
          %4955 = vmatpush2.msra.mxu0 0.0
          %4956 = vmatprep.subr.mxu0 0.0
          %4957 = vmatpush2.msra.mxu0 0.0
          %4958 = vmatprep.subr.mxu0 0.0
          %4959 = vmatpush2.msra.mxu0 0.0
          %4960 = vmatprep.subr.mxu0 0.0
          %4961 = vmatpush2.msra.mxu0 0.0
          %4962 = vmatprep.subr.mxu0 0.0
          %4963 = vmatpush2.msra.mxu0 0.0
          %4964 = vmatprep.subr.mxu0 0.0
          %4965 = vmatpush2.msra.mxu0 0.0
          %4966 = vmatprep.subr.mxu0 0.0
          %4967 = vmatpush2.msra.mxu0 0.0
          %4968 = vmatprep.subr.mxu0 0.0
          %4969 = vmatpush2.msra.mxu0 0.0
          %4970 = vmatprep.subr.mxu0 0.0
          %4971 = vmatpush2.msra.mxu0 0.0
          %4972 = vmatprep.subr.mxu0 0.0
          %4973 = vmatpush2.msra.mxu0 0.0
          %4974 = vmatprep.subr.mxu0 0.0
          %4975 = vmatpush2.msra.mxu0 0.0
          %4976 = vmatprep.subr.mxu0 0.0
          %4977 = vmatpush2.msra.mxu0 0.0
          %4978 = vmatprep.subr.mxu0 0.0
          %4979 = vmatpush2.msra.mxu0 0.0
          %4980 = vmatprep.subr.mxu0 0.0
          %4981 = vmatpush2.msra.mxu0 0.0
          %4982 = vmatprep.subr.mxu0 0.0
          %4983 = vmatpush2.msra.mxu0 0.0
          %4984 = vmatprep.subr.mxu0 0.0
          %4985 = vmatpush2.msra.mxu0 0.0
          %4986 = vmatprep.mubr.f32.mxu0 0.0
          %4987 = vmatmul.mubr.f32.gmra.mxu0 %v3255
          %v4988 = vpop.f32.mrf.mxu0
          %v4989 = vadd.f32 0.0, %v4988
          %v4990 = vpop.f32.mrf.mxu0
          %4991 = vmatprep.mubr.f32.mxu0 0.0
          %4992 = vmatmul.mubr.f32.gmra.mxu0 %v3258
          %v4993 = vpop.f32.mrf.mxu0
          %v4994 = vadd.f32 0.0, %v4993
          %v4995 = vpop.f32.mrf.mxu0
          %4996 = vdwg.mxu0
          %v4997 = vadd.f32 %v4920, %v4989
          %v4998 = vadd.f32 %v4921, %v4994
          %4999 = vmatprep.subr.mxu0 0.0
          %5000 = vmatpush1.msra.mxu0 0.0
          %5001 = vmatprep.subr.mxu0 0.0
          %5002 = vmatpush1.msra.mxu0 0.0
          %5003 = vmatprep.subr.mxu0 0.0
          %5004 = vmatpush1.msra.mxu0 0.0
          %5005 = vmatprep.subr.mxu0 0.0
          %5006 = vmatpush1.msra.mxu0 0.0
          %5007 = vmatprep.subr.mxu0 0.0
          %5008 = vmatpush1.msra.mxu0 0.0
          %5009 = vmatprep.subr.mxu0 0.0
          %5010 = vmatpush1.msra.mxu0 0.0
          %5011 = vmatprep.subr.mxu0 0.0
          %5012 = vmatpush1.msra.mxu0 0.0
          %5013 = vmatprep.subr.mxu0 0.0
          %5014 = vmatpush1.msra.mxu0 0.0
          %5015 = vmatprep.subr.mxu0 0.0
          %5016 = vmatpush1.msra.mxu0 0.0
          %5017 = vmatprep.subr.mxu0 0.0
          %5018 = vmatpush1.msra.mxu0 0.0
          %5019 = vmatprep.subr.mxu0 0.0
          %5020 = vmatpush1.msra.mxu0 0.0
          %5021 = vmatprep.subr.mxu0 0.0
          %5022 = vmatpush1.msra.mxu0 0.0
          %5023 = vmatprep.subr.mxu0 0.0
          %5024 = vmatpush1.msra.mxu0 0.0
          %5025 = vmatprep.subr.mxu0 0.0
          %5026 = vmatpush1.msra.mxu0 0.0
          %5027 = vmatprep.subr.mxu0 0.0
          %5028 = vmatpush1.msra.mxu0 0.0
          %5029 = vmatprep.subr.mxu0 0.0
          %5030 = vmatpush1.msra.mxu0 %v2901
          %5031 = vmatprep.subr.mxu0 0.0
          %5032 = vmatpush2.msra.mxu0 0.0
          %5033 = vmatprep.subr.mxu0 0.0
          %5034 = vmatpush2.msra.mxu0 0.0
          %5035 = vmatprep.subr.mxu0 0.0
          %5036 = vmatpush2.msra.mxu0 0.0
          %5037 = vmatprep.subr.mxu0 0.0
          %5038 = vmatpush2.msra.mxu0 0.0
          %5039 = vmatprep.subr.mxu0 0.0
          %5040 = vmatpush2.msra.mxu0 0.0
          %5041 = vmatprep.subr.mxu0 0.0
          %5042 = vmatpush2.msra.mxu0 0.0
          %5043 = vmatprep.subr.mxu0 0.0
          %5044 = vmatpush2.msra.mxu0 0.0
          %5045 = vmatprep.subr.mxu0 0.0
          %5046 = vmatpush2.msra.mxu0 0.0
          %5047 = vmatprep.subr.mxu0 0.0
          %5048 = vmatpush2.msra.mxu0 0.0
          %5049 = vmatprep.subr.mxu0 0.0
          %5050 = vmatpush2.msra.mxu0 0.0
          %5051 = vmatprep.subr.mxu0 0.0
          %5052 = vmatpush2.msra.mxu0 0.0
          %5053 = vmatprep.subr.mxu0 0.0
          %5054 = vmatpush2.msra.mxu0 0.0
          %5055 = vmatprep.subr.mxu0 0.0
          %5056 = vmatpush2.msra.mxu0 0.0
          %5057 = vmatprep.subr.mxu0 0.0
          %5058 = vmatpush2.msra.mxu0 0.0
          %5059 = vmatprep.subr.mxu0 0.0
          %5060 = vmatpush2.msra.mxu0 0.0
          %5061 = vmatprep.subr.mxu0 0.0
          %5062 = vmatpush2.msra.mxu0 0.0
          %5063 = vmatprep.mubr.f32.mxu0 0.0
          %5064 = vmatmul.mubr.f32.gmra.mxu0 %v3345
          %v5065 = vpop.f32.mrf.mxu0
          %v5066 = vadd.f32 0.0, %v5065
          %v5067 = vpop.f32.mrf.mxu0
          %5068 = vmatprep.mubr.f32.mxu0 0.0
          %5069 = vmatmul.mubr.f32.gmra.mxu0 %v3347
          %v5070 = vpop.f32.mrf.mxu0
          %v5071 = vadd.f32 0.0, %v5070
          %v5072 = vpop.f32.mrf.mxu0
          %5073 = vdwg.mxu0
          %v5074 = vadd.f32 %v4997, %v5066
          %v5075 = vadd.f32 %v4998, %v5071
          %5076 = vmatprep.subr.mxu0 0.0
          %5077 = vmatpush1.msra.mxu0 0.0
          %5078 = vmatprep.subr.mxu0 0.0
          %5079 = vmatpush1.msra.mxu0 0.0
          %5080 = vmatprep.subr.mxu0 0.0
          %5081 = vmatpush1.msra.mxu0 0.0
          %5082 = vmatprep.subr.mxu0 0.0
          %5083 = vmatpush1.msra.mxu0 0.0
          %5084 = vmatprep.subr.mxu0 0.0
          %5085 = vmatpush1.msra.mxu0 0.0
          %5086 = vmatprep.subr.mxu0 0.0
          %5087 = vmatpush1.msra.mxu0 0.0
          %5088 = vmatprep.subr.mxu0 0.0
          %5089 = vmatpush1.msra.mxu0 0.0
          %5090 = vmatprep.subr.mxu0 0.0
          %5091 = vmatpush1.msra.mxu0 0.0
          %5092 = vmatprep.subr.mxu0 0.0
          %5093 = vmatpush1.msra.mxu0 0.0
          %5094 = vmatprep.subr.mxu0 0.0
          %5095 = vmatpush1.msra.mxu0 0.0
          %5096 = vmatprep.subr.mxu0 0.0
          %5097 = vmatpush1.msra.mxu0 0.0
          %5098 = vmatprep.subr.mxu0 0.0
          %5099 = vmatpush1.msra.mxu0 0.0
          %5100 = vmatprep.subr.mxu0 0.0
          %5101 = vmatpush1.msra.mxu0 0.0
          %5102 = vmatprep.subr.mxu0 0.0
          %5103 = vmatpush1.msra.mxu0 0.0
          %5104 = vmatprep.subr.mxu0 0.0
          %5105 = vmatpush1.msra.mxu0 0.0
          %5106 = vmatprep.subr.mxu0 0.0
          %5107 = vmatpush1.msra.mxu0 %v2990
          %5108 = vmatprep.subr.mxu0 0.0
          %5109 = vmatpush2.msra.mxu0 0.0
          %5110 = vmatprep.subr.mxu0 0.0
          %5111 = vmatpush2.msra.mxu0 0.0
          %5112 = vmatprep.subr.mxu0 0.0
          %5113 = vmatpush2.msra.mxu0 0.0
          %5114 = vmatprep.subr.mxu0 0.0
          %5115 = vmatpush2.msra.mxu0 0.0
          %5116 = vmatprep.subr.mxu0 0.0
          %5117 = vmatpush2.msra.mxu0 0.0
          %5118 = vmatprep.subr.mxu0 0.0
          %5119 = vmatpush2.msra.mxu0 0.0
          %5120 = vmatprep.subr.mxu0 0.0
          %5121 = vmatpush2.msra.mxu0 0.0
          %5122 = vmatprep.subr.mxu0 0.0
          %5123 = vmatpush2.msra.mxu0 0.0
          %5124 = vmatprep.subr.mxu0 0.0
          %5125 = vmatpush2.msra.mxu0 0.0
          %5126 = vmatprep.subr.mxu0 0.0
          %5127 = vmatpush2.msra.mxu0 0.0
          %5128 = vmatprep.subr.mxu0 0.0
          %5129 = vmatpush2.msra.mxu0 0.0
          %5130 = vmatprep.subr.mxu0 0.0
          %5131 = vmatpush2.msra.mxu0 0.0
          %5132 = vmatprep.subr.mxu0 0.0
          %5133 = vmatpush2.msra.mxu0 0.0
          %5134 = vmatprep.subr.mxu0 0.0
          %5135 = vmatpush2.msra.mxu0 0.0
          %5136 = vmatprep.subr.mxu0 0.0
          %5137 = vmatpush2.msra.mxu0 0.0
          %5138 = vmatprep.subr.mxu0 0.0
          %5139 = vmatpush2.msra.mxu0 0.0
          %5140 = vmatprep.mubr.f32.mxu0 0.0
          %5141 = vmatmul.mubr.f32.gmra.mxu0 %v3434
          %v5142 = vpop.f32.mrf.mxu0
          %v5143 = vadd.f32 0.0, %v5142
          %v5144 = vpop.f32.mrf.mxu0
          %5145 = vmatprep.mubr.f32.mxu0 0.0
          %5146 = vmatmul.mubr.f32.gmra.mxu0 %v3436
          %v5147 = vpop.f32.mrf.mxu0
          %v5148 = vadd.f32 0.0, %v5147
          %v5149 = vpop.f32.mrf.mxu0
          %5150 = vdwg.mxu0
          %v5151 = vadd.f32 %v5074, %v5143
          %v5152 = vadd.f32 %v5075, %v5148
          %5153 = vmatprep.subr.mxu0 0.0
          %5154 = vmatpush1.msra.mxu0 0.0
          %5155 = vmatprep.subr.mxu0 0.0
          %5156 = vmatpush1.msra.mxu0 0.0
          %5157 = vmatprep.subr.mxu0 0.0
          %5158 = vmatpush1.msra.mxu0 0.0
          %5159 = vmatprep.subr.mxu0 0.0
          %5160 = vmatpush1.msra.mxu0 0.0
          %5161 = vmatprep.subr.mxu0 0.0
          %5162 = vmatpush1.msra.mxu0 0.0
          %5163 = vmatprep.subr.mxu0 0.0
          %5164 = vmatpush1.msra.mxu0 0.0
          %5165 = vmatprep.subr.mxu0 0.0
          %5166 = vmatpush1.msra.mxu0 0.0
          %5167 = vmatprep.subr.mxu0 0.0
          %5168 = vmatpush1.msra.mxu0 0.0
          %5169 = vmatprep.subr.mxu0 0.0
          %5170 = vmatpush1.msra.mxu0 0.0
          %5171 = vmatprep.subr.mxu0 0.0
          %5172 = vmatpush1.msra.mxu0 0.0
          %5173 = vmatprep.subr.mxu0 0.0
          %5174 = vmatpush1.msra.mxu0 0.0
          %5175 = vmatprep.subr.mxu0 0.0
          %5176 = vmatpush1.msra.mxu0 0.0
          %5177 = vmatprep.subr.mxu0 0.0
          %5178 = vmatpush1.msra.mxu0 0.0
          %5179 = vmatprep.subr.mxu0 0.0
          %5180 = vmatpush1.msra.mxu0 0.0
          %5181 = vmatprep.subr.mxu0 0.0
          %5182 = vmatpush1.msra.mxu0 0.0
          %5183 = vmatprep.subr.mxu0 0.0
          %5184 = vmatpush1.msra.mxu0 %v3079
          %5185 = vmatprep.subr.mxu0 0.0
          %5186 = vmatpush2.msra.mxu0 0.0
          %5187 = vmatprep.subr.mxu0 0.0
          %5188 = vmatpush2.msra.mxu0 0.0
          %5189 = vmatprep.subr.mxu0 0.0
          %5190 = vmatpush2.msra.mxu0 0.0
          %5191 = vmatprep.subr.mxu0 0.0
          %5192 = vmatpush2.msra.mxu0 0.0
          %5193 = vmatprep.subr.mxu0 0.0
          %5194 = vmatpush2.msra.mxu0 0.0
          %5195 = vmatprep.subr.mxu0 0.0
          %5196 = vmatpush2.msra.mxu0 0.0
          %5197 = vmatprep.subr.mxu0 0.0
          %5198 = vmatpush2.msra.mxu0 0.0
          %5199 = vmatprep.subr.mxu0 0.0
          %5200 = vmatpush2.msra.mxu0 0.0
          %5201 = vmatprep.subr.mxu0 0.0
          %5202 = vmatpush2.msra.mxu0 0.0
          %5203 = vmatprep.subr.mxu0 0.0
          %5204 = vmatpush2.msra.mxu0 0.0
          %5205 = vmatprep.subr.mxu0 0.0
          %5206 = vmatpush2.msra.mxu0 0.0
          %5207 = vmatprep.subr.mxu0 0.0
          %5208 = vmatpush2.msra.mxu0 0.0
          %5209 = vmatprep.subr.mxu0 0.0
          %5210 = vmatpush2.msra.mxu0 0.0
          %5211 = vmatprep.subr.mxu0 0.0
          %5212 = vmatpush2.msra.mxu0 0.0
          %5213 = vmatprep.subr.mxu0 0.0
          %5214 = vmatpush2.msra.mxu0 0.0
          %5215 = vmatprep.subr.mxu0 0.0
          %5216 = vmatpush2.msra.mxu0 0.0
          %5217 = vmatprep.mubr.f32.mxu0 0.0
          %5218 = vmatmul.mubr.f32.gmra.mxu0 %v3523
          %v5219 = vpop.f32.mrf.mxu0
          %v5220 = vadd.f32 0.0, %v5219
          %v5221 = vpop.f32.mrf.mxu0
          %5222 = vmatprep.mubr.f32.mxu0 0.0
          %5223 = vmatmul.mubr.f32.gmra.mxu0 %v3525
          %v5224 = vpop.f32.mrf.mxu0
          %v5225 = vadd.f32 0.0, %v5224
          %v5226 = vpop.f32.mrf.mxu0
          %5227 = vdwg.mxu0
          %v5228 = vadd.f32 %v5151, %v5220
          %v5229 = vadd.f32 %v5152, %v5225
          %5230 = vmatprep.subr.mxu0 0.0
          %5231 = vmatpush1.msra.mxu0 0.0
          %5232 = vmatprep.subr.mxu0 0.0
          %5233 = vmatpush1.msra.mxu0 0.0
          %5234 = vmatprep.subr.mxu0 0.0
          %5235 = vmatpush1.msra.mxu0 0.0
          %5236 = vmatprep.subr.mxu0 0.0
          %5237 = vmatpush1.msra.mxu0 0.0
          %5238 = vmatprep.subr.mxu0 0.0
          %5239 = vmatpush1.msra.mxu0 0.0
          %5240 = vmatprep.subr.mxu0 0.0
          %5241 = vmatpush1.msra.mxu0 0.0
          %5242 = vmatprep.subr.mxu0 0.0
          %5243 = vmatpush1.msra.mxu0 0.0
          %5244 = vmatprep.subr.mxu0 0.0
          %5245 = vmatpush1.msra.mxu0 0.0
          %5246 = vmatprep.subr.mxu0 0.0
          %5247 = vmatpush1.msra.mxu0 0.0
          %5248 = vmatprep.subr.mxu0 0.0
          %5249 = vmatpush1.msra.mxu0 0.0
          %5250 = vmatprep.subr.mxu0 0.0
          %5251 = vmatpush1.msra.mxu0 0.0
          %5252 = vmatprep.subr.mxu0 0.0
          %5253 = vmatpush1.msra.mxu0 0.0
          %5254 = vmatprep.subr.mxu0 0.0
          %5255 = vmatpush1.msra.mxu0 0.0
          %5256 = vmatprep.subr.mxu0 0.0
          %5257 = vmatpush1.msra.mxu0 0.0
          %5258 = vmatprep.subr.mxu0 0.0
          %5259 = vmatpush1.msra.mxu0 0.0
          %5260 = vmatprep.subr.mxu0 0.0
          %5261 = vmatpush1.msra.mxu0 %v3168
          %5262 = vmatprep.subr.mxu0 0.0
          %5263 = vmatpush2.msra.mxu0 0.0
          %5264 = vmatprep.subr.mxu0 0.0
          %5265 = vmatpush2.msra.mxu0 0.0
          %5266 = vmatprep.subr.mxu0 0.0
          %5267 = vmatpush2.msra.mxu0 0.0
          %5268 = vmatprep.subr.mxu0 0.0
          %5269 = vmatpush2.msra.mxu0 0.0
          %5270 = vmatprep.subr.mxu0 0.0
          %5271 = vmatpush2.msra.mxu0 0.0
          %5272 = vmatprep.subr.mxu0 0.0
          %5273 = vmatpush2.msra.mxu0 0.0
          %5274 = vmatprep.subr.mxu0 0.0
          %5275 = vmatpush2.msra.mxu0 0.0
          %5276 = vmatprep.subr.mxu0 0.0
          %5277 = vmatpush2.msra.mxu0 0.0
          %5278 = vmatprep.subr.mxu0 0.0
          %5279 = vmatpush2.msra.mxu0 0.0
          %5280 = vmatprep.subr.mxu0 0.0
          %5281 = vmatpush2.msra.mxu0 0.0
          %5282 = vmatprep.subr.mxu0 0.0
          %5283 = vmatpush2.msra.mxu0 0.0
          %5284 = vmatprep.subr.mxu0 0.0
          %5285 = vmatpush2.msra.mxu0 0.0
          %5286 = vmatprep.subr.mxu0 0.0
          %5287 = vmatpush2.msra.mxu0 0.0
          %5288 = vmatprep.subr.mxu0 0.0
          %5289 = vmatpush2.msra.mxu0 0.0
          %5290 = vmatprep.subr.mxu0 0.0
          %5291 = vmatpush2.msra.mxu0 0.0
          %5292 = vmatprep.subr.mxu0 0.0
          %5293 = vmatpush2.msra.mxu0 0.0
          %5294 = vmatprep.mubr.f32.mxu0 0.0
          %5295 = vmatmul.mubr.f32.gmra.mxu0 %v3612
          %v5296 = vpop.f32.mrf.mxu0
          %v5297 = vadd.f32 0.0, %v5296
          %v5298 = vpop.f32.mrf.mxu0
          %5299 = vmatprep.mubr.f32.mxu0 0.0
          %5300 = vmatmul.mubr.f32.gmra.mxu0 %v3614
          %v5301 = vpop.f32.mrf.mxu0
          %v5302 = vadd.f32 0.0, %v5301
          %v5303 = vpop.f32.mrf.mxu0
          %5304 = vdwg.mxu0
          %v5305 = vadd.f32 %v5228, %v5297
          %v5306 = vadd.f32 %v5229, %v5302
          %5307 = vmatprep.subr.mxu0 0.0
          %5308 = vmatpush1.msra.mxu0 0.0
          %5309 = vmatprep.subr.mxu0 0.0
          %5310 = vmatpush1.msra.mxu0 0.0
          %5311 = vmatprep.subr.mxu0 0.0
          %5312 = vmatpush1.msra.mxu0 0.0
          %5313 = vmatprep.subr.mxu0 0.0
          %5314 = vmatpush1.msra.mxu0 0.0
          %5315 = vmatprep.subr.mxu0 0.0
          %5316 = vmatpush1.msra.mxu0 0.0
          %5317 = vmatprep.subr.mxu0 0.0
          %5318 = vmatpush1.msra.mxu0 0.0
          %5319 = vmatprep.subr.mxu0 0.0
          %5320 = vmatpush1.msra.mxu0 0.0
          %5321 = vmatprep.subr.mxu0 0.0
          %5322 = vmatpush1.msra.mxu0 0.0
          %5323 = vmatprep.subr.mxu0 0.0
          %5324 = vmatpush1.msra.mxu0 0.0
          %5325 = vmatprep.subr.mxu0 0.0
          %5326 = vmatpush1.msra.mxu0 0.0
          %5327 = vmatprep.subr.mxu0 0.0
          %5328 = vmatpush1.msra.mxu0 0.0
          %5329 = vmatprep.subr.mxu0 0.0
          %5330 = vmatpush1.msra.mxu0 0.0
          %5331 = vmatprep.subr.mxu0 0.0
          %5332 = vmatpush1.msra.mxu0 0.0
          %5333 = vmatprep.subr.mxu0 0.0
          %5334 = vmatpush1.msra.mxu0 0.0
          %5335 = vmatprep.subr.mxu0 0.0
          %5336 = vmatpush1.msra.mxu0 0.0
          %5337 = vmatprep.subr.mxu0 0.0
          %5338 = vmatpush1.msra.mxu0 %v3261
          %5339 = vmatprep.subr.mxu0 0.0
          %5340 = vmatpush2.msra.mxu0 0.0
          %5341 = vmatprep.subr.mxu0 0.0
          %5342 = vmatpush2.msra.mxu0 0.0
          %5343 = vmatprep.subr.mxu0 0.0
          %5344 = vmatpush2.msra.mxu0 0.0
          %5345 = vmatprep.subr.mxu0 0.0
          %5346 = vmatpush2.msra.mxu0 0.0
          %5347 = vmatprep.subr.mxu0 0.0
          %5348 = vmatpush2.msra.mxu0 0.0
          %5349 = vmatprep.subr.mxu0 0.0
          %5350 = vmatpush2.msra.mxu0 0.0
          %5351 = vmatprep.subr.mxu0 0.0
          %5352 = vmatpush2.msra.mxu0 0.0
          %5353 = vmatprep.subr.mxu0 0.0
          %5354 = vmatpush2.msra.mxu0 0.0
          %5355 = vmatprep.subr.mxu0 0.0
          %5356 = vmatpush2.msra.mxu0 0.0
          %5357 = vmatprep.subr.mxu0 0.0
          %5358 = vmatpush2.msra.mxu0 0.0
          %5359 = vmatprep.subr.mxu0 0.0
          %5360 = vmatpush2.msra.mxu0 0.0
          %5361 = vmatprep.subr.mxu0 0.0
          %5362 = vmatpush2.msra.mxu0 0.0
          %5363 = vmatprep.subr.mxu0 0.0
          %5364 = vmatpush2.msra.mxu0 0.0
          %5365 = vmatprep.subr.mxu0 0.0
          %5366 = vmatpush2.msra.mxu0 0.0
          %5367 = vmatprep.subr.mxu0 0.0
          %5368 = vmatpush2.msra.mxu0 0.0
          %5369 = vmatprep.subr.mxu0 0.0
          %5370 = vmatpush2.msra.mxu0 0.0
          %5371 = vmatprep.mubr.f32.mxu0 0.0
          %5372 = vmatmul.mubr.f32.gmra.mxu0 %v3704
          %v5373 = vpop.f32.mrf.mxu0
          %v5374 = vadd.f32 0.0, %v5373
          %v5375 = vpop.f32.mrf.mxu0
          %5376 = vmatprep.mubr.f32.mxu0 0.0
          %5377 = vmatmul.mubr.f32.gmra.mxu0 %v3707
          %v5378 = vpop.f32.mrf.mxu0
          %v5379 = vadd.f32 0.0, %v5378
          %v5380 = vpop.f32.mrf.mxu0
          %5381 = vdwg.mxu0
          %v5382 = vadd.f32 %v5305, %v5374
          %v5383 = vadd.f32 %v5306, %v5379
          %5384 = vmatprep.subr.mxu0 0.0
          %5385 = vmatpush1.msra.mxu0 0.0
          %5386 = vmatprep.subr.mxu0 0.0
          %5387 = vmatpush1.msra.mxu0 0.0
          %5388 = vmatprep.subr.mxu0 0.0
          %5389 = vmatpush1.msra.mxu0 0.0
          %5390 = vmatprep.subr.mxu0 0.0
          %5391 = vmatpush1.msra.mxu0 0.0
          %5392 = vmatprep.subr.mxu0 0.0
          %5393 = vmatpush1.msra.mxu0 0.0
          %5394 = vmatprep.subr.mxu0 0.0
          %5395 = vmatpush1.msra.mxu0 0.0
          %5396 = vmatprep.subr.mxu0 0.0
          %5397 = vmatpush1.msra.mxu0 0.0
          %5398 = vmatprep.subr.mxu0 0.0
          %5399 = vmatpush1.msra.mxu0 0.0
          %5400 = vmatprep.subr.mxu0 0.0
          %5401 = vmatpush1.msra.mxu0 0.0
          %5402 = vmatprep.subr.mxu0 0.0
          %5403 = vmatpush1.msra.mxu0 0.0
          %5404 = vmatprep.subr.mxu0 0.0
          %5405 = vmatpush1.msra.mxu0 0.0
          %5406 = vmatprep.subr.mxu0 0.0
          %5407 = vmatpush1.msra.mxu0 0.0
          %5408 = vmatprep.subr.mxu0 0.0
          %5409 = vmatpush1.msra.mxu0 0.0
          %5410 = vmatprep.subr.mxu0 0.0
          %5411 = vmatpush1.msra.mxu0 0.0
          %5412 = vmatprep.subr.mxu0 0.0
          %5413 = vmatpush1.msra.mxu0 0.0
          %5414 = vmatprep.subr.mxu0 0.0
          %5415 = vmatpush1.msra.mxu0 %v3350
          %5416 = vmatprep.subr.mxu0 0.0
          %5417 = vmatpush2.msra.mxu0 0.0
          %5418 = vmatprep.subr.mxu0 0.0
          %5419 = vmatpush2.msra.mxu0 0.0
          %5420 = vmatprep.subr.mxu0 0.0
          %5421 = vmatpush2.msra.mxu0 0.0
          %5422 = vmatprep.subr.mxu0 0.0
          %5423 = vmatpush2.msra.mxu0 0.0
          %5424 = vmatprep.subr.mxu0 0.0
          %5425 = vmatpush2.msra.mxu0 0.0
          %5426 = vmatprep.subr.mxu0 0.0
          %5427 = vmatpush2.msra.mxu0 0.0
          %5428 = vmatprep.subr.mxu0 0.0
          %5429 = vmatpush2.msra.mxu0 0.0
          %5430 = vmatprep.subr.mxu0 0.0
          %5431 = vmatpush2.msra.mxu0 0.0
          %5432 = vmatprep.subr.mxu0 0.0
          %5433 = vmatpush2.msra.mxu0 0.0
          %5434 = vmatprep.subr.mxu0 0.0
          %5435 = vmatpush2.msra.mxu0 0.0
          %5436 = vmatprep.subr.mxu0 0.0
          %5437 = vmatpush2.msra.mxu0 0.0
          %5438 = vmatprep.subr.mxu0 0.0
          %5439 = vmatpush2.msra.mxu0 0.0
          %5440 = vmatprep.subr.mxu0 0.0
          %5441 = vmatpush2.msra.mxu0 0.0
          %5442 = vmatprep.subr.mxu0 0.0
          %5443 = vmatpush2.msra.mxu0 0.0
          %5444 = vmatprep.subr.mxu0 0.0
          %5445 = vmatpush2.msra.mxu0 0.0
          %5446 = vmatprep.subr.mxu0 0.0
          %5447 = vmatpush2.msra.mxu0 0.0
          %5448 = vmatprep.mubr.f32.mxu0 0.0
          %5449 = vmatmul.mubr.f32.gmra.mxu0 %v3794
          %v5450 = vpop.f32.mrf.mxu0
          %v5451 = vadd.f32 0.0, %v5450
          %v5452 = vpop.f32.mrf.mxu0
          %5453 = vmatprep.mubr.f32.mxu0 0.0
          %5454 = vmatmul.mubr.f32.gmra.mxu0 %v3796
          %v5455 = vpop.f32.mrf.mxu0
          %v5456 = vadd.f32 0.0, %v5455
          %v5457 = vpop.f32.mrf.mxu0
          %5458 = vdwg.mxu0
          %v5459 = vadd.f32 %v5382, %v5451
          %v5460 = vadd.f32 %v5383, %v5456
          %5461 = vmatprep.subr.mxu0 0.0
          %5462 = vmatpush1.msra.mxu0 0.0
          %5463 = vmatprep.subr.mxu0 0.0
          %5464 = vmatpush1.msra.mxu0 0.0
          %5465 = vmatprep.subr.mxu0 0.0
          %5466 = vmatpush1.msra.mxu0 0.0
          %5467 = vmatprep.subr.mxu0 0.0
          %5468 = vmatpush1.msra.mxu0 0.0
          %5469 = vmatprep.subr.mxu0 0.0
          %5470 = vmatpush1.msra.mxu0 0.0
          %5471 = vmatprep.subr.mxu0 0.0
          %5472 = vmatpush1.msra.mxu0 0.0
          %5473 = vmatprep.subr.mxu0 0.0
          %5474 = vmatpush1.msra.mxu0 0.0
          %5475 = vmatprep.subr.mxu0 0.0
          %5476 = vmatpush1.msra.mxu0 0.0
          %5477 = vmatprep.subr.mxu0 0.0
          %5478 = vmatpush1.msra.mxu0 0.0
          %5479 = vmatprep.subr.mxu0 0.0
          %5480 = vmatpush1.msra.mxu0 0.0
          %5481 = vmatprep.subr.mxu0 0.0
          %5482 = vmatpush1.msra.mxu0 0.0
          %5483 = vmatprep.subr.mxu0 0.0
          %5484 = vmatpush1.msra.mxu0 0.0
          %5485 = vmatprep.subr.mxu0 0.0
          %5486 = vmatpush1.msra.mxu0 0.0
          %5487 = vmatprep.subr.mxu0 0.0
          %5488 = vmatpush1.msra.mxu0 0.0
          %5489 = vmatprep.subr.mxu0 0.0
          %5490 = vmatpush1.msra.mxu0 0.0
          %5491 = vmatprep.subr.mxu0 0.0
          %5492 = vmatpush1.msra.mxu0 %v3439
          %5493 = vmatprep.subr.mxu0 0.0
          %5494 = vmatpush2.msra.mxu0 0.0
          %5495 = vmatprep.subr.mxu0 0.0
          %5496 = vmatpush2.msra.mxu0 0.0
          %5497 = vmatprep.subr.mxu0 0.0
          %5498 = vmatpush2.msra.mxu0 0.0
          %5499 = vmatprep.subr.mxu0 0.0
          %5500 = vmatpush2.msra.mxu0 0.0
          %5501 = vmatprep.subr.mxu0 0.0
          %5502 = vmatpush2.msra.mxu0 0.0
          %5503 = vmatprep.subr.mxu0 0.0
          %5504 = vmatpush2.msra.mxu0 0.0
          %5505 = vmatprep.subr.mxu0 0.0
          %5506 = vmatpush2.msra.mxu0 0.0
          %5507 = vmatprep.subr.mxu0 0.0
          %5508 = vmatpush2.msra.mxu0 0.0
          %5509 = vmatprep.subr.mxu0 0.0
          %5510 = vmatpush2.msra.mxu0 0.0
          %5511 = vmatprep.subr.mxu0 0.0
          %5512 = vmatpush2.msra.mxu0 0.0
          %5513 = vmatprep.subr.mxu0 0.0
          %5514 = vmatpush2.msra.mxu0 0.0
          %5515 = vmatprep.subr.mxu0 0.0
          %5516 = vmatpush2.msra.mxu0 0.0
          %5517 = vmatprep.subr.mxu0 0.0
          %5518 = vmatpush2.msra.mxu0 0.0
          %5519 = vmatprep.subr.mxu0 0.0
          %5520 = vmatpush2.msra.mxu0 0.0
          %5521 = vmatprep.subr.mxu0 0.0
          %5522 = vmatpush2.msra.mxu0 0.0
          %5523 = vmatprep.subr.mxu0 0.0
          %5524 = vmatpush2.msra.mxu0 0.0
          %5525 = vmatprep.mubr.f32.mxu0 0.0
          %5526 = vmatmul.mubr.f32.gmra.mxu0 %v3883
          %v5527 = vpop.f32.mrf.mxu0
          %v5528 = vadd.f32 0.0, %v5527
          %v5529 = vpop.f32.mrf.mxu0
          %5530 = vmatprep.mubr.f32.mxu0 0.0
          %5531 = vmatmul.mubr.f32.gmra.mxu0 %v3885
          %v5532 = vpop.f32.mrf.mxu0
          %v5533 = vadd.f32 0.0, %v5532
          %v5534 = vpop.f32.mrf.mxu0
          %5535 = vdwg.mxu0
          %v5536 = vadd.f32 %v5459, %v5528
          %v5537 = vadd.f32 %v5460, %v5533
          %5538 = vmatprep.subr.mxu0 0.0
          %5539 = vmatpush1.msra.mxu0 0.0
          %5540 = vmatprep.subr.mxu0 0.0
          %5541 = vmatpush1.msra.mxu0 0.0
          %5542 = vmatprep.subr.mxu0 0.0
          %5543 = vmatpush1.msra.mxu0 0.0
          %5544 = vmatprep.subr.mxu0 0.0
          %5545 = vmatpush1.msra.mxu0 0.0
          %5546 = vmatprep.subr.mxu0 0.0
          %5547 = vmatpush1.msra.mxu0 0.0
          %5548 = vmatprep.subr.mxu0 0.0
          %5549 = vmatpush1.msra.mxu0 0.0
          %5550 = vmatprep.subr.mxu0 0.0
          %5551 = vmatpush1.msra.mxu0 0.0
          %5552 = vmatprep.subr.mxu0 0.0
          %5553 = vmatpush1.msra.mxu0 0.0
          %5554 = vmatprep.subr.mxu0 0.0
          %5555 = vmatpush1.msra.mxu0 0.0
          %5556 = vmatprep.subr.mxu0 0.0
          %5557 = vmatpush1.msra.mxu0 0.0
          %5558 = vmatprep.subr.mxu0 0.0
          %5559 = vmatpush1.msra.mxu0 0.0
          %5560 = vmatprep.subr.mxu0 0.0
          %5561 = vmatpush1.msra.mxu0 0.0
          %5562 = vmatprep.subr.mxu0 0.0
          %5563 = vmatpush1.msra.mxu0 0.0
          %5564 = vmatprep.subr.mxu0 0.0
          %5565 = vmatpush1.msra.mxu0 0.0
          %5566 = vmatprep.subr.mxu0 0.0
          %5567 = vmatpush1.msra.mxu0 0.0
          %5568 = vmatprep.subr.mxu0 0.0
          %5569 = vmatpush1.msra.mxu0 %v3528
          %5570 = vmatprep.subr.mxu0 0.0
          %5571 = vmatpush2.msra.mxu0 0.0
          %5572 = vmatprep.subr.mxu0 0.0
          %5573 = vmatpush2.msra.mxu0 0.0
          %5574 = vmatprep.subr.mxu0 0.0
          %5575 = vmatpush2.msra.mxu0 0.0
          %5576 = vmatprep.subr.mxu0 0.0
          %5577 = vmatpush2.msra.mxu0 0.0
          %5578 = vmatprep.subr.mxu0 0.0
          %5579 = vmatpush2.msra.mxu0 0.0
          %5580 = vmatprep.subr.mxu0 0.0
          %5581 = vmatpush2.msra.mxu0 0.0
          %5582 = vmatprep.subr.mxu0 0.0
          %5583 = vmatpush2.msra.mxu0 0.0
          %5584 = vmatprep.subr.mxu0 0.0
          %5585 = vmatpush2.msra.mxu0 0.0
          %5586 = vmatprep.subr.mxu0 0.0
          %5587 = vmatpush2.msra.mxu0 0.0
          %5588 = vmatprep.subr.mxu0 0.0
          %5589 = vmatpush2.msra.mxu0 0.0
          %5590 = vmatprep.subr.mxu0 0.0
          %5591 = vmatpush2.msra.mxu0 0.0
          %5592 = vmatprep.subr.mxu0 0.0
          %5593 = vmatpush2.msra.mxu0 0.0
          %5594 = vmatprep.subr.mxu0 0.0
          %5595 = vmatpush2.msra.mxu0 0.0
          %5596 = vmatprep.subr.mxu0 0.0
          %5597 = vmatpush2.msra.mxu0 0.0
          %5598 = vmatprep.subr.mxu0 0.0
          %5599 = vmatpush2.msra.mxu0 0.0
          %5600 = vmatprep.subr.mxu0 0.0
          %5601 = vmatpush2.msra.mxu0 0.0
          %5602 = vmatprep.mubr.f32.mxu0 0.0
          %5603 = vmatmul.mubr.f32.gmra.mxu0 %v3972
          %v5604 = vpop.f32.mrf.mxu0
          %v5605 = vadd.f32 0.0, %v5604
          %v5606 = vpop.f32.mrf.mxu0
          %5607 = vmatprep.mubr.f32.mxu0 0.0
          %5608 = vmatmul.mubr.f32.gmra.mxu0 %v3974
          %v5609 = vpop.f32.mrf.mxu0
          %v5610 = vadd.f32 0.0, %v5609
          %v5611 = vpop.f32.mrf.mxu0
          %5612 = vdwg.mxu0
          %v5613 = vadd.f32 %v5536, %v5605
          %v5614 = vadd.f32 %v5537, %v5610
          %5615 = vmatprep.subr.mxu0 0.0
          %5616 = vmatpush1.msra.mxu0 0.0
          %5617 = vmatprep.subr.mxu0 0.0
          %5618 = vmatpush1.msra.mxu0 0.0
          %5619 = vmatprep.subr.mxu0 0.0
          %5620 = vmatpush1.msra.mxu0 0.0
          %5621 = vmatprep.subr.mxu0 0.0
          %5622 = vmatpush1.msra.mxu0 0.0
          %5623 = vmatprep.subr.mxu0 0.0
          %5624 = vmatpush1.msra.mxu0 0.0
          %5625 = vmatprep.subr.mxu0 0.0
          %5626 = vmatpush1.msra.mxu0 0.0
          %5627 = vmatprep.subr.mxu0 0.0
          %5628 = vmatpush1.msra.mxu0 0.0
          %5629 = vmatprep.subr.mxu0 0.0
          %5630 = vmatpush1.msra.mxu0 0.0
          %5631 = vmatprep.subr.mxu0 0.0
          %5632 = vmatpush1.msra.mxu0 0.0
          %5633 = vmatprep.subr.mxu0 0.0
          %5634 = vmatpush1.msra.mxu0 0.0
          %5635 = vmatprep.subr.mxu0 0.0
          %5636 = vmatpush1.msra.mxu0 0.0
          %5637 = vmatprep.subr.mxu0 0.0
          %5638 = vmatpush1.msra.mxu0 0.0
          %5639 = vmatprep.subr.mxu0 0.0
          %5640 = vmatpush1.msra.mxu0 0.0
          %5641 = vmatprep.subr.mxu0 0.0
          %5642 = vmatpush1.msra.mxu0 0.0
          %5643 = vmatprep.subr.mxu0 0.0
          %5644 = vmatpush1.msra.mxu0 0.0
          %5645 = vmatprep.subr.mxu0 0.0
          %5646 = vmatpush1.msra.mxu0 %v3617
          %5647 = vmatprep.subr.mxu0 0.0
          %5648 = vmatpush2.msra.mxu0 0.0
          %5649 = vmatprep.subr.mxu0 0.0
          %5650 = vmatpush2.msra.mxu0 0.0
          %5651 = vmatprep.subr.mxu0 0.0
          %5652 = vmatpush2.msra.mxu0 0.0
          %5653 = vmatprep.subr.mxu0 0.0
          %5654 = vmatpush2.msra.mxu0 0.0
          %5655 = vmatprep.subr.mxu0 0.0
          %5656 = vmatpush2.msra.mxu0 0.0
          %5657 = vmatprep.subr.mxu0 0.0
          %5658 = vmatpush2.msra.mxu0 0.0
          %5659 = vmatprep.subr.mxu0 0.0
          %5660 = vmatpush2.msra.mxu0 0.0
          %5661 = vmatprep.subr.mxu0 0.0
          %5662 = vmatpush2.msra.mxu0 0.0
          %5663 = vmatprep.subr.mxu0 0.0
          %5664 = vmatpush2.msra.mxu0 0.0
          %5665 = vmatprep.subr.mxu0 0.0
          %5666 = vmatpush2.msra.mxu0 0.0
          %5667 = vmatprep.subr.mxu0 0.0
          %5668 = vmatpush2.msra.mxu0 0.0
          %5669 = vmatprep.subr.mxu0 0.0
          %5670 = vmatpush2.msra.mxu0 0.0
          %5671 = vmatprep.subr.mxu0 0.0
          %5672 = vmatpush2.msra.mxu0 0.0
          %5673 = vmatprep.subr.mxu0 0.0
          %5674 = vmatpush2.msra.mxu0 0.0
          %5675 = vmatprep.subr.mxu0 0.0
          %5676 = vmatpush2.msra.mxu0 0.0
          %5677 = vmatprep.subr.mxu0 0.0
          %5678 = vmatpush2.msra.mxu0 0.0
          %5679 = vmatprep.mubr.f32.mxu0 0.0
          %5680 = vmatmul.mubr.f32.gmra.mxu0 %v4061
          %v5681 = vpop.f32.mrf.mxu0
          %v5682 = vadd.f32 0.0, %v5681
          %v5683 = vpop.f32.mrf.mxu0
          %5684 = vmatprep.mubr.f32.mxu0 0.0
          %5685 = vmatmul.mubr.f32.gmra.mxu0 %v4063
          %v5686 = vpop.f32.mrf.mxu0
          %v5687 = vadd.f32 0.0, %v5686
          %v5688 = vpop.f32.mrf.mxu0
          %5689 = vdwg.mxu0
          %v5690 = vadd.f32 %v5613, %v5682
          %v5691 = vadd.f32 %v5614, %v5687
          %s5692 = sadd.s32 %s1900, 5
          %s5693 = smul.u32 %s5692, 16
          %s5694 = scalar_lea.vmem [#allocation2], %s5693
          %v5695 = vld [vmem:[%s5694] sm:$0xff]
          %v5696 = vld [vmem:[%s5694 + $0x8] sm:$0x3f]
          %v5698 = vsel %vm1914, %v5695, 0
          %v5701 = vsel %vm1914, %v5696, 0
          %5703 = vmatprep.subr.mxu0 0.0
          %5704 = vmatpush1.msra.mxu0 0.0
          %5705 = vmatprep.subr.mxu0 0.0
          %5706 = vmatpush1.msra.mxu0 0.0
          %5707 = vmatprep.subr.mxu0 0.0
          %5708 = vmatpush1.msra.mxu0 0.0
          %5709 = vmatprep.subr.mxu0 0.0
          %5710 = vmatpush1.msra.mxu0 0.0
          %5711 = vmatprep.subr.mxu0 0.0
          %5712 = vmatpush1.msra.mxu0 0.0
          %5713 = vmatprep.subr.mxu0 0.0
          %5714 = vmatpush1.msra.mxu0 0.0
          %5715 = vmatprep.subr.mxu0 0.0
          %5716 = vmatpush1.msra.mxu0 0.0
          %5717 = vmatprep.subr.mxu0 0.0
          %5718 = vmatpush1.msra.mxu0 0.0
          %5719 = vmatprep.subr.mxu0 0.0
          %5720 = vmatpush1.msra.mxu0 0.0
          %5721 = vmatprep.subr.mxu0 0.0
          %5722 = vmatpush1.msra.mxu0 0.0
          %5723 = vmatprep.subr.mxu0 0.0
          %5724 = vmatpush1.msra.mxu0 0.0
          %5725 = vmatprep.subr.mxu0 0.0
          %5726 = vmatpush1.msra.mxu0 0.0
          %5727 = vmatprep.subr.mxu0 0.0
          %5728 = vmatpush1.msra.mxu0 0.0
          %5729 = vmatprep.subr.mxu0 0.0
          %5730 = vmatpush1.msra.mxu0 0.0
          %5731 = vmatprep.subr.mxu0 0.0
          %5732 = vmatpush1.msra.mxu0 0.0
          %5733 = vmatprep.subr.mxu0 0.0
          %5734 = vmatpush1.msra.mxu0 %v3710
          %5735 = vmatprep.subr.mxu0 0.0
          %5736 = vmatpush2.msra.mxu0 0.0
          %5737 = vmatprep.subr.mxu0 0.0
          %5738 = vmatpush2.msra.mxu0 0.0
          %5739 = vmatprep.subr.mxu0 0.0
          %5740 = vmatpush2.msra.mxu0 0.0
          %5741 = vmatprep.subr.mxu0 0.0
          %5742 = vmatpush2.msra.mxu0 0.0
          %5743 = vmatprep.subr.mxu0 0.0
          %5744 = vmatpush2.msra.mxu0 0.0
          %5745 = vmatprep.subr.mxu0 0.0
          %5746 = vmatpush2.msra.mxu0 0.0
          %5747 = vmatprep.subr.mxu0 0.0
          %5748 = vmatpush2.msra.mxu0 0.0
          %5749 = vmatprep.subr.mxu0 0.0
          %5750 = vmatpush2.msra.mxu0 0.0
          %5751 = vmatprep.subr.mxu0 0.0
          %5752 = vmatpush2.msra.mxu0 0.0
          %5753 = vmatprep.subr.mxu0 0.0
          %5754 = vmatpush2.msra.mxu0 0.0
          %5755 = vmatprep.subr.mxu0 0.0
          %5756 = vmatpush2.msra.mxu0 0.0
          %5757 = vmatprep.subr.mxu0 0.0
          %5758 = vmatpush2.msra.mxu0 0.0
          %5759 = vmatprep.subr.mxu0 0.0
          %5760 = vmatpush2.msra.mxu0 0.0
          %5761 = vmatprep.subr.mxu0 0.0
          %5762 = vmatpush2.msra.mxu0 0.0
          %5763 = vmatprep.subr.mxu0 0.0
          %5764 = vmatpush2.msra.mxu0 0.0
          %5765 = vmatprep.subr.mxu0 0.0
          %5766 = vmatpush2.msra.mxu0 0.0
          %5767 = vmatprep.mubr.f32.mxu0 0.0
          %5768 = vmatmul.mubr.f32.gmra.mxu0 %v5698
          %v5769 = vpop.f32.mrf.mxu0
          %v5770 = vadd.f32 0.0, %v5769
          %v5771 = vpop.f32.mrf.mxu0
          %5772 = vmatprep.mubr.f32.mxu0 0.0
          %5773 = vmatmul.mubr.f32.gmra.mxu0 %v5701
          %v5774 = vpop.f32.mrf.mxu0
          %v5775 = vadd.f32 0.0, %v5774
          %v5776 = vpop.f32.mrf.mxu0
          %5777 = vdwg.mxu0
          %v5778 = vadd.f32 %v5690, %v5770
          %v5779 = vadd.f32 %v5691, %v5775
          %v5780 = vrot.slane %v5695, 1
          %v5781 = vrot.slane %v5696, 1
          %v5782 = vsel %vm1910, %v5780, %v5781
          %v5783 = vsel %vm1914, %v5782, 0
          %v5785 = vsel %vm1914, %v5781, 0
          %5787 = vmatprep.subr.mxu0 0.0
          %5788 = vmatpush1.msra.mxu0 0.0
          %5789 = vmatprep.subr.mxu0 0.0
          %5790 = vmatpush1.msra.mxu0 0.0
          %5791 = vmatprep.subr.mxu0 0.0
          %5792 = vmatpush1.msra.mxu0 0.0
          %5793 = vmatprep.subr.mxu0 0.0
          %5794 = vmatpush1.msra.mxu0 0.0
          %5795 = vmatprep.subr.mxu0 0.0
          %5796 = vmatpush1.msra.mxu0 0.0
          %5797 = vmatprep.subr.mxu0 0.0
          %5798 = vmatpush1.msra.mxu0 0.0
          %5799 = vmatprep.subr.mxu0 0.0
          %5800 = vmatpush1.msra.mxu0 0.0
          %5801 = vmatprep.subr.mxu0 0.0
          %5802 = vmatpush1.msra.mxu0 0.0
          %5803 = vmatprep.subr.mxu0 0.0
          %5804 = vmatpush1.msra.mxu0 0.0
          %5805 = vmatprep.subr.mxu0 0.0
          %5806 = vmatpush1.msra.mxu0 0.0
          %5807 = vmatprep.subr.mxu0 0.0
          %5808 = vmatpush1.msra.mxu0 0.0
          %5809 = vmatprep.subr.mxu0 0.0
          %5810 = vmatpush1.msra.mxu0 0.0
          %5811 = vmatprep.subr.mxu0 0.0
          %5812 = vmatpush1.msra.mxu0 0.0
          %5813 = vmatprep.subr.mxu0 0.0
          %5814 = vmatpush1.msra.mxu0 0.0
          %5815 = vmatprep.subr.mxu0 0.0
          %5816 = vmatpush1.msra.mxu0 0.0
          %5817 = vmatprep.subr.mxu0 0.0
          %5818 = vmatpush1.msra.mxu0 %v3799
          %5819 = vmatprep.subr.mxu0 0.0
          %5820 = vmatpush2.msra.mxu0 0.0
          %5821 = vmatprep.subr.mxu0 0.0
          %5822 = vmatpush2.msra.mxu0 0.0
          %5823 = vmatprep.subr.mxu0 0.0
          %5824 = vmatpush2.msra.mxu0 0.0
          %5825 = vmatprep.subr.mxu0 0.0
          %5826 = vmatpush2.msra.mxu0 0.0
          %5827 = vmatprep.subr.mxu0 0.0
          %5828 = vmatpush2.msra.mxu0 0.0
          %5829 = vmatprep.subr.mxu0 0.0
          %5830 = vmatpush2.msra.mxu0 0.0
          %5831 = vmatprep.subr.mxu0 0.0
          %5832 = vmatpush2.msra.mxu0 0.0
          %5833 = vmatprep.subr.mxu0 0.0
          %5834 = vmatpush2.msra.mxu0 0.0
          %5835 = vmatprep.subr.mxu0 0.0
          %5836 = vmatpush2.msra.mxu0 0.0
          %5837 = vmatprep.subr.mxu0 0.0
          %5838 = vmatpush2.msra.mxu0 0.0
          %5839 = vmatprep.subr.mxu0 0.0
          %5840 = vmatpush2.msra.mxu0 0.0
          %5841 = vmatprep.subr.mxu0 0.0
          %5842 = vmatpush2.msra.mxu0 0.0
          %5843 = vmatprep.subr.mxu0 0.0
          %5844 = vmatpush2.msra.mxu0 0.0
          %5845 = vmatprep.subr.mxu0 0.0
          %5846 = vmatpush2.msra.mxu0 0.0
          %5847 = vmatprep.subr.mxu0 0.0
          %5848 = vmatpush2.msra.mxu0 0.0
          %5849 = vmatprep.subr.mxu0 0.0
          %5850 = vmatpush2.msra.mxu0 0.0
          %5851 = vmatprep.mubr.f32.mxu0 0.0
          %5852 = vmatmul.mubr.f32.gmra.mxu0 %v5783
          %v5853 = vpop.f32.mrf.mxu0
          %v5854 = vadd.f32 0.0, %v5853
          %v5855 = vpop.f32.mrf.mxu0
          %5856 = vmatprep.mubr.f32.mxu0 0.0
          %5857 = vmatmul.mubr.f32.gmra.mxu0 %v5785
          %v5858 = vpop.f32.mrf.mxu0
          %v5859 = vadd.f32 0.0, %v5858
          %v5860 = vpop.f32.mrf.mxu0
          %5861 = vdwg.mxu0
          %v5862 = vadd.f32 %v5778, %v5854
          %v5863 = vadd.f32 %v5779, %v5859
          %v5864 = vrot.slane %v5695, 2
          %v5865 = vrot.slane %v5696, 2
          %v5866 = vsel %vm1919, %v5864, %v5865
          %v5867 = vsel %vm1914, %v5866, 0
          %v5869 = vsel %vm1914, %v5865, 0
          %5871 = vmatprep.subr.mxu0 0.0
          %5872 = vmatpush1.msra.mxu0 0.0
          %5873 = vmatprep.subr.mxu0 0.0
          %5874 = vmatpush1.msra.mxu0 0.0
          %5875 = vmatprep.subr.mxu0 0.0
          %5876 = vmatpush1.msra.mxu0 0.0
          %5877 = vmatprep.subr.mxu0 0.0
          %5878 = vmatpush1.msra.mxu0 0.0
          %5879 = vmatprep.subr.mxu0 0.0
          %5880 = vmatpush1.msra.mxu0 0.0
          %5881 = vmatprep.subr.mxu0 0.0
          %5882 = vmatpush1.msra.mxu0 0.0
          %5883 = vmatprep.subr.mxu0 0.0
          %5884 = vmatpush1.msra.mxu0 0.0
          %5885 = vmatprep.subr.mxu0 0.0
          %5886 = vmatpush1.msra.mxu0 0.0
          %5887 = vmatprep.subr.mxu0 0.0
          %5888 = vmatpush1.msra.mxu0 0.0
          %5889 = vmatprep.subr.mxu0 0.0
          %5890 = vmatpush1.msra.mxu0 0.0
          %5891 = vmatprep.subr.mxu0 0.0
          %5892 = vmatpush1.msra.mxu0 0.0
          %5893 = vmatprep.subr.mxu0 0.0
          %5894 = vmatpush1.msra.mxu0 0.0
          %5895 = vmatprep.subr.mxu0 0.0
          %5896 = vmatpush1.msra.mxu0 0.0
          %5897 = vmatprep.subr.mxu0 0.0
          %5898 = vmatpush1.msra.mxu0 0.0
          %5899 = vmatprep.subr.mxu0 0.0
          %5900 = vmatpush1.msra.mxu0 0.0
          %5901 = vmatprep.subr.mxu0 0.0
          %5902 = vmatpush1.msra.mxu0 %v3888
          %5903 = vmatprep.subr.mxu0 0.0
          %5904 = vmatpush2.msra.mxu0 0.0
          %5905 = vmatprep.subr.mxu0 0.0
          %5906 = vmatpush2.msra.mxu0 0.0
          %5907 = vmatprep.subr.mxu0 0.0
          %5908 = vmatpush2.msra.mxu0 0.0
          %5909 = vmatprep.subr.mxu0 0.0
          %5910 = vmatpush2.msra.mxu0 0.0
          %5911 = vmatprep.subr.mxu0 0.0
          %5912 = vmatpush2.msra.mxu0 0.0
          %5913 = vmatprep.subr.mxu0 0.0
          %5914 = vmatpush2.msra.mxu0 0.0
          %5915 = vmatprep.subr.mxu0 0.0
          %5916 = vmatpush2.msra.mxu0 0.0
          %5917 = vmatprep.subr.mxu0 0.0
          %5918 = vmatpush2.msra.mxu0 0.0
          %5919 = vmatprep.subr.mxu0 0.0
          %5920 = vmatpush2.msra.mxu0 0.0
          %5921 = vmatprep.subr.mxu0 0.0
          %5922 = vmatpush2.msra.mxu0 0.0
          %5923 = vmatprep.subr.mxu0 0.0
          %5924 = vmatpush2.msra.mxu0 0.0
          %5925 = vmatprep.subr.mxu0 0.0
          %5926 = vmatpush2.msra.mxu0 0.0
          %5927 = vmatprep.subr.mxu0 0.0
          %5928 = vmatpush2.msra.mxu0 0.0
          %5929 = vmatprep.subr.mxu0 0.0
          %5930 = vmatpush2.msra.mxu0 0.0
          %5931 = vmatprep.subr.mxu0 0.0
          %5932 = vmatpush2.msra.mxu0 0.0
          %5933 = vmatprep.subr.mxu0 0.0
          %5934 = vmatpush2.msra.mxu0 0.0
          %5935 = vmatprep.mubr.f32.mxu0 0.0
          %5936 = vmatmul.mubr.f32.gmra.mxu0 %v5867
          %v5937 = vpop.f32.mrf.mxu0
          %v5938 = vadd.f32 0.0, %v5937
          %v5939 = vpop.f32.mrf.mxu0
          %5940 = vmatprep.mubr.f32.mxu0 0.0
          %5941 = vmatmul.mubr.f32.gmra.mxu0 %v5869
          %v5942 = vpop.f32.mrf.mxu0
          %v5943 = vadd.f32 0.0, %v5942
          %v5944 = vpop.f32.mrf.mxu0
          %5945 = vdwg.mxu0
          %v5946 = vadd.f32 %v5862, %v5938
          %v5947 = vadd.f32 %v5863, %v5943
          %v5948 = vrot.slane %v5695, 3
          %v5949 = vrot.slane %v5696, 3
          %v5950 = vsel %vm2171, %v5948, %v5949
          %v5951 = vsel %vm1914, %v5950, 0
          %v5953 = vsel %vm1914, %v5949, 0
          %5955 = vmatprep.subr.mxu0 0.0
          %5956 = vmatpush1.msra.mxu0 0.0
          %5957 = vmatprep.subr.mxu0 0.0
          %5958 = vmatpush1.msra.mxu0 0.0
          %5959 = vmatprep.subr.mxu0 0.0
          %5960 = vmatpush1.msra.mxu0 0.0
          %5961 = vmatprep.subr.mxu0 0.0
          %5962 = vmatpush1.msra.mxu0 0.0
          %5963 = vmatprep.subr.mxu0 0.0
          %5964 = vmatpush1.msra.mxu0 0.0
          %5965 = vmatprep.subr.mxu0 0.0
          %5966 = vmatpush1.msra.mxu0 0.0
          %5967 = vmatprep.subr.mxu0 0.0
          %5968 = vmatpush1.msra.mxu0 0.0
          %5969 = vmatprep.subr.mxu0 0.0
          %5970 = vmatpush1.msra.mxu0 0.0
          %5971 = vmatprep.subr.mxu0 0.0
          %5972 = vmatpush1.msra.mxu0 0.0
          %5973 = vmatprep.subr.mxu0 0.0
          %5974 = vmatpush1.msra.mxu0 0.0
          %5975 = vmatprep.subr.mxu0 0.0
          %5976 = vmatpush1.msra.mxu0 0.0
          %5977 = vmatprep.subr.mxu0 0.0
          %5978 = vmatpush1.msra.mxu0 0.0
          %5979 = vmatprep.subr.mxu0 0.0
          %5980 = vmatpush1.msra.mxu0 0.0
          %5981 = vmatprep.subr.mxu0 0.0
          %5982 = vmatpush1.msra.mxu0 0.0
          %5983 = vmatprep.subr.mxu0 0.0
          %5984 = vmatpush1.msra.mxu0 0.0
          %5985 = vmatprep.subr.mxu0 0.0
          %5986 = vmatpush1.msra.mxu0 %v3977
          %5987 = vmatprep.subr.mxu0 0.0
          %5988 = vmatpush2.msra.mxu0 0.0
          %5989 = vmatprep.subr.mxu0 0.0
          %5990 = vmatpush2.msra.mxu0 0.0
          %5991 = vmatprep.subr.mxu0 0.0
          %5992 = vmatpush2.msra.mxu0 0.0
          %5993 = vmatprep.subr.mxu0 0.0
          %5994 = vmatpush2.msra.mxu0 0.0
          %5995 = vmatprep.subr.mxu0 0.0
          %5996 = vmatpush2.msra.mxu0 0.0
          %5997 = vmatprep.subr.mxu0 0.0
          %5998 = vmatpush2.msra.mxu0 0.0
          %5999 = vmatprep.subr.mxu0 0.0
          %6000 = vmatpush2.msra.mxu0 0.0
          %6001 = vmatprep.subr.mxu0 0.0
          %6002 = vmatpush2.msra.mxu0 0.0
          %6003 = vmatprep.subr.mxu0 0.0
          %6004 = vmatpush2.msra.mxu0 0.0
          %6005 = vmatprep.subr.mxu0 0.0
          %6006 = vmatpush2.msra.mxu0 0.0
          %6007 = vmatprep.subr.mxu0 0.0
          %6008 = vmatpush2.msra.mxu0 0.0
          %6009 = vmatprep.subr.mxu0 0.0
          %6010 = vmatpush2.msra.mxu0 0.0
          %6011 = vmatprep.subr.mxu0 0.0
          %6012 = vmatpush2.msra.mxu0 0.0
          %6013 = vmatprep.subr.mxu0 0.0
          %6014 = vmatpush2.msra.mxu0 0.0
          %6015 = vmatprep.subr.mxu0 0.0
          %6016 = vmatpush2.msra.mxu0 0.0
          %6017 = vmatprep.subr.mxu0 0.0
          %6018 = vmatpush2.msra.mxu0 0.0
          %6019 = vmatprep.mubr.f32.mxu0 0.0
          %6020 = vmatmul.mubr.f32.gmra.mxu0 %v5951
          %v6021 = vpop.f32.mrf.mxu0
          %v6022 = vadd.f32 0.0, %v6021
          %v6023 = vpop.f32.mrf.mxu0
          %6024 = vmatprep.mubr.f32.mxu0 0.0
          %6025 = vmatmul.mubr.f32.gmra.mxu0 %v5953
          %v6026 = vpop.f32.mrf.mxu0
          %v6027 = vadd.f32 0.0, %v6026
          %v6028 = vpop.f32.mrf.mxu0
          %6029 = vdwg.mxu0
          %v6030 = vadd.f32 %v5946, %v6022
          %v6031 = vadd.f32 %v5947, %v6027
          %v6032 = vrot.slane %v5695, 4
          %v6033 = vrot.slane %v5696, 4
          %v6034 = vsel %vm2261, %v6032, %v6033
          %v6035 = vsel %vm1914, %v6034, 0
          %v6037 = vsel %vm1914, %v6033, 0
          %6039 = vmatprep.subr.mxu0 0.0
          %6040 = vmatpush1.msra.mxu0 0.0
          %6041 = vmatprep.subr.mxu0 0.0
          %6042 = vmatpush1.msra.mxu0 0.0
          %6043 = vmatprep.subr.mxu0 0.0
          %6044 = vmatpush1.msra.mxu0 0.0
          %6045 = vmatprep.subr.mxu0 0.0
          %6046 = vmatpush1.msra.mxu0 0.0
          %6047 = vmatprep.subr.mxu0 0.0
          %6048 = vmatpush1.msra.mxu0 0.0
          %6049 = vmatprep.subr.mxu0 0.0
          %6050 = vmatpush1.msra.mxu0 0.0
          %6051 = vmatprep.subr.mxu0 0.0
          %6052 = vmatpush1.msra.mxu0 0.0
          %6053 = vmatprep.subr.mxu0 0.0
          %6054 = vmatpush1.msra.mxu0 0.0
          %6055 = vmatprep.subr.mxu0 0.0
          %6056 = vmatpush1.msra.mxu0 0.0
          %6057 = vmatprep.subr.mxu0 0.0
          %6058 = vmatpush1.msra.mxu0 0.0
          %6059 = vmatprep.subr.mxu0 0.0
          %6060 = vmatpush1.msra.mxu0 0.0
          %6061 = vmatprep.subr.mxu0 0.0
          %6062 = vmatpush1.msra.mxu0 0.0
          %6063 = vmatprep.subr.mxu0 0.0
          %6064 = vmatpush1.msra.mxu0 0.0
          %6065 = vmatprep.subr.mxu0 0.0
          %6066 = vmatpush1.msra.mxu0 0.0
          %6067 = vmatprep.subr.mxu0 0.0
          %6068 = vmatpush1.msra.mxu0 0.0
          %6069 = vmatprep.subr.mxu0 0.0
          %6070 = vmatpush1.msra.mxu0 %v4066
          %6071 = vmatprep.subr.mxu0 0.0
          %6072 = vmatpush2.msra.mxu0 0.0
          %6073 = vmatprep.subr.mxu0 0.0
          %6074 = vmatpush2.msra.mxu0 0.0
          %6075 = vmatprep.subr.mxu0 0.0
          %6076 = vmatpush2.msra.mxu0 0.0
          %6077 = vmatprep.subr.mxu0 0.0
          %6078 = vmatpush2.msra.mxu0 0.0
          %6079 = vmatprep.subr.mxu0 0.0
          %6080 = vmatpush2.msra.mxu0 0.0
          %6081 = vmatprep.subr.mxu0 0.0
          %6082 = vmatpush2.msra.mxu0 0.0
          %6083 = vmatprep.subr.mxu0 0.0
          %6084 = vmatpush2.msra.mxu0 0.0
          %6085 = vmatprep.subr.mxu0 0.0
          %6086 = vmatpush2.msra.mxu0 0.0
          %6087 = vmatprep.subr.mxu0 0.0
          %6088 = vmatpush2.msra.mxu0 0.0
          %6089 = vmatprep.subr.mxu0 0.0
          %6090 = vmatpush2.msra.mxu0 0.0
          %6091 = vmatprep.subr.mxu0 0.0
          %6092 = vmatpush2.msra.mxu0 0.0
          %6093 = vmatprep.subr.mxu0 0.0
          %6094 = vmatpush2.msra.mxu0 0.0
          %6095 = vmatprep.subr.mxu0 0.0
          %6096 = vmatpush2.msra.mxu0 0.0
          %6097 = vmatprep.subr.mxu0 0.0
          %6098 = vmatpush2.msra.mxu0 0.0
          %6099 = vmatprep.subr.mxu0 0.0
          %6100 = vmatpush2.msra.mxu0 0.0
          %6101 = vmatprep.subr.mxu0 0.0
          %6102 = vmatpush2.msra.mxu0 0.0
          %6103 = vmatprep.mubr.f32.mxu0 0.0
          %6104 = vmatmul.mubr.f32.gmra.mxu0 %v6035
          %v6105 = vpop.f32.mrf.mxu0
          %v6106 = vadd.f32 0.0, %v6105
          %v6107 = vpop.f32.mrf.mxu0
          %6108 = vmatprep.mubr.f32.mxu0 0.0
          %6109 = vmatmul.mubr.f32.gmra.mxu0 %v6037
          %v6110 = vpop.f32.mrf.mxu0
          %v6111 = vadd.f32 0.0, %v6110
          %v6112 = vpop.f32.mrf.mxu0
          %6113 = vdwg.mxu0
          %v6114 = vadd.f32 %v6030, %v6106
          %v6115 = vadd.f32 %v6031, %v6111
          %v6116 = vadd.f32 %v6114, %v4150
          %v6117 = vadd.f32 %v6115, %v4150
          %v6118 = vtanh.pop %v6116
          %v6119 = vtanh.pop %v6117
          %v6120 = vadd.f32 %v4154, %v6118
          %v6121 = vadd.f32 %v4155, %v6119
          %vm6122 = vcmask 80896
          %v6124 = vsel %vm6122, %v401, 0
          %vm6126 = vcmask 1041408
          %v6128 = vsel %vm6126, %v6121, 0
          %6130 = vmatprep.subr.mxu0 0.0
          %6131 = vmatpush1.msra.mxu0 0.0
          %6132 = vmatprep.subr.mxu0 0.0
          %6133 = vmatpush1.msra.mxu0 0.0
          %6134 = vmatprep.subr.mxu0 0.0
          %6135 = vmatpush1.msra.mxu0 0.0
          %6136 = vmatprep.subr.mxu0 0.0
          %6137 = vmatpush1.msra.mxu0 0.0
          %6138 = vmatprep.subr.mxu0 0.0
          %6139 = vmatpush1.msra.mxu0 0.0
          %6140 = vmatprep.subr.mxu0 0.0
          %6141 = vmatpush1.msra.mxu0 0.0
          %6142 = vmatprep.subr.mxu0 0.0
          %6143 = vmatpush1.msra.mxu0 0.0
          %6144 = vmatprep.subr.mxu0 0.0
          %6145 = vmatpush1.msra.mxu0 0.0
          %6146 = vmatprep.subr.mxu0 0.0
          %6147 = vmatpush1.msra.mxu0 0.0
          %6148 = vmatprep.subr.mxu0 0.0
          %6149 = vmatpush1.msra.mxu0 0.0
          %6150 = vmatprep.subr.mxu0 0.0
          %6151 = vmatpush1.msra.mxu0 0.0
          %6152 = vmatprep.subr.mxu0 0.0
          %6153 = vmatpush1.msra.mxu0 0.0
          %6154 = vmatprep.subr.mxu0 0.0
          %6155 = vmatpush1.msra.mxu0 0.0
          %6156 = vmatprep.subr.mxu0 0.0
          %6157 = vmatpush1.msra.mxu0 0.0
          %6158 = vmatprep.subr.mxu0 0.0
          %6159 = vmatpush1.msra.mxu0 %v6128
          %6160 = vmatprep.subr.mxu0 0.0
          %6161 = vmatpush1.msra.mxu0 %v6120
          %6162 = vmatprep.subr.mxu0 0.0
          %6163 = vmatpush2.msra.mxu0 0.0
          %6164 = vmatprep.subr.mxu0 0.0
          %6165 = vmatpush2.msra.mxu0 0.0
          %6166 = vmatprep.subr.mxu0 0.0
          %6167 = vmatpush2.msra.mxu0 0.0
          %6168 = vmatprep.subr.mxu0 0.0
          %6169 = vmatpush2.msra.mxu0 0.0
          %6170 = vmatprep.subr.mxu0 0.0
          %6171 = vmatpush2.msra.mxu0 0.0
          %6172 = vmatprep.subr.mxu0 0.0
          %6173 = vmatpush2.msra.mxu0 0.0
          %6174 = vmatprep.subr.mxu0 0.0
          %6175 = vmatpush2.msra.mxu0 0.0
          %6176 = vmatprep.subr.mxu0 0.0
          %6177 = vmatpush2.msra.mxu0 0.0
          %6178 = vmatprep.subr.mxu0 0.0
          %6179 = vmatpush2.msra.mxu0 0.0
          %6180 = vmatprep.subr.mxu0 0.0
          %6181 = vmatpush2.msra.mxu0 0.0
          %6182 = vmatprep.subr.mxu0 0.0
          %6183 = vmatpush2.msra.mxu0 0.0
          %6184 = vmatprep.subr.mxu0 0.0
          %6185 = vmatpush2.msra.mxu0 0.0
          %6186 = vmatprep.subr.mxu0 0.0
          %6187 = vmatpush2.msra.mxu0 0.0
          %6188 = vmatprep.subr.mxu0 0.0
          %6189 = vmatpush2.msra.mxu0 0.0
          %6190 = vmatprep.subr.mxu0 0.0
          %6191 = vmatpush2.msra.mxu0 0.0
          %6192 = vmatprep.subr.mxu0 0.0
          %6193 = vmatpush2.msra.mxu0 0.0
          %6194 = vmatprep.mubr.f32.mxu0 0.0
          %6195 = vmatmul.mubr.f32.gmra.mxu0 %v6124
          %v6196 = vpop.f32.mrf.mxu0
          %v6197 = vadd.f32 0.0, %v6196
          %v6198 = vpop.f32.mrf.mxu0
          %6199 = vdwg.mxu0
          %v6200 = vmul.f32 %v6197, 0.25
          %s6201 = smul.u32 %s1895, 8
          %s6202 = scalar_lea.vmem [#allocation3], %s6201
          %vm6203 = vcmask 126976
          %6204 = vst.msk [vmem:[%s6202] sm:$0x1f] %vm6203, %v6200
        $region76: #{lenet5_forward.1} parent=63 // loop_footer
          %s1899 = sadd.s32 1, %s1895
        $region77: #{lenet5_forward.1} parent=63 // loop_footer_branch
          %1894 = sbr.rel target = $region73
        $region78: #{lenet5_forward.1} parent=63 // loop_exit
          _
        %v6205 = vld [vmem:[#allocation3] sm:$0x1f]
        %v6206 = vld [vmem:[%s5] sm:$0xff]
        %v6207 = vld [vmem:[%s5 + $0x8] sm:$0xff]
        %s6208 = scalar_lea.vmem %s5, 16
        %v6209 = vld [vmem:[%s6208] sm:$0xff]
        %v6210 = vld [vmem:[%s6208 + $0x8] sm:$0xff]
        %v6212 = vrot.slane %v6205, 1
        %vm6213 = vcmask 130048
        %v6214 = vsel %vm6213, %v6212, 0
        %6216 = vmatprep.subr.mxu0 0.0
        %6217 = vmatpush1.msra.mxu0 0.0
        %6218 = vmatprep.subr.mxu0 0.0
        %6219 = vmatpush1.msra.mxu0 0.0
        %6220 = vmatprep.subr.mxu0 0.0
        %6221 = vmatpush1.msra.mxu0 0.0
        %6222 = vmatprep.subr.mxu0 0.0
        %6223 = vmatpush1.msra.mxu0 0.0
        %6224 = vmatprep.subr.mxu0 0.0
        %6225 = vmatpush1.msra.mxu0 0.0
        %6226 = vmatprep.subr.mxu0 0.0
        %6227 = vmatpush1.msra.mxu0 0.0
        %6228 = vmatprep.subr.mxu0 0.0
        %6229 = vmatpush1.msra.mxu0 0.0
        %6230 = vmatprep.subr.mxu0 0.0
        %6231 = vmatpush1.msra.mxu0 0.0
        %6232 = vmatprep.subr.mxu0 0.0
        %6233 = vmatpush1.msra.mxu0 0.0
        %6234 = vmatprep.subr.mxu0 0.0
        %6235 = vmatpush1.msra.mxu0 0.0
        %6236 = vmatprep.subr.mxu0 0.0
        %6237 = vmatpush1.msra.mxu0 0.0
        %6238 = vmatprep.subr.mxu0 0.0
        %6239 = vmatpush1.msra.mxu0 0.0
        %6240 = vmatprep.subr.mxu0 0.0
        %6241 = vmatpush1.msra.mxu0 0.0
        %6242 = vmatprep.subr.mxu0 0.0
        %6243 = vmatpush1.msra.mxu0 0.0
        %6244 = vmatprep.subr.mxu0 0.0
        %6245 = vmatpush1.msra.mxu0 %v6210
        %6246 = vmatprep.subr.mxu0 0.0
        %6247 = vmatpush1.msra.mxu0 %v6209
        %6248 = vmatprep.subr.mxu0 0.0
        %6249 = vmatpush2.msra.mxu0 0.0
        %6250 = vmatprep.subr.mxu0 0.0
        %6251 = vmatpush2.msra.mxu0 0.0
        %6252 = vmatprep.subr.mxu0 0.0
        %6253 = vmatpush2.msra.mxu0 0.0
        %6254 = vmatprep.subr.mxu0 0.0
        %6255 = vmatpush2.msra.mxu0 0.0
        %6256 = vmatprep.subr.mxu0 0.0
        %6257 = vmatpush2.msra.mxu0 0.0
        %6258 = vmatprep.subr.mxu0 0.0
        %6259 = vmatpush2.msra.mxu0 0.0
        %6260 = vmatprep.subr.mxu0 0.0
        %6261 = vmatpush2.msra.mxu0 0.0
        %6262 = vmatprep.subr.mxu0 0.0
        %6263 = vmatpush2.msra.mxu0 0.0
        %6264 = vmatprep.subr.mxu0 0.0
        %6265 = vmatpush2.msra.mxu0 0.0
        %6266 = vmatprep.subr.mxu0 0.0
        %6267 = vmatpush2.msra.mxu0 0.0
        %6268 = vmatprep.subr.mxu0 0.0
        %6269 = vmatpush2.msra.mxu0 0.0
        %6270 = vmatprep.subr.mxu0 0.0
        %6271 = vmatpush2.msra.mxu0 0.0
        %6272 = vmatprep.subr.mxu0 0.0
        %6273 = vmatpush2.msra.mxu0 0.0
        %6274 = vmatprep.subr.mxu0 0.0
        %6275 = vmatpush2.msra.mxu0 0.0
        %6276 = vmatprep.subr.mxu0 0.0
        %6277 = vmatpush2.msra.mxu0 0.0
        %6278 = vmatprep.subr.mxu0 0.0
        %6279 = vmatpush2.msra.mxu0 0.0
        %6280 = vmatprep.mubr.f32.mxu0 0.0
        %6281 = vmatmul.mubr.f32.gmra.mxu0 %v6214
        %v6282 = vpop.f32.mrf.mxu0
        %v6283 = vadd.f32 0.0, %v6282
        %v6284 = vpop.f32.mrf.mxu0
        %6285 = vdwg.mxu0
        %v6286 = vsel %vm6213, %v6205, 0
        %6288 = vmatprep.subr.mxu0 0.0
        %6289 = vmatpush1.msra.mxu0 0.0
        %6290 = vmatprep.subr.mxu0 0.0
        %6291 = vmatpush1.msra.mxu0 0.0
        %6292 = vmatprep.subr.mxu0 0.0
        %6293 = vmatpush1.msra.mxu0 0.0
        %6294 = vmatprep.subr.mxu0 0.0
        %6295 = vmatpush1.msra.mxu0 0.0
        %6296 = vmatprep.subr.mxu0 0.0
        %6297 = vmatpush1.msra.mxu0 0.0
        %6298 = vmatprep.subr.mxu0 0.0
        %6299 = vmatpush1.msra.mxu0 0.0
        %6300 = vmatprep.subr.mxu0 0.0
        %6301 = vmatpush1.msra.mxu0 0.0
        %6302 = vmatprep.subr.mxu0 0.0
        %6303 = vmatpush1.msra.mxu0 0.0
        %6304 = vmatprep.subr.mxu0 0.0
        %6305 = vmatpush1.msra.mxu0 0.0
        %6306 = vmatprep.subr.mxu0 0.0
        %6307 = vmatpush1.msra.mxu0 0.0
        %6308 = vmatprep.subr.mxu0 0.0
        %6309 = vmatpush1.msra.mxu0 0.0
        %6310 = vmatprep.subr.mxu0 0.0
        %6311 = vmatpush1.msra.mxu0 0.0
        %6312 = vmatprep.subr.mxu0 0.0
        %6313 = vmatpush1.msra.mxu0 0.0
        %6314 = vmatprep.subr.mxu0 0.0
        %6315 = vmatpush1.msra.mxu0 0.0
        %6316 = vmatprep.subr.mxu0 0.0
        %6317 = vmatpush1.msra.mxu0 %v6207
        %6318 = vmatprep.subr.mxu0 0.0
        %6319 = vmatpush1.msra.mxu0 %v6206
        %6320 = vmatprep.subr.mxu0 0.0
        %6321 = vmatpush2.msra.mxu0 0.0
        %6322 = vmatprep.subr.mxu0 0.0
        %6323 = vmatpush2.msra.mxu0 0.0
        %6324 = vmatprep.subr.mxu0 0.0
        %6325 = vmatpush2.msra.mxu0 0.0
        %6326 = vmatprep.subr.mxu0 0.0
        %6327 = vmatpush2.msra.mxu0 0.0
        %6328 = vmatprep.subr.mxu0 0.0
        %6329 = vmatpush2.msra.mxu0 0.0
        %6330 = vmatprep.subr.mxu0 0.0
        %6331 = vmatpush2.msra.mxu0 0.0
        %6332 = vmatprep.subr.mxu0 0.0
        %6333 = vmatpush2.msra.mxu0 0.0
        %6334 = vmatprep.subr.mxu0 0.0
        %6335 = vmatpush2.msra.mxu0 0.0
        %6336 = vmatprep.subr.mxu0 0.0
        %6337 = vmatpush2.msra.mxu0 0.0
        %6338 = vmatprep.subr.mxu0 0.0
        %6339 = vmatpush2.msra.mxu0 0.0
        %6340 = vmatprep.subr.mxu0 0.0
        %6341 = vmatpush2.msra.mxu0 0.0
        %6342 = vmatprep.subr.mxu0 0.0
        %6343 = vmatpush2.msra.mxu0 0.0
        %6344 = vmatprep.subr.mxu0 0.0
        %6345 = vmatpush2.msra.mxu0 0.0
        %6346 = vmatprep.subr.mxu0 0.0
        %6347 = vmatpush2.msra.mxu0 0.0
        %6348 = vmatprep.subr.mxu0 0.0
        %6349 = vmatpush2.msra.mxu0 0.0
        %6350 = vmatprep.subr.mxu0 0.0
        %6351 = vmatpush2.msra.mxu0 0.0
        %6352 = vmatprep.mubr.f32.mxu0 0.0
        %6353 = vmatmul.mubr.f32.gmra.mxu0 %v6286
        %v6354 = vpop.f32.mrf.mxu0
        %v6355 = vadd.f32 %v6283, %v6354
        %v6356 = vpop.f32.mrf.mxu0
        %6357 = vdwg.mxu0
        %s6358 = scalar_lea.vmem %s5, 32
        %v6359 = vld [vmem:[%s6358] sm:$0xff]
        %v6360 = vld [vmem:[%s6358 + $0x8] sm:$0xff]
        %v6361 = vrot.slane %v6205, 2
        %v6362 = vsel %vm6213, %v6361, 0
        %6364 = vmatprep.subr.mxu0 0.0
        %6365 = vmatpush1.msra.mxu0 0.0
        %6366 = vmatprep.subr.mxu0 0.0
        %6367 = vmatpush1.msra.mxu0 0.0
        %6368 = vmatprep.subr.mxu0 0.0
        %6369 = vmatpush1.msra.mxu0 0.0
        %6370 = vmatprep.subr.mxu0 0.0
        %6371 = vmatpush1.msra.mxu0 0.0
        %6372 = vmatprep.subr.mxu0 0.0
        %6373 = vmatpush1.msra.mxu0 0.0
        %6374 = vmatprep.subr.mxu0 0.0
        %6375 = vmatpush1.msra.mxu0 0.0
        %6376 = vmatprep.subr.mxu0 0.0
        %6377 = vmatpush1.msra.mxu0 0.0
        %6378 = vmatprep.subr.mxu0 0.0
        %6379 = vmatpush1.msra.mxu0 0.0
        %6380 = vmatprep.subr.mxu0 0.0
        %6381 = vmatpush1.msra.mxu0 0.0
        %6382 = vmatprep.subr.mxu0 0.0
        %6383 = vmatpush1.msra.mxu0 0.0
        %6384 = vmatprep.subr.mxu0 0.0
        %6385 = vmatpush1.msra.mxu0 0.0
        %6386 = vmatprep.subr.mxu0 0.0
        %6387 = vmatpush1.msra.mxu0 0.0
        %6388 = vmatprep.subr.mxu0 0.0
        %6389 = vmatpush1.msra.mxu0 0.0
        %6390 = vmatprep.subr.mxu0 0.0
        %6391 = vmatpush1.msra.mxu0 0.0
        %6392 = vmatprep.subr.mxu0 0.0
        %6393 = vmatpush1.msra.mxu0 %v6360
        %6394 = vmatprep.subr.mxu0 0.0
        %6395 = vmatpush1.msra.mxu0 %v6359
        %6396 = vmatprep.subr.mxu0 0.0
        %6397 = vmatpush2.msra.mxu0 0.0
        %6398 = vmatprep.subr.mxu0 0.0
        %6399 = vmatpush2.msra.mxu0 0.0
        %6400 = vmatprep.subr.mxu0 0.0
        %6401 = vmatpush2.msra.mxu0 0.0
        %6402 = vmatprep.subr.mxu0 0.0
        %6403 = vmatpush2.msra.mxu0 0.0
        %6404 = vmatprep.subr.mxu0 0.0
        %6405 = vmatpush2.msra.mxu0 0.0
        %6406 = vmatprep.subr.mxu0 0.0
        %6407 = vmatpush2.msra.mxu0 0.0
        %6408 = vmatprep.subr.mxu0 0.0
        %6409 = vmatpush2.msra.mxu0 0.0
        %6410 = vmatprep.subr.mxu0 0.0
        %6411 = vmatpush2.msra.mxu0 0.0
        %6412 = vmatprep.subr.mxu0 0.0
        %6413 = vmatpush2.msra.mxu0 0.0
        %6414 = vmatprep.subr.mxu0 0.0
        %6415 = vmatpush2.msra.mxu0 0.0
        %6416 = vmatprep.subr.mxu0 0.0
        %6417 = vmatpush2.msra.mxu0 0.0
        %6418 = vmatprep.subr.mxu0 0.0
        %6419 = vmatpush2.msra.mxu0 0.0
        %6420 = vmatprep.subr.mxu0 0.0
        %6421 = vmatpush2.msra.mxu0 0.0
        %6422 = vmatprep.subr.mxu0 0.0
        %6423 = vmatpush2.msra.mxu0 0.0
        %6424 = vmatprep.subr.mxu0 0.0
        %6425 = vmatpush2.msra.mxu0 0.0
        %6426 = vmatprep.subr.mxu0 0.0
        %6427 = vmatpush2.msra.mxu0 0.0
        %6428 = vmatprep.mubr.f32.mxu0 0.0
        %6429 = vmatmul.mubr.f32.gmra.mxu0 %v6362
        %v6430 = vpop.f32.mrf.mxu0
        %v6431 = vadd.f32 0.0, %v6430
        %v6432 = vpop.f32.mrf.mxu0
        %6433 = vdwg.mxu0
        %v6434 = vadd.f32 %v6355, %v6431
        %s6435 = scalar_lea.vmem %s5, 48
        %v6436 = vld [vmem:[%s6435] sm:$0xff]
        %v6437 = vld [vmem:[%s6435 + $0x8] sm:$0xff]
        %v6438 = vrot.slane %v6205, 3
        %v6439 = vsel %vm6213, %v6438, 0
        %6441 = vmatprep.subr.mxu0 0.0
        %6442 = vmatpush1.msra.mxu0 0.0
        %6443 = vmatprep.subr.mxu0 0.0
        %6444 = vmatpush1.msra.mxu0 0.0
        %6445 = vmatprep.subr.mxu0 0.0
        %6446 = vmatpush1.msra.mxu0 0.0
        %6447 = vmatprep.subr.mxu0 0.0
        %6448 = vmatpush1.msra.mxu0 0.0
        %6449 = vmatprep.subr.mxu0 0.0
        %6450 = vmatpush1.msra.mxu0 0.0
        %6451 = vmatprep.subr.mxu0 0.0
        %6452 = vmatpush1.msra.mxu0 0.0
        %6453 = vmatprep.subr.mxu0 0.0
        %6454 = vmatpush1.msra.mxu0 0.0
        %6455 = vmatprep.subr.mxu0 0.0
        %6456 = vmatpush1.msra.mxu0 0.0
        %6457 = vmatprep.subr.mxu0 0.0
        %6458 = vmatpush1.msra.mxu0 0.0
        %6459 = vmatprep.subr.mxu0 0.0
        %6460 = vmatpush1.msra.mxu0 0.0
        %6461 = vmatprep.subr.mxu0 0.0
        %6462 = vmatpush1.msra.mxu0 0.0
        %6463 = vmatprep.subr.mxu0 0.0
        %6464 = vmatpush1.msra.mxu0 0.0
        %6465 = vmatprep.subr.mxu0 0.0
        %6466 = vmatpush1.msra.mxu0 0.0
        %6467 = vmatprep.subr.mxu0 0.0
        %6468 = vmatpush1.msra.mxu0 0.0
        %6469 = vmatprep.subr.mxu0 0.0
        %6470 = vmatpush1.msra.mxu0 %v6437
        %6471 = vmatprep.subr.mxu0 0.0
        %6472 = vmatpush1.msra.mxu0 %v6436
        %6473 = vmatprep.subr.mxu0 0.0
        %6474 = vmatpush2.msra.mxu0 0.0
        %6475 = vmatprep.subr.mxu0 0.0
        %6476 = vmatpush2.msra.mxu0 0.0
        %6477 = vmatprep.subr.mxu0 0.0
        %6478 = vmatpush2.msra.mxu0 0.0
        %6479 = vmatprep.subr.mxu0 0.0
        %6480 = vmatpush2.msra.mxu0 0.0
        %6481 = vmatprep.subr.mxu0 0.0
        %6482 = vmatpush2.msra.mxu0 0.0
        %6483 = vmatprep.subr.mxu0 0.0
        %6484 = vmatpush2.msra.mxu0 0.0
        %6485 = vmatprep.subr.mxu0 0.0
        %6486 = vmatpush2.msra.mxu0 0.0
        %6487 = vmatprep.subr.mxu0 0.0
        %6488 = vmatpush2.msra.mxu0 0.0
        %6489 = vmatprep.subr.mxu0 0.0
        %6490 = vmatpush2.msra.mxu0 0.0
        %6491 = vmatprep.subr.mxu0 0.0
        %6492 = vmatpush2.msra.mxu0 0.0
        %6493 = vmatprep.subr.mxu0 0.0
        %6494 = vmatpush2.msra.mxu0 0.0
        %6495 = vmatprep.subr.mxu0 0.0
        %6496 = vmatpush2.msra.mxu0 0.0
        %6497 = vmatprep.subr.mxu0 0.0
        %6498 = vmatpush2.msra.mxu0 0.0
        %6499 = vmatprep.subr.mxu0 0.0
        %6500 = vmatpush2.msra.mxu0 0.0
        %6501 = vmatprep.subr.mxu0 0.0
        %6502 = vmatpush2.msra.mxu0 0.0
        %6503 = vmatprep.subr.mxu0 0.0
        %6504 = vmatpush2.msra.mxu0 0.0
        %6505 = vmatprep.mubr.f32.mxu0 0.0
        %6506 = vmatmul.mubr.f32.gmra.mxu0 %v6439
        %v6507 = vpop.f32.mrf.mxu0
        %v6508 = vadd.f32 0.0, %v6507
        %v6509 = vpop.f32.mrf.mxu0
        %6510 = vdwg.mxu0
        %v6511 = vadd.f32 %v6434, %v6508
        %s6512 = scalar_lea.vmem %s5, 64
        %v6513 = vld [vmem:[%s6512] sm:$0xff]
        %v6514 = vld [vmem:[%s6512 + $0x8] sm:$0xff]
        %v6515 = vrot.slane %v6205, 4
        %v6516 = vsel %vm6213, %v6515, 0
        %6518 = vmatprep.subr.mxu0 0.0
        %6519 = vmatpush1.msra.mxu0 0.0
        %6520 = vmatprep.subr.mxu0 0.0
        %6521 = vmatpush1.msra.mxu0 0.0
        %6522 = vmatprep.subr.mxu0 0.0
        %6523 = vmatpush1.msra.mxu0 0.0
        %6524 = vmatprep.subr.mxu0 0.0
        %6525 = vmatpush1.msra.mxu0 0.0
        %6526 = vmatprep.subr.mxu0 0.0
        %6527 = vmatpush1.msra.mxu0 0.0
        %6528 = vmatprep.subr.mxu0 0.0
        %6529 = vmatpush1.msra.mxu0 0.0
        %6530 = vmatprep.subr.mxu0 0.0
        %6531 = vmatpush1.msra.mxu0 0.0
        %6532 = vmatprep.subr.mxu0 0.0
        %6533 = vmatpush1.msra.mxu0 0.0
        %6534 = vmatprep.subr.mxu0 0.0
        %6535 = vmatpush1.msra.mxu0 0.0
        %6536 = vmatprep.subr.mxu0 0.0
        %6537 = vmatpush1.msra.mxu0 0.0
        %6538 = vmatprep.subr.mxu0 0.0
        %6539 = vmatpush1.msra.mxu0 0.0
        %6540 = vmatprep.subr.mxu0 0.0
        %6541 = vmatpush1.msra.mxu0 0.0
        %6542 = vmatprep.subr.mxu0 0.0
        %6543 = vmatpush1.msra.mxu0 0.0
        %6544 = vmatprep.subr.mxu0 0.0
        %6545 = vmatpush1.msra.mxu0 0.0
        %6546 = vmatprep.subr.mxu0 0.0
        %6547 = vmatpush1.msra.mxu0 %v6514
        %6548 = vmatprep.subr.mxu0 0.0
        %6549 = vmatpush1.msra.mxu0 %v6513
        %6550 = vmatprep.subr.mxu0 0.0
        %6551 = vmatpush2.msra.mxu0 0.0
        %6552 = vmatprep.subr.mxu0 0.0
        %6553 = vmatpush2.msra.mxu0 0.0
        %6554 = vmatprep.subr.mxu0 0.0
        %6555 = vmatpush2.msra.mxu0 0.0
        %6556 = vmatprep.subr.mxu0 0.0
        %6557 = vmatpush2.msra.mxu0 0.0
        %6558 = vmatprep.subr.mxu0 0.0
        %6559 = vmatpush2.msra.mxu0 0.0
        %6560 = vmatprep.subr.mxu0 0.0
        %6561 = vmatpush2.msra.mxu0 0.0
        %6562 = vmatprep.subr.mxu0 0.0
        %6563 = vmatpush2.msra.mxu0 0.0
        %6564 = vmatprep.subr.mxu0 0.0
        %6565 = vmatpush2.msra.mxu0 0.0
        %6566 = vmatprep.subr.mxu0 0.0
        %6567 = vmatpush2.msra.mxu0 0.0
        %6568 = vmatprep.subr.mxu0 0.0
        %6569 = vmatpush2.msra.mxu0 0.0
        %6570 = vmatprep.subr.mxu0 0.0
        %6571 = vmatpush2.msra.mxu0 0.0
        %6572 = vmatprep.subr.mxu0 0.0
        %6573 = vmatpush2.msra.mxu0 0.0
        %6574 = vmatprep.subr.mxu0 0.0
        %6575 = vmatpush2.msra.mxu0 0.0
        %6576 = vmatprep.subr.mxu0 0.0
        %6577 = vmatpush2.msra.mxu0 0.0
        %6578 = vmatprep.subr.mxu0 0.0
        %6579 = vmatpush2.msra.mxu0 0.0
        %6580 = vmatprep.subr.mxu0 0.0
        %6581 = vmatpush2.msra.mxu0 0.0
        %6582 = vmatprep.mubr.f32.mxu0 0.0
        %6583 = vmatmul.mubr.f32.gmra.mxu0 %v6516
        %v6584 = vpop.f32.mrf.mxu0
        %v6585 = vadd.f32 0.0, %v6584
        %v6586 = vpop.f32.mrf.mxu0
        %6587 = vdwg.mxu0
        %v6588 = vadd.f32 %v6511, %v6585
        %s6589 = scalar_lea.vmem [#allocation3], 8
        %v6590 = vld [vmem:[%s6589] sm:$0x1f]
        %s6591 = scalar_lea.vmem %s5, 80
        %v6592 = vld [vmem:[%s6591] sm:$0xff]
        %v6593 = vld [vmem:[%s6591 + $0x8] sm:$0xff]
        %v6595 = vsel %vm6213, %v6590, 0
        %6597 = vmatprep.subr.mxu0 0.0
        %6598 = vmatpush1.msra.mxu0 0.0
        %6599 = vmatprep.subr.mxu0 0.0
        %6600 = vmatpush1.msra.mxu0 0.0
        %6601 = vmatprep.subr.mxu0 0.0
        %6602 = vmatpush1.msra.mxu0 0.0
        %6603 = vmatprep.subr.mxu0 0.0
        %6604 = vmatpush1.msra.mxu0 0.0
        %6605 = vmatprep.subr.mxu0 0.0
        %6606 = vmatpush1.msra.mxu0 0.0
        %6607 = vmatprep.subr.mxu0 0.0
        %6608 = vmatpush1.msra.mxu0 0.0
        %6609 = vmatprep.subr.mxu0 0.0
        %6610 = vmatpush1.msra.mxu0 0.0
        %6611 = vmatprep.subr.mxu0 0.0
        %6612 = vmatpush1.msra.mxu0 0.0
        %6613 = vmatprep.subr.mxu0 0.0
        %6614 = vmatpush1.msra.mxu0 0.0
        %6615 = vmatprep.subr.mxu0 0.0
        %6616 = vmatpush1.msra.mxu0 0.0
        %6617 = vmatprep.subr.mxu0 0.0
        %6618 = vmatpush1.msra.mxu0 0.0
        %6619 = vmatprep.subr.mxu0 0.0
        %6620 = vmatpush1.msra.mxu0 0.0
        %6621 = vmatprep.subr.mxu0 0.0
        %6622 = vmatpush1.msra.mxu0 0.0
        %6623 = vmatprep.subr.mxu0 0.0
        %6624 = vmatpush1.msra.mxu0 0.0
        %6625 = vmatprep.subr.mxu0 0.0
        %6626 = vmatpush1.msra.mxu0 %v6593
        %6627 = vmatprep.subr.mxu0 0.0
        %6628 = vmatpush1.msra.mxu0 %v6592
        %6629 = vmatprep.subr.mxu0 0.0
        %6630 = vmatpush2.msra.mxu0 0.0
        %6631 = vmatprep.subr.mxu0 0.0
        %6632 = vmatpush2.msra.mxu0 0.0
        %6633 = vmatprep.subr.mxu0 0.0
        %6634 = vmatpush2.msra.mxu0 0.0
        %6635 = vmatprep.subr.mxu0 0.0
        %6636 = vmatpush2.msra.mxu0 0.0
        %6637 = vmatprep.subr.mxu0 0.0
        %6638 = vmatpush2.msra.mxu0 0.0
        %6639 = vmatprep.subr.mxu0 0.0
        %6640 = vmatpush2.msra.mxu0 0.0
        %6641 = vmatprep.subr.mxu0 0.0
        %6642 = vmatpush2.msra.mxu0 0.0
        %6643 = vmatprep.subr.mxu0 0.0
        %6644 = vmatpush2.msra.mxu0 0.0
        %6645 = vmatprep.subr.mxu0 0.0
        %6646 = vmatpush2.msra.mxu0 0.0
        %6647 = vmatprep.subr.mxu0 0.0
        %6648 = vmatpush2.msra.mxu0 0.0
        %6649 = vmatprep.subr.mxu0 0.0
        %6650 = vmatpush2.msra.mxu0 0.0
        %6651 = vmatprep.subr.mxu0 0.0
        %6652 = vmatpush2.msra.mxu0 0.0
        %6653 = vmatprep.subr.mxu0 0.0
        %6654 = vmatpush2.msra.mxu0 0.0
        %6655 = vmatprep.subr.mxu0 0.0
        %6656 = vmatpush2.msra.mxu0 0.0
        %6657 = vmatprep.subr.mxu0 0.0
        %6658 = vmatpush2.msra.mxu0 0.0
        %6659 = vmatprep.subr.mxu0 0.0
        %6660 = vmatpush2.msra.mxu0 0.0
        %6661 = vmatprep.mubr.f32.mxu0 0.0
        %6662 = vmatmul.mubr.f32.gmra.mxu0 %v6595
        %v6663 = vpop.f32.mrf.mxu0
        %v6664 = vadd.f32 0.0, %v6663
        %v6665 = vpop.f32.mrf.mxu0
        %6666 = vdwg.mxu0
        %v6667 = vadd.f32 %v6588, %v6664
        %s6668 = scalar_lea.vmem %s5, 96
        %v6669 = vld [vmem:[%s6668] sm:$0xff]
        %v6670 = vld [vmem:[%s6668 + $0x8] sm:$0xff]
        %v6671 = vrot.slane %v6590, 1
        %v6672 = vsel %vm6213, %v6671, 0
        %6674 = vmatprep.subr.mxu0 0.0
        %6675 = vmatpush1.msra.mxu0 0.0
        %6676 = vmatprep.subr.mxu0 0.0
        %6677 = vmatpush1.msra.mxu0 0.0
        %6678 = vmatprep.subr.mxu0 0.0
        %6679 = vmatpush1.msra.mxu0 0.0
        %6680 = vmatprep.subr.mxu0 0.0
        %6681 = vmatpush1.msra.mxu0 0.0
        %6682 = vmatprep.subr.mxu0 0.0
        %6683 = vmatpush1.msra.mxu0 0.0
        %6684 = vmatprep.subr.mxu0 0.0
        %6685 = vmatpush1.msra.mxu0 0.0
        %6686 = vmatprep.subr.mxu0 0.0
        %6687 = vmatpush1.msra.mxu0 0.0
        %6688 = vmatprep.subr.mxu0 0.0
        %6689 = vmatpush1.msra.mxu0 0.0
        %6690 = vmatprep.subr.mxu0 0.0
        %6691 = vmatpush1.msra.mxu0 0.0
        %6692 = vmatprep.subr.mxu0 0.0
        %6693 = vmatpush1.msra.mxu0 0.0
        %6694 = vmatprep.subr.mxu0 0.0
        %6695 = vmatpush1.msra.mxu0 0.0
        %6696 = vmatprep.subr.mxu0 0.0
        %6697 = vmatpush1.msra.mxu0 0.0
        %6698 = vmatprep.subr.mxu0 0.0
        %6699 = vmatpush1.msra.mxu0 0.0
        %6700 = vmatprep.subr.mxu0 0.0
        %6701 = vmatpush1.msra.mxu0 0.0
        %6702 = vmatprep.subr.mxu0 0.0
        %6703 = vmatpush1.msra.mxu0 %v6670
        %6704 = vmatprep.subr.mxu0 0.0
        %6705 = vmatpush1.msra.mxu0 %v6669
        %6706 = vmatprep.subr.mxu0 0.0
        %6707 = vmatpush2.msra.mxu0 0.0
        %6708 = vmatprep.subr.mxu0 0.0
        %6709 = vmatpush2.msra.mxu0 0.0
        %6710 = vmatprep.subr.mxu0 0.0
        %6711 = vmatpush2.msra.mxu0 0.0
        %6712 = vmatprep.subr.mxu0 0.0
        %6713 = vmatpush2.msra.mxu0 0.0
        %6714 = vmatprep.subr.mxu0 0.0
        %6715 = vmatpush2.msra.mxu0 0.0
        %6716 = vmatprep.subr.mxu0 0.0
        %6717 = vmatpush2.msra.mxu0 0.0
        %6718 = vmatprep.subr.mxu0 0.0
        %6719 = vmatpush2.msra.mxu0 0.0
        %6720 = vmatprep.subr.mxu0 0.0
        %6721 = vmatpush2.msra.mxu0 0.0
        %6722 = vmatprep.subr.mxu0 0.0
        %6723 = vmatpush2.msra.mxu0 0.0
        %6724 = vmatprep.subr.mxu0 0.0
        %6725 = vmatpush2.msra.mxu0 0.0
        %6726 = vmatprep.subr.mxu0 0.0
        %6727 = vmatpush2.msra.mxu0 0.0
        %6728 = vmatprep.subr.mxu0 0.0
        %6729 = vmatpush2.msra.mxu0 0.0
        %6730 = vmatprep.subr.mxu0 0.0
        %6731 = vmatpush2.msra.mxu0 0.0
        %6732 = vmatprep.subr.mxu0 0.0
        %6733 = vmatpush2.msra.mxu0 0.0
        %6734 = vmatprep.subr.mxu0 0.0
        %6735 = vmatpush2.msra.mxu0 0.0
        %6736 = vmatprep.subr.mxu0 0.0
        %6737 = vmatpush2.msra.mxu0 0.0
        %6738 = vmatprep.mubr.f32.mxu0 0.0
        %6739 = vmatmul.mubr.f32.gmra.mxu0 %v6672
        %v6740 = vpop.f32.mrf.mxu0
        %v6741 = vadd.f32 0.0, %v6740
        %v6742 = vpop.f32.mrf.mxu0
        %6743 = vdwg.mxu0
        %v6744 = vadd.f32 %v6667, %v6741
        %s6745 = scalar_lea.vmem %s5, 112
        %v6746 = vld [vmem:[%s6745] sm:$0xff]
        %v6747 = vld [vmem:[%s6745 + $0x8] sm:$0xff]
        %v6748 = vrot.slane %v6590, 2
        %v6749 = vsel %vm6213, %v6748, 0
        %6751 = vmatprep.subr.mxu0 0.0
        %6752 = vmatpush1.msra.mxu0 0.0
        %6753 = vmatprep.subr.mxu0 0.0
        %6754 = vmatpush1.msra.mxu0 0.0
        %6755 = vmatprep.subr.mxu0 0.0
        %6756 = vmatpush1.msra.mxu0 0.0
        %6757 = vmatprep.subr.mxu0 0.0
        %6758 = vmatpush1.msra.mxu0 0.0
        %6759 = vmatprep.subr.mxu0 0.0
        %6760 = vmatpush1.msra.mxu0 0.0
        %6761 = vmatprep.subr.mxu0 0.0
        %6762 = vmatpush1.msra.mxu0 0.0
        %6763 = vmatprep.subr.mxu0 0.0
        %6764 = vmatpush1.msra.mxu0 0.0
        %6765 = vmatprep.subr.mxu0 0.0
        %6766 = vmatpush1.msra.mxu0 0.0
        %6767 = vmatprep.subr.mxu0 0.0
        %6768 = vmatpush1.msra.mxu0 0.0
        %6769 = vmatprep.subr.mxu0 0.0
        %6770 = vmatpush1.msra.mxu0 0.0
        %6771 = vmatprep.subr.mxu0 0.0
        %6772 = vmatpush1.msra.mxu0 0.0
        %6773 = vmatprep.subr.mxu0 0.0
        %6774 = vmatpush1.msra.mxu0 0.0
        %6775 = vmatprep.subr.mxu0 0.0
        %6776 = vmatpush1.msra.mxu0 0.0
        %6777 = vmatprep.subr.mxu0 0.0
        %6778 = vmatpush1.msra.mxu0 0.0
        %6779 = vmatprep.subr.mxu0 0.0
        %6780 = vmatpush1.msra.mxu0 %v6747
        %6781 = vmatprep.subr.mxu0 0.0
        %6782 = vmatpush1.msra.mxu0 %v6746
        %6783 = vmatprep.subr.mxu0 0.0
        %6784 = vmatpush2.msra.mxu0 0.0
        %6785 = vmatprep.subr.mxu0 0.0
        %6786 = vmatpush2.msra.mxu0 0.0
        %6787 = vmatprep.subr.mxu0 0.0
        %6788 = vmatpush2.msra.mxu0 0.0
        %6789 = vmatprep.subr.mxu0 0.0
        %6790 = vmatpush2.msra.mxu0 0.0
        %6791 = vmatprep.subr.mxu0 0.0
        %6792 = vmatpush2.msra.mxu0 0.0
        %6793 = vmatprep.subr.mxu0 0.0
        %6794 = vmatpush2.msra.mxu0 0.0
        %6795 = vmatprep.subr.mxu0 0.0
        %6796 = vmatpush2.msra.mxu0 0.0
        %6797 = vmatprep.subr.mxu0 0.0
        %6798 = vmatpush2.msra.mxu0 0.0
        %6799 = vmatprep.subr.mxu0 0.0
        %6800 = vmatpush2.msra.mxu0 0.0
        %6801 = vmatprep.subr.mxu0 0.0
        %6802 = vmatpush2.msra.mxu0 0.0
        %6803 = vmatprep.subr.mxu0 0.0
        %6804 = vmatpush2.msra.mxu0 0.0
        %6805 = vmatprep.subr.mxu0 0.0
        %6806 = vmatpush2.msra.mxu0 0.0
        %6807 = vmatprep.subr.mxu0 0.0
        %6808 = vmatpush2.msra.mxu0 0.0
        %6809 = vmatprep.subr.mxu0 0.0
        %6810 = vmatpush2.msra.mxu0 0.0
        %6811 = vmatprep.subr.mxu0 0.0
        %6812 = vmatpush2.msra.mxu0 0.0
        %6813 = vmatprep.subr.mxu0 0.0
        %6814 = vmatpush2.msra.mxu0 0.0
        %6815 = vmatprep.mubr.f32.mxu0 0.0
        %6816 = vmatmul.mubr.f32.gmra.mxu0 %v6749
        %v6817 = vpop.f32.mrf.mxu0
        %v6818 = vadd.f32 0.0, %v6817
        %v6819 = vpop.f32.mrf.mxu0
        %6820 = vdwg.mxu0
        %v6821 = vadd.f32 %v6744, %v6818
        %s6822 = scalar_lea.vmem %s5, 128
        %v6823 = vld [vmem:[%s6822] sm:$0xff]
        %v6824 = vld [vmem:[%s6822 + $0x8] sm:$0xff]
        %v6825 = vrot.slane %v6590, 3
        %v6826 = vsel %vm6213, %v6825, 0
        %6828 = vmatprep.subr.mxu0 0.0
        %6829 = vmatpush1.msra.mxu0 0.0
        %6830 = vmatprep.subr.mxu0 0.0
        %6831 = vmatpush1.msra.mxu0 0.0
        %6832 = vmatprep.subr.mxu0 0.0
        %6833 = vmatpush1.msra.mxu0 0.0
        %6834 = vmatprep.subr.mxu0 0.0
        %6835 = vmatpush1.msra.mxu0 0.0
        %6836 = vmatprep.subr.mxu0 0.0
        %6837 = vmatpush1.msra.mxu0 0.0
        %6838 = vmatprep.subr.mxu0 0.0
        %6839 = vmatpush1.msra.mxu0 0.0
        %6840 = vmatprep.subr.mxu0 0.0
        %6841 = vmatpush1.msra.mxu0 0.0
        %6842 = vmatprep.subr.mxu0 0.0
        %6843 = vmatpush1.msra.mxu0 0.0
        %6844 = vmatprep.subr.mxu0 0.0
        %6845 = vmatpush1.msra.mxu0 0.0
        %6846 = vmatprep.subr.mxu0 0.0
        %6847 = vmatpush1.msra.mxu0 0.0
        %6848 = vmatprep.subr.mxu0 0.0
        %6849 = vmatpush1.msra.mxu0 0.0
        %6850 = vmatprep.subr.mxu0 0.0
        %6851 = vmatpush1.msra.mxu0 0.0
        %6852 = vmatprep.subr.mxu0 0.0
        %6853 = vmatpush1.msra.mxu0 0.0
        %6854 = vmatprep.subr.mxu0 0.0
        %6855 = vmatpush1.msra.mxu0 0.0
        %6856 = vmatprep.subr.mxu0 0.0
        %6857 = vmatpush1.msra.mxu0 %v6824
        %6858 = vmatprep.subr.mxu0 0.0
        %6859 = vmatpush1.msra.mxu0 %v6823
        %6860 = vmatprep.subr.mxu0 0.0
        %6861 = vmatpush2.msra.mxu0 0.0
        %6862 = vmatprep.subr.mxu0 0.0
        %6863 = vmatpush2.msra.mxu0 0.0
        %6864 = vmatprep.subr.mxu0 0.0
        %6865 = vmatpush2.msra.mxu0 0.0
        %6866 = vmatprep.subr.mxu0 0.0
        %6867 = vmatpush2.msra.mxu0 0.0
        %6868 = vmatprep.subr.mxu0 0.0
        %6869 = vmatpush2.msra.mxu0 0.0
        %6870 = vmatprep.subr.mxu0 0.0
        %6871 = vmatpush2.msra.mxu0 0.0
        %6872 = vmatprep.subr.mxu0 0.0
        %6873 = vmatpush2.msra.mxu0 0.0
        %6874 = vmatprep.subr.mxu0 0.0
        %6875 = vmatpush2.msra.mxu0 0.0
        %6876 = vmatprep.subr.mxu0 0.0
        %6877 = vmatpush2.msra.mxu0 0.0
        %6878 = vmatprep.subr.mxu0 0.0
        %6879 = vmatpush2.msra.mxu0 0.0
        %6880 = vmatprep.subr.mxu0 0.0
        %6881 = vmatpush2.msra.mxu0 0.0
        %6882 = vmatprep.subr.mxu0 0.0
        %6883 = vmatpush2.msra.mxu0 0.0
        %6884 = vmatprep.subr.mxu0 0.0
        %6885 = vmatpush2.msra.mxu0 0.0
        %6886 = vmatprep.subr.mxu0 0.0
        %6887 = vmatpush2.msra.mxu0 0.0
        %6888 = vmatprep.subr.mxu0 0.0
        %6889 = vmatpush2.msra.mxu0 0.0
        %6890 = vmatprep.subr.mxu0 0.0
        %6891 = vmatpush2.msra.mxu0 0.0
        %6892 = vmatprep.mubr.f32.mxu0 0.0
        %6893 = vmatmul.mubr.f32.gmra.mxu0 %v6826
        %v6894 = vpop.f32.mrf.mxu0
        %v6895 = vadd.f32 0.0, %v6894
        %v6896 = vpop.f32.mrf.mxu0
        %6897 = vdwg.mxu0
        %v6898 = vadd.f32 %v6821, %v6895
        %s6899 = scalar_lea.vmem %s5, 144
        %v6900 = vld [vmem:[%s6899] sm:$0xff]
        %v6901 = vld [vmem:[%s6899 + $0x8] sm:$0xff]
        %v6902 = vrot.slane %v6590, 4
        %v6903 = vsel %vm6213, %v6902, 0
        %6905 = vmatprep.subr.mxu0 0.0
        %6906 = vmatpush1.msra.mxu0 0.0
        %6907 = vmatprep.subr.mxu0 0.0
        %6908 = vmatpush1.msra.mxu0 0.0
        %6909 = vmatprep.subr.mxu0 0.0
        %6910 = vmatpush1.msra.mxu0 0.0
        %6911 = vmatprep.subr.mxu0 0.0
        %6912 = vmatpush1.msra.mxu0 0.0
        %6913 = vmatprep.subr.mxu0 0.0
        %6914 = vmatpush1.msra.mxu0 0.0
        %6915 = vmatprep.subr.mxu0 0.0
        %6916 = vmatpush1.msra.mxu0 0.0
        %6917 = vmatprep.subr.mxu0 0.0
        %6918 = vmatpush1.msra.mxu0 0.0
        %6919 = vmatprep.subr.mxu0 0.0
        %6920 = vmatpush1.msra.mxu0 0.0
        %6921 = vmatprep.subr.mxu0 0.0
        %6922 = vmatpush1.msra.mxu0 0.0
        %6923 = vmatprep.subr.mxu0 0.0
        %6924 = vmatpush1.msra.mxu0 0.0
        %6925 = vmatprep.subr.mxu0 0.0
        %6926 = vmatpush1.msra.mxu0 0.0
        %6927 = vmatprep.subr.mxu0 0.0
        %6928 = vmatpush1.msra.mxu0 0.0
        %6929 = vmatprep.subr.mxu0 0.0
        %6930 = vmatpush1.msra.mxu0 0.0
        %6931 = vmatprep.subr.mxu0 0.0
        %6932 = vmatpush1.msra.mxu0 0.0
        %6933 = vmatprep.subr.mxu0 0.0
        %6934 = vmatpush1.msra.mxu0 %v6901
        %6935 = vmatprep.subr.mxu0 0.0
        %6936 = vmatpush1.msra.mxu0 %v6900
        %6937 = vmatprep.subr.mxu0 0.0
        %6938 = vmatpush2.msra.mxu0 0.0
        %6939 = vmatprep.subr.mxu0 0.0
        %6940 = vmatpush2.msra.mxu0 0.0
        %6941 = vmatprep.subr.mxu0 0.0
        %6942 = vmatpush2.msra.mxu0 0.0
        %6943 = vmatprep.subr.mxu0 0.0
        %6944 = vmatpush2.msra.mxu0 0.0
        %6945 = vmatprep.subr.mxu0 0.0
        %6946 = vmatpush2.msra.mxu0 0.0
        %6947 = vmatprep.subr.mxu0 0.0
        %6948 = vmatpush2.msra.mxu0 0.0
        %6949 = vmatprep.subr.mxu0 0.0
        %6950 = vmatpush2.msra.mxu0 0.0
        %6951 = vmatprep.subr.mxu0 0.0
        %6952 = vmatpush2.msra.mxu0 0.0
        %6953 = vmatprep.subr.mxu0 0.0
        %6954 = vmatpush2.msra.mxu0 0.0
        %6955 = vmatprep.subr.mxu0 0.0
        %6956 = vmatpush2.msra.mxu0 0.0
        %6957 = vmatprep.subr.mxu0 0.0
        %6958 = vmatpush2.msra.mxu0 0.0
        %6959 = vmatprep.subr.mxu0 0.0
        %6960 = vmatpush2.msra.mxu0 0.0
        %6961 = vmatprep.subr.mxu0 0.0
        %6962 = vmatpush2.msra.mxu0 0.0
        %6963 = vmatprep.subr.mxu0 0.0
        %6964 = vmatpush2.msra.mxu0 0.0
        %6965 = vmatprep.subr.mxu0 0.0
        %6966 = vmatpush2.msra.mxu0 0.0
        %6967 = vmatprep.subr.mxu0 0.0
        %6968 = vmatpush2.msra.mxu0 0.0
        %6969 = vmatprep.mubr.f32.mxu0 0.0
        %6970 = vmatmul.mubr.f32.gmra.mxu0 %v6903
        %v6971 = vpop.f32.mrf.mxu0
        %v6972 = vadd.f32 0.0, %v6971
        %v6973 = vpop.f32.mrf.mxu0
        %6974 = vdwg.mxu0
        %v6975 = vadd.f32 %v6898, %v6972
        %s6976 = scalar_lea.vmem [#allocation3], 16
        %v6977 = vld [vmem:[%s6976] sm:$0x1f]
        %s6978 = scalar_lea.vmem %s5, 160
        %v6979 = vld [vmem:[%s6978] sm:$0xff]
        %v6980 = vld [vmem:[%s6978 + $0x8] sm:$0xff]
        %v6982 = vsel %vm6213, %v6977, 0
        %6984 = vmatprep.subr.mxu0 0.0
        %6985 = vmatpush1.msra.mxu0 0.0
        %6986 = vmatprep.subr.mxu0 0.0
        %6987 = vmatpush1.msra.mxu0 0.0
        %6988 = vmatprep.subr.mxu0 0.0
        %6989 = vmatpush1.msra.mxu0 0.0
        %6990 = vmatprep.subr.mxu0 0.0
        %6991 = vmatpush1.msra.mxu0 0.0
        %6992 = vmatprep.subr.mxu0 0.0
        %6993 = vmatpush1.msra.mxu0 0.0
        %6994 = vmatprep.subr.mxu0 0.0
        %6995 = vmatpush1.msra.mxu0 0.0
        %6996 = vmatprep.subr.mxu0 0.0
        %6997 = vmatpush1.msra.mxu0 0.0
        %6998 = vmatprep.subr.mxu0 0.0
        %6999 = vmatpush1.msra.mxu0 0.0
        %7000 = vmatprep.subr.mxu0 0.0
        %7001 = vmatpush1.msra.mxu0 0.0
        %7002 = vmatprep.subr.mxu0 0.0
        %7003 = vmatpush1.msra.mxu0 0.0
        %7004 = vmatprep.subr.mxu0 0.0
        %7005 = vmatpush1.msra.mxu0 0.0
        %7006 = vmatprep.subr.mxu0 0.0
        %7007 = vmatpush1.msra.mxu0 0.0
        %7008 = vmatprep.subr.mxu0 0.0
        %7009 = vmatpush1.msra.mxu0 0.0
        %7010 = vmatprep.subr.mxu0 0.0
        %7011 = vmatpush1.msra.mxu0 0.0
        %7012 = vmatprep.subr.mxu0 0.0
        %7013 = vmatpush1.msra.mxu0 %v6980
        %7014 = vmatprep.subr.mxu0 0.0
        %7015 = vmatpush1.msra.mxu0 %v6979
        %7016 = vmatprep.subr.mxu0 0.0
        %7017 = vmatpush2.msra.mxu0 0.0
        %7018 = vmatprep.subr.mxu0 0.0
        %7019 = vmatpush2.msra.mxu0 0.0
        %7020 = vmatprep.subr.mxu0 0.0
        %7021 = vmatpush2.msra.mxu0 0.0
        %7022 = vmatprep.subr.mxu0 0.0
        %7023 = vmatpush2.msra.mxu0 0.0
        %7024 = vmatprep.subr.mxu0 0.0
        %7025 = vmatpush2.msra.mxu0 0.0
        %7026 = vmatprep.subr.mxu0 0.0
        %7027 = vmatpush2.msra.mxu0 0.0
        %7028 = vmatprep.subr.mxu0 0.0
        %7029 = vmatpush2.msra.mxu0 0.0
        %7030 = vmatprep.subr.mxu0 0.0
        %7031 = vmatpush2.msra.mxu0 0.0
        %7032 = vmatprep.subr.mxu0 0.0
        %7033 = vmatpush2.msra.mxu0 0.0
        %7034 = vmatprep.subr.mxu0 0.0
        %7035 = vmatpush2.msra.mxu0 0.0
        %7036 = vmatprep.subr.mxu0 0.0
        %7037 = vmatpush2.msra.mxu0 0.0
        %7038 = vmatprep.subr.mxu0 0.0
        %7039 = vmatpush2.msra.mxu0 0.0
        %7040 = vmatprep.subr.mxu0 0.0
        %7041 = vmatpush2.msra.mxu0 0.0
        %7042 = vmatprep.subr.mxu0 0.0
        %7043 = vmatpush2.msra.mxu0 0.0
        %7044 = vmatprep.subr.mxu0 0.0
        %7045 = vmatpush2.msra.mxu0 0.0
        %7046 = vmatprep.subr.mxu0 0.0
        %7047 = vmatpush2.msra.mxu0 0.0
        %7048 = vmatprep.mubr.f32.mxu0 0.0
        %7049 = vmatmul.mubr.f32.gmra.mxu0 %v6982
        %v7050 = vpop.f32.mrf.mxu0
        %v7051 = vadd.f32 0.0, %v7050
        %v7052 = vpop.f32.mrf.mxu0
        %7053 = vdwg.mxu0
        %v7054 = vadd.f32 %v6975, %v7051
        %s7055 = scalar_lea.vmem %s5, 176
        %v7056 = vld [vmem:[%s7055] sm:$0xff]
        %v7057 = vld [vmem:[%s7055 + $0x8] sm:$0xff]
        %v7058 = vrot.slane %v6977, 1
        %v7059 = vsel %vm6213, %v7058, 0
        %7061 = vmatprep.subr.mxu0 0.0
        %7062 = vmatpush1.msra.mxu0 0.0
        %7063 = vmatprep.subr.mxu0 0.0
        %7064 = vmatpush1.msra.mxu0 0.0
        %7065 = vmatprep.subr.mxu0 0.0
        %7066 = vmatpush1.msra.mxu0 0.0
        %7067 = vmatprep.subr.mxu0 0.0
        %7068 = vmatpush1.msra.mxu0 0.0
        %7069 = vmatprep.subr.mxu0 0.0
        %7070 = vmatpush1.msra.mxu0 0.0
        %7071 = vmatprep.subr.mxu0 0.0
        %7072 = vmatpush1.msra.mxu0 0.0
        %7073 = vmatprep.subr.mxu0 0.0
        %7074 = vmatpush1.msra.mxu0 0.0
        %7075 = vmatprep.subr.mxu0 0.0
        %7076 = vmatpush1.msra.mxu0 0.0
        %7077 = vmatprep.subr.mxu0 0.0
        %7078 = vmatpush1.msra.mxu0 0.0
        %7079 = vmatprep.subr.mxu0 0.0
        %7080 = vmatpush1.msra.mxu0 0.0
        %7081 = vmatprep.subr.mxu0 0.0
        %7082 = vmatpush1.msra.mxu0 0.0
        %7083 = vmatprep.subr.mxu0 0.0
        %7084 = vmatpush1.msra.mxu0 0.0
        %7085 = vmatprep.subr.mxu0 0.0
        %7086 = vmatpush1.msra.mxu0 0.0
        %7087 = vmatprep.subr.mxu0 0.0
        %7088 = vmatpush1.msra.mxu0 0.0
        %7089 = vmatprep.subr.mxu0 0.0
        %7090 = vmatpush1.msra.mxu0 %v7057
        %7091 = vmatprep.subr.mxu0 0.0
        %7092 = vmatpush1.msra.mxu0 %v7056
        %7093 = vmatprep.subr.mxu0 0.0
        %7094 = vmatpush2.msra.mxu0 0.0
        %7095 = vmatprep.subr.mxu0 0.0
        %7096 = vmatpush2.msra.mxu0 0.0
        %7097 = vmatprep.subr.mxu0 0.0
        %7098 = vmatpush2.msra.mxu0 0.0
        %7099 = vmatprep.subr.mxu0 0.0
        %7100 = vmatpush2.msra.mxu0 0.0
        %7101 = vmatprep.subr.mxu0 0.0
        %7102 = vmatpush2.msra.mxu0 0.0
        %7103 = vmatprep.subr.mxu0 0.0
        %7104 = vmatpush2.msra.mxu0 0.0
        %7105 = vmatprep.subr.mxu0 0.0
        %7106 = vmatpush2.msra.mxu0 0.0
        %7107 = vmatprep.subr.mxu0 0.0
        %7108 = vmatpush2.msra.mxu0 0.0
        %7109 = vmatprep.subr.mxu0 0.0
        %7110 = vmatpush2.msra.mxu0 0.0
        %7111 = vmatprep.subr.mxu0 0.0
        %7112 = vmatpush2.msra.mxu0 0.0
        %7113 = vmatprep.subr.mxu0 0.0
        %7114 = vmatpush2.msra.mxu0 0.0
        %7115 = vmatprep.subr.mxu0 0.0
        %7116 = vmatpush2.msra.mxu0 0.0
        %7117 = vmatprep.subr.mxu0 0.0
        %7118 = vmatpush2.msra.mxu0 0.0
        %7119 = vmatprep.subr.mxu0 0.0
        %7120 = vmatpush2.msra.mxu0 0.0
        %7121 = vmatprep.subr.mxu0 0.0
        %7122 = vmatpush2.msra.mxu0 0.0
        %7123 = vmatprep.subr.mxu0 0.0
        %7124 = vmatpush2.msra.mxu0 0.0
        %7125 = vmatprep.mubr.f32.mxu0 0.0
        %7126 = vmatmul.mubr.f32.gmra.mxu0 %v7059
        %v7127 = vpop.f32.mrf.mxu0
        %v7128 = vadd.f32 0.0, %v7127
        %v7129 = vpop.f32.mrf.mxu0
        %7130 = vdwg.mxu0
        %v7131 = vadd.f32 %v7054, %v7128
        %s7132 = scalar_lea.vmem %s5, 192
        %v7133 = vld [vmem:[%s7132] sm:$0xff]
        %v7134 = vld [vmem:[%s7132 + $0x8] sm:$0xff]
        %v7135 = vrot.slane %v6977, 2
        %v7136 = vsel %vm6213, %v7135, 0
        %7138 = vmatprep.subr.mxu0 0.0
        %7139 = vmatpush1.msra.mxu0 0.0
        %7140 = vmatprep.subr.mxu0 0.0
        %7141 = vmatpush1.msra.mxu0 0.0
        %7142 = vmatprep.subr.mxu0 0.0
        %7143 = vmatpush1.msra.mxu0 0.0
        %7144 = vmatprep.subr.mxu0 0.0
        %7145 = vmatpush1.msra.mxu0 0.0
        %7146 = vmatprep.subr.mxu0 0.0
        %7147 = vmatpush1.msra.mxu0 0.0
        %7148 = vmatprep.subr.mxu0 0.0
        %7149 = vmatpush1.msra.mxu0 0.0
        %7150 = vmatprep.subr.mxu0 0.0
        %7151 = vmatpush1.msra.mxu0 0.0
        %7152 = vmatprep.subr.mxu0 0.0
        %7153 = vmatpush1.msra.mxu0 0.0
        %7154 = vmatprep.subr.mxu0 0.0
        %7155 = vmatpush1.msra.mxu0 0.0
        %7156 = vmatprep.subr.mxu0 0.0
        %7157 = vmatpush1.msra.mxu0 0.0
        %7158 = vmatprep.subr.mxu0 0.0
        %7159 = vmatpush1.msra.mxu0 0.0
        %7160 = vmatprep.subr.mxu0 0.0
        %7161 = vmatpush1.msra.mxu0 0.0
        %7162 = vmatprep.subr.mxu0 0.0
        %7163 = vmatpush1.msra.mxu0 0.0
        %7164 = vmatprep.subr.mxu0 0.0
        %7165 = vmatpush1.msra.mxu0 0.0
        %7166 = vmatprep.subr.mxu0 0.0
        %7167 = vmatpush1.msra.mxu0 %v7134
        %7168 = vmatprep.subr.mxu0 0.0
        %7169 = vmatpush1.msra.mxu0 %v7133
        %7170 = vmatprep.subr.mxu0 0.0
        %7171 = vmatpush2.msra.mxu0 0.0
        %7172 = vmatprep.subr.mxu0 0.0
        %7173 = vmatpush2.msra.mxu0 0.0
        %7174 = vmatprep.subr.mxu0 0.0
        %7175 = vmatpush2.msra.mxu0 0.0
        %7176 = vmatprep.subr.mxu0 0.0
        %7177 = vmatpush2.msra.mxu0 0.0
        %7178 = vmatprep.subr.mxu0 0.0
        %7179 = vmatpush2.msra.mxu0 0.0
        %7180 = vmatprep.subr.mxu0 0.0
        %7181 = vmatpush2.msra.mxu0 0.0
        %7182 = vmatprep.subr.mxu0 0.0
        %7183 = vmatpush2.msra.mxu0 0.0
        %7184 = vmatprep.subr.mxu0 0.0
        %7185 = vmatpush2.msra.mxu0 0.0
        %7186 = vmatprep.subr.mxu0 0.0
        %7187 = vmatpush2.msra.mxu0 0.0
        %7188 = vmatprep.subr.mxu0 0.0
        %7189 = vmatpush2.msra.mxu0 0.0
        %7190 = vmatprep.subr.mxu0 0.0
        %7191 = vmatpush2.msra.mxu0 0.0
        %7192 = vmatprep.subr.mxu0 0.0
        %7193 = vmatpush2.msra.mxu0 0.0
        %7194 = vmatprep.subr.mxu0 0.0
        %7195 = vmatpush2.msra.mxu0 0.0
        %7196 = vmatprep.subr.mxu0 0.0
        %7197 = vmatpush2.msra.mxu0 0.0
        %7198 = vmatprep.subr.mxu0 0.0
        %7199 = vmatpush2.msra.mxu0 0.0
        %7200 = vmatprep.subr.mxu0 0.0
        %7201 = vmatpush2.msra.mxu0 0.0
        %7202 = vmatprep.mubr.f32.mxu0 0.0
        %7203 = vmatmul.mubr.f32.gmra.mxu0 %v7136
        %v7204 = vpop.f32.mrf.mxu0
        %v7205 = vadd.f32 0.0, %v7204
        %v7206 = vpop.f32.mrf.mxu0
        %7207 = vdwg.mxu0
        %v7208 = vadd.f32 %v7131, %v7205
        %s7209 = scalar_lea.vmem %s5, 208
        %v7210 = vld [vmem:[%s7209] sm:$0xff]
        %v7211 = vld [vmem:[%s7209 + $0x8] sm:$0xff]
        %v7212 = vrot.slane %v6977, 3
        %v7213 = vsel %vm6213, %v7212, 0
        %7215 = vmatprep.subr.mxu0 0.0
        %7216 = vmatpush1.msra.mxu0 0.0
        %7217 = vmatprep.subr.mxu0 0.0
        %7218 = vmatpush1.msra.mxu0 0.0
        %7219 = vmatprep.subr.mxu0 0.0
        %7220 = vmatpush1.msra.mxu0 0.0
        %7221 = vmatprep.subr.mxu0 0.0
        %7222 = vmatpush1.msra.mxu0 0.0
        %7223 = vmatprep.subr.mxu0 0.0
        %7224 = vmatpush1.msra.mxu0 0.0
        %7225 = vmatprep.subr.mxu0 0.0
        %7226 = vmatpush1.msra.mxu0 0.0
        %7227 = vmatprep.subr.mxu0 0.0
        %7228 = vmatpush1.msra.mxu0 0.0
        %7229 = vmatprep.subr.mxu0 0.0
        %7230 = vmatpush1.msra.mxu0 0.0
        %7231 = vmatprep.subr.mxu0 0.0
        %7232 = vmatpush1.msra.mxu0 0.0
        %7233 = vmatprep.subr.mxu0 0.0
        %7234 = vmatpush1.msra.mxu0 0.0
        %7235 = vmatprep.subr.mxu0 0.0
        %7236 = vmatpush1.msra.mxu0 0.0
        %7237 = vmatprep.subr.mxu0 0.0
        %7238 = vmatpush1.msra.mxu0 0.0
        %7239 = vmatprep.subr.mxu0 0.0
        %7240 = vmatpush1.msra.mxu0 0.0
        %7241 = vmatprep.subr.mxu0 0.0
        %7242 = vmatpush1.msra.mxu0 0.0
        %7243 = vmatprep.subr.mxu0 0.0
        %7244 = vmatpush1.msra.mxu0 %v7211
        %7245 = vmatprep.subr.mxu0 0.0
        %7246 = vmatpush1.msra.mxu0 %v7210
        %7247 = vmatprep.subr.mxu0 0.0
        %7248 = vmatpush2.msra.mxu0 0.0
        %7249 = vmatprep.subr.mxu0 0.0
        %7250 = vmatpush2.msra.mxu0 0.0
        %7251 = vmatprep.subr.mxu0 0.0
        %7252 = vmatpush2.msra.mxu0 0.0
        %7253 = vmatprep.subr.mxu0 0.0
        %7254 = vmatpush2.msra.mxu0 0.0
        %7255 = vmatprep.subr.mxu0 0.0
        %7256 = vmatpush2.msra.mxu0 0.0
        %7257 = vmatprep.subr.mxu0 0.0
        %7258 = vmatpush2.msra.mxu0 0.0
        %7259 = vmatprep.subr.mxu0 0.0
        %7260 = vmatpush2.msra.mxu0 0.0
        %7261 = vmatprep.subr.mxu0 0.0
        %7262 = vmatpush2.msra.mxu0 0.0
        %7263 = vmatprep.subr.mxu0 0.0
        %7264 = vmatpush2.msra.mxu0 0.0
        %7265 = vmatprep.subr.mxu0 0.0
        %7266 = vmatpush2.msra.mxu0 0.0
        %7267 = vmatprep.subr.mxu0 0.0
        %7268 = vmatpush2.msra.mxu0 0.0
        %7269 = vmatprep.subr.mxu0 0.0
        %7270 = vmatpush2.msra.mxu0 0.0
        %7271 = vmatprep.subr.mxu0 0.0
        %7272 = vmatpush2.msra.mxu0 0.0
        %7273 = vmatprep.subr.mxu0 0.0
        %7274 = vmatpush2.msra.mxu0 0.0
        %7275 = vmatprep.subr.mxu0 0.0
        %7276 = vmatpush2.msra.mxu0 0.0
        %7277 = vmatprep.subr.mxu0 0.0
        %7278 = vmatpush2.msra.mxu0 0.0
        %7279 = vmatprep.mubr.f32.mxu0 0.0
        %7280 = vmatmul.mubr.f32.gmra.mxu0 %v7213
        %v7281 = vpop.f32.mrf.mxu0
        %v7282 = vadd.f32 0.0, %v7281
        %v7283 = vpop.f32.mrf.mxu0
        %7284 = vdwg.mxu0
        %v7285 = vadd.f32 %v7208, %v7282
        %s7286 = scalar_lea.vmem %s5, 224
        %v7287 = vld [vmem:[%s7286] sm:$0xff]
        %v7288 = vld [vmem:[%s7286 + $0x8] sm:$0xff]
        %v7289 = vrot.slane %v6977, 4
        %v7290 = vsel %vm6213, %v7289, 0
        %7292 = vmatprep.subr.mxu0 0.0
        %7293 = vmatpush1.msra.mxu0 0.0
        %7294 = vmatprep.subr.mxu0 0.0
        %7295 = vmatpush1.msra.mxu0 0.0
        %7296 = vmatprep.subr.mxu0 0.0
        %7297 = vmatpush1.msra.mxu0 0.0
        %7298 = vmatprep.subr.mxu0 0.0
        %7299 = vmatpush1.msra.mxu0 0.0
        %7300 = vmatprep.subr.mxu0 0.0
        %7301 = vmatpush1.msra.mxu0 0.0
        %7302 = vmatprep.subr.mxu0 0.0
        %7303 = vmatpush1.msra.mxu0 0.0
        %7304 = vmatprep.subr.mxu0 0.0
        %7305 = vmatpush1.msra.mxu0 0.0
        %7306 = vmatprep.subr.mxu0 0.0
        %7307 = vmatpush1.msra.mxu0 0.0
        %7308 = vmatprep.subr.mxu0 0.0
        %7309 = vmatpush1.msra.mxu0 0.0
        %7310 = vmatprep.subr.mxu0 0.0
        %7311 = vmatpush1.msra.mxu0 0.0
        %7312 = vmatprep.subr.mxu0 0.0
        %7313 = vmatpush1.msra.mxu0 0.0
        %7314 = vmatprep.subr.mxu0 0.0
        %7315 = vmatpush1.msra.mxu0 0.0
        %7316 = vmatprep.subr.mxu0 0.0
        %7317 = vmatpush1.msra.mxu0 0.0
        %7318 = vmatprep.subr.mxu0 0.0
        %7319 = vmatpush1.msra.mxu0 0.0
        %7320 = vmatprep.subr.mxu0 0.0
        %7321 = vmatpush1.msra.mxu0 %v7288
        %7322 = vmatprep.subr.mxu0 0.0
        %7323 = vmatpush1.msra.mxu0 %v7287
        %7324 = vmatprep.subr.mxu0 0.0
        %7325 = vmatpush2.msra.mxu0 0.0
        %7326 = vmatprep.subr.mxu0 0.0
        %7327 = vmatpush2.msra.mxu0 0.0
        %7328 = vmatprep.subr.mxu0 0.0
        %7329 = vmatpush2.msra.mxu0 0.0
        %7330 = vmatprep.subr.mxu0 0.0
        %7331 = vmatpush2.msra.mxu0 0.0
        %7332 = vmatprep.subr.mxu0 0.0
        %7333 = vmatpush2.msra.mxu0 0.0
        %7334 = vmatprep.subr.mxu0 0.0
        %7335 = vmatpush2.msra.mxu0 0.0
        %7336 = vmatprep.subr.mxu0 0.0
        %7337 = vmatpush2.msra.mxu0 0.0
        %7338 = vmatprep.subr.mxu0 0.0
        %7339 = vmatpush2.msra.mxu0 0.0
        %7340 = vmatprep.subr.mxu0 0.0
        %7341 = vmatpush2.msra.mxu0 0.0
        %7342 = vmatprep.subr.mxu0 0.0
        %7343 = vmatpush2.msra.mxu0 0.0
        %7344 = vmatprep.subr.mxu0 0.0
        %7345 = vmatpush2.msra.mxu0 0.0
        %7346 = vmatprep.subr.mxu0 0.0
        %7347 = vmatpush2.msra.mxu0 0.0
        %7348 = vmatprep.subr.mxu0 0.0
        %7349 = vmatpush2.msra.mxu0 0.0
        %7350 = vmatprep.subr.mxu0 0.0
        %7351 = vmatpush2.msra.mxu0 0.0
        %7352 = vmatprep.subr.mxu0 0.0
        %7353 = vmatpush2.msra.mxu0 0.0
        %7354 = vmatprep.subr.mxu0 0.0
        %7355 = vmatpush2.msra.mxu0 0.0
        %7356 = vmatprep.mubr.f32.mxu0 0.0
        %7357 = vmatmul.mubr.f32.gmra.mxu0 %v7290
        %v7358 = vpop.f32.mrf.mxu0
        %v7359 = vadd.f32 0.0, %v7358
        %v7360 = vpop.f32.mrf.mxu0
        %7361 = vdwg.mxu0
        %v7362 = vadd.f32 %v7285, %v7359
        %s7363 = scalar_lea.vmem [#allocation3], 24
        %v7364 = vld [vmem:[%s7363] sm:$0x1f]
        %s7365 = scalar_lea.vmem %s5, 240
        %v7366 = vld [vmem:[%s7365] sm:$0xff]
        %v7367 = vld [vmem:[%s7365 + $0x8] sm:$0xff]
        %v7369 = vsel %vm6213, %v7364, 0
        %7371 = vmatprep.subr.mxu0 0.0
        %7372 = vmatpush1.msra.mxu0 0.0
        %7373 = vmatprep.subr.mxu0 0.0
        %7374 = vmatpush1.msra.mxu0 0.0
        %7375 = vmatprep.subr.mxu0 0.0
        %7376 = vmatpush1.msra.mxu0 0.0
        %7377 = vmatprep.subr.mxu0 0.0
        %7378 = vmatpush1.msra.mxu0 0.0
        %7379 = vmatprep.subr.mxu0 0.0
        %7380 = vmatpush1.msra.mxu0 0.0
        %7381 = vmatprep.subr.mxu0 0.0
        %7382 = vmatpush1.msra.mxu0 0.0
        %7383 = vmatprep.subr.mxu0 0.0
        %7384 = vmatpush1.msra.mxu0 0.0
        %7385 = vmatprep.subr.mxu0 0.0
        %7386 = vmatpush1.msra.mxu0 0.0
        %7387 = vmatprep.subr.mxu0 0.0
        %7388 = vmatpush1.msra.mxu0 0.0
        %7389 = vmatprep.subr.mxu0 0.0
        %7390 = vmatpush1.msra.mxu0 0.0
        %7391 = vmatprep.subr.mxu0 0.0
        %7392 = vmatpush1.msra.mxu0 0.0
        %7393 = vmatprep.subr.mxu0 0.0
        %7394 = vmatpush1.msra.mxu0 0.0
        %7395 = vmatprep.subr.mxu0 0.0
        %7396 = vmatpush1.msra.mxu0 0.0
        %7397 = vmatprep.subr.mxu0 0.0
        %7398 = vmatpush1.msra.mxu0 0.0
        %7399 = vmatprep.subr.mxu0 0.0
        %7400 = vmatpush1.msra.mxu0 %v7367
        %7401 = vmatprep.subr.mxu0 0.0
        %7402 = vmatpush1.msra.mxu0 %v7366
        %7403 = vmatprep.subr.mxu0 0.0
        %7404 = vmatpush2.msra.mxu0 0.0
        %7405 = vmatprep.subr.mxu0 0.0
        %7406 = vmatpush2.msra.mxu0 0.0
        %7407 = vmatprep.subr.mxu0 0.0
        %7408 = vmatpush2.msra.mxu0 0.0
        %7409 = vmatprep.subr.mxu0 0.0
        %7410 = vmatpush2.msra.mxu0 0.0
        %7411 = vmatprep.subr.mxu0 0.0
        %7412 = vmatpush2.msra.mxu0 0.0
        %7413 = vmatprep.subr.mxu0 0.0
        %7414 = vmatpush2.msra.mxu0 0.0
        %7415 = vmatprep.subr.mxu0 0.0
        %7416 = vmatpush2.msra.mxu0 0.0
        %7417 = vmatprep.subr.mxu0 0.0
        %7418 = vmatpush2.msra.mxu0 0.0
        %7419 = vmatprep.subr.mxu0 0.0
        %7420 = vmatpush2.msra.mxu0 0.0
        %7421 = vmatprep.subr.mxu0 0.0
        %7422 = vmatpush2.msra.mxu0 0.0
        %7423 = vmatprep.subr.mxu0 0.0
        %7424 = vmatpush2.msra.mxu0 0.0
        %7425 = vmatprep.subr.mxu0 0.0
        %7426 = vmatpush2.msra.mxu0 0.0
        %7427 = vmatprep.subr.mxu0 0.0
        %7428 = vmatpush2.msra.mxu0 0.0
        %7429 = vmatprep.subr.mxu0 0.0
        %7430 = vmatpush2.msra.mxu0 0.0
        %7431 = vmatprep.subr.mxu0 0.0
        %7432 = vmatpush2.msra.mxu0 0.0
        %7433 = vmatprep.subr.mxu0 0.0
        %7434 = vmatpush2.msra.mxu0 0.0
        %7435 = vmatprep.mubr.f32.mxu0 0.0
        %7436 = vmatmul.mubr.f32.gmra.mxu0 %v7369
        %v7437 = vpop.f32.mrf.mxu0
        %v7438 = vadd.f32 0.0, %v7437
        %v7439 = vpop.f32.mrf.mxu0
        %7440 = vdwg.mxu0
        %v7441 = vadd.f32 %v7362, %v7438
        %s7442 = scalar_lea.vmem %s5, 256
        %v7443 = vld [vmem:[%s7442] sm:$0xff]
        %v7444 = vld [vmem:[%s7442 + $0x8] sm:$0xff]
        %v7445 = vrot.slane %v7364, 1
        %v7446 = vsel %vm6213, %v7445, 0
        %7448 = vmatprep.subr.mxu0 0.0
        %7449 = vmatpush1.msra.mxu0 0.0
        %7450 = vmatprep.subr.mxu0 0.0
        %7451 = vmatpush1.msra.mxu0 0.0
        %7452 = vmatprep.subr.mxu0 0.0
        %7453 = vmatpush1.msra.mxu0 0.0
        %7454 = vmatprep.subr.mxu0 0.0
        %7455 = vmatpush1.msra.mxu0 0.0
        %7456 = vmatprep.subr.mxu0 0.0
        %7457 = vmatpush1.msra.mxu0 0.0
        %7458 = vmatprep.subr.mxu0 0.0
        %7459 = vmatpush1.msra.mxu0 0.0
        %7460 = vmatprep.subr.mxu0 0.0
        %7461 = vmatpush1.msra.mxu0 0.0
        %7462 = vmatprep.subr.mxu0 0.0
        %7463 = vmatpush1.msra.mxu0 0.0
        %7464 = vmatprep.subr.mxu0 0.0
        %7465 = vmatpush1.msra.mxu0 0.0
        %7466 = vmatprep.subr.mxu0 0.0
        %7467 = vmatpush1.msra.mxu0 0.0
        %7468 = vmatprep.subr.mxu0 0.0
        %7469 = vmatpush1.msra.mxu0 0.0
        %7470 = vmatprep.subr.mxu0 0.0
        %7471 = vmatpush1.msra.mxu0 0.0
        %7472 = vmatprep.subr.mxu0 0.0
        %7473 = vmatpush1.msra.mxu0 0.0
        %7474 = vmatprep.subr.mxu0 0.0
        %7475 = vmatpush1.msra.mxu0 0.0
        %7476 = vmatprep.subr.mxu0 0.0
        %7477 = vmatpush1.msra.mxu0 %v7444
        %7478 = vmatprep.subr.mxu0 0.0
        %7479 = vmatpush1.msra.mxu0 %v7443
        %7480 = vmatprep.subr.mxu0 0.0
        %7481 = vmatpush2.msra.mxu0 0.0
        %7482 = vmatprep.subr.mxu0 0.0
        %7483 = vmatpush2.msra.mxu0 0.0
        %7484 = vmatprep.subr.mxu0 0.0
        %7485 = vmatpush2.msra.mxu0 0.0
        %7486 = vmatprep.subr.mxu0 0.0
        %7487 = vmatpush2.msra.mxu0 0.0
        %7488 = vmatprep.subr.mxu0 0.0
        %7489 = vmatpush2.msra.mxu0 0.0
        %7490 = vmatprep.subr.mxu0 0.0
        %7491 = vmatpush2.msra.mxu0 0.0
        %7492 = vmatprep.subr.mxu0 0.0
        %7493 = vmatpush2.msra.mxu0 0.0
        %7494 = vmatprep.subr.mxu0 0.0
        %7495 = vmatpush2.msra.mxu0 0.0
        %7496 = vmatprep.subr.mxu0 0.0
        %7497 = vmatpush2.msra.mxu0 0.0
        %7498 = vmatprep.subr.mxu0 0.0
        %7499 = vmatpush2.msra.mxu0 0.0
        %7500 = vmatprep.subr.mxu0 0.0
        %7501 = vmatpush2.msra.mxu0 0.0
        %7502 = vmatprep.subr.mxu0 0.0
        %7503 = vmatpush2.msra.mxu0 0.0
        %7504 = vmatprep.subr.mxu0 0.0
        %7505 = vmatpush2.msra.mxu0 0.0
        %7506 = vmatprep.subr.mxu0 0.0
        %7507 = vmatpush2.msra.mxu0 0.0
        %7508 = vmatprep.subr.mxu0 0.0
        %7509 = vmatpush2.msra.mxu0 0.0
        %7510 = vmatprep.subr.mxu0 0.0
        %7511 = vmatpush2.msra.mxu0 0.0
        %7512 = vmatprep.mubr.f32.mxu0 0.0
        %7513 = vmatmul.mubr.f32.gmra.mxu0 %v7446
        %v7514 = vpop.f32.mrf.mxu0
        %v7515 = vadd.f32 0.0, %v7514
        %v7516 = vpop.f32.mrf.mxu0
        %7517 = vdwg.mxu0
        %v7518 = vadd.f32 %v7441, %v7515
        %s7519 = scalar_lea.vmem %s5, 272
        %v7520 = vld [vmem:[%s7519] sm:$0xff]
        %v7521 = vld [vmem:[%s7519 + $0x8] sm:$0xff]
        %v7522 = vrot.slane %v7364, 2
        %v7523 = vsel %vm6213, %v7522, 0
        %7525 = vmatprep.subr.mxu0 0.0
        %7526 = vmatpush1.msra.mxu0 0.0
        %7527 = vmatprep.subr.mxu0 0.0
        %7528 = vmatpush1.msra.mxu0 0.0
        %7529 = vmatprep.subr.mxu0 0.0
        %7530 = vmatpush1.msra.mxu0 0.0
        %7531 = vmatprep.subr.mxu0 0.0
        %7532 = vmatpush1.msra.mxu0 0.0
        %7533 = vmatprep.subr.mxu0 0.0
        %7534 = vmatpush1.msra.mxu0 0.0
        %7535 = vmatprep.subr.mxu0 0.0
        %7536 = vmatpush1.msra.mxu0 0.0
        %7537 = vmatprep.subr.mxu0 0.0
        %7538 = vmatpush1.msra.mxu0 0.0
        %7539 = vmatprep.subr.mxu0 0.0
        %7540 = vmatpush1.msra.mxu0 0.0
        %7541 = vmatprep.subr.mxu0 0.0
        %7542 = vmatpush1.msra.mxu0 0.0
        %7543 = vmatprep.subr.mxu0 0.0
        %7544 = vmatpush1.msra.mxu0 0.0
        %7545 = vmatprep.subr.mxu0 0.0
        %7546 = vmatpush1.msra.mxu0 0.0
        %7547 = vmatprep.subr.mxu0 0.0
        %7548 = vmatpush1.msra.mxu0 0.0
        %7549 = vmatprep.subr.mxu0 0.0
        %7550 = vmatpush1.msra.mxu0 0.0
        %7551 = vmatprep.subr.mxu0 0.0
        %7552 = vmatpush1.msra.mxu0 0.0
        %7553 = vmatprep.subr.mxu0 0.0
        %7554 = vmatpush1.msra.mxu0 %v7521
        %7555 = vmatprep.subr.mxu0 0.0
        %7556 = vmatpush1.msra.mxu0 %v7520
        %7557 = vmatprep.subr.mxu0 0.0
        %7558 = vmatpush2.msra.mxu0 0.0
        %7559 = vmatprep.subr.mxu0 0.0
        %7560 = vmatpush2.msra.mxu0 0.0
        %7561 = vmatprep.subr.mxu0 0.0
        %7562 = vmatpush2.msra.mxu0 0.0
        %7563 = vmatprep.subr.mxu0 0.0
        %7564 = vmatpush2.msra.mxu0 0.0
        %7565 = vmatprep.subr.mxu0 0.0
        %7566 = vmatpush2.msra.mxu0 0.0
        %7567 = vmatprep.subr.mxu0 0.0
        %7568 = vmatpush2.msra.mxu0 0.0
        %7569 = vmatprep.subr.mxu0 0.0
        %7570 = vmatpush2.msra.mxu0 0.0
        %7571 = vmatprep.subr.mxu0 0.0
        %7572 = vmatpush2.msra.mxu0 0.0
        %7573 = vmatprep.subr.mxu0 0.0
        %7574 = vmatpush2.msra.mxu0 0.0
        %7575 = vmatprep.subr.mxu0 0.0
        %7576 = vmatpush2.msra.mxu0 0.0
        %7577 = vmatprep.subr.mxu0 0.0
        %7578 = vmatpush2.msra.mxu0 0.0
        %7579 = vmatprep.subr.mxu0 0.0
        %7580 = vmatpush2.msra.mxu0 0.0
        %7581 = vmatprep.subr.mxu0 0.0
        %7582 = vmatpush2.msra.mxu0 0.0
        %7583 = vmatprep.subr.mxu0 0.0
        %7584 = vmatpush2.msra.mxu0 0.0
        %7585 = vmatprep.subr.mxu0 0.0
        %7586 = vmatpush2.msra.mxu0 0.0
        %7587 = vmatprep.subr.mxu0 0.0
        %7588 = vmatpush2.msra.mxu0 0.0
        %7589 = vmatprep.mubr.f32.mxu0 0.0
        %7590 = vmatmul.mubr.f32.gmra.mxu0 %v7523
        %v7591 = vpop.f32.mrf.mxu0
        %v7592 = vadd.f32 0.0, %v7591
        %v7593 = vpop.f32.mrf.mxu0
        %7594 = vdwg.mxu0
        %v7595 = vadd.f32 %v7518, %v7592
        %s7596 = scalar_lea.vmem %s5, 288
        %v7597 = vld [vmem:[%s7596] sm:$0xff]
        %v7598 = vld [vmem:[%s7596 + $0x8] sm:$0xff]
        %v7599 = vrot.slane %v7364, 3
        %v7600 = vsel %vm6213, %v7599, 0
        %7602 = vmatprep.subr.mxu0 0.0
        %7603 = vmatpush1.msra.mxu0 0.0
        %7604 = vmatprep.subr.mxu0 0.0
        %7605 = vmatpush1.msra.mxu0 0.0
        %7606 = vmatprep.subr.mxu0 0.0
        %7607 = vmatpush1.msra.mxu0 0.0
        %7608 = vmatprep.subr.mxu0 0.0
        %7609 = vmatpush1.msra.mxu0 0.0
        %7610 = vmatprep.subr.mxu0 0.0
        %7611 = vmatpush1.msra.mxu0 0.0
        %7612 = vmatprep.subr.mxu0 0.0
        %7613 = vmatpush1.msra.mxu0 0.0
        %7614 = vmatprep.subr.mxu0 0.0
        %7615 = vmatpush1.msra.mxu0 0.0
        %7616 = vmatprep.subr.mxu0 0.0
        %7617 = vmatpush1.msra.mxu0 0.0
        %7618 = vmatprep.subr.mxu0 0.0
        %7619 = vmatpush1.msra.mxu0 0.0
        %7620 = vmatprep.subr.mxu0 0.0
        %7621 = vmatpush1.msra.mxu0 0.0
        %7622 = vmatprep.subr.mxu0 0.0
        %7623 = vmatpush1.msra.mxu0 0.0
        %7624 = vmatprep.subr.mxu0 0.0
        %7625 = vmatpush1.msra.mxu0 0.0
        %7626 = vmatprep.subr.mxu0 0.0
        %7627 = vmatpush1.msra.mxu0 0.0
        %7628 = vmatprep.subr.mxu0 0.0
        %7629 = vmatpush1.msra.mxu0 0.0
        %7630 = vmatprep.subr.mxu0 0.0
        %7631 = vmatpush1.msra.mxu0 %v7598
        %7632 = vmatprep.subr.mxu0 0.0
        %7633 = vmatpush1.msra.mxu0 %v7597
        %7634 = vmatprep.subr.mxu0 0.0
        %7635 = vmatpush2.msra.mxu0 0.0
        %7636 = vmatprep.subr.mxu0 0.0
        %7637 = vmatpush2.msra.mxu0 0.0
        %7638 = vmatprep.subr.mxu0 0.0
        %7639 = vmatpush2.msra.mxu0 0.0
        %7640 = vmatprep.subr.mxu0 0.0
        %7641 = vmatpush2.msra.mxu0 0.0
        %7642 = vmatprep.subr.mxu0 0.0
        %7643 = vmatpush2.msra.mxu0 0.0
        %7644 = vmatprep.subr.mxu0 0.0
        %7645 = vmatpush2.msra.mxu0 0.0
        %7646 = vmatprep.subr.mxu0 0.0
        %7647 = vmatpush2.msra.mxu0 0.0
        %7648 = vmatprep.subr.mxu0 0.0
        %7649 = vmatpush2.msra.mxu0 0.0
        %7650 = vmatprep.subr.mxu0 0.0
        %7651 = vmatpush2.msra.mxu0 0.0
        %7652 = vmatprep.subr.mxu0 0.0
        %7653 = vmatpush2.msra.mxu0 0.0
        %7654 = vmatprep.subr.mxu0 0.0
        %7655 = vmatpush2.msra.mxu0 0.0
        %7656 = vmatprep.subr.mxu0 0.0
        %7657 = vmatpush2.msra.mxu0 0.0
        %7658 = vmatprep.subr.mxu0 0.0
        %7659 = vmatpush2.msra.mxu0 0.0
        %7660 = vmatprep.subr.mxu0 0.0
        %7661 = vmatpush2.msra.mxu0 0.0
        %7662 = vmatprep.subr.mxu0 0.0
        %7663 = vmatpush2.msra.mxu0 0.0
        %7664 = vmatprep.subr.mxu0 0.0
        %7665 = vmatpush2.msra.mxu0 0.0
        %7666 = vmatprep.mubr.f32.mxu0 0.0
        %7667 = vmatmul.mubr.f32.gmra.mxu0 %v7600
        %v7668 = vpop.f32.mrf.mxu0
        %v7669 = vadd.f32 0.0, %v7668
        %v7670 = vpop.f32.mrf.mxu0
        %7671 = vdwg.mxu0
        %v7672 = vadd.f32 %v7595, %v7669
        %s7673 = scalar_lea.vmem %s5, 304
        %v7674 = vld [vmem:[%s7673] sm:$0xff]
        %v7675 = vld [vmem:[%s7673 + $0x8] sm:$0xff]
        %v7676 = vrot.slane %v7364, 4
        %v7677 = vsel %vm6213, %v7676, 0
        %7679 = vmatprep.subr.mxu0 0.0
        %7680 = vmatpush1.msra.mxu0 0.0
        %7681 = vmatprep.subr.mxu0 0.0
        %7682 = vmatpush1.msra.mxu0 0.0
        %7683 = vmatprep.subr.mxu0 0.0
        %7684 = vmatpush1.msra.mxu0 0.0
        %7685 = vmatprep.subr.mxu0 0.0
        %7686 = vmatpush1.msra.mxu0 0.0
        %7687 = vmatprep.subr.mxu0 0.0
        %7688 = vmatpush1.msra.mxu0 0.0
        %7689 = vmatprep.subr.mxu0 0.0
        %7690 = vmatpush1.msra.mxu0 0.0
        %7691 = vmatprep.subr.mxu0 0.0
        %7692 = vmatpush1.msra.mxu0 0.0
        %7693 = vmatprep.subr.mxu0 0.0
        %7694 = vmatpush1.msra.mxu0 0.0
        %7695 = vmatprep.subr.mxu0 0.0
        %7696 = vmatpush1.msra.mxu0 0.0
        %7697 = vmatprep.subr.mxu0 0.0
        %7698 = vmatpush1.msra.mxu0 0.0
        %7699 = vmatprep.subr.mxu0 0.0
        %7700 = vmatpush1.msra.mxu0 0.0
        %7701 = vmatprep.subr.mxu0 0.0
        %7702 = vmatpush1.msra.mxu0 0.0
        %7703 = vmatprep.subr.mxu0 0.0
        %7704 = vmatpush1.msra.mxu0 0.0
        %7705 = vmatprep.subr.mxu0 0.0
        %7706 = vmatpush1.msra.mxu0 0.0
        %7707 = vmatprep.subr.mxu0 0.0
        %7708 = vmatpush1.msra.mxu0 %v7675
        %7709 = vmatprep.subr.mxu0 0.0
        %7710 = vmatpush1.msra.mxu0 %v7674
        %7711 = vmatprep.subr.mxu0 0.0
        %7712 = vmatpush2.msra.mxu0 0.0
        %7713 = vmatprep.subr.mxu0 0.0
        %7714 = vmatpush2.msra.mxu0 0.0
        %7715 = vmatprep.subr.mxu0 0.0
        %7716 = vmatpush2.msra.mxu0 0.0
        %7717 = vmatprep.subr.mxu0 0.0
        %7718 = vmatpush2.msra.mxu0 0.0
        %7719 = vmatprep.subr.mxu0 0.0
        %7720 = vmatpush2.msra.mxu0 0.0
        %7721 = vmatprep.subr.mxu0 0.0
        %7722 = vmatpush2.msra.mxu0 0.0
        %7723 = vmatprep.subr.mxu0 0.0
        %7724 = vmatpush2.msra.mxu0 0.0
        %7725 = vmatprep.subr.mxu0 0.0
        %7726 = vmatpush2.msra.mxu0 0.0
        %7727 = vmatprep.subr.mxu0 0.0
        %7728 = vmatpush2.msra.mxu0 0.0
        %7729 = vmatprep.subr.mxu0 0.0
        %7730 = vmatpush2.msra.mxu0 0.0
        %7731 = vmatprep.subr.mxu0 0.0
        %7732 = vmatpush2.msra.mxu0 0.0
        %7733 = vmatprep.subr.mxu0 0.0
        %7734 = vmatpush2.msra.mxu0 0.0
        %7735 = vmatprep.subr.mxu0 0.0
        %7736 = vmatpush2.msra.mxu0 0.0
        %7737 = vmatprep.subr.mxu0 0.0
        %7738 = vmatpush2.msra.mxu0 0.0
        %7739 = vmatprep.subr.mxu0 0.0
        %7740 = vmatpush2.msra.mxu0 0.0
        %7741 = vmatprep.subr.mxu0 0.0
        %7742 = vmatpush2.msra.mxu0 0.0
        %7743 = vmatprep.mubr.f32.mxu0 0.0
        %7744 = vmatmul.mubr.f32.gmra.mxu0 %v7677
        %v7745 = vpop.f32.mrf.mxu0
        %v7746 = vadd.f32 0.0, %v7745
        %v7747 = vpop.f32.mrf.mxu0
        %7748 = vdwg.mxu0
        %v7749 = vadd.f32 %v7672, %v7746
        %s7750 = scalar_lea.vmem [#allocation3], 32
        %v7751 = vld [vmem:[%s7750] sm:$0x1f]
        %s7752 = scalar_lea.vmem %s5, 320
        %v7753 = vld [vmem:[%s7752] sm:$0xff]
        %v7754 = vld [vmem:[%s7752 + $0x8] sm:$0xff]
        %v7756 = vsel %vm6213, %v7751, 0
        %7758 = vmatprep.subr.mxu0 0.0
        %7759 = vmatpush1.msra.mxu0 0.0
        %7760 = vmatprep.subr.mxu0 0.0
        %7761 = vmatpush1.msra.mxu0 0.0
        %7762 = vmatprep.subr.mxu0 0.0
        %7763 = vmatpush1.msra.mxu0 0.0
        %7764 = vmatprep.subr.mxu0 0.0
        %7765 = vmatpush1.msra.mxu0 0.0
        %7766 = vmatprep.subr.mxu0 0.0
        %7767 = vmatpush1.msra.mxu0 0.0
        %7768 = vmatprep.subr.mxu0 0.0
        %7769 = vmatpush1.msra.mxu0 0.0
        %7770 = vmatprep.subr.mxu0 0.0
        %7771 = vmatpush1.msra.mxu0 0.0
        %7772 = vmatprep.subr.mxu0 0.0
        %7773 = vmatpush1.msra.mxu0 0.0
        %7774 = vmatprep.subr.mxu0 0.0
        %7775 = vmatpush1.msra.mxu0 0.0
        %7776 = vmatprep.subr.mxu0 0.0
        %7777 = vmatpush1.msra.mxu0 0.0
        %7778 = vmatprep.subr.mxu0 0.0
        %7779 = vmatpush1.msra.mxu0 0.0
        %7780 = vmatprep.subr.mxu0 0.0
        %7781 = vmatpush1.msra.mxu0 0.0
        %7782 = vmatprep.subr.mxu0 0.0
        %7783 = vmatpush1.msra.mxu0 0.0
        %7784 = vmatprep.subr.mxu0 0.0
        %7785 = vmatpush1.msra.mxu0 0.0
        %7786 = vmatprep.subr.mxu0 0.0
        %7787 = vmatpush1.msra.mxu0 %v7754
        %7788 = vmatprep.subr.mxu0 0.0
        %7789 = vmatpush1.msra.mxu0 %v7753
        %7790 = vmatprep.subr.mxu0 0.0
        %7791 = vmatpush2.msra.mxu0 0.0
        %7792 = vmatprep.subr.mxu0 0.0
        %7793 = vmatpush2.msra.mxu0 0.0
        %7794 = vmatprep.subr.mxu0 0.0
        %7795 = vmatpush2.msra.mxu0 0.0
        %7796 = vmatprep.subr.mxu0 0.0
        %7797 = vmatpush2.msra.mxu0 0.0
        %7798 = vmatprep.subr.mxu0 0.0
        %7799 = vmatpush2.msra.mxu0 0.0
        %7800 = vmatprep.subr.mxu0 0.0
        %7801 = vmatpush2.msra.mxu0 0.0
        %7802 = vmatprep.subr.mxu0 0.0
        %7803 = vmatpush2.msra.mxu0 0.0
        %7804 = vmatprep.subr.mxu0 0.0
        %7805 = vmatpush2.msra.mxu0 0.0
        %7806 = vmatprep.subr.mxu0 0.0
        %7807 = vmatpush2.msra.mxu0 0.0
        %7808 = vmatprep.subr.mxu0 0.0
        %7809 = vmatpush2.msra.mxu0 0.0
        %7810 = vmatprep.subr.mxu0 0.0
        %7811 = vmatpush2.msra.mxu0 0.0
        %7812 = vmatprep.subr.mxu0 0.0
        %7813 = vmatpush2.msra.mxu0 0.0
        %7814 = vmatprep.subr.mxu0 0.0
        %7815 = vmatpush2.msra.mxu0 0.0
        %7816 = vmatprep.subr.mxu0 0.0
        %7817 = vmatpush2.msra.mxu0 0.0
        %7818 = vmatprep.subr.mxu0 0.0
        %7819 = vmatpush2.msra.mxu0 0.0
        %7820 = vmatprep.subr.mxu0 0.0
        %7821 = vmatpush2.msra.mxu0 0.0
        %7822 = vmatprep.mubr.f32.mxu0 0.0
        %7823 = vmatmul.mubr.f32.gmra.mxu0 %v7756
        %v7824 = vpop.f32.mrf.mxu0
        %v7825 = vadd.f32 0.0, %v7824
        %v7826 = vpop.f32.mrf.mxu0
        %7827 = vdwg.mxu0
        %v7828 = vadd.f32 %v7749, %v7825
        %s7829 = scalar_lea.vmem %s5, 336
        %v7830 = vld [vmem:[%s7829] sm:$0xff]
        %v7831 = vld [vmem:[%s7829 + $0x8] sm:$0xff]
        %v7832 = vrot.slane %v7751, 1
        %v7833 = vsel %vm6213, %v7832, 0
        %7835 = vmatprep.subr.mxu0 0.0
        %7836 = vmatpush1.msra.mxu0 0.0
        %7837 = vmatprep.subr.mxu0 0.0
        %7838 = vmatpush1.msra.mxu0 0.0
        %7839 = vmatprep.subr.mxu0 0.0
        %7840 = vmatpush1.msra.mxu0 0.0
        %7841 = vmatprep.subr.mxu0 0.0
        %7842 = vmatpush1.msra.mxu0 0.0
        %7843 = vmatprep.subr.mxu0 0.0
        %7844 = vmatpush1.msra.mxu0 0.0
        %7845 = vmatprep.subr.mxu0 0.0
        %7846 = vmatpush1.msra.mxu0 0.0
        %7847 = vmatprep.subr.mxu0 0.0
        %7848 = vmatpush1.msra.mxu0 0.0
        %7849 = vmatprep.subr.mxu0 0.0
        %7850 = vmatpush1.msra.mxu0 0.0
        %7851 = vmatprep.subr.mxu0 0.0
        %7852 = vmatpush1.msra.mxu0 0.0
        %7853 = vmatprep.subr.mxu0 0.0
        %7854 = vmatpush1.msra.mxu0 0.0
        %7855 = vmatprep.subr.mxu0 0.0
        %7856 = vmatpush1.msra.mxu0 0.0
        %7857 = vmatprep.subr.mxu0 0.0
        %7858 = vmatpush1.msra.mxu0 0.0
        %7859 = vmatprep.subr.mxu0 0.0
        %7860 = vmatpush1.msra.mxu0 0.0
        %7861 = vmatprep.subr.mxu0 0.0
        %7862 = vmatpush1.msra.mxu0 0.0
        %7863 = vmatprep.subr.mxu0 0.0
        %7864 = vmatpush1.msra.mxu0 %v7831
        %7865 = vmatprep.subr.mxu0 0.0
        %7866 = vmatpush1.msra.mxu0 %v7830
        %7867 = vmatprep.subr.mxu0 0.0
        %7868 = vmatpush2.msra.mxu0 0.0
        %7869 = vmatprep.subr.mxu0 0.0
        %7870 = vmatpush2.msra.mxu0 0.0
        %7871 = vmatprep.subr.mxu0 0.0
        %7872 = vmatpush2.msra.mxu0 0.0
        %7873 = vmatprep.subr.mxu0 0.0
        %7874 = vmatpush2.msra.mxu0 0.0
        %7875 = vmatprep.subr.mxu0 0.0
        %7876 = vmatpush2.msra.mxu0 0.0
        %7877 = vmatprep.subr.mxu0 0.0
        %7878 = vmatpush2.msra.mxu0 0.0
        %7879 = vmatprep.subr.mxu0 0.0
        %7880 = vmatpush2.msra.mxu0 0.0
        %7881 = vmatprep.subr.mxu0 0.0
        %7882 = vmatpush2.msra.mxu0 0.0
        %7883 = vmatprep.subr.mxu0 0.0
        %7884 = vmatpush2.msra.mxu0 0.0
        %7885 = vmatprep.subr.mxu0 0.0
        %7886 = vmatpush2.msra.mxu0 0.0
        %7887 = vmatprep.subr.mxu0 0.0
        %7888 = vmatpush2.msra.mxu0 0.0
        %7889 = vmatprep.subr.mxu0 0.0
        %7890 = vmatpush2.msra.mxu0 0.0
        %7891 = vmatprep.subr.mxu0 0.0
        %7892 = vmatpush2.msra.mxu0 0.0
        %7893 = vmatprep.subr.mxu0 0.0
        %7894 = vmatpush2.msra.mxu0 0.0
        %7895 = vmatprep.subr.mxu0 0.0
        %7896 = vmatpush2.msra.mxu0 0.0
        %7897 = vmatprep.subr.mxu0 0.0
        %7898 = vmatpush2.msra.mxu0 0.0
        %7899 = vmatprep.mubr.f32.mxu0 0.0
        %7900 = vmatmul.mubr.f32.gmra.mxu0 %v7833
        %v7901 = vpop.f32.mrf.mxu0
        %v7902 = vadd.f32 0.0, %v7901
        %v7903 = vpop.f32.mrf.mxu0
        %7904 = vdwg.mxu0
        %v7905 = vadd.f32 %v7828, %v7902
        %s7906 = scalar_lea.vmem %s5, 352
        %v7907 = vld [vmem:[%s7906] sm:$0xff]
        %v7908 = vld [vmem:[%s7906 + $0x8] sm:$0xff]
        %v7909 = vrot.slane %v7751, 2
        %v7910 = vsel %vm6213, %v7909, 0
        %7912 = vmatprep.subr.mxu0 0.0
        %7913 = vmatpush1.msra.mxu0 0.0
        %7914 = vmatprep.subr.mxu0 0.0
        %7915 = vmatpush1.msra.mxu0 0.0
        %7916 = vmatprep.subr.mxu0 0.0
        %7917 = vmatpush1.msra.mxu0 0.0
        %7918 = vmatprep.subr.mxu0 0.0
        %7919 = vmatpush1.msra.mxu0 0.0
        %7920 = vmatprep.subr.mxu0 0.0
        %7921 = vmatpush1.msra.mxu0 0.0
        %7922 = vmatprep.subr.mxu0 0.0
        %7923 = vmatpush1.msra.mxu0 0.0
        %7924 = vmatprep.subr.mxu0 0.0
        %7925 = vmatpush1.msra.mxu0 0.0
        %7926 = vmatprep.subr.mxu0 0.0
        %7927 = vmatpush1.msra.mxu0 0.0
        %7928 = vmatprep.subr.mxu0 0.0
        %7929 = vmatpush1.msra.mxu0 0.0
        %7930 = vmatprep.subr.mxu0 0.0
        %7931 = vmatpush1.msra.mxu0 0.0
        %7932 = vmatprep.subr.mxu0 0.0
        %7933 = vmatpush1.msra.mxu0 0.0
        %7934 = vmatprep.subr.mxu0 0.0
        %7935 = vmatpush1.msra.mxu0 0.0
        %7936 = vmatprep.subr.mxu0 0.0
        %7937 = vmatpush1.msra.mxu0 0.0
        %7938 = vmatprep.subr.mxu0 0.0
        %7939 = vmatpush1.msra.mxu0 0.0
        %7940 = vmatprep.subr.mxu0 0.0
        %7941 = vmatpush1.msra.mxu0 %v7908
        %7942 = vmatprep.subr.mxu0 0.0
        %7943 = vmatpush1.msra.mxu0 %v7907
        %7944 = vmatprep.subr.mxu0 0.0
        %7945 = vmatpush2.msra.mxu0 0.0
        %7946 = vmatprep.subr.mxu0 0.0
        %7947 = vmatpush2.msra.mxu0 0.0
        %7948 = vmatprep.subr.mxu0 0.0
        %7949 = vmatpush2.msra.mxu0 0.0
        %7950 = vmatprep.subr.mxu0 0.0
        %7951 = vmatpush2.msra.mxu0 0.0
        %7952 = vmatprep.subr.mxu0 0.0
        %7953 = vmatpush2.msra.mxu0 0.0
        %7954 = vmatprep.subr.mxu0 0.0
        %7955 = vmatpush2.msra.mxu0 0.0
        %7956 = vmatprep.subr.mxu0 0.0
        %7957 = vmatpush2.msra.mxu0 0.0
        %7958 = vmatprep.subr.mxu0 0.0
        %7959 = vmatpush2.msra.mxu0 0.0
        %7960 = vmatprep.subr.mxu0 0.0
        %7961 = vmatpush2.msra.mxu0 0.0
        %7962 = vmatprep.subr.mxu0 0.0
        %7963 = vmatpush2.msra.mxu0 0.0
        %7964 = vmatprep.subr.mxu0 0.0
        %7965 = vmatpush2.msra.mxu0 0.0
        %7966 = vmatprep.subr.mxu0 0.0
        %7967 = vmatpush2.msra.mxu0 0.0
        %7968 = vmatprep.subr.mxu0 0.0
        %7969 = vmatpush2.msra.mxu0 0.0
        %7970 = vmatprep.subr.mxu0 0.0
        %7971 = vmatpush2.msra.mxu0 0.0
        %7972 = vmatprep.subr.mxu0 0.0
        %7973 = vmatpush2.msra.mxu0 0.0
        %7974 = vmatprep.subr.mxu0 0.0
        %7975 = vmatpush2.msra.mxu0 0.0
        %7976 = vmatprep.mubr.f32.mxu0 0.0
        %7977 = vmatmul.mubr.f32.gmra.mxu0 %v7910
        %v7978 = vpop.f32.mrf.mxu0
        %v7979 = vadd.f32 0.0, %v7978
        %v7980 = vpop.f32.mrf.mxu0
        %7981 = vdwg.mxu0
        %v7982 = vadd.f32 %v7905, %v7979
        %s7983 = scalar_lea.vmem %s5, 368
        %v7984 = vld [vmem:[%s7983] sm:$0xff]
        %v7985 = vld [vmem:[%s7983 + $0x8] sm:$0xff]
        %v7986 = vrot.slane %v7751, 3
        %v7987 = vsel %vm6213, %v7986, 0
        %7989 = vmatprep.subr.mxu0 0.0
        %7990 = vmatpush1.msra.mxu0 0.0
        %7991 = vmatprep.subr.mxu0 0.0
        %7992 = vmatpush1.msra.mxu0 0.0
        %7993 = vmatprep.subr.mxu0 0.0
        %7994 = vmatpush1.msra.mxu0 0.0
        %7995 = vmatprep.subr.mxu0 0.0
        %7996 = vmatpush1.msra.mxu0 0.0
        %7997 = vmatprep.subr.mxu0 0.0
        %7998 = vmatpush1.msra.mxu0 0.0
        %7999 = vmatprep.subr.mxu0 0.0
        %8000 = vmatpush1.msra.mxu0 0.0
        %8001 = vmatprep.subr.mxu0 0.0
        %8002 = vmatpush1.msra.mxu0 0.0
        %8003 = vmatprep.subr.mxu0 0.0
        %8004 = vmatpush1.msra.mxu0 0.0
        %8005 = vmatprep.subr.mxu0 0.0
        %8006 = vmatpush1.msra.mxu0 0.0
        %8007 = vmatprep.subr.mxu0 0.0
        %8008 = vmatpush1.msra.mxu0 0.0
        %8009 = vmatprep.subr.mxu0 0.0
        %8010 = vmatpush1.msra.mxu0 0.0
        %8011 = vmatprep.subr.mxu0 0.0
        %8012 = vmatpush1.msra.mxu0 0.0
        %8013 = vmatprep.subr.mxu0 0.0
        %8014 = vmatpush1.msra.mxu0 0.0
        %8015 = vmatprep.subr.mxu0 0.0
        %8016 = vmatpush1.msra.mxu0 0.0
        %8017 = vmatprep.subr.mxu0 0.0
        %8018 = vmatpush1.msra.mxu0 %v7985
        %8019 = vmatprep.subr.mxu0 0.0
        %8020 = vmatpush1.msra.mxu0 %v7984
        %8021 = vmatprep.subr.mxu0 0.0
        %8022 = vmatpush2.msra.mxu0 0.0
        %8023 = vmatprep.subr.mxu0 0.0
        %8024 = vmatpush2.msra.mxu0 0.0
        %8025 = vmatprep.subr.mxu0 0.0
        %8026 = vmatpush2.msra.mxu0 0.0
        %8027 = vmatprep.subr.mxu0 0.0
        %8028 = vmatpush2.msra.mxu0 0.0
        %8029 = vmatprep.subr.mxu0 0.0
        %8030 = vmatpush2.msra.mxu0 0.0
        %8031 = vmatprep.subr.mxu0 0.0
        %8032 = vmatpush2.msra.mxu0 0.0
        %8033 = vmatprep.subr.mxu0 0.0
        %8034 = vmatpush2.msra.mxu0 0.0
        %8035 = vmatprep.subr.mxu0 0.0
        %8036 = vmatpush2.msra.mxu0 0.0
        %8037 = vmatprep.subr.mxu0 0.0
        %8038 = vmatpush2.msra.mxu0 0.0
        %8039 = vmatprep.subr.mxu0 0.0
        %8040 = vmatpush2.msra.mxu0 0.0
        %8041 = vmatprep.subr.mxu0 0.0
        %8042 = vmatpush2.msra.mxu0 0.0
        %8043 = vmatprep.subr.mxu0 0.0
        %8044 = vmatpush2.msra.mxu0 0.0
        %8045 = vmatprep.subr.mxu0 0.0
        %8046 = vmatpush2.msra.mxu0 0.0
        %8047 = vmatprep.subr.mxu0 0.0
        %8048 = vmatpush2.msra.mxu0 0.0
        %8049 = vmatprep.subr.mxu0 0.0
        %8050 = vmatpush2.msra.mxu0 0.0
        %8051 = vmatprep.subr.mxu0 0.0
        %8052 = vmatpush2.msra.mxu0 0.0
        %8053 = vmatprep.mubr.f32.mxu0 0.0
        %8054 = vmatmul.mubr.f32.gmra.mxu0 %v7987
        %v8055 = vpop.f32.mrf.mxu0
        %v8056 = vadd.f32 0.0, %v8055
        %v8057 = vpop.f32.mrf.mxu0
        %8058 = vdwg.mxu0
        %v8059 = vadd.f32 %v7982, %v8056
        %s8060 = scalar_lea.vmem %s5, 384
        %v8061 = vld [vmem:[%s8060] sm:$0xff]
        %v8062 = vld [vmem:[%s8060 + $0x8] sm:$0xff]
        %v8063 = vrot.slane %v7751, 4
        %v8064 = vsel %vm6213, %v8063, 0
        %8066 = vmatprep.subr.mxu0 0.0
        %8067 = vmatpush1.msra.mxu0 0.0
        %8068 = vmatprep.subr.mxu0 0.0
        %8069 = vmatpush1.msra.mxu0 0.0
        %8070 = vmatprep.subr.mxu0 0.0
        %8071 = vmatpush1.msra.mxu0 0.0
        %8072 = vmatprep.subr.mxu0 0.0
        %8073 = vmatpush1.msra.mxu0 0.0
        %8074 = vmatprep.subr.mxu0 0.0
        %8075 = vmatpush1.msra.mxu0 0.0
        %8076 = vmatprep.subr.mxu0 0.0
        %8077 = vmatpush1.msra.mxu0 0.0
        %8078 = vmatprep.subr.mxu0 0.0
        %8079 = vmatpush1.msra.mxu0 0.0
        %8080 = vmatprep.subr.mxu0 0.0
        %8081 = vmatpush1.msra.mxu0 0.0
        %8082 = vmatprep.subr.mxu0 0.0
        %8083 = vmatpush1.msra.mxu0 0.0
        %8084 = vmatprep.subr.mxu0 0.0
        %8085 = vmatpush1.msra.mxu0 0.0
        %8086 = vmatprep.subr.mxu0 0.0
        %8087 = vmatpush1.msra.mxu0 0.0
        %8088 = vmatprep.subr.mxu0 0.0
        %8089 = vmatpush1.msra.mxu0 0.0
        %8090 = vmatprep.subr.mxu0 0.0
        %8091 = vmatpush1.msra.mxu0 0.0
        %8092 = vmatprep.subr.mxu0 0.0
        %8093 = vmatpush1.msra.mxu0 0.0
        %8094 = vmatprep.subr.mxu0 0.0
        %8095 = vmatpush1.msra.mxu0 %v8062
        %8096 = vmatprep.subr.mxu0 0.0
        %8097 = vmatpush1.msra.mxu0 %v8061
        %8098 = vmatprep.subr.mxu0 0.0
        %8099 = vmatpush2.msra.mxu0 0.0
        %8100 = vmatprep.subr.mxu0 0.0
        %8101 = vmatpush2.msra.mxu0 0.0
        %8102 = vmatprep.subr.mxu0 0.0
        %8103 = vmatpush2.msra.mxu0 0.0
        %8104 = vmatprep.subr.mxu0 0.0
        %8105 = vmatpush2.msra.mxu0 0.0
        %8106 = vmatprep.subr.mxu0 0.0
        %8107 = vmatpush2.msra.mxu0 0.0
        %8108 = vmatprep.subr.mxu0 0.0
        %8109 = vmatpush2.msra.mxu0 0.0
        %8110 = vmatprep.subr.mxu0 0.0
        %8111 = vmatpush2.msra.mxu0 0.0
        %8112 = vmatprep.subr.mxu0 0.0
        %8113 = vmatpush2.msra.mxu0 0.0
        %8114 = vmatprep.subr.mxu0 0.0
        %8115 = vmatpush2.msra.mxu0 0.0
        %8116 = vmatprep.subr.mxu0 0.0
        %8117 = vmatpush2.msra.mxu0 0.0
        %8118 = vmatprep.subr.mxu0 0.0
        %8119 = vmatpush2.msra.mxu0 0.0
        %8120 = vmatprep.subr.mxu0 0.0
        %8121 = vmatpush2.msra.mxu0 0.0
        %8122 = vmatprep.subr.mxu0 0.0
        %8123 = vmatpush2.msra.mxu0 0.0
        %8124 = vmatprep.subr.mxu0 0.0
        %8125 = vmatpush2.msra.mxu0 0.0
        %8126 = vmatprep.subr.mxu0 0.0
        %8127 = vmatpush2.msra.mxu0 0.0
        %8128 = vmatprep.subr.mxu0 0.0
        %8129 = vmatpush2.msra.mxu0 0.0
        %8130 = vmatprep.mubr.f32.mxu0 0.0
        %8131 = vmatmul.mubr.f32.gmra.mxu0 %v8064
        %v8132 = vpop.f32.mrf.mxu0
        %v8133 = vadd.f32 0.0, %v8132
        %v8134 = vpop.f32.mrf.mxu0
        %8135 = vdwg.mxu0
        %v8136 = vadd.f32 %v8059, %v8133
        %v8137 = vld [vmem:[%s6] sm:$0x1]
        %v8138 = vadd.f32 %v8136, %v8137
        %v8139 = vtanh.pop %v8138
        %v8140 = vld [vmem:[%s7] sm:$0xff]
        %v8141 = vld [vmem:[%s7 + $0x8] sm:$0xff]
        %v8142 = vld [vmem:[%s7 + $0x10] sm:$0xff]
        %v8143 = vld [vmem:[%s7 + $0x18] sm:$0xff]
        %v8144 = vld [vmem:[%s7 + $0x20] sm:$0xff]
        %v8145 = vld [vmem:[%s7 + $0x28] sm:$0xff]
        %v8146 = vld [vmem:[%s7 + $0x30] sm:$0xff]
        %v8147 = vld [vmem:[%s7 + $0x38] sm:$0xff]
        %v8148 = vld [vmem:[%s7 + $0x40] sm:$0xff]
        %v8149 = vld [vmem:[%s7 + $0x48] sm:$0xff]
        %v8150 = vld [vmem:[%s7 + $0x50] sm:$0xff]
        %v8151 = vld [vmem:[%s7 + $0x58] sm:$0xff]
        %v8152 = vld [vmem:[%s7 + $0x60] sm:$0xff]
        %v8153 = vld [vmem:[%s7 + $0x68] sm:$0xff]
        %v8154 = vld [vmem:[%s7 + $0x70] sm:$0xff]
        %v8155 = vld [vmem:[%s8] sm:$0x1]
        %vm8156 = vcmask 982016
        %v8158 = vsel %vm8156, %v8139, 0
        %8160 = vmatprep.subr.mxu0 0.0
        %8161 = vmatpush1.msra.mxu0 0.0
        %8162 = vmatprep.subr.mxu0 0.0
        %8163 = vmatpush1.msra.mxu0 %v8154
        %8164 = vmatprep.subr.mxu0 0.0
        %8165 = vmatpush1.msra.mxu0 %v8153
        %8166 = vmatprep.subr.mxu0 0.0
        %8167 = vmatpush1.msra.mxu0 %v8152
        %8168 = vmatprep.subr.mxu0 0.0
        %8169 = vmatpush1.msra.mxu0 %v8151
        %8170 = vmatprep.subr.mxu0 0.0
        %8171 = vmatpush1.msra.mxu0 %v8150
        %8172 = vmatprep.subr.mxu0 0.0
        %8173 = vmatpush1.msra.mxu0 %v8149
        %8174 = vmatprep.subr.mxu0 0.0
        %8175 = vmatpush1.msra.mxu0 %v8148
        %8176 = vmatprep.subr.mxu0 0.0
        %8177 = vmatpush1.msra.mxu0 %v8147
        %8178 = vmatprep.subr.mxu0 0.0
        %8179 = vmatpush1.msra.mxu0 %v8146
        %8180 = vmatprep.subr.mxu0 0.0
        %8181 = vmatpush1.msra.mxu0 %v8145
        %8182 = vmatprep.subr.mxu0 0.0
        %8183 = vmatpush1.msra.mxu0 %v8144
        %8184 = vmatprep.subr.mxu0 0.0
        %8185 = vmatpush1.msra.mxu0 %v8143
        %8186 = vmatprep.subr.mxu0 0.0
        %8187 = vmatpush1.msra.mxu0 %v8142
        %8188 = vmatprep.subr.mxu0 0.0
        %8189 = vmatpush1.msra.mxu0 %v8141
        %8190 = vmatprep.subr.mxu0 0.0
        %8191 = vmatpush1.msra.mxu0 %v8140
        %8192 = vmatprep.subr.mxu0 0.0
        %8193 = vmatpush2.msra.mxu0 0.0
        %8194 = vmatprep.subr.mxu0 0.0
        %8195 = vmatpush2.msra.mxu0 0.0
        %8196 = vmatprep.subr.mxu0 0.0
        %8197 = vmatpush2.msra.mxu0 0.0
        %8198 = vmatprep.subr.mxu0 0.0
        %8199 = vmatpush2.msra.mxu0 0.0
        %8200 = vmatprep.subr.mxu0 0.0
        %8201 = vmatpush2.msra.mxu0 0.0
        %8202 = vmatprep.subr.mxu0 0.0
        %8203 = vmatpush2.msra.mxu0 0.0
        %8204 = vmatprep.subr.mxu0 0.0
        %8205 = vmatpush2.msra.mxu0 0.0
        %8206 = vmatprep.subr.mxu0 0.0
        %8207 = vmatpush2.msra.mxu0 0.0
        %8208 = vmatprep.subr.mxu0 0.0
        %8209 = vmatpush2.msra.mxu0 0.0
        %8210 = vmatprep.subr.mxu0 0.0
        %8211 = vmatpush2.msra.mxu0 0.0
        %8212 = vmatprep.subr.mxu0 0.0
        %8213 = vmatpush2.msra.mxu0 0.0
        %8214 = vmatprep.subr.mxu0 0.0
        %8215 = vmatpush2.msra.mxu0 0.0
        %8216 = vmatprep.subr.mxu0 0.0
        %8217 = vmatpush2.msra.mxu0 0.0
        %8218 = vmatprep.subr.mxu0 0.0
        %8219 = vmatpush2.msra.mxu0 0.0
        %8220 = vmatprep.subr.mxu0 0.0
        %8221 = vmatpush2.msra.mxu0 0.0
        %8222 = vmatprep.subr.mxu0 0.0
        %8223 = vmatpush2.msra.mxu0 0.0
        %8224 = vmatprep.mubr.f32.mxu0 0.0
        %8225 = vmatmul.mubr.f32.gmra.mxu0 %v8158
        %v8226 = vpop.f32.mrf.mxu0
        %v8227 = vadd.f32 %v8155, %v8226
        %v8228 = vpop.f32.mrf.mxu0
        %8229 = vdwg.mxu0
        %v8230 = vtanh.pop %v8227
        %v8231 = vld [vmem:[%s9] sm:$0xff]
        %v8232 = vld [vmem:[%s9 + $0x8] sm:$0xff]
        %v8233 = vld [vmem:[%s9 + $0x10] sm:$0xff]
        %v8234 = vld [vmem:[%s9 + $0x18] sm:$0xff]
        %v8235 = vld [vmem:[%s9 + $0x20] sm:$0xff]
        %v8236 = vld [vmem:[%s9 + $0x28] sm:$0xff]
        %v8237 = vld [vmem:[%s9 + $0x30] sm:$0xff]
        %v8238 = vld [vmem:[%s9 + $0x38] sm:$0xff]
        %v8239 = vld [vmem:[%s9 + $0x40] sm:$0xff]
        %v8240 = vld [vmem:[%s9 + $0x48] sm:$0xff]
        %v8241 = vld [vmem:[%s9 + $0x50] sm:$0xf]
        %v8242 = vld [vmem:[%s10] sm:$0x1]
        %vm8243 = vcmask 687104
        %v8245 = vsel %vm8243, %v8230, 0
        %vm8247 = vcmask 1043456
        %v8249 = vsel %vm8247, %v8241, 0
        %8251 = vmatprep.subr.mxu0 0.0
        %8252 = vmatpush1.msra.mxu0 0.0
        %8253 = vmatprep.subr.mxu0 0.0
        %8254 = vmatpush1.msra.mxu0 0.0
        %8255 = vmatprep.subr.mxu0 0.0
        %8256 = vmatpush1.msra.mxu0 0.0
        %8257 = vmatprep.subr.mxu0 0.0
        %8258 = vmatpush1.msra.mxu0 0.0
        %8259 = vmatprep.subr.mxu0 0.0
        %8260 = vmatpush1.msra.mxu0 0.0
        %8261 = vmatprep.subr.mxu0 0.0
        %8262 = vmatpush1.msra.mxu0 %v8249
        %8263 = vmatprep.subr.mxu0 0.0
        %8264 = vmatpush1.msra.mxu0 %v8240
        %8265 = vmatprep.subr.mxu0 0.0
        %8266 = vmatpush1.msra.mxu0 %v8239
        %8267 = vmatprep.subr.mxu0 0.0
        %8268 = vmatpush1.msra.mxu0 %v8238
        %8269 = vmatprep.subr.mxu0 0.0
        %8270 = vmatpush1.msra.mxu0 %v8237
        %8271 = vmatprep.subr.mxu0 0.0
        %8272 = vmatpush1.msra.mxu0 %v8236
        %8273 = vmatprep.subr.mxu0 0.0
        %8274 = vmatpush1.msra.mxu0 %v8235
        %8275 = vmatprep.subr.mxu0 0.0
        %8276 = vmatpush1.msra.mxu0 %v8234
        %8277 = vmatprep.subr.mxu0 0.0
        %8278 = vmatpush1.msra.mxu0 %v8233
        %8279 = vmatprep.subr.mxu0 0.0
        %8280 = vmatpush1.msra.mxu0 %v8232
        %8281 = vmatprep.subr.mxu0 0.0
        %8282 = vmatpush1.msra.mxu0 %v8231
        %8283 = vmatprep.subr.mxu0 0.0
        %8284 = vmatpush2.msra.mxu0 0.0
        %8285 = vmatprep.subr.mxu0 0.0
        %8286 = vmatpush2.msra.mxu0 0.0
        %8287 = vmatprep.subr.mxu0 0.0
        %8288 = vmatpush2.msra.mxu0 0.0
        %8289 = vmatprep.subr.mxu0 0.0
        %8290 = vmatpush2.msra.mxu0 0.0
        %8291 = vmatprep.subr.mxu0 0.0
        %8292 = vmatpush2.msra.mxu0 0.0
        %8293 = vmatprep.subr.mxu0 0.0
        %8294 = vmatpush2.msra.mxu0 0.0
        %8295 = vmatprep.subr.mxu0 0.0
        %8296 = vmatpush2.msra.mxu0 0.0
        %8297 = vmatprep.subr.mxu0 0.0
        %8298 = vmatpush2.msra.mxu0 0.0
        %8299 = vmatprep.subr.mxu0 0.0
        %8300 = vmatpush2.msra.mxu0 0.0
        %8301 = vmatprep.subr.mxu0 0.0
        %8302 = vmatpush2.msra.mxu0 0.0
        %8303 = vmatprep.subr.mxu0 0.0
        %8304 = vmatpush2.msra.mxu0 0.0
        %8305 = vmatprep.subr.mxu0 0.0
        %8306 = vmatpush2.msra.mxu0 0.0
        %8307 = vmatprep.subr.mxu0 0.0
        %8308 = vmatpush2.msra.mxu0 0.0
        %8309 = vmatprep.subr.mxu0 0.0
        %8310 = vmatpush2.msra.mxu0 0.0
        %8311 = vmatprep.subr.mxu0 0.0
        %8312 = vmatpush2.msra.mxu0 0.0
        %8313 = vmatprep.subr.mxu0 0.0
        %8314 = vmatpush2.msra.mxu0 0.0
        %8315 = vmatprep.mubr.f32.mxu0 0.0
        %8316 = vmatmul.mubr.f32.gmra.mxu0 %v8245
        %v8317 = vpop.f32.mrf.mxu0
        %v8318 = vadd.f32 %v8242, %v8317
        %v8319 = vpop.f32.mrf.mxu0
        %8320 = vdwg.mxu0
        %vm8321 = vcmask 73728
        %v8322 = vsel %vm8321, %v8318, -inf
        %8323 = vmax.xlane.f32.xlu0 %v8322
        %v8324 = vpop.xlane.xlu0 %8323
        %v8325 = vsub.f32 %v8318, %v8324
        %v8326 = vmul.f32 %v8325, 1.442695
        %v8327 = vpow.pop %v8326
        %v8328 = vsel %vm8321, %v8327, 0.0
        %8329 = vadd.xlane.f32.xlu0 %v8328
        %v8330 = vpop.xlane.xlu0 %8329
        %v8331 = vrcp.pop %v8330
        %v8332 = vmul.f32 %v8327, %v8331
        %8333 = vst.msk [vmem:[%s378] sm:$0x1] %vm8321, %v8332
        %s8334 = sand.u32 %s269, 1
        %s8335 = scalar_lea.sflag [#allocation5], %s8334
        %s8336 = sand.u32 %s269, 1
        %s8337 = scalar_lea.vmem [#allocation4], %s8336
        // Predicated region
        $region79: #{lenet5_forward.1} parent=63 // pred_check
          %p8338 = pneg %p279
        $region80: #{lenet5_forward.1} parent=63 // pred_check_branch
          %8340 = sbr.rel (%p8338) target = $region82
        $region81: #{lenet5_forward.1} parent=63 // pred_region
          %s8342 = ssub.s32 16, 16
          %8343 = vsyncadd %s8335, %s8342
          %s8344 = smul.addr %s25, 16
          %s8345 = scalar_lea.hbm %s11, %s8344
          %s8347 = sshll.u32 %s8337, 4
          %s8348 = int_to_ptr.vmem [resolvable:$true] %s8347
          %8350 = dma.vmem_to_hbm [thread:$0]  %s8348, 16, %s8345, %s8335
        $region82: #{lenet5_forward.1} parent=63 // pred_fallthru
          _
      $region64: #{lenet5_forward.1} parent=5 // pred_fallthru
        _
      %p8351 = scmp.le.s32.totalorder 2, %s20
      // Predicated region
      $region83: #{lenet5_forward.1} parent=5 // pred_check
        %p8352 = pneg %p8351
      $region84: #{lenet5_forward.1} parent=5 // pred_check_branch
        %8354 = sbr.rel (%p8352) target = $region86
      $region85: #{lenet5_forward.1} parent=5 // pred_region
        %s8355 = ssub.s32 %s20, 2
        // Predicated region
        $region87: #{lenet5_forward.1} parent=85 // pred_check
          %p8356 = pneg %p285
        $region88: #{lenet5_forward.1} parent=85 // pred_check_branch
          %8358 = sbr.rel (%p8356) target = $region90
        $region89: #{lenet5_forward.1} parent=85 // pred_region
          %s8359 = sand.u32 %s270, 1
          %s8360 = scalar_lea.sflag [#allocation5], %s8359
          %s8361 = sand.u32 %s270, 1
          %s8362 = scalar_lea.vmem [#allocation4], %s8361
          %8363 = dma.done %s8360, 16
        $region90: #{lenet5_forward.1} parent=85 // pred_fallthru
          _
      $region86: #{lenet5_forward.1} parent=5 // pred_fallthru
        _
    $region6: #{lenet5_forward.1} parent=1 // loop_footer
      %s24 = sadd.s32 1, %s20
    $region7: #{lenet5_forward.1} parent=1 // loop_footer_branch
      %19 = sbr.rel target = $region3
    $region8: #{lenet5_forward.1} parent=1 // loop_exit
      _
    %8364 = vsyncpa [#allocation5], 1
    %s8365 = scalar_lea.sflag [#allocation5], 1
    %8366 = vsyncpa %s8365, 1

</llo_original>
